<compile_context>
chip_gen: v5e
topology: v5e:2x2
jax: 0.10.0
libtpu: 0.0.40
codegen_flags: <defaults>
</compile_context>

<pallas_src>
import numpy as np
import jax
import jax.numpy as jnp
from jax.experimental import pallas as pl
from jax.experimental.pallas import tpu as pltpu


def _round_up(x, m):
    return ((x + m - 1) // m) * m


# ------------------------- recurrent decoder kernel ---------------------------
def decoder_kernel(
    feat_ref,                     # (Bp, N, E)   encoder features
    emb_ref,                      # (T, Bp, EM)  caption embeddings (time-major, resident)
    u_w_ref, att_b_ref,           # attention U: (E, A), bias (1, A) = u_b + w_b
    a_w_ref,                      # attention A weight: (1, A)   (a_b dropped: softmax shift-inv.)
    ih_w_ref, ih_b_ref,           # init_h: (E, D) [already /N], (1, D)
    ic_w_ref, ic_b_ref,           # init_c: (E, D) [already /N], (1, D)
    wemb_ref, lb_ref,             # fused LSTM embedding weights: (EM, 4D), bias (1, 4D)
    wctx_ref,                     # fused LSTM context weights:   (E, 4D)
    wha_ref,                      # fused h weights: (D, 4D + A) = [w_hh | w_w]
    h_out_ref,                    # out (T, Bp, D)  hidden states (resident)
    alphas_ref,                   # out (T, Bp, N)  attention weights (resident)
    eg_ref,                       # scratch (T, Bp, 4D)  hoisted embedding gate terms
):
    T, Bp, D = h_out_ref.shape
    _, N, E = feat_ref.shape
    A = u_w_ref.shape[1]
    EM = emb_ref.shape[2]
    G = 4 * D

    feats = feat_ref[...]                                                    # (Bp, N, E)

    # ---- hoisted (step-invariant) attention projection: one GEMM, W-bias folded in ----
    u_hs = (jnp.dot(feats.reshape(Bp * N, E), u_w_ref[...],
                    preferred_element_type=jnp.float32)
            + att_b_ref[...]).reshape(Bp, N, A)                              # (Bp, N, A)

    # ---- hoisted embedding -> gate projection for ALL steps: one GEMM ----
    eg_ref[...] = (jnp.dot(emb_ref[...].reshape(T * Bp, EM), wemb_ref[...],
                           preferred_element_type=jnp.float32)
                   + lb_ref[...]).reshape(T, Bp, G)                          # (T, Bp, 4D)

    # ---- init_hidden_state (1/N folded into the weights in the wrapper) ----
    sum_f = jnp.sum(feats, axis=1)                                           # (Bp, E)
    h0 = jnp.dot(sum_f, ih_w_ref[...],
                 preferred_element_type=jnp.float32) + ih_b_ref[...]         # (Bp, D)
    c0 = jnp.dot(sum_f, ic_w_ref[...],
                 preferred_element_type=jnp.float32) + ic_b_ref[...]         # (Bp, D)

    a_w = a_w_ref[...]
    w_ctx = wctx_ref[...]
    w_ha = wha_ref[...]

    def step(s, carry):
        h, c = carry

        # ---- one fused h projection: [LSTM hidden-gate slab | attention W(h)] ----
        hz = jnp.dot(h, w_ha, preferred_element_type=jnp.float32)           # (Bp, 4D+A)
        w_ah = hz[:, G:]                                                     # (Bp, A)

        # ---- Attention (u_hs reused from the hoisted GEMM; exact softmax) ----
        combined = jnp.tanh(u_hs + w_ah[:, None, :])                         # (Bp, N, A)
        scores = jnp.sum(combined * a_w, axis=-1)                            # (Bp, N)
        m = jnp.max(scores, axis=1, keepdims=True)
        e = jnp.exp(scores - m)
        alpha = e / jnp.sum(e, axis=1, keepdims=True)                        # (Bp, N)
        context = jnp.sum(feats * alpha[:, :, None], axis=1)                 # (Bp, E)

        # ---- fused LSTMCell: 2 in-loop dots, lane-aligned 4D(=128) gate slab ----
        gates = (eg_ref[s] + hz[:, :G]
                 + jnp.dot(context, w_ctx, preferred_element_type=jnp.float32))  # (Bp, 4D)
        # full-width activations over the whole slab, then static lane slices
        sig = jax.nn.sigmoid(gates)
        th = jnp.tanh(gates)
        i_g = sig[:, 0 * D:1 * D]
        f_g = sig[:, 1 * D:2 * D]
        g_g = th[:, 2 * D:3 * D]
        o_g = sig[:, 3 * D:4 * D]
        c_new = f_g * c + i_g * g_g
        h_new = o_g * jnp.tanh(c_new)

        h_out_ref[s] = h_new
        # Note: alphas' last dim (N) is lane-sparse at toy sizes; padding it to 128 is a
        # minor lever here and skipped to keep the output layout identical to the module.
        alphas_ref[s] = alpha
        return h_new, c_new

    jax.lax.fori_loop(0, T, step, (h0, c0), unroll=True)


# --------------------- gridded, lane-dense vocab projection --------------------
def fcn_kernel(h_ref, w_ref, b_ref, out_ref):
    # (RT, D) @ (D, VT) + (1, VT)  -- dropout == identity (eval mode)
    out_ref[...] = (jnp.dot(h_ref[...], w_ref[...],
                            preferred_element_type=jnp.float32) + b_ref[...])


# ---------------------------------- wrapper ------------------------------------
def decoder_rnn_forward(features, captions, p):
    """features: (B, N, encoder_dim) f32, captions: (B, seq_len) int32."""
    B, N, E = features.shape
    seq_len = captions.shape[1]
    T = seq_len - 1
    EM = p['emb_table'].shape[1]
    D = p['init_h_w'].shape[1]
    A = p['u_w'].shape[1]
    V = p['fcn_w'].shape[1]
    G = 4 * D

    # pad batch to a multiple of 8 sublanes (padded rows are independent; dropped at end)
    Bp = _round_up(B, 8)
    pad = Bp - B
    feats_p = jnp.pad(features, ((0, pad), (0, 0), (0, 0)))
    caps_p = jnp.pad(captions, ((0, pad), (0, 0)))

    # embedding lookup (gather) is glue -> plain JAX, then time-major, resident
    embeds = jnp.take(p['emb_table'], caps_p[:, :T], axis=0)          # (Bp, T, EM)
    embeds_t = jnp.transpose(embeds, (1, 0, 2))                        # (T, Bp, EM)

    # fuse LSTM gate weights (gate order i, f, g, o along the 4D lane axis)
    w_x = jnp.transpose(p['lw_ih'], (1, 0, 2)).reshape(EM + E, G)      # (EM+E, 4D)
    w_emb = w_x[:EM]                                                   # (EM, 4D)
    w_ctx = w_x[EM:]                                                   # (E, 4D)
    w_h = jnp.transpose(p['lw_hh'], (1, 0, 2)).reshape(D, G)           # (D, 4D)
    lb = (p['lb_ih'] + p['lb_hh']).reshape(1, G)                       # (1, 4D)
    # fuse the two h-dependent projections: [LSTM hidden gates | attention W]
    w_ha = jnp.concatenate([w_h, p['w_w']], axis=1)                    # (D, 4D + A)
    att_b = p['u_b'] + p['w_b']                                        # (1, A)
    # fold the 1/N of the feature mean into init_h / init_c weights
    ih_w = p['init_h_w'] / N
    ic_w = p['init_c_w'] / N

    vmem = pl.BlockSpec(memory_space=pltpu.MemorySpace.VMEM)

    def nbytes(*shapes):
        return sum(int(np.prod(s)) * 4 for s in shapes)

    rec_vmem = 2 * nbytes(
        (Bp, N, E), (T, Bp, EM), (E, A), (1, A), (1, A),
        (E, D), (1, D), (E, D), (1, D),
        (EM, G), (1, G), (E, G), (D, G + A),
        (T, Bp, D), (T, Bp, N), (T, Bp, G)) + (4 << 20)

    # --- recurrent kernel: grid=(), T-step unrolled loop inside, everything VMEM-resident ---
    h_all, alphas_t = pl.pallas_call(
        decoder_kernel,
        out_shape=(jax.ShapeDtypeStruct((T, Bp, D), jnp.float32),
                   jax.ShapeDtypeStruct((T, Bp, N), jnp.float32)),
        in_specs=[vmem] * 13,
        out_specs=(vmem, vmem),
        scratch_shapes=[pltpu.VMEM((T, Bp, G), jnp.float32)],
        compiler_params=pltpu.CompilerParams(vmem_limit_bytes=int(rec_vmem)),
    )(feats_p, embeds_t,
      p['u_w'], att_b, p['a_w'],
      ih_w, p['init_h_b'], ic_w, p['init_c_b'],
      w_emb, lb, w_ctx, w_ha)

    # --- vocab projection: gridded, lane-dense (V padded to multiple of 128),
    #     rows presented batch-major so the kernel output is already (B, T, V)-ordered ---
    Vp = _round_up(V, 128)
    VT = Vp if Vp <= 512 else 512
    Vp = _round_up(Vp, VT)
    fcn_w = jnp.pad(p['fcn_w'], ((0, 0), (0, Vp - V)))                 # (D, Vp)
    fcn_b = jnp.pad(p['fcn_b'], ((0, 0), (0, Vp - V)))                 # (1, Vp)

    rows = Bp * T
    RT = rows if rows <= 256 else 256
    rows_pad = _round_up(rows, RT)
    h_rows = jnp.transpose(h_all, (1, 0, 2)).reshape(rows, D)          # batch-major rows
    if rows_pad != rows:
        h_rows = jnp.pad(h_rows, ((0, rows_pad - rows), (0, 0)))

    fcn_vmem = 2 * 2 * nbytes((RT, D), (D, VT), (1, VT), (RT, VT)) + (4 << 20)

    preds_flat = pl.pallas_call(
        fcn_kernel,
        out_shape=jax.ShapeDtypeStruct((rows_pad, Vp), jnp.float32),
        grid=(rows_pad // RT, Vp // VT),
        in_specs=[pl.BlockSpec((RT, D), lambda i, j: (i, 0)),
                  pl.BlockSpec((D, VT), lambda i, j: (0, j)),
                  pl.BlockSpec((1, VT), lambda i, j: (0, j))],
        out_specs=pl.BlockSpec((RT, VT), lambda i, j: (i, j)),
        compiler_params=pltpu.CompilerParams(
            dimension_semantics=("parallel", "parallel"),
            vmem_limit_bytes=int(fcn_vmem)),
    )(h_rows, fcn_w, fcn_b)

    preds = preds_flat[:rows].reshape(Bp, T, Vp)[:B, :, :V]            # (B, T, V)
    alphas = jnp.transpose(alphas_t, (1, 0, 2))[:B]                    # (B, T, N)
    return preds, alphas


# --------------------------- pure-JAX reference --------------------------------
def reference_forward(features, captions, p):
    embeds = p['emb_table'][captions]
    mean_f = features.mean(axis=1)
    h = mean_f @ p['init_h_w'] + p['init_h_b'][0]
    c = mean_f @ p['init_c_w'] + p['init_c_b'][0]
    T = captions.shape[1] - 1
    preds, alphas = [], []
    for s in range(T):
        u_hs = jnp.einsum('bne,ea->bna', features, p['u_w']) + p['u_b'][0]
        w_ah = h @ p['w_w'] + p['w_b'][0]
        comb = jnp.tanh(u_hs + w_ah[:, None, :])
        scores = jnp.sum(comb * p['a_w'][0][None, None, :], axis=-1) + p['a_b'][0, 0]
        alpha = jax.nn.softmax(scores, axis=1)
        context = jnp.sum(features * alpha[:, :, None], axis=1)
        x = jnp.concatenate([embeds[:, s], context], axis=1)
        gates = [x @ p['lw_ih'][k] + p['lb_ih'][k] + h @ p['lw_hh'][k] + p['lb_hh'][k]
                 for k in range(4)]
        i_g = jax.nn.sigmoid(gates[0]); f_g = jax.nn.sigmoid(gates[1])
        g_g = jnp.tanh(gates[2]);       o_g = jax.nn.sigmoid(gates[3])
        c = f_g * c + i_g * g_g
        h = o_g * jnp.tanh(c)
        preds.append(h @ p['fcn_w'] + p['fcn_b'][0])
        alphas.append(alpha)
    return jnp.stack(preds, axis=1), jnp.stack(alphas, axis=1)


# --------------------------------- main ----------------------------------------
if __name__ == "__main__":
    # make XLA's f32 matmuls in the reference full precision so kernel vs. ref
    # differences are purely algorithmic (reassociation-level)
    jax.config.update("jax_default_matmul_precision", "highest")

    # small shapes consistent with the module
    B, N = 2, 16                        # batch, number of encoder spatial features
    encoder_dim, decoder_dim, attention_dim = 32, 32, 32
    embed_size, vocab_size, seq_len = 32, 64, 8

    key = jax.random.PRNGKey(0)
    ks = jax.random.split(key, 24)
    sc = 0.1
    params = {
        'emb_table': sc * jax.random.normal(ks[0], (vocab_size, embed_size), jnp.float32),
        'u_w': sc * jax.random.normal(ks[1], (encoder_dim, attention_dim), jnp.float32),
        'u_b': sc * jax.random.normal(ks[2], (1, attention_dim), jnp.float32),
        'w_w': sc * jax.random.normal(ks[3], (decoder_dim, attention_dim), jnp.float32),
        'w_b': sc * jax.random.normal(ks[4], (1, attention_dim), jnp.float32),
        'a_w': sc * jax.random.normal(ks[5], (1, attention_dim), jnp.float32),
        'a_b': sc * jax.random.normal(ks[6], (1, 1), jnp.float32),
        'init_h_w': sc * jax.random.normal(ks[7], (encoder_dim, decoder_dim), jnp.float32),
        'init_h_b': sc * jax.random.normal(ks[8], (1, decoder_dim), jnp.float32),
        'init_c_w': sc * jax.random.normal(ks[9], (encoder_dim, decoder_dim), jnp.float32),
        'init_c_b': sc * jax.random.normal(ks[10], (1, decoder_dim), jnp.float32),
        # LSTMCell weights, gate order (i, f, g, o), stored transposed for x @ W
        'lw_ih': sc * jax.random.normal(ks[11], (4, embed_size + encoder_dim, decoder_dim), jnp.float32),
        'lb_ih': sc * jax.random.normal(ks[12], (4, decoder_dim), jnp.float32),
        'lw_hh': sc * jax.random.normal(ks[13], (4, decoder_dim, decoder_dim), jnp.float32),
        'lb_hh': sc * jax.random.normal(ks[14], (4, decoder_dim), jnp.float32),
        'fcn_w': sc * jax.random.normal(ks[15], (decoder_dim, vocab_size), jnp.float32),
        'fcn_b': sc * jax.random.normal(ks[16], (1, vocab_size), jnp.float32),
    }

    features = jax.random.normal(ks[17], (B, N, encoder_dim), jnp.float32)
    captions = jax.random.randint(ks[18], (B, seq_len), 0, vocab_size, jnp.int32)

    preds, alphas = decoder_rnn_forward(features, captions, params)
    preds = jax.block_until_ready(preds)
    alphas = jax.block_until_ready(alphas)

    preds_ref, alphas_ref = reference_forward(features, captions, params)
    np.testing.assert_allclose(np.asarray(preds), np.asarray(preds_ref), rtol=2e-3, atol=2e-4)
    np.testing.assert_allclose(np.asarray(alphas), np.asarray(alphas_ref), rtol=2e-3, atol=2e-4)

    assert preds.shape == (B, seq_len - 1, vocab_size)
    assert alphas.shape == (B, seq_len - 1, N)
    print("KERNEL_OK")
</pallas_src>

<mosaic_0001>
module attributes {stable_mosaic.version = 11 : i64} {
  func.func @decoder_kernel(%arg0: memref<8x16x32xf32, #tpu.memory_space<vmem>>, %arg1: memref<7x8x32xf32, #tpu.memory_space<vmem>>, %arg2: memref<32x32xf32, #tpu.memory_space<vmem>>, %arg3: memref<1x32xf32, #tpu.memory_space<vmem>>, %arg4: memref<1x32xf32, #tpu.memory_space<vmem>>, %arg5: memref<32x32xf32, #tpu.memory_space<vmem>>, %arg6: memref<1x32xf32, #tpu.memory_space<vmem>>, %arg7: memref<32x32xf32, #tpu.memory_space<vmem>>, %arg8: memref<1x32xf32, #tpu.memory_space<vmem>>, %arg9: memref<32x128xf32, #tpu.memory_space<vmem>>, %arg10: memref<1x128xf32, #tpu.memory_space<vmem>>, %arg11: memref<32x128xf32, #tpu.memory_space<vmem>>, %arg12: memref<32x160xf32, #tpu.memory_space<vmem>>, %arg13: memref<7x8x32xf32, #tpu.memory_space<vmem>>, %arg14: memref<7x8x16xf32, #tpu.memory_space<vmem>>, %arg15: memref<7x8x128xf32, #tpu.memory_space<vmem>>) attributes {dimension_semantics = [], scalar_prefetch = 0 : i64, scratch_operands = 1 : i64, tpu.core_type = #tpu.core_type<tc>} {
    %c0 = arith.constant 0 : index
    %c0_0 = arith.constant 0 : index
    %c0_1 = arith.constant 0 : index
    %0 = vector.load %arg0[%c0, %c0_0, %c0_1] : memref<8x16x32xf32, #tpu.memory_space<vmem>>, vector<8x16x32xf32>
    %1 = vector.shape_cast %0 : vector<8x16x32xf32> to vector<128x32xf32>
    %c0_2 = arith.constant 0 : index
    %c0_3 = arith.constant 0 : index
    %2 = vector.load %arg2[%c0_2, %c0_3] : memref<32x32xf32, #tpu.memory_space<vmem>>, vector<32x32xf32>
    %cst = arith.constant dense<0.000000e+00> : vector<128x32xf32>
    %3 = tpu.matmul %1, %2, %cst {dimension_numbers = #tpu.dot_dimension_numbers<[1], [0], [0], [1], [0, 0, 1, 1], [], []>, precision = #tpu.contract_precision<fp32>} : vector<128x32xf32>, vector<32x32xf32>, vector<128x32xf32> -> vector<128x32xf32>
    %c0_4 = arith.constant 0 : index
    %c0_5 = arith.constant 0 : index
    %4 = vector.load %arg3[%c0_4, %c0_5] : memref<1x32xf32, #tpu.memory_space<vmem>>, vector<1x32xf32>
    %5 = vector.broadcast %4 : vector<1x32xf32> to vector<128x32xf32>
    %6 = arith.addf %3, %5 : vector<128x32xf32>
    %7 = vector.shape_cast %6 : vector<128x32xf32> to vector<8x16x32xf32>
    %c0_6 = arith.constant 0 : index
    %c0_7 = arith.constant 0 : index
    %c0_8 = arith.constant 0 : index
    %8 = vector.load %arg1[%c0_6, %c0_7, %c0_8] : memref<7x8x32xf32, #tpu.memory_space<vmem>>, vector<7x8x32xf32>
    %9 = vector.shape_cast %8 : vector<7x8x32xf32> to vector<56x32xf32>
    %c0_9 = arith.constant 0 : index
    %c0_10 = arith.constant 0 : index
    %10 = vector.load %arg9[%c0_9, %c0_10] : memref<32x128xf32, #tpu.memory_space<vmem>>, vector<32x128xf32>
    %cst_11 = arith.constant dense<0.000000e+00> : vector<56x128xf32>
    %11 = tpu.matmul %9, %10, %cst_11 {dimension_numbers = #tpu.dot_dimension_numbers<[1], [0], [0], [1], [0, 0, 1, 1], [], []>, precision = #tpu.contract_precision<fp32>} : vector<56x32xf32>, vector<32x128xf32>, vector<56x128xf32> -> vector<56x128xf32>
    %c0_12 = arith.constant 0 : index
    %c0_13 = arith.constant 0 : index
    %12 = vector.load %arg10[%c0_12, %c0_13] : memref<1x128xf32, #tpu.memory_space<vmem>>, vector<1x128xf32>
    %13 = vector.broadcast %12 : vector<1x128xf32> to vector<56x128xf32>
    %14 = arith.addf %11, %13 : vector<56x128xf32>
    %15 = vector.shape_cast %14 : vector<56x128xf32> to vector<7x8x128xf32>
    %c0_14 = arith.constant 0 : index
    %c0_15 = arith.constant 0 : index
    %c0_16 = arith.constant 0 : index
    %16 = vector.load %arg15[%c0_14, %c0_15, %c0_16] : memref<7x8x128xf32, #tpu.memory_space<vmem>>, vector<7x8x128xf32>
    tpu.vector_store %arg15[%c0_14, %c0_15, %c0_16], %15 {strides = array<i32>} : memref<7x8x128xf32, #tpu.memory_space<vmem>>, vector<7x8x128xf32>,
    %cst_17 = arith.constant dense<0.000000e+00> : vector<8x32xf32>
    %17 = vector.multi_reduction <add>, %0, %cst_17 [1] : vector<8x16x32xf32> to vector<8x32xf32>
    %c0_18 = arith.constant 0 : index
    %c0_19 = arith.constant 0 : index
    %18 = vector.load %arg5[%c0_18, %c0_19] : memref<32x32xf32, #tpu.memory_space<vmem>>, vector<32x32xf32>
    %cst_20 = arith.constant dense<0.000000e+00> : vector<8x32xf32>
    %19 = tpu.matmul %17, %18, %cst_20 {dimension_numbers = #tpu.dot_dimension_numbers<[1], [0], [0], [1], [0, 0, 1, 1], [], []>, precision = #tpu.contract_precision<fp32>} : vector<8x32xf32>, vector<32x32xf32>, vector<8x32xf32> -> vector<8x32xf32>
    %c0_21 = arith.constant 0 : index
    %c0_22 = arith.constant 0 : index
    %20 = vector.load %arg6[%c0_21, %c0_22] : memref<1x32xf32, #tpu.memory_space<vmem>>, vector<1x32xf32>
    %21 = vector.broadcast %20 : vector<1x32xf32> to vector<8x32xf32>
    %22 = arith.addf %19, %21 : vector<8x32xf32>
    %c0_23 = arith.constant 0 : index
    %c0_24 = arith.constant 0 : index
    %23 = vector.load %arg7[%c0_23, %c0_24] : memref<32x32xf32, #tpu.memory_space<vmem>>, vector<32x32xf32>
    %cst_25 = arith.constant dense<0.000000e+00> : vector<8x32xf32>
    %24 = tpu.matmul %17, %23, %cst_25 {dimension_numbers = #tpu.dot_dimension_numbers<[1], [0], [0], [1], [0, 0, 1, 1], [], []>, precision = #tpu.contract_precision<fp32>} : vector<8x32xf32>, vector<32x32xf32>, vector<8x32xf32> -> vector<8x32xf32>
    %c0_26 = arith.constant 0 : index
    %c0_27 = arith.constant 0 : index
    %25 = vector.load %arg8[%c0_26, %c0_27] : memref<1x32xf32, #tpu.memory_space<vmem>>, vector<1x32xf32>
    %26 = vector.broadcast %25 : vector<1x32xf32> to vector<8x32xf32>
    %27 = arith.addf %24, %26 : vector<8x32xf32>
    %c0_28 = arith.constant 0 : index
    %c0_29 = arith.constant 0 : index
    %28 = vector.load %arg4[%c0_28, %c0_29] : memref<1x32xf32, #tpu.memory_space<vmem>>, vector<1x32xf32>
    %c0_30 = arith.constant 0 : index
    %c0_31 = arith.constant 0 : index
    %29 = vector.load %arg11[%c0_30, %c0_31] : memref<32x128xf32, #tpu.memory_space<vmem>>, vector<32x128xf32>
    %c0_32 = arith.constant 0 : index
    %c0_33 = arith.constant 0 : index
    %30 = vector.load %arg12[%c0_32, %c0_33] : memref<32x160xf32, #tpu.memory_space<vmem>>, vector<32x160xf32>
    %c0_i32 = arith.constant 0 : i32
    %cst_34 = arith.constant dense<0.000000e+00> : vector<8x160xf32>
    %31 = tpu.matmul %22, %30, %cst_34 {dimension_numbers = #tpu.dot_dimension_numbers<[1], [0], [0], [1], [0, 0, 1, 1], [], []>, precision = #tpu.contract_precision<fp32>} : vector<8x32xf32>, vector<32x160xf32>, vector<8x160xf32> -> vector<8x160xf32>
    %32 = vector.extract_strided_slice %31 {offsets = [0, 128], sizes = [8, 32], strides = [1, 1]} : vector<8x160xf32> to vector<8x32xf32>
    %33 = vector.shape_cast %32 : vector<8x32xf32> to vector<8x1x32xf32>
    %34 = vector.broadcast %33 : vector<8x1x32xf32> to vector<8x16x32xf32>
    %35 = arith.addf %7, %34 : vector<8x16x32xf32>
    %36 = math.tanh %35 : vector<8x16x32xf32>
    %37 = vector.shape_cast %28 : vector<1x32xf32> to vector<1x1x32xf32>
    %38 = vector.broadcast %37 : vector<1x1x32xf32> to vector<8x16x32xf32>
    %39 = arith.mulf %36, %38 : vector<8x16x32xf32>
    %cst_35 = arith.constant dense<0.000000e+00> : vector<8x16xf32>
    %40 = vector.multi_reduction <add>, %39, %cst_35 [2] : vector<8x16x32xf32> to vector<8x16xf32>
    %cst_36 = arith.constant dense<0xFF800000> : vector<8xf32>
    %41 = vector.multi_reduction <maximumf>, %40, %cst_36 [1] : vector<8x16xf32> to vector<8xf32>
    %42 = vector.shape_cast %41 : vector<8xf32> to vector<8x1xf32>
    %43 = vector.broadcast %42 : vector<8x1xf32> to vector<8x16xf32>
    %44 = arith.subf %40, %43 : vector<8x16xf32>
    %45 = math.exp %44 : vector<8x16xf32>
    %cst_37 = arith.constant dense<0.000000e+00> : vector<8xf32>
    %46 = vector.multi_reduction <add>, %45, %cst_37 [1] : vector<8x16xf32> to vector<8xf32>
    %47 = vector.shape_cast %46 : vector<8xf32> to vector<8x1xf32>
    %48 = vector.broadcast %47 : vector<8x1xf32> to vector<8x16xf32>
    %49 = arith.divf %45, %48 : vector<8x16xf32>
    %50 = vector.shape_cast %49 : vector<8x16xf32> to vector<8x16x1xf32>
    %51 = vector.broadcast %50 : vector<8x16x1xf32> to vector<8x16x32xf32>
    %52 = arith.mulf %0, %51 : vector<8x16x32xf32>
    %cst_38 = arith.constant dense<0.000000e+00> : vector<8x32xf32>
    %53 = vector.multi_reduction <add>, %52, %cst_38 [1] : vector<8x16x32xf32> to vector<8x32xf32>
    %54 = arith.index_cast %c0_i32 : i32 to index
    %c0_39 = arith.constant 0 : index
    %c0_40 = arith.constant 0 : index
    %55 = vector.load %arg15[%54, %c0_39, %c0_40] : memref<7x8x128xf32, #tpu.memory_space<vmem>>, vector<1x8x128xf32>
    %56 = vector.shape_cast %55 : vector<1x8x128xf32> to vector<8x128xf32>
    %57 = vector.extract_strided_slice %31 {offsets = [0, 0], sizes = [8, 128], strides = [1, 1]} : vector<8x160xf32> to vector<8x128xf32>
    %58 = arith.addf %56, %57 : vector<8x128xf32>
    %cst_41 = arith.constant dense<0.000000e+00> : vector<8x128xf32>
    %59 = tpu.matmul %53, %29, %cst_41 {dimension_numbers = #tpu.dot_dimension_numbers<[1], [0], [0], [1], [0, 0, 1, 1], [], []>, precision = #tpu.contract_precision<fp32>} : vector<8x32xf32>, vector<32x128xf32>, vector<8x128xf32> -> vector<8x128xf32>
    %60 = arith.addf %58, %59 : vector<8x128xf32>
    %61 = arith.negf %60 : vector<8x128xf32>
    %62 = math.exp %61 : vector<8x128xf32>
    %cst_42 = arith.constant 1.000000e+00 : f32
    %63 = vector.broadcast %cst_42 : f32 to vector<8x128xf32>
    %64 = arith.addf %63, %62 : vector<8x128xf32>
    %65 = arith.divf %63, %64 : vector<8x128xf32>
    %66 = math.tanh %60 : vector<8x128xf32>
    %67 = vector.extract_strided_slice %65 {offsets = [0, 0], sizes = [8, 32], strides = [1, 1]} : vector<8x128xf32> to vector<8x32xf32>
    %68 = vector.extract_strided_slice %65 {offsets = [0, 32], sizes = [8, 32], strides = [1, 1]} : vector<8x128xf32> to vector<8x32xf32>
    %69 = vector.extract_strided_slice %66 {offsets = [0, 64], sizes = [8, 32], strides = [1, 1]} : vector<8x128xf32> to vector<8x32xf32>
    %70 = vector.extract_strided_slice %65 {offsets = [0, 96], sizes = [8, 32], strides = [1, 1]} : vector<8x128xf32> to vector<8x32xf32>
    %71 = arith.mulf %68, %27 : vector<8x32xf32>
    %72 = arith.mulf %67, %69 : vector<8x32xf32>
    %73 = arith.addf %71, %72 : vector<8x32xf32>
    %74 = math.tanh %73 : vector<8x32xf32>
    %75 = arith.mulf %70, %74 : vector<8x32xf32>
    %76 = arith.index_cast %c0_i32 : i32 to index
    %c0_43 = arith.constant 0 : index
    %c0_44 = arith.constant 0 : index
    %77 = vector.load %arg13[%76, %c0_43, %c0_44] : memref<7x8x32xf32, #tpu.memory_space<vmem>>, vector<1x8x32xf32>
    %78 = vector.shape_cast %77 : vector<1x8x32xf32> to vector<8x32xf32>
    %79 = vector.shape_cast %75 : vector<8x32xf32> to vector<1x8x32xf32>
    tpu.vector_store %arg13[%76, %c0_43, %c0_44], %79 {strides = array<i32>} : memref<7x8x32xf32, #tpu.memory_space<vmem>>, vector<1x8x32xf32>,
    %80 = arith.index_cast %c0_i32 : i32 to index
    %c0_45 = arith.constant 0 : index
    %c0_46 = arith.constant 0 : index
    %81 = vector.load %arg14[%80, %c0_45, %c0_46] : memref<7x8x16xf32, #tpu.memory_space<vmem>>, vector<1x8x16xf32>
    %82 = vector.shape_cast %81 : vector<1x8x16xf32> to vector<8x16xf32>
    %83 = vector.shape_cast %49 : vector<8x16xf32> to vector<1x8x16xf32>
    tpu.vector_store %arg14[%80, %c0_45, %c0_46], %83 {strides = array<i32>} : memref<7x8x16xf32, #tpu.memory_space<vmem>>, vector<1x8x16xf32>,
    %c1_i32 = arith.constant 1 : i32
    %cst_47 = arith.constant dense<0.000000e+00> : vector<8x160xf32>
    %84 = tpu.matmul %75, %30, %cst_47 {dimension_numbers = #tpu.dot_dimension_numbers<[1], [0], [0], [1], [0, 0, 1, 1], [], []>, precision = #tpu.contract_precision<fp32>} : vector<8x32xf32>, vector<32x160xf32>, vector<8x160xf32> -> vector<8x160xf32>
    %85 = vector.extract_strided_slice %84 {offsets = [0, 128], sizes = [8, 32], strides = [1, 1]} : vector<8x160xf32> to vector<8x32xf32>
    %86 = vector.shape_cast %85 : vector<8x32xf32> to vector<8x1x32xf32>
    %87 = vector.broadcast %86 : vector<8x1x32xf32> to vector<8x16x32xf32>
    %88 = arith.addf %7, %87 : vector<8x16x32xf32>
    %89 = math.tanh %88 : vector<8x16x32xf32>
    %90 = vector.shape_cast %28 : vector<1x32xf32> to vector<1x1x32xf32>
    %91 = vector.broadcast %90 : vector<1x1x32xf32> to vector<8x16x32xf32>
    %92 = arith.mulf %89, %91 : vector<8x16x32xf32>
    %cst_48 = arith.constant dense<0.000000e+00> : vector<8x16xf32>
    %93 = vector.multi_reduction <add>, %92, %cst_48 [2] : vector<8x16x32xf32> to vector<8x16xf32>
    %cst_49 = arith.constant dense<0xFF800000> : vector<8xf32>
    %94 = vector.multi_reduction <maximumf>, %93, %cst_49 [1] : vector<8x16xf32> to vector<8xf32>
    %95 = vector.shape_cast %94 : vector<8xf32> to vector<8x1xf32>
    %96 = vector.broadcast %95 : vector<8x1xf32> to vector<8x16xf32>
    %97 = arith.subf %93, %96 : vector<8x16xf32>
    %98 = math.exp %97 : vector<8x16xf32>
    %cst_50 = arith.constant dense<0.000000e+00> : vector<8xf32>
    %99 = vector.multi_reduction <add>, %98, %cst_50 [1] : vector<8x16xf32> to vector<8xf32>
    %100 = vector.shape_cast %99 : vector<8xf32> to vector<8x1xf32>
    %101 = vector.broadcast %100 : vector<8x1xf32> to vector<8x16xf32>
    %102 = arith.divf %98, %101 : vector<8x16xf32>
    %103 = vector.shape_cast %102 : vector<8x16xf32> to vector<8x16x1xf32>
    %104 = vector.broadcast %103 : vector<8x16x1xf32> to vector<8x16x32xf32>
    %105 = arith.mulf %0, %104 : vector<8x16x32xf32>
    %cst_51 = arith.constant dense<0.000000e+00> : vector<8x32xf32>
    %106 = vector.multi_reduction <add>, %105, %cst_51 [1] : vector<8x16x32xf32> to vector<8x32xf32>
    %107 = arith.index_cast %c1_i32 : i32 to index
    %c0_52 = arith.constant 0 : index
    %c0_53 = arith.constant 0 : index
    %108 = vector.load %arg15[%107, %c0_52, %c0_53] : memref<7x8x128xf32, #tpu.memory_space<vmem>>, vector<1x8x128xf32>
    %109 = vector.shape_cast %108 : vector<1x8x128xf32> to vector<8x128xf32>
    %110 = vector.extract_strided_slice %84 {offsets = [0, 0], sizes = [8, 128], strides = [1, 1]} : vector<8x160xf32> to vector<8x128xf32>
    %111 = arith.addf %109, %110 : vector<8x128xf32>
    %cst_54 = arith.constant dense<0.000000e+00> : vector<8x128xf32>
    %112 = tpu.matmul %106, %29, %cst_54 {dimension_numbers = #tpu.dot_dimension_numbers<[1], [0], [0], [1], [0, 0, 1, 1], [], []>, precision = #tpu.contract_precision<fp32>} : vector<8x32xf32>, vector<32x128xf32>, vector<8x128xf32> -> vector<8x128xf32>
    %113 = arith.addf %111, %112 : vector<8x128xf32>
    %114 = arith.negf %113 : vector<8x128xf32>
    %115 = math.exp %114 : vector<8x128xf32>
    %cst_55 = arith.constant 1.000000e+00 : f32
    %116 = vector.broadcast %cst_55 : f32 to vector<8x128xf32>
    %117 = arith.addf %116, %115 : vector<8x128xf32>
    %118 = arith.divf %116, %117 : vector<8x128xf32>
    %119 = math.tanh %113 : vector<8x128xf32>
    %120 = vector.extract_strided_slice %118 {offsets = [0, 0], sizes = [8, 32], strides = [1, 1]} : vector<8x128xf32> to vector<8x32xf32>
    %121 = vector.extract_strided_slice %118 {offsets = [0, 32], sizes = [8, 32], strides = [1, 1]} : vector<8x128xf32> to vector<8x32xf32>
    %122 = vector.extract_strided_slice %119 {offsets = [0, 64], sizes = [8, 32], strides = [1, 1]} : vector<8x128xf32> to vector<8x32xf32>
    %123 = vector.extract_strided_slice %118 {offsets = [0, 96], sizes = [8, 32], strides = [1, 1]} : vector<8x128xf32> to vector<8x32xf32>
    %124 = arith.mulf %121, %73 : vector<8x32xf32>
    %125 = arith.mulf %120, %122 : vector<8x32xf32>
    %126 = arith.addf %124, %125 : vector<8x32xf32>
    %127 = math.tanh %126 : vector<8x32xf32>
    %128 = arith.mulf %123, %127 : vector<8x32xf32>
    %129 = arith.index_cast %c1_i32 : i32 to index
    %c0_56 = arith.constant 0 : index
    %c0_57 = arith.constant 0 : index
    %130 = vector.load %arg13[%129, %c0_56, %c0_57] : memref<7x8x32xf32, #tpu.memory_space<vmem>>, vector<1x8x32xf32>
    %131 = vector.shape_cast %130 : vector<1x8x32xf32> to vector<8x32xf32>
    %132 = vector.shape_cast %128 : vector<8x32xf32> to vector<1x8x32xf32>
    tpu.vector_store %arg13[%129, %c0_56, %c0_57], %132 {strides = array<i32>} : memref<7x8x32xf32, #tpu.memory_space<vmem>>, vector<1x8x32xf32>,
    %133 = arith.index_cast %c1_i32 : i32 to index
    %c0_58 = arith.constant 0 : index
    %c0_59 = arith.constant 0 : index
    %134 = vector.load %arg14[%133, %c0_58, %c0_59] : memref<7x8x16xf32, #tpu.memory_space<vmem>>, vector<1x8x16xf32>
    %135 = vector.shape_cast %134 : vector<1x8x16xf32> to vector<8x16xf32>
    %136 = vector.shape_cast %102 : vector<8x16xf32> to vector<1x8x16xf32>
    tpu.vector_store %arg14[%133, %c0_58, %c0_59], %136 {strides = array<i32>} : memref<7x8x16xf32, #tpu.memory_space<vmem>>, vector<1x8x16xf32>,
    %c2_i32 = arith.constant 2 : i32
    %cst_60 = arith.constant dense<0.000000e+00> : vector<8x160xf32>
    %137 = tpu.matmul %128, %30, %cst_60 {dimension_numbers = #tpu.dot_dimension_numbers<[1], [0], [0], [1], [0, 0, 1, 1], [], []>, precision = #tpu.contract_precision<fp32>} : vector<8x32xf32>, vector<32x160xf32>, vector<8x160xf32> -> vector<8x160xf32>
    %138 = vector.extract_strided_slice %137 {offsets = [0, 128], sizes = [8, 32], strides = [1, 1]} : vector<8x160xf32> to vector<8x32xf32>
    %139 = vector.shape_cast %138 : vector<8x32xf32> to vector<8x1x32xf32>
    %140 = vector.broadcast %139 : vector<8x1x32xf32> to vector<8x16x32xf32>
    %141 = arith.addf %7, %140 : vector<8x16x32xf32>
    %142 = math.tanh %141 : vector<8x16x32xf32>
    %143 = vector.shape_cast %28 : vector<1x32xf32> to vector<1x1x32xf32>
    %144 = vector.broadcast %143 : vector<1x1x32xf32> to vector<8x16x32xf32>
    %145 = arith.mulf %142, %144 : vector<8x16x32xf32>
    %cst_61 = arith.constant dense<0.000000e+00> : vector<8x16xf32>
    %146 = vector.multi_reduction <add>, %145, %cst_61 [2] : vector<8x16x32xf32> to vector<8x16xf32>
    %cst_62 = arith.constant dense<0xFF800000> : vector<8xf32>
    %147 = vector.multi_reduction <maximumf>, %146, %cst_62 [1] : vector<8x16xf32> to vector<8xf32>
    %148 = vector.shape_cast %147 : vector<8xf32> to vector<8x1xf32>
    %149 = vector.broadcast %148 : vector<8x1xf32> to vector<8x16xf32>
    %150 = arith.subf %146, %149 : vector<8x16xf32>
    %151 = math.exp %150 : vector<8x16xf32>
    %cst_63 = arith.constant dense<0.000000e+00> : vector<8xf32>
    %152 = vector.multi_reduction <add>, %151, %cst_63 [1] : vector<8x16xf32> to vector<8xf32>
    %153 = vector.shape_cast %152 : vector<8xf32> to vector<8x1xf32>
    %154 = vector.broadcast %153 : vector<8x1xf32> to vector<8x16xf32>
    %155 = arith.divf %151, %154 : vector<8x16xf32>
    %156 = vector.shape_cast %155 : vector<8x16xf32> to vector<8x16x1xf32>
    %157 = vector.broadcast %156 : vector<8x16x1xf32> to vector<8x16x32xf32>
    %158 = arith.mulf %0, %157 : vector<8x16x32xf32>
    %cst_64 = arith.constant dense<0.000000e+00> : vector<8x32xf32>
    %159 = vector.multi_reduction <add>, %158, %cst_64 [1] : vector<8x16x32xf32> to vector<8x32xf32>
    %160 = arith.index_cast %c2_i32 : i32 to index
    %c0_65 = arith.constant 0 : index
    %c0_66 = arith.constant 0 : index
    %161 = vector.load %arg15[%160, %c0_65, %c0_66] : memref<7x8x128xf32, #tpu.memory_space<vmem>>, vector<1x8x128xf32>
    %162 = vector.shape_cast %161 : vector<1x8x128xf32> to vector<8x128xf32>
    %163 = vector.extract_strided_slice %137 {offsets = [0, 0], sizes = [8, 128], strides = [1, 1]} : vector<8x160xf32> to vector<8x128xf32>
    %164 = arith.addf %162, %163 : vector<8x128xf32>
    %cst_67 = arith.constant dense<0.000000e+00> : vector<8x128xf32>
    %165 = tpu.matmul %159, %29, %cst_67 {dimension_numbers = #tpu.dot_dimension_numbers<[1], [0], [0], [1], [0, 0, 1, 1], [], []>, precision = #tpu.contract_precision<fp32>} : vector<8x32xf32>, vector<32x128xf32>, vector<8x128xf32> -> vector<8x128xf32>
    %166 = arith.addf %164, %165 : vector<8x128xf32>
    %167 = arith.negf %166 : vector<8x128xf32>
    %168 = math.exp %167 : vector<8x128xf32>
    %cst_68 = arith.constant 1.000000e+00 : f32
    %169 = vector.broadcast %cst_68 : f32 to vector<8x128xf32>
    %170 = arith.addf %169, %168 : vector<8x128xf32>
    %171 = arith.divf %169, %170 : vector<8x128xf32>
    %172 = math.tanh %166 : vector<8x128xf32>
    %173 = vector.extract_strided_slice %171 {offsets = [0, 0], sizes = [8, 32], strides = [1, 1]} : vector<8x128xf32> to vector<8x32xf32>
    %174 = vector.extract_strided_slice %171 {offsets = [0, 32], sizes = [8, 32], strides = [1, 1]} : vector<8x128xf32> to vector<8x32xf32>
    %175 = vector.extract_strided_slice %172 {offsets = [0, 64], sizes = [8, 32], strides = [1, 1]} : vector<8x128xf32> to vector<8x32xf32>
    %176 = vector.extract_strided_slice %171 {offsets = [0, 96], sizes = [8, 32], strides = [1, 1]} : vector<8x128xf32> to vector<8x32xf32>
    %177 = arith.mulf %174, %126 : vector<8x32xf32>
    %178 = arith.mulf %173, %175 : vector<8x32xf32>
    %179 = arith.addf %177, %178 : vector<8x32xf32>
    %180 = math.tanh %179 : vector<8x32xf32>
    %181 = arith.mulf %176, %180 : vector<8x32xf32>
    %182 = arith.index_cast %c2_i32 : i32 to index
    %c0_69 = arith.constant 0 : index
    %c0_70 = arith.constant 0 : index
    %183 = vector.load %arg13[%182, %c0_69, %c0_70] : memref<7x8x32xf32, #tpu.memory_space<vmem>>, vector<1x8x32xf32>
    %184 = vector.shape_cast %183 : vector<1x8x32xf32> to vector<8x32xf32>
    %185 = vector.shape_cast %181 : vector<8x32xf32> to vector<1x8x32xf32>
    tpu.vector_store %arg13[%182, %c0_69, %c0_70], %185 {strides = array<i32>} : memref<7x8x32xf32, #tpu.memory_space<vmem>>, vector<1x8x32xf32>,
    %186 = arith.index_cast %c2_i32 : i32 to index
    %c0_71 = arith.constant 0 : index
    %c0_72 = arith.constant 0 : index
    %187 = vector.load %arg14[%186, %c0_71, %c0_72] : memref<7x8x16xf32, #tpu.memory_space<vmem>>, vector<1x8x16xf32>
    %188 = vector.shape_cast %187 : vector<1x8x16xf32> to vector<8x16xf32>
    %189 = vector.shape_cast %155 : vector<8x16xf32> to vector<1x8x16xf32>
    tpu.vector_store %arg14[%186, %c0_71, %c0_72], %189 {strides = array<i32>} : memref<7x8x16xf32, #tpu.memory_space<vmem>>, vector<1x8x16xf32>,
    %c3_i32 = arith.constant 3 : i32
    %cst_73 = arith.constant dense<0.000000e+00> : vector<8x160xf32>
    %190 = tpu.matmul %181, %30, %cst_73 {dimension_numbers = #tpu.dot_dimension_numbers<[1], [0], [0], [1], [0, 0, 1, 1], [], []>, precision = #tpu.contract_precision<fp32>} : vector<8x32xf32>, vector<32x160xf32>, vector<8x160xf32> -> vector<8x160xf32>
    %191 = vector.extract_strided_slice %190 {offsets = [0, 128], sizes = [8, 32], strides = [1, 1]} : vector<8x160xf32> to vector<8x32xf32>
    %192 = vector.shape_cast %191 : vector<8x32xf32> to vector<8x1x32xf32>
    %193 = vector.broadcast %192 : vector<8x1x32xf32> to vector<8x16x32xf32>
    %194 = arith.addf %7, %193 : vector<8x16x32xf32>
    %195 = math.tanh %194 : vector<8x16x32xf32>
    %196 = vector.shape_cast %28 : vector<1x32xf32> to vector<1x1x32xf32>
    %197 = vector.broadcast %196 : vector<1x1x32xf32> to vector<8x16x32xf32>
    %198 = arith.mulf %195, %197 : vector<8x16x32xf32>
    %cst_74 = arith.constant dense<0.000000e+00> : vector<8x16xf32>
    %199 = vector.multi_reduction <add>, %198, %cst_74 [2] : vector<8x16x32xf32> to vector<8x16xf32>
    %cst_75 = arith.constant dense<0xFF800000> : vector<8xf32>
    %200 = vector.multi_reduction <maximumf>, %199, %cst_75 [1] : vector<8x16xf32> to vector<8xf32>
    %201 = vector.shape_cast %200 : vector<8xf32> to vector<8x1xf32>
    %202 = vector.broadcast %201 : vector<8x1xf32> to vector<8x16xf32>
    %203 = arith.subf %199, %202 : vector<8x16xf32>
    %204 = math.exp %203 : vector<8x16xf32>
    %cst_76 = arith.constant dense<0.000000e+00> : vector<8xf32>
    %205 = vector.multi_reduction <add>, %204, %cst_76 [1] : vector<8x16xf32> to vector<8xf32>
    %206 = vector.shape_cast %205 : vector<8xf32> to vector<8x1xf32>
    %207 = vector.broadcast %206 : vector<8x1xf32> to vector<8x16xf32>
    %208 = arith.divf %204, %207 : vector<8x16xf32>
    %209 = vector.shape_cast %208 : vector<8x16xf32> to vector<8x16x1xf32>
    %210 = vector.broadcast %209 : vector<8x16x1xf32> to vector<8x16x32xf32>
    %211 = arith.mulf %0, %210 : vector<8x16x32xf32>
    %cst_77 = arith.constant dense<0.000000e+00> : vector<8x32xf32>
    %212 = vector.multi_reduction <add>, %211, %cst_77 [1] : vector<8x16x32xf32> to vector<8x32xf32>
    %213 = arith.index_cast %c3_i32 : i32 to index
    %c0_78 = arith.constant 0 : index
    %c0_79 = arith.constant 0 : index
    %214 = vector.load %arg15[%213, %c0_78, %c0_79] : memref<7x8x128xf32, #tpu.memory_space<vmem>>, vector<1x8x128xf32>
    %215 = vector.shape_cast %214 : vector<1x8x128xf32> to vector<8x128xf32>
    %216 = vector.extract_strided_slice %190 {offsets = [0, 0], sizes = [8, 128], strides = [1, 1]} : vector<8x160xf32> to vector<8x128xf32>
    %217 = arith.addf %215, %216 : vector<8x128xf32>
    %cst_80 = arith.constant dense<0.000000e+00> : vector<8x128xf32>
    %218 = tpu.matmul %212, %29, %cst_80 {dimension_numbers = #tpu.dot_dimension_numbers<[1], [0], [0], [1], [0, 0, 1, 1], [], []>, precision = #tpu.contract_precision<fp32>} : vector<8x32xf32>, vector<32x128xf32>, vector<8x128xf32> -> vector<8x128xf32>
    %219 = arith.addf %217, %218 : vector<8x128xf32>
    %220 = arith.negf %219 : vector<8x128xf32>
    %221 = math.exp %220 : vector<8x128xf32>
    %cst_81 = arith.constant 1.000000e+00 : f32
    %222 = vector.broadcast %cst_81 : f32 to vector<8x128xf32>
    %223 = arith.addf %222, %221 : vector<8x128xf32>
    %224 = arith.divf %222, %223 : vector<8x128xf32>
    %225 = math.tanh %219 : vector<8x128xf32>
    %226 = vector.extract_strided_slice %224 {offsets = [0, 0], sizes = [8, 32], strides = [1, 1]} : vector<8x128xf32> to vector<8x32xf32>
    %227 = vector.extract_strided_slice %224 {offsets = [0, 32], sizes = [8, 32], strides = [1, 1]} : vector<8x128xf32> to vector<8x32xf32>
    %228 = vector.extract_strided_slice %225 {offsets = [0, 64], sizes = [8, 32], strides = [1, 1]} : vector<8x128xf32> to vector<8x32xf32>
    %229 = vector.extract_strided_slice %224 {offsets = [0, 96], sizes = [8, 32], strides = [1, 1]} : vector<8x128xf32> to vector<8x32xf32>
    %230 = arith.mulf %227, %179 : vector<8x32xf32>
    %231 = arith.mulf %226, %228 : vector<8x32xf32>
    %232 = arith.addf %230, %231 : vector<8x32xf32>
    %233 = math.tanh %232 : vector<8x32xf32>
    %234 = arith.mulf %229, %233 : vector<8x32xf32>
    %235 = arith.index_cast %c3_i32 : i32 to index
    %c0_82 = arith.constant 0 : index
    %c0_83 = arith.constant 0 : index
    %236 = vector.load %arg13[%235, %c0_82, %c0_83] : memref<7x8x32xf32, #tpu.memory_space<vmem>>, vector<1x8x32xf32>
    %237 = vector.shape_cast %236 : vector<1x8x32xf32> to vector<8x32xf32>
    %238 = vector.shape_cast %234 : vector<8x32xf32> to vector<1x8x32xf32>
    tpu.vector_store %arg13[%235, %c0_82, %c0_83], %238 {strides = array<i32>} : memref<7x8x32xf32, #tpu.memory_space<vmem>>, vector<1x8x32xf32>,
    %239 = arith.index_cast %c3_i32 : i32 to index
    %c0_84 = arith.constant 0 : index
    %c0_85 = arith.constant 0 : index
    %240 = vector.load %arg14[%239, %c0_84, %c0_85] : memref<7x8x16xf32, #tpu.memory_space<vmem>>, vector<1x8x16xf32>
    %241 = vector.shape_cast %240 : vector<1x8x16xf32> to vector<8x16xf32>
    %242 = vector.shape_cast %208 : vector<8x16xf32> to vector<1x8x16xf32>
    tpu.vector_store %arg14[%239, %c0_84, %c0_85], %242 {strides = array<i32>} : memref<7x8x16xf32, #tpu.memory_space<vmem>>, vector<1x8x16xf32>,
    %c4_i32 = arith.constant 4 : i32
    %cst_86 = arith.constant dense<0.000000e+00> : vector<8x160xf32>
    %243 = tpu.matmul %234, %30, %cst_86 {dimension_numbers = #tpu.dot_dimension_numbers<[1], [0], [0], [1], [0, 0, 1, 1], [], []>, precision = #tpu.contract_precision<fp32>} : vector<8x32xf32>, vector<32x160xf32>, vector<8x160xf32> -> vector<8x160xf32>
    %244 = vector.extract_strided_slice %243 {offsets = [0, 128], sizes = [8, 32], strides = [1, 1]} : vector<8x160xf32> to vector<8x32xf32>
    %245 = vector.shape_cast %244 : vector<8x32xf32> to vector<8x1x32xf32>
    %246 = vector.broadcast %245 : vector<8x1x32xf32> to vector<8x16x32xf32>
    %247 = arith.addf %7, %246 : vector<8x16x32xf32>
    %248 = math.tanh %247 : vector<8x16x32xf32>
    %249 = vector.shape_cast %28 : vector<1x32xf32> to vector<1x1x32xf32>
    %250 = vector.broadcast %249 : vector<1x1x32xf32> to vector<8x16x32xf32>
    %251 = arith.mulf %248, %250 : vector<8x16x32xf32>
    %cst_87 = arith.constant dense<0.000000e+00> : vector<8x16xf32>
    %252 = vector.multi_reduction <add>, %251, %cst_87 [2] : vector<8x16x32xf32> to vector<8x16xf32>
    %cst_88 = arith.constant dense<0xFF800000> : vector<8xf32>
    %253 = vector.multi_reduction <maximumf>, %252, %cst_88 [1] : vector<8x16xf32> to vector<8xf32>
    %254 = vector.shape_cast %253 : vector<8xf32> to vector<8x1xf32>
    %255 = vector.broadcast %254 : vector<8x1xf32> to vector<8x16xf32>
    %256 = arith.subf %252, %255 : vector<8x16xf32>
    %257 = math.exp %256 : vector<8x16xf32>
    %cst_89 = arith.constant dense<0.000000e+00> : vector<8xf32>
    %258 = vector.multi_reduction <add>, %257, %cst_89 [1] : vector<8x16xf32> to vector<8xf32>
    %259 = vector.shape_cast %258 : vector<8xf32> to vector<8x1xf32>
    %260 = vector.broadcast %259 : vector<8x1xf32> to vector<8x16xf32>
    %261 = arith.divf %257, %260 : vector<8x16xf32>
    %262 = vector.shape_cast %261 : vector<8x16xf32> to vector<8x16x1xf32>
    %263 = vector.broadcast %262 : vector<8x16x1xf32> to vector<8x16x32xf32>
    %264 = arith.mulf %0, %263 : vector<8x16x32xf32>
    %cst_90 = arith.constant dense<0.000000e+00> : vector<8x32xf32>
    %265 = vector.multi_reduction <add>, %264, %cst_90 [1] : vector<8x16x32xf32> to vector<8x32xf32>
    %266 = arith.index_cast %c4_i32 : i32 to index
    %c0_91 = arith.constant 0 : index
    %c0_92 = arith.constant 0 : index
    %267 = vector.load %arg15[%266, %c0_91, %c0_92] : memref<7x8x128xf32, #tpu.memory_space<vmem>>, vector<1x8x128xf32>
    %268 = vector.shape_cast %267 : vector<1x8x128xf32> to vector<8x128xf32>
    %269 = vector.extract_strided_slice %243 {offsets = [0, 0], sizes = [8, 128], strides = [1, 1]} : vector<8x160xf32> to vector<8x128xf32>
    %270 = arith.addf %268, %269 : vector<8x128xf32>
    %cst_93 = arith.constant dense<0.000000e+00> : vector<8x128xf32>
    %271 = tpu.matmul %265, %29, %cst_93 {dimension_numbers = #tpu.dot_dimension_numbers<[1], [0], [0], [1], [0, 0, 1, 1], [], []>, precision = #tpu.contract_precision<fp32>} : vector<8x32xf32>, vector<32x128xf32>, vector<8x128xf32> -> vector<8x128xf32>
    %272 = arith.addf %270, %271 : vector<8x128xf32>
    %273 = arith.negf %272 : vector<8x128xf32>
    %274 = math.exp %273 : vector<8x128xf32>
    %cst_94 = arith.constant 1.000000e+00 : f32
    %275 = vector.broadcast %cst_94 : f32 to vector<8x128xf32>
    %276 = arith.addf %275, %274 : vector<8x128xf32>
    %277 = arith.divf %275, %276 : vector<8x128xf32>
    %278 = math.tanh %272 : vector<8x128xf32>
    %279 = vector.extract_strided_slice %277 {offsets = [0, 0], sizes = [8, 32], strides = [1, 1]} : vector<8x128xf32> to vector<8x32xf32>
    %280 = vector.extract_strided_slice %277 {offsets = [0, 32], sizes = [8, 32], strides = [1, 1]} : vector<8x128xf32> to vector<8x32xf32>
    %281 = vector.extract_strided_slice %278 {offsets = [0, 64], sizes = [8, 32], strides = [1, 1]} : vector<8x128xf32> to vector<8x32xf32>
    %282 = vector.extract_strided_slice %277 {offsets = [0, 96], sizes = [8, 32], strides = [1, 1]} : vector<8x128xf32> to vector<8x32xf32>
    %283 = arith.mulf %280, %232 : vector<8x32xf32>
    %284 = arith.mulf %279, %281 : vector<8x32xf32>
    %285 = arith.addf %283, %284 : vector<8x32xf32>
    %286 = math.tanh %285 : vector<8x32xf32>
    %287 = arith.mulf %282, %286 : vector<8x32xf32>
    %288 = arith.index_cast %c4_i32 : i32 to index
    %c0_95 = arith.constant 0 : index
    %c0_96 = arith.constant 0 : index
    %289 = vector.load %arg13[%288, %c0_95, %c0_96] : memref<7x8x32xf32, #tpu.memory_space<vmem>>, vector<1x8x32xf32>
    %290 = vector.shape_cast %289 : vector<1x8x32xf32> to vector<8x32xf32>
    %291 = vector.shape_cast %287 : vector<8x32xf32> to vector<1x8x32xf32>
    tpu.vector_store %arg13[%288, %c0_95, %c0_96], %291 {strides = array<i32>} : memref<7x8x32xf32, #tpu.memory_space<vmem>>, vector<1x8x32xf32>,
    %292 = arith.index_cast %c4_i32 : i32 to index
    %c0_97 = arith.constant 0 : index
    %c0_98 = arith.constant 0 : index
    %293 = vector.load %arg14[%292, %c0_97, %c0_98] : memref<7x8x16xf32, #tpu.memory_space<vmem>>, vector<1x8x16xf32>
    %294 = vector.shape_cast %293 : vector<1x8x16xf32> to vector<8x16xf32>
    %295 = vector.shape_cast %261 : vector<8x16xf32> to vector<1x8x16xf32>
    tpu.vector_store %arg14[%292, %c0_97, %c0_98], %295 {strides = array<i32>} : memref<7x8x16xf32, #tpu.memory_space<vmem>>, vector<1x8x16xf32>,
    %c5_i32 = arith.constant 5 : i32
    %cst_99 = arith.constant dense<0.000000e+00> : vector<8x160xf32>
    %296 = tpu.matmul %287, %30, %cst_99 {dimension_numbers = #tpu.dot_dimension_numbers<[1], [0], [0], [1], [0, 0, 1, 1], [], []>, precision = #tpu.contract_precision<fp32>} : vector<8x32xf32>, vector<32x160xf32>, vector<8x160xf32> -> vector<8x160xf32>
    %297 = vector.extract_strided_slice %296 {offsets = [0, 128], sizes = [8, 32], strides = [1, 1]} : vector<8x160xf32> to vector<8x32xf32>
    %298 = vector.shape_cast %297 : vector<8x32xf32> to vector<8x1x32xf32>
    %299 = vector.broadcast %298 : vector<8x1x32xf32> to vector<8x16x32xf32>
    %300 = arith.addf %7, %299 : vector<8x16x32xf32>
    %301 = math.tanh %300 : vector<8x16x32xf32>
    %302 = vector.shape_cast %28 : vector<1x32xf32> to vector<1x1x32xf32>
    %303 = vector.broadcast %302 : vector<1x1x32xf32> to vector<8x16x32xf32>
    %304 = arith.mulf %301, %303 : vector<8x16x32xf32>
    %cst_100 = arith.constant dense<0.000000e+00> : vector<8x16xf32>
    %305 = vector.multi_reduction <add>, %304, %cst_100 [2] : vector<8x16x32xf32> to vector<8x16xf32>
    %cst_101 = arith.constant dense<0xFF800000> : vector<8xf32>
    %306 = vector.multi_reduction <maximumf>, %305, %cst_101 [1] : vector<8x16xf32> to vector<8xf32>
    %307 = vector.shape_cast %306 : vector<8xf32> to vector<8x1xf32>
    %308 = vector.broadcast %307 : vector<8x1xf32> to vector<8x16xf32>
    %309 = arith.subf %305, %308 : vector<8x16xf32>
    %310 = math.exp %309 : vector<8x16xf32>
    %cst_102 = arith.constant dense<0.000000e+00> : vector<8xf32>
    %311 = vector.multi_reduction <add>, %310, %cst_102 [1] : vector<8x16xf32> to vector<8xf32>
    %312 = vector.shape_cast %311 : vector<8xf32> to vector<8x1xf32>
    %313 = vector.broadcast %312 : vector<8x1xf32> to vector<8x16xf32>
    %314 = arith.divf %310, %313 : vector<8x16xf32>
    %315 = vector.shape_cast %314 : vector<8x16xf32> to vector<8x16x1xf32>
    %316 = vector.broadcast %315 : vector<8x16x1xf32> to vector<8x16x32xf32>
    %317 = arith.mulf %0, %316 : vector<8x16x32xf32>
    %cst_103 = arith.constant dense<0.000000e+00> : vector<8x32xf32>
    %318 = vector.multi_reduction <add>, %317, %cst_103 [1] : vector<8x16x32xf32> to vector<8x32xf32>
    %319 = arith.index_cast %c5_i32 : i32 to index
    %c0_104 = arith.constant 0 : index
    %c0_105 = arith.constant 0 : index
    %320 = vector.load %arg15[%319, %c0_104, %c0_105] : memref<7x8x128xf32, #tpu.memory_space<vmem>>, vector<1x8x128xf32>
    %321 = vector.shape_cast %320 : vector<1x8x128xf32> to vector<8x128xf32>
    %322 = vector.extract_strided_slice %296 {offsets = [0, 0], sizes = [8, 128], strides = [1, 1]} : vector<8x160xf32> to vector<8x128xf32>
    %323 = arith.addf %321, %322 : vector<8x128xf32>
    %cst_106 = arith.constant dense<0.000000e+00> : vector<8x128xf32>
    %324 = tpu.matmul %318, %29, %cst_106 {dimension_numbers = #tpu.dot_dimension_numbers<[1], [0], [0], [1], [0, 0, 1, 1], [], []>, precision = #tpu.contract_precision<fp32>} : vector<8x32xf32>, vector<32x128xf32>, vector<8x128xf32> -> vector<8x128xf32>
    %325 = arith.addf %323, %324 : vector<8x128xf32>
    %326 = arith.negf %325 : vector<8x128xf32>
    %327 = math.exp %326 : vector<8x128xf32>
    %cst_107 = arith.constant 1.000000e+00 : f32
    %328 = vector.broadcast %cst_107 : f32 to vector<8x128xf32>
    %329 = arith.addf %328, %327 : vector<8x128xf32>
    %330 = arith.divf %328, %329 : vector<8x128xf32>
    %331 = math.tanh %325 : vector<8x128xf32>
    %332 = vector.extract_strided_slice %330 {offsets = [0, 0], sizes = [8, 32], strides = [1, 1]} : vector<8x128xf32> to vector<8x32xf32>
    %333 = vector.extract_strided_slice %330 {offsets = [0, 32], sizes = [8, 32], strides = [1, 1]} : vector<8x128xf32> to vector<8x32xf32>
    %334 = vector.extract_strided_slice %331 {offsets = [0, 64], sizes = [8, 32], strides = [1, 1]} : vector<8x128xf32> to vector<8x32xf32>
    %335 = vector.extract_strided_slice %330 {offsets = [0, 96], sizes = [8, 32], strides = [1, 1]} : vector<8x128xf32> to vector<8x32xf32>
    %336 = arith.mulf %333, %285 : vector<8x32xf32>
    %337 = arith.mulf %332, %334 : vector<8x32xf32>
    %338 = arith.addf %336, %337 : vector<8x32xf32>
    %339 = math.tanh %338 : vector<8x32xf32>
    %340 = arith.mulf %335, %339 : vector<8x32xf32>
    %341 = arith.index_cast %c5_i32 : i32 to index
    %c0_108 = arith.constant 0 : index
    %c0_109 = arith.constant 0 : index
    %342 = vector.load %arg13[%341, %c0_108, %c0_109] : memref<7x8x32xf32, #tpu.memory_space<vmem>>, vector<1x8x32xf32>
    %343 = vector.shape_cast %342 : vector<1x8x32xf32> to vector<8x32xf32>
    %344 = vector.shape_cast %340 : vector<8x32xf32> to vector<1x8x32xf32>
    tpu.vector_store %arg13[%341, %c0_108, %c0_109], %344 {strides = array<i32>} : memref<7x8x32xf32, #tpu.memory_space<vmem>>, vector<1x8x32xf32>,
    %345 = arith.index_cast %c5_i32 : i32 to index
    %c0_110 = arith.constant 0 : index
    %c0_111 = arith.constant 0 : index
    %346 = vector.load %arg14[%345, %c0_110, %c0_111] : memref<7x8x16xf32, #tpu.memory_space<vmem>>, vector<1x8x16xf32>
    %347 = vector.shape_cast %346 : vector<1x8x16xf32> to vector<8x16xf32>
    %348 = vector.shape_cast %314 : vector<8x16xf32> to vector<1x8x16xf32>
    tpu.vector_store %arg14[%345, %c0_110, %c0_111], %348 {strides = array<i32>} : memref<7x8x16xf32, #tpu.memory_space<vmem>>, vector<1x8x16xf32>,
    %c6_i32 = arith.constant 6 : i32
    %cst_112 = arith.constant dense<0.000000e+00> : vector<8x160xf32>
    %349 = tpu.matmul %340, %30, %cst_112 {dimension_numbers = #tpu.dot_dimension_numbers<[1], [0], [0], [1], [0, 0, 1, 1], [], []>, precision = #tpu.contract_precision<fp32>} : vector<8x32xf32>, vector<32x160xf32>, vector<8x160xf32> -> vector<8x160xf32>
    %350 = vector.extract_strided_slice %349 {offsets = [0, 128], sizes = [8, 32], strides = [1, 1]} : vector<8x160xf32> to vector<8x32xf32>
    %351 = vector.shape_cast %350 : vector<8x32xf32> to vector<8x1x32xf32>
    %352 = vector.broadcast %351 : vector<8x1x32xf32> to vector<8x16x32xf32>
    %353 = arith.addf %7, %352 : vector<8x16x32xf32>
    %354 = math.tanh %353 : vector<8x16x32xf32>
    %355 = vector.shape_cast %28 : vector<1x32xf32> to vector<1x1x32xf32>
    %356 = vector.broadcast %355 : vector<1x1x32xf32> to vector<8x16x32xf32>
    %357 = arith.mulf %354, %356 : vector<8x16x32xf32>
    %cst_113 = arith.constant dense<0.000000e+00> : vector<8x16xf32>
    %358 = vector.multi_reduction <add>, %357, %cst_113 [2] : vector<8x16x32xf32> to vector<8x16xf32>
    %cst_114 = arith.constant dense<0xFF800000> : vector<8xf32>
    %359 = vector.multi_reduction <maximumf>, %358, %cst_114 [1] : vector<8x16xf32> to vector<8xf32>
    %360 = vector.shape_cast %359 : vector<8xf32> to vector<8x1xf32>
    %361 = vector.broadcast %360 : vector<8x1xf32> to vector<8x16xf32>
    %362 = arith.subf %358, %361 : vector<8x16xf32>
    %363 = math.exp %362 : vector<8x16xf32>
    %cst_115 = arith.constant dense<0.000000e+00> : vector<8xf32>
    %364 = vector.multi_reduction <add>, %363, %cst_115 [1] : vector<8x16xf32> to vector<8xf32>
    %365 = vector.shape_cast %364 : vector<8xf32> to vector<8x1xf32>
    %366 = vector.broadcast %365 : vector<8x1xf32> to vector<8x16xf32>
    %367 = arith.divf %363, %366 : vector<8x16xf32>
    %368 = vector.shape_cast %367 : vector<8x16xf32> to vector<8x16x1xf32>
    %369 = vector.broadcast %368 : vector<8x16x1xf32> to vector<8x16x32xf32>
    %370 = arith.mulf %0, %369 : vector<8x16x32xf32>
    %cst_116 = arith.constant dense<0.000000e+00> : vector<8x32xf32>
    %371 = vector.multi_reduction <add>, %370, %cst_116 [1] : vector<8x16x32xf32> to vector<8x32xf32>
    %372 = arith.index_cast %c6_i32 : i32 to index
    %c0_117 = arith.constant 0 : index
    %c0_118 = arith.constant 0 : index
    %373 = vector.load %arg15[%372, %c0_117, %c0_118] : memref<7x8x128xf32, #tpu.memory_space<vmem>>, vector<1x8x128xf32>
    %374 = vector.shape_cast %373 : vector<1x8x128xf32> to vector<8x128xf32>
    %375 = vector.extract_strided_slice %349 {offsets = [0, 0], sizes = [8, 128], strides = [1, 1]} : vector<8x160xf32> to vector<8x128xf32>
    %376 = arith.addf %374, %375 : vector<8x128xf32>
    %cst_119 = arith.constant dense<0.000000e+00> : vector<8x128xf32>
    %377 = tpu.matmul %371, %29, %cst_119 {dimension_numbers = #tpu.dot_dimension_numbers<[1], [0], [0], [1], [0, 0, 1, 1], [], []>, precision = #tpu.contract_precision<fp32>} : vector<8x32xf32>, vector<32x128xf32>, vector<8x128xf32> -> vector<8x128xf32>
    %378 = arith.addf %376, %377 : vector<8x128xf32>
    %379 = arith.negf %378 : vector<8x128xf32>
    %380 = math.exp %379 : vector<8x128xf32>
    %cst_120 = arith.constant 1.000000e+00 : f32
    %381 = vector.broadcast %cst_120 : f32 to vector<8x128xf32>
    %382 = arith.addf %381, %380 : vector<8x128xf32>
    %383 = arith.divf %381, %382 : vector<8x128xf32>
    %384 = math.tanh %378 : vector<8x128xf32>
    %385 = vector.extract_strided_slice %383 {offsets = [0, 0], sizes = [8, 32], strides = [1, 1]} : vector<8x128xf32> to vector<8x32xf32>
    %386 = vector.extract_strided_slice %383 {offsets = [0, 32], sizes = [8, 32], strides = [1, 1]} : vector<8x128xf32> to vector<8x32xf32>
    %387 = vector.extract_strided_slice %384 {offsets = [0, 64], sizes = [8, 32], strides = [1, 1]} : vector<8x128xf32> to vector<8x32xf32>
    %388 = vector.extract_strided_slice %383 {offsets = [0, 96], sizes = [8, 32], strides = [1, 1]} : vector<8x128xf32> to vector<8x32xf32>
    %389 = arith.mulf %386, %338 : vector<8x32xf32>
    %390 = arith.mulf %385, %387 : vector<8x32xf32>
    %391 = arith.addf %389, %390 : vector<8x32xf32>
    %392 = math.tanh %391 : vector<8x32xf32>
    %393 = arith.mulf %388, %392 : vector<8x32xf32>
    %394 = arith.index_cast %c6_i32 : i32 to index
    %c0_121 = arith.constant 0 : index
    %c0_122 = arith.constant 0 : index
    %395 = vector.load %arg13[%394, %c0_121, %c0_122] : memref<7x8x32xf32, #tpu.memory_space<vmem>>, vector<1x8x32xf32>
    %396 = vector.shape_cast %395 : vector<1x8x32xf32> to vector<8x32xf32>
    %397 = vector.shape_cast %393 : vector<8x32xf32> to vector<1x8x32xf32>
    tpu.vector_store %arg13[%394, %c0_121, %c0_122], %397 {strides = array<i32>} : memref<7x8x32xf32, #tpu.memory_space<vmem>>, vector<1x8x32xf32>,
    %398 = arith.index_cast %c6_i32 : i32 to index
    %c0_123 = arith.constant 0 : index
    %c0_124 = arith.constant 0 : index
    %399 = vector.load %arg14[%398, %c0_123, %c0_124] : memref<7x8x16xf32, #tpu.memory_space<vmem>>, vector<1x8x16xf32>
    %400 = vector.shape_cast %399 : vector<1x8x16xf32> to vector<8x16xf32>
    %401 = vector.shape_cast %367 : vector<8x16xf32> to vector<1x8x16xf32>
    tpu.vector_store %arg14[%398, %c0_123, %c0_124], %401 {strides = array<i32>} : memref<7x8x16xf32, #tpu.memory_space<vmem>>, vector<1x8x16xf32>,
    %c7_i32 = arith.constant 7 : i32
    return
  }
}

</mosaic_0001>

<llo_original>
// kernel: tpu_custom_call.1
$region0: #{tpu_custom_call.1}
  #allocation0 [shape = 'u32[]', space=smem, size = 0x4, offset = 0x4, fixed_abs, tag = 'smem constant byte address 0x4 - core index']
  #allocation1 [shape = 'u32[72,128]{1,0:T(1,128)}', space=vmem, size = 0x9000, scoped, tag = 'internal scratch']
  #allocation2 [shape = 'f32[7,8,128]{2,1,0:T(8,128)}', space=vmem, size = 0x7000, scoped, tag = 'scratch operand']
  %s0 = inlined_call_operand.hbm [shape: f32[8,16,32], index: 0, kind: input, shape index: {}]
  %s1 = inlined_call_operand.hbm [shape: f32[7,8,32], index: 1, kind: input, shape index: {}]
  %s2 = inlined_call_operand.hbm [shape: f32[32,32], index: 2, kind: input, shape index: {}]
  %s3 = inlined_call_operand.vmem [shape: f32[1,32], index: 3, kind: input, shape index: {}]
  %s4 = inlined_call_operand.vmem [shape: f32[1,32], index: 4, kind: input, shape index: {}]
  %s5 = inlined_call_operand.hbm [shape: f32[32,32], index: 5, kind: input, shape index: {}]
  %s6 = inlined_call_operand.vmem [shape: f32[1,32], index: 6, kind: input, shape index: {}]
  %s7 = inlined_call_operand.hbm [shape: f32[32,32], index: 7, kind: input, shape index: {}]
  %s8 = inlined_call_operand.vmem [shape: f32[1,32], index: 8, kind: input, shape index: {}]
  %s9 = inlined_call_operand.hbm [shape: f32[32,128], index: 9, kind: input, shape index: {}]
  %s10 = inlined_call_operand.vmem [shape: f32[1,128], index: 10, kind: input, shape index: {}]
  %s11 = inlined_call_operand.hbm [shape: f32[32,128], index: 11, kind: input, shape index: {}]
  %s12 = inlined_call_operand.hbm [shape: f32[32,160], index: 12, kind: input, shape index: {}]
  %s13 = inlined_call_operand.hbm [shape: f32[7,8,32], index: 13, kind: output, shape index: {0}]
  %s14 = inlined_call_operand.hbm [shape: f32[7,8,16], index: 14, kind: output, shape index: {1}]
  %15 = xla_tuple %s13, %s14
  %s16 = sld [smem:[#allocation0]]
  $region102: #{tpu_custom_call.1} parent=0
    _
  %s18 = ssub.s32 1, %s16
  %s19 = scalar_select 0, %s18, %s16
  $region1: #{tpu_custom_call.1} parent=0
    #allocation3 [shape = 'u8[65536]{0}', space=vmem, size = 0x10000, scoped, tag = 'input window, operand 0, single buffered']
    #allocation4 [shape = 's32[1]{0}', space=sflag, size = 0x4, scoped, tag = 'scoped memory for tpu_custom_call.1']
    #allocation5 [shape = 's32[1]{0}', space=sflag, size = 0x4, scoped, tag = 'scoped memory for tpu_custom_call.1']
    #allocation6 [shape = 'u8[28672]{0}', space=vmem, size = 0x7000, scoped, tag = 'input window, operand 1, single buffered']
    #allocation7 [shape = 's32[1]{0}', space=sflag, size = 0x4, scoped, tag = 'scoped memory for tpu_custom_call.1']
    #allocation8 [shape = 'u8[16384]{0}', space=vmem, size = 0x4000, scoped, tag = 'input window, operand 2, single buffered']
    #allocation9 [shape = 'u8[16384]{0}', space=vmem, size = 0x4000, scoped, tag = 'input window, operand 5, single buffered']
    #allocation10 [shape = 's32[1]{0}', space=sflag, size = 0x4, scoped, tag = 'scoped memory for tpu_custom_call.1']
    #allocation11 [shape = 'u8[16384]{0}', space=vmem, size = 0x4000, scoped, tag = 'input window, operand 7, single buffered']
    #allocation12 [shape = 'u8[16384]{0}', space=vmem, size = 0x4000, scoped, tag = 'input window, operand 9, single buffered']
    #allocation13 [shape = 's32[1]{0}', space=sflag, size = 0x4, scoped, tag = 'scoped memory for tpu_custom_call.1']
    #allocation14 [shape = 'u8[16384]{0}', space=vmem, size = 0x4000, scoped, tag = 'input window, operand 11, single buffered']
    #allocation15 [shape = 'u8[32768]{0}', space=vmem, size = 0x8000, scoped, tag = 'input window, operand 12, single buffered']
    #allocation16 [shape = 's32[1]{0}', space=sflag, size = 0x4, scoped, tag = 'scoped memory for tpu_custom_call.1']
    #allocation17 [shape = 'u8[28672]{0}', space=vmem, size = 0x7000, scoped, tag = 'output window, operand 0, single buffered']
    #allocation18 [shape = 'u8[28672]{0}', space=vmem, size = 0x7000, scoped, tag = 'output window, operand 1, single buffered']
    #allocation19 [shape = 's32[1]{0}', space=sflag, size = 0x4, scoped, tag = 'scoped memory for tpu_custom_call.1']
    %20 = vsyncpa [#allocation4], 0
    %21 = vsyncpa [#allocation7], 0
    %22 = vsyncpa [#allocation10], 0
    %23 = vsyncpa [#allocation13], 0
    %24 = vsyncpa [#allocation16], 0
    %25 = vsyncpa [#allocation5], 0
    %26 = vsyncpa [#allocation19], 0
    // Predicated region
    $region2: #{tpu_custom_call.1} parent=1 // pred_check
      _
    $region3: #{tpu_custom_call.1} parent=1 // pred_check_branch
      %28 = sbr.rel (0) target = $region5
    $region4: #{tpu_custom_call.1} parent=1 // pred_region
      %30 = vsyncadd [#allocation4], 0
      %s31 = sshll.u32 %s0, 4
      %s32 = int_to_ptr.hbm [resolvable:$true] %s31
      %s33 = sshll.u32 [#allocation3], 4
      %s34 = int_to_ptr.vmem [resolvable:$true] %s33
      %39 = dma.hbm_to_vmem [thread:$0]  %s32, 2048, %s34, [#allocation4], 128, 128, 8
    $region5: #{tpu_custom_call.1} parent=1 // pred_fallthru
      _
    // Predicated region
    $region6: #{tpu_custom_call.1} parent=1 // pred_check
      _
    $region7: #{tpu_custom_call.1} parent=1 // pred_check_branch
      %41 = sbr.rel (0) target = $region9
    $region8: #{tpu_custom_call.1} parent=1 // pred_region
      %43 = vsyncadd [#allocation7], 0
      %s44 = sshll.u32 %s1, 4
      %s45 = int_to_ptr.hbm [resolvable:$true] %s44
      %s46 = sshll.u32 [#allocation6], 4
      %s47 = int_to_ptr.vmem [resolvable:$true] %s46
      %52 = dma.hbm_to_vmem [thread:$0]  %s45, 896, %s47, [#allocation7], 128, 128, 8
    $region9: #{tpu_custom_call.1} parent=1 // pred_fallthru
      _
    // Predicated region
    $region10: #{tpu_custom_call.1} parent=1 // pred_check
      _
    $region11: #{tpu_custom_call.1} parent=1 // pred_check_branch
      %54 = sbr.rel (0) target = $region13
    $region12: #{tpu_custom_call.1} parent=1 // pred_region
      %56 = vsyncadd [#allocation7], 0
      %s57 = sshll.u32 %s2, 4
      %s58 = int_to_ptr.hbm [resolvable:$true] %s57
      %s59 = sshll.u32 [#allocation8], 4
      %s60 = int_to_ptr.vmem [resolvable:$true] %s59
      %65 = dma.hbm_to_vmem [thread:$0]  %s58, 512, %s60, [#allocation7], 128, 128, 8
    $region13: #{tpu_custom_call.1} parent=1 // pred_fallthru
      _
    // Predicated region
    $region14: #{tpu_custom_call.1} parent=1 // pred_check
      _
    $region15: #{tpu_custom_call.1} parent=1 // pred_check_branch
      %67 = sbr.rel (0) target = $region17
    $region16: #{tpu_custom_call.1} parent=1 // pred_region
      _
    $region17: #{tpu_custom_call.1} parent=1 // pred_fallthru
      _
    // Predicated region
    $region18: #{tpu_custom_call.1} parent=1 // pred_check
      _
    $region19: #{tpu_custom_call.1} parent=1 // pred_check_branch
      %69 = sbr.rel (0) target = $region21
    $region20: #{tpu_custom_call.1} parent=1 // pred_region
      _
    $region21: #{tpu_custom_call.1} parent=1 // pred_fallthru
      _
    // Predicated region
    $region22: #{tpu_custom_call.1} parent=1 // pred_check
      _
    $region23: #{tpu_custom_call.1} parent=1 // pred_check_branch
      %71 = sbr.rel (0) target = $region25
    $region24: #{tpu_custom_call.1} parent=1 // pred_region
      %73 = vsyncadd [#allocation10], 0
      %s74 = sshll.u32 %s5, 4
      %s75 = int_to_ptr.hbm [resolvable:$true] %s74
      %s76 = sshll.u32 [#allocation9], 4
      %s77 = int_to_ptr.vmem [resolvable:$true] %s76
      %82 = dma.hbm_to_vmem [thread:$0]  %s75, 512, %s77, [#allocation10], 128, 128, 8
    $region25: #{tpu_custom_call.1} parent=1 // pred_fallthru
      _
    // Predicated region
    $region26: #{tpu_custom_call.1} parent=1 // pred_check
      _
    $region27: #{tpu_custom_call.1} parent=1 // pred_check_branch
      %84 = sbr.rel (0) target = $region29
    $region28: #{tpu_custom_call.1} parent=1 // pred_region
      _
    $region29: #{tpu_custom_call.1} parent=1 // pred_fallthru
      _
    // Predicated region
    $region30: #{tpu_custom_call.1} parent=1 // pred_check
      _
    $region31: #{tpu_custom_call.1} parent=1 // pred_check_branch
      %86 = sbr.rel (0) target = $region33
    $region32: #{tpu_custom_call.1} parent=1 // pred_region
      %88 = vsyncadd [#allocation10], 0
      %s89 = sshll.u32 %s7, 4
      %s90 = int_to_ptr.hbm [resolvable:$true] %s89
      %s91 = sshll.u32 [#allocation11], 4
      %s92 = int_to_ptr.vmem [resolvable:$true] %s91
      %97 = dma.hbm_to_vmem [thread:$0]  %s90, 512, %s92, [#allocation10], 128, 128, 8
    $region33: #{tpu_custom_call.1} parent=1 // pred_fallthru
      _
    // Predicated region
    $region34: #{tpu_custom_call.1} parent=1 // pred_check
      _
    $region35: #{tpu_custom_call.1} parent=1 // pred_check_branch
      %99 = sbr.rel (0) target = $region37
    $region36: #{tpu_custom_call.1} parent=1 // pred_region
      _
    $region37: #{tpu_custom_call.1} parent=1 // pred_fallthru
      _
    // Predicated region
    $region38: #{tpu_custom_call.1} parent=1 // pred_check
      _
    $region39: #{tpu_custom_call.1} parent=1 // pred_check_branch
      %101 = sbr.rel (0) target = $region41
    $region40: #{tpu_custom_call.1} parent=1 // pred_region
      %103 = vsyncadd [#allocation13], 0
      %s104 = sshll.u32 %s9, 4
      %s105 = int_to_ptr.hbm [resolvable:$true] %s104
      %s106 = sshll.u32 [#allocation12], 4
      %s107 = int_to_ptr.vmem [resolvable:$true] %s106
      %112 = dma.hbm_to_vmem [thread:$0]  %s105, 512, %s107, [#allocation13], 128, 128, 8
    $region41: #{tpu_custom_call.1} parent=1 // pred_fallthru
      _
    // Predicated region
    $region42: #{tpu_custom_call.1} parent=1 // pred_check
      _
    $region43: #{tpu_custom_call.1} parent=1 // pred_check_branch
      %114 = sbr.rel (0) target = $region45
    $region44: #{tpu_custom_call.1} parent=1 // pred_region
      _
    $region45: #{tpu_custom_call.1} parent=1 // pred_fallthru
      _
    // Predicated region
    $region46: #{tpu_custom_call.1} parent=1 // pred_check
      _
    $region47: #{tpu_custom_call.1} parent=1 // pred_check_branch
      %116 = sbr.rel (0) target = $region49
    $region48: #{tpu_custom_call.1} parent=1 // pred_region
      %118 = vsyncadd [#allocation13], 0
      %s119 = sshll.u32 %s11, 4
      %s120 = int_to_ptr.hbm [resolvable:$true] %s119
      %s121 = sshll.u32 [#allocation14], 4
      %s122 = int_to_ptr.vmem [resolvable:$true] %s121
      %127 = dma.hbm_to_vmem [thread:$0]  %s120, 512, %s122, [#allocation13], 128, 128, 8
    $region49: #{tpu_custom_call.1} parent=1 // pred_fallthru
      _
    // Predicated region
    $region50: #{tpu_custom_call.1} parent=1 // pred_check
      _
    $region51: #{tpu_custom_call.1} parent=1 // pred_check_branch
      %129 = sbr.rel (0) target = $region53
    $region52: #{tpu_custom_call.1} parent=1 // pred_region
      %131 = vsyncadd [#allocation16], 0
      %s132 = sshll.u32 %s12, 4
      %s133 = int_to_ptr.hbm [resolvable:$true] %s132
      %s134 = sshll.u32 [#allocation15], 4
      %s135 = int_to_ptr.vmem [resolvable:$true] %s134
      %140 = dma.hbm_to_vmem [thread:$0]  %s133, 1024, %s135, [#allocation16], 256, 256, 16
    $region53: #{tpu_custom_call.1} parent=1 // pred_fallthru
      _
    // Predicated region
    $region54: #{tpu_custom_call.1} parent=1 // pred_check
      _
    $region55: #{tpu_custom_call.1} parent=1 // pred_check_branch
      %142 = sbr.rel (0) target = $region57
    $region56: #{tpu_custom_call.1} parent=1 // pred_region
      %144 = dma.done [#allocation4], 2048
    $region57: #{tpu_custom_call.1} parent=1 // pred_fallthru
      _
    // Predicated region
    $region58: #{tpu_custom_call.1} parent=1 // pred_check
      _
    $region59: #{tpu_custom_call.1} parent=1 // pred_check_branch
      %146 = sbr.rel (0) target = $region61
    $region60: #{tpu_custom_call.1} parent=1 // pred_region
      %148 = dma.done [#allocation7], 896
    $region61: #{tpu_custom_call.1} parent=1 // pred_fallthru
      _
    // Predicated region
    $region62: #{tpu_custom_call.1} parent=1 // pred_check
      _
    $region63: #{tpu_custom_call.1} parent=1 // pred_check_branch
      %150 = sbr.rel (0) target = $region65
    $region64: #{tpu_custom_call.1} parent=1 // pred_region
      %152 = dma.done [#allocation7], 512
    $region65: #{tpu_custom_call.1} parent=1 // pred_fallthru
      _
    // Predicated region
    $region66: #{tpu_custom_call.1} parent=1 // pred_check
      _
    $region67: #{tpu_custom_call.1} parent=1 // pred_check_branch
      %154 = sbr.rel (0) target = $region69
    $region68: #{tpu_custom_call.1} parent=1 // pred_region
      %156 = dma.done [#allocation10], 512
    $region69: #{tpu_custom_call.1} parent=1 // pred_fallthru
      _
    // Predicated region
    $region70: #{tpu_custom_call.1} parent=1 // pred_check
      _
    $region71: #{tpu_custom_call.1} parent=1 // pred_check_branch
      %158 = sbr.rel (0) target = $region73
    $region72: #{tpu_custom_call.1} parent=1 // pred_region
      %160 = dma.done [#allocation10], 512
    $region73: #{tpu_custom_call.1} parent=1 // pred_fallthru
      _
    // Predicated region
    $region74: #{tpu_custom_call.1} parent=1 // pred_check
      _
    $region75: #{tpu_custom_call.1} parent=1 // pred_check_branch
      %162 = sbr.rel (0) target = $region77
    $region76: #{tpu_custom_call.1} parent=1 // pred_region
      %164 = dma.done [#allocation13], 512
    $region77: #{tpu_custom_call.1} parent=1 // pred_fallthru
      _
    // Predicated region
    $region78: #{tpu_custom_call.1} parent=1 // pred_check
      _
    $region79: #{tpu_custom_call.1} parent=1 // pred_check_branch
      %166 = sbr.rel (0) target = $region81
    $region80: #{tpu_custom_call.1} parent=1 // pred_region
      %168 = dma.done [#allocation13], 512
    $region81: #{tpu_custom_call.1} parent=1 // pred_fallthru
      _
    // Predicated region
    $region82: #{tpu_custom_call.1} parent=1 // pred_check
      _
    $region83: #{tpu_custom_call.1} parent=1 // pred_check_branch
      %170 = sbr.rel (0) target = $region85
    $region84: #{tpu_custom_call.1} parent=1 // pred_region
      %172 = dma.done [#allocation16], 1024
    $region85: #{tpu_custom_call.1} parent=1 // pred_fallthru
      _
    %v173 = vld [vmem:[#allocation3] sm:$0xff]
    %v174 = vld [vmem:[#allocation3 + $0x8] sm:$0xff]
    %v175 = vld [vmem:[#allocation3 + $0x10] sm:$0xff]
    %v176 = vld [vmem:[#allocation3 + $0x18] sm:$0xff]
    %v177 = vld [vmem:[#allocation3 + $0x20] sm:$0xff]
    %v178 = vld [vmem:[#allocation3 + $0x28] sm:$0xff]
    %v179 = vld [vmem:[#allocation3 + $0x30] sm:$0xff]
    %v180 = vld [vmem:[#allocation3 + $0x38] sm:$0xff]
    %v181 = vld [vmem:[#allocation3 + $0x40] sm:$0xff]
    %v182 = vld [vmem:[#allocation3 + $0x48] sm:$0xff]
    %v183 = vld [vmem:[#allocation3 + $0x50] sm:$0xff]
    %v184 = vld [vmem:[#allocation3 + $0x58] sm:$0xff]
    %v185 = vld [vmem:[#allocation3 + $0x60] sm:$0xff]
    %v186 = vld [vmem:[#allocation3 + $0x68] sm:$0xff]
    %v187 = vld [vmem:[#allocation3 + $0x70] sm:$0xff]
    %v188 = vld [vmem:[#allocation3 + $0x78] sm:$0xff]
    %v189 = vld [vmem:[#allocation8] sm:$0xff]
    %v190 = vld [vmem:[#allocation8 + $0x8] sm:$0xff]
    %v191 = vld [vmem:[#allocation8 + $0x10] sm:$0xff]
    %v192 = vld [vmem:[#allocation8 + $0x18] sm:$0xff]
    %v193 = vld [vmem:[%s3] sm:$0x1]
    %v195 = vperm.slane %v193, 0
    %vm197 = vcmask 261120
    %v199 = vsel %vm197, %v173, 0
    %v202 = vsel %vm197, %v174, 0
    %v205 = vsel %vm197, %v175, 0
    %v208 = vsel %vm197, %v176, 0
    %v211 = vsel %vm197, %v177, 0
    %v214 = vsel %vm197, %v178, 0
    %v217 = vsel %vm197, %v179, 0
    %v220 = vsel %vm197, %v180, 0
    %v223 = vsel %vm197, %v181, 0
    %v226 = vsel %vm197, %v182, 0
    %v229 = vsel %vm197, %v183, 0
    %v232 = vsel %vm197, %v184, 0
    %v235 = vsel %vm197, %v185, 0
    %v238 = vsel %vm197, %v186, 0
    %v241 = vsel %vm197, %v187, 0
    %v244 = vsel %vm197, %v188, 0
    %246 = vmatpush.msra.mxu0 0.0
    %247 = vmatpush.msra.mxu0 0.0
    %248 = vmatpush.msra.mxu0 0.0
    %249 = vmatpush.msra.mxu0 0.0
    %250 = vmatpush.msra.mxu0 0.0
    %251 = vmatpush.msra.mxu0 0.0
    %252 = vmatpush.msra.mxu0 0.0
    %253 = vmatpush.msra.mxu0 0.0
    %254 = vmatpush.msra.mxu0 0.0
    %255 = vmatpush.msra.mxu0 0.0
    %256 = vmatpush.msra.mxu0 0.0
    %257 = vmatpush.msra.mxu0 0.0
    %v258 = vand.u32 %v192, 4294901760
    %259 = vmatpush.msra.mxu0 %v258
    %v260 = vand.u32 %v191, 4294901760
    %261 = vmatpush.msra.mxu0 %v260
    %v262 = vand.u32 %v190, 4294901760
    %263 = vmatpush.msra.mxu0 %v262
    %v264 = vand.u32 %v189, 4294901760
    %265 = vmatpush.msra.mxu0 %v264
    %v266 = vand.u32 %v199, 4294901760
    %v267 = vsub.f32 %v199, %v266
    %v268 = vand.u32 %v267, 4294901760
    %v269 = vsub.f32 %v267, %v268
    %v270 = vand.u32 %v269, 4294901760
    %271 = vmatmul.f32.gmra.mxu0 %v270
    %v272 = vpop.f32.mrf.mxu0
    %v273 = vadd.f32 %v195, %v272
    %v274 = vand.u32 %v202, 4294901760
    %v275 = vsub.f32 %v202, %v274
    %v276 = vand.u32 %v275, 4294901760
    %v277 = vsub.f32 %v275, %v276
    %v278 = vand.u32 %v277, 4294901760
    %279 = vmatmul.f32.gmra.mxu0 %v278
    %v280 = vpop.f32.mrf.mxu0
    %v281 = vadd.f32 %v195, %v280
    %v282 = vand.u32 %v205, 4294901760
    %v283 = vsub.f32 %v205, %v282
    %v284 = vand.u32 %v283, 4294901760
    %v285 = vsub.f32 %v283, %v284
    %v286 = vand.u32 %v285, 4294901760
    %287 = vmatmul.f32.gmra.mxu0 %v286
    %v288 = vpop.f32.mrf.mxu0
    %v289 = vadd.f32 %v195, %v288
    %v290 = vand.u32 %v208, 4294901760
    %v291 = vsub.f32 %v208, %v290
    %v292 = vand.u32 %v291, 4294901760
    %v293 = vsub.f32 %v291, %v292
    %v294 = vand.u32 %v293, 4294901760
    %295 = vmatmul.f32.gmra.mxu0 %v294
    %v296 = vpop.f32.mrf.mxu0
    %v297 = vadd.f32 %v195, %v296
    %v298 = vand.u32 %v211, 4294901760
    %v299 = vsub.f32 %v211, %v298
    %v300 = vand.u32 %v299, 4294901760
    %v301 = vsub.f32 %v299, %v300
    %v302 = vand.u32 %v301, 4294901760
    %303 = vmatmul.f32.gmra.mxu0 %v302
    %v304 = vpop.f32.mrf.mxu0
    %v305 = vadd.f32 %v195, %v304
    %v306 = vand.u32 %v214, 4294901760
    %v307 = vsub.f32 %v214, %v306
    %v308 = vand.u32 %v307, 4294901760
    %v309 = vsub.f32 %v307, %v308
    %v310 = vand.u32 %v309, 4294901760
    %311 = vmatmul.f32.gmra.mxu0 %v310
    %v312 = vpop.f32.mrf.mxu0
    %v313 = vadd.f32 %v195, %v312
    %v314 = vand.u32 %v217, 4294901760
    %v315 = vsub.f32 %v217, %v314
    %v316 = vand.u32 %v315, 4294901760
    %v317 = vsub.f32 %v315, %v316
    %v318 = vand.u32 %v317, 4294901760
    %319 = vmatmul.f32.gmra.mxu0 %v318
    %v320 = vpop.f32.mrf.mxu0
    %v321 = vadd.f32 %v195, %v320
    %v322 = vand.u32 %v220, 4294901760
    %v323 = vsub.f32 %v220, %v322
    %v324 = vand.u32 %v323, 4294901760
    %v325 = vsub.f32 %v323, %v324
    %v326 = vand.u32 %v325, 4294901760
    %327 = vmatmul.f32.gmra.mxu0 %v326
    %v328 = vpop.f32.mrf.mxu0
    %v329 = vadd.f32 %v195, %v328
    %v330 = vand.u32 %v223, 4294901760
    %v331 = vsub.f32 %v223, %v330
    %v332 = vand.u32 %v331, 4294901760
    %v333 = vsub.f32 %v331, %v332
    %v334 = vand.u32 %v333, 4294901760
    %335 = vmatmul.f32.gmra.mxu0 %v334
    %v336 = vpop.f32.mrf.mxu0
    %v337 = vadd.f32 %v195, %v336
    %v338 = vand.u32 %v226, 4294901760
    %v339 = vsub.f32 %v226, %v338
    %v340 = vand.u32 %v339, 4294901760
    %v341 = vsub.f32 %v339, %v340
    %v342 = vand.u32 %v341, 4294901760
    %343 = vmatmul.f32.gmra.mxu0 %v342
    %v344 = vpop.f32.mrf.mxu0
    %v345 = vadd.f32 %v195, %v344
    %v346 = vand.u32 %v229, 4294901760
    %v347 = vsub.f32 %v229, %v346
    %v348 = vand.u32 %v347, 4294901760
    %v349 = vsub.f32 %v347, %v348
    %v350 = vand.u32 %v349, 4294901760
    %351 = vmatmul.f32.gmra.mxu0 %v350
    %v352 = vpop.f32.mrf.mxu0
    %v353 = vadd.f32 %v195, %v352
    %v354 = vand.u32 %v232, 4294901760
    %v355 = vsub.f32 %v232, %v354
    %v356 = vand.u32 %v355, 4294901760
    %v357 = vsub.f32 %v355, %v356
    %v358 = vand.u32 %v357, 4294901760
    %359 = vmatmul.f32.gmra.mxu0 %v358
    %v360 = vpop.f32.mrf.mxu0
    %v361 = vadd.f32 %v195, %v360
    %v362 = vand.u32 %v235, 4294901760
    %v363 = vsub.f32 %v235, %v362
    %v364 = vand.u32 %v363, 4294901760
    %v365 = vsub.f32 %v363, %v364
    %v366 = vand.u32 %v365, 4294901760
    %367 = vmatmul.f32.gmra.mxu0 %v366
    %v368 = vpop.f32.mrf.mxu0
    %v369 = vadd.f32 %v195, %v368
    %v370 = vand.u32 %v238, 4294901760
    %v371 = vsub.f32 %v238, %v370
    %v372 = vand.u32 %v371, 4294901760
    %v373 = vsub.f32 %v371, %v372
    %v374 = vand.u32 %v373, 4294901760
    %375 = vmatmul.f32.gmra.mxu0 %v374
    %v376 = vpop.f32.mrf.mxu0
    %v377 = vadd.f32 %v195, %v376
    %v378 = vand.u32 %v241, 4294901760
    %v379 = vsub.f32 %v241, %v378
    %v380 = vand.u32 %v379, 4294901760
    %v381 = vsub.f32 %v379, %v380
    %v382 = vand.u32 %v381, 4294901760
    %383 = vmatmul.f32.gmra.mxu0 %v382
    %v384 = vpop.f32.mrf.mxu0
    %v385 = vadd.f32 %v195, %v384
    %v386 = vand.u32 %v244, 4294901760
    %v387 = vsub.f32 %v244, %v386
    %v388 = vand.u32 %v387, 4294901760
    %v389 = vsub.f32 %v387, %v388
    %v390 = vand.u32 %v389, 4294901760
    %391 = vmatmul.f32.gmra.mxu0 %v390
    %v392 = vpop.f32.mrf.mxu0
    %v393 = vadd.f32 %v195, %v392
    %394 = vdwg.mxu0
    %395 = vmatpush.msra.mxu0 0.0
    %396 = vmatpush.msra.mxu0 0.0
    %397 = vmatpush.msra.mxu0 0.0
    %398 = vmatpush.msra.mxu0 0.0
    %399 = vmatpush.msra.mxu0 0.0
    %400 = vmatpush.msra.mxu0 0.0
    %401 = vmatpush.msra.mxu0 0.0
    %402 = vmatpush.msra.mxu0 0.0
    %403 = vmatpush.msra.mxu0 0.0
    %404 = vmatpush.msra.mxu0 0.0
    %405 = vmatpush.msra.mxu0 0.0
    %406 = vmatpush.msra.mxu0 0.0
    %v407 = vand.u32 %v192, 4294901760
    %v408 = vsub.f32 %v192, %v407
    %v409 = vand.u32 %v408, 4294901760
    %v410 = vsub.f32 %v408, %v409
    %v411 = vand.u32 %v410, 4294901760
    %412 = vmatpush.msra.mxu0 %v411
    %v413 = vand.u32 %v191, 4294901760
    %v414 = vsub.f32 %v191, %v413
    %v415 = vand.u32 %v414, 4294901760
    %v416 = vsub.f32 %v414, %v415
    %v417 = vand.u32 %v416, 4294901760
    %418 = vmatpush.msra.mxu0 %v417
    %v419 = vand.u32 %v190, 4294901760
    %v420 = vsub.f32 %v190, %v419
    %v421 = vand.u32 %v420, 4294901760
    %v422 = vsub.f32 %v420, %v421
    %v423 = vand.u32 %v422, 4294901760
    %424 = vmatpush.msra.mxu0 %v423
    %v425 = vand.u32 %v189, 4294901760
    %v426 = vsub.f32 %v189, %v425
    %v427 = vand.u32 %v426, 4294901760
    %v428 = vsub.f32 %v426, %v427
    %v429 = vand.u32 %v428, 4294901760
    %430 = vmatpush.msra.mxu0 %v429
    %v431 = vand.u32 %v199, 4294901760
    %432 = vmatmul.f32.gmra.mxu0 %v431
    %v433 = vpop.f32.mrf.mxu0
    %v434 = vadd.f32 %v273, %v433
    %v435 = vand.u32 %v202, 4294901760
    %436 = vmatmul.f32.gmra.mxu0 %v435
    %v437 = vpop.f32.mrf.mxu0
    %v438 = vadd.f32 %v281, %v437
    %v439 = vand.u32 %v205, 4294901760
    %440 = vmatmul.f32.gmra.mxu0 %v439
    %v441 = vpop.f32.mrf.mxu0
    %v442 = vadd.f32 %v289, %v441
    %v443 = vand.u32 %v208, 4294901760
    %444 = vmatmul.f32.gmra.mxu0 %v443
    %v445 = vpop.f32.mrf.mxu0
    %v446 = vadd.f32 %v297, %v445
    %v447 = vand.u32 %v211, 4294901760
    %448 = vmatmul.f32.gmra.mxu0 %v447
    %v449 = vpop.f32.mrf.mxu0
    %v450 = vadd.f32 %v305, %v449
    %v451 = vand.u32 %v214, 4294901760
    %452 = vmatmul.f32.gmra.mxu0 %v451
    %v453 = vpop.f32.mrf.mxu0
    %v454 = vadd.f32 %v313, %v453
    %v455 = vand.u32 %v217, 4294901760
    %456 = vmatmul.f32.gmra.mxu0 %v455
    %v457 = vpop.f32.mrf.mxu0
    %v458 = vadd.f32 %v321, %v457
    %v459 = vand.u32 %v220, 4294901760
    %460 = vmatmul.f32.gmra.mxu0 %v459
    %v461 = vpop.f32.mrf.mxu0
    %v462 = vadd.f32 %v329, %v461
    %v463 = vand.u32 %v223, 4294901760
    %464 = vmatmul.f32.gmra.mxu0 %v463
    %v465 = vpop.f32.mrf.mxu0
    %v466 = vadd.f32 %v337, %v465
    %v467 = vand.u32 %v226, 4294901760
    %468 = vmatmul.f32.gmra.mxu0 %v467
    %v469 = vpop.f32.mrf.mxu0
    %v470 = vadd.f32 %v345, %v469
    %v471 = vand.u32 %v229, 4294901760
    %472 = vmatmul.f32.gmra.mxu0 %v471
    %v473 = vpop.f32.mrf.mxu0
    %v474 = vadd.f32 %v353, %v473
    %v475 = vand.u32 %v232, 4294901760
    %476 = vmatmul.f32.gmra.mxu0 %v475
    %v477 = vpop.f32.mrf.mxu0
    %v478 = vadd.f32 %v361, %v477
    %v479 = vand.u32 %v235, 4294901760
    %480 = vmatmul.f32.gmra.mxu0 %v479
    %v481 = vpop.f32.mrf.mxu0
    %v482 = vadd.f32 %v369, %v481
    %v483 = vand.u32 %v238, 4294901760
    %484 = vmatmul.f32.gmra.mxu0 %v483
    %v485 = vpop.f32.mrf.mxu0
    %v486 = vadd.f32 %v377, %v485
    %v487 = vand.u32 %v241, 4294901760
    %488 = vmatmul.f32.gmra.mxu0 %v487
    %v489 = vpop.f32.mrf.mxu0
    %v490 = vadd.f32 %v385, %v489
    %v491 = vand.u32 %v244, 4294901760
    %492 = vmatmul.f32.gmra.mxu0 %v491
    %v493 = vpop.f32.mrf.mxu0
    %v494 = vadd.f32 %v393, %v493
    %495 = vdwg.mxu0
    %496 = vmatpush.msra.mxu0 0.0
    %497 = vmatpush.msra.mxu0 0.0
    %498 = vmatpush.msra.mxu0 0.0
    %499 = vmatpush.msra.mxu0 0.0
    %500 = vmatpush.msra.mxu0 0.0
    %501 = vmatpush.msra.mxu0 0.0
    %502 = vmatpush.msra.mxu0 0.0
    %503 = vmatpush.msra.mxu0 0.0
    %504 = vmatpush.msra.mxu0 0.0
    %505 = vmatpush.msra.mxu0 0.0
    %506 = vmatpush.msra.mxu0 0.0
    %507 = vmatpush.msra.mxu0 0.0
    %v508 = vand.u32 %v192, 4294901760
    %v509 = vsub.f32 %v192, %v508
    %510 = vmatpush.msra.mxu0 %v509
    %v511 = vand.u32 %v191, 4294901760
    %v512 = vsub.f32 %v191, %v511
    %513 = vmatpush.msra.mxu0 %v512
    %v514 = vand.u32 %v190, 4294901760
    %v515 = vsub.f32 %v190, %v514
    %516 = vmatpush.msra.mxu0 %v515
    %v517 = vand.u32 %v189, 4294901760
    %v518 = vsub.f32 %v189, %v517
    %519 = vmatpush.msra.mxu0 %v518
    %v520 = vand.u32 %v199, 4294901760
    %v521 = vsub.f32 %v199, %v520
    %522 = vmatmul.f32.gmra.mxu0 %v521
    %v523 = vpop.f32.mrf.mxu0
    %v524 = vadd.f32 %v434, %v523
    %v525 = vand.u32 %v202, 4294901760
    %v526 = vsub.f32 %v202, %v525
    %527 = vmatmul.f32.gmra.mxu0 %v526
    %v528 = vpop.f32.mrf.mxu0
    %v529 = vadd.f32 %v438, %v528
    %v530 = vand.u32 %v205, 4294901760
    %v531 = vsub.f32 %v205, %v530
    %532 = vmatmul.f32.gmra.mxu0 %v531
    %v533 = vpop.f32.mrf.mxu0
    %v534 = vadd.f32 %v442, %v533
    %v535 = vand.u32 %v208, 4294901760
    %v536 = vsub.f32 %v208, %v535
    %537 = vmatmul.f32.gmra.mxu0 %v536
    %v538 = vpop.f32.mrf.mxu0
    %v539 = vadd.f32 %v446, %v538
    %v540 = vand.u32 %v211, 4294901760
    %v541 = vsub.f32 %v211, %v540
    %542 = vmatmul.f32.gmra.mxu0 %v541
    %v543 = vpop.f32.mrf.mxu0
    %v544 = vadd.f32 %v450, %v543
    %v545 = vand.u32 %v214, 4294901760
    %v546 = vsub.f32 %v214, %v545
    %547 = vmatmul.f32.gmra.mxu0 %v546
    %v548 = vpop.f32.mrf.mxu0
    %v549 = vadd.f32 %v454, %v548
    %v550 = vand.u32 %v217, 4294901760
    %v551 = vsub.f32 %v217, %v550
    %552 = vmatmul.f32.gmra.mxu0 %v551
    %v553 = vpop.f32.mrf.mxu0
    %v554 = vadd.f32 %v458, %v553
    %v555 = vand.u32 %v220, 4294901760
    %v556 = vsub.f32 %v220, %v555
    %557 = vmatmul.f32.gmra.mxu0 %v556
    %v558 = vpop.f32.mrf.mxu0
    %v559 = vadd.f32 %v462, %v558
    %v560 = vand.u32 %v223, 4294901760
    %v561 = vsub.f32 %v223, %v560
    %562 = vmatmul.f32.gmra.mxu0 %v561
    %v563 = vpop.f32.mrf.mxu0
    %v564 = vadd.f32 %v466, %v563
    %v565 = vand.u32 %v226, 4294901760
    %v566 = vsub.f32 %v226, %v565
    %567 = vmatmul.f32.gmra.mxu0 %v566
    %v568 = vpop.f32.mrf.mxu0
    %v569 = vadd.f32 %v470, %v568
    %v570 = vand.u32 %v229, 4294901760
    %v571 = vsub.f32 %v229, %v570
    %572 = vmatmul.f32.gmra.mxu0 %v571
    %v573 = vpop.f32.mrf.mxu0
    %v574 = vadd.f32 %v474, %v573
    %v575 = vand.u32 %v232, 4294901760
    %v576 = vsub.f32 %v232, %v575
    %577 = vmatmul.f32.gmra.mxu0 %v576
    %v578 = vpop.f32.mrf.mxu0
    %v579 = vadd.f32 %v478, %v578
    %v580 = vand.u32 %v235, 4294901760
    %v581 = vsub.f32 %v235, %v580
    %582 = vmatmul.f32.gmra.mxu0 %v581
    %v583 = vpop.f32.mrf.mxu0
    %v584 = vadd.f32 %v482, %v583
    %v585 = vand.u32 %v238, 4294901760
    %v586 = vsub.f32 %v238, %v585
    %587 = vmatmul.f32.gmra.mxu0 %v586
    %v588 = vpop.f32.mrf.mxu0
    %v589 = vadd.f32 %v486, %v588
    %v590 = vand.u32 %v241, 4294901760
    %v591 = vsub.f32 %v241, %v590
    %592 = vmatmul.f32.gmra.mxu0 %v591
    %v593 = vpop.f32.mrf.mxu0
    %v594 = vadd.f32 %v490, %v593
    %v595 = vand.u32 %v244, 4294901760
    %v596 = vsub.f32 %v244, %v595
    %597 = vmatmul.f32.gmra.mxu0 %v596
    %v598 = vpop.f32.mrf.mxu0
    %v599 = vadd.f32 %v494, %v598
    %600 = vdwg.mxu0
    %601 = vmatpush.msra.mxu0 0.0
    %602 = vmatpush.msra.mxu0 0.0
    %603 = vmatpush.msra.mxu0 0.0
    %604 = vmatpush.msra.mxu0 0.0
    %605 = vmatpush.msra.mxu0 0.0
    %606 = vmatpush.msra.mxu0 0.0
    %607 = vmatpush.msra.mxu0 0.0
    %608 = vmatpush.msra.mxu0 0.0
    %609 = vmatpush.msra.mxu0 0.0
    %610 = vmatpush.msra.mxu0 0.0
    %611 = vmatpush.msra.mxu0 0.0
    %612 = vmatpush.msra.mxu0 0.0
    %v613 = vand.u32 %v192, 4294901760
    %614 = vmatpush.msra.mxu0 %v613
    %v615 = vand.u32 %v191, 4294901760
    %616 = vmatpush.msra.mxu0 %v615
    %v617 = vand.u32 %v190, 4294901760
    %618 = vmatpush.msra.mxu0 %v617
    %v619 = vand.u32 %v189, 4294901760
    %620 = vmatpush.msra.mxu0 %v619
    %v621 = vand.u32 %v199, 4294901760
    %v622 = vsub.f32 %v199, %v621
    %v623 = vand.u32 %v622, 4294901760
    %624 = vmatmul.f32.gmra.mxu0 %v623
    %v625 = vpop.f32.mrf.mxu0
    %v626 = vadd.f32 %v524, %v625
    %v627 = vand.u32 %v202, 4294901760
    %v628 = vsub.f32 %v202, %v627
    %v629 = vand.u32 %v628, 4294901760
    %630 = vmatmul.f32.gmra.mxu0 %v629
    %v631 = vpop.f32.mrf.mxu0
    %v632 = vadd.f32 %v529, %v631
    %v633 = vand.u32 %v205, 4294901760
    %v634 = vsub.f32 %v205, %v633
    %v635 = vand.u32 %v634, 4294901760
    %636 = vmatmul.f32.gmra.mxu0 %v635
    %v637 = vpop.f32.mrf.mxu0
    %v638 = vadd.f32 %v534, %v637
    %v639 = vand.u32 %v208, 4294901760
    %v640 = vsub.f32 %v208, %v639
    %v641 = vand.u32 %v640, 4294901760
    %642 = vmatmul.f32.gmra.mxu0 %v641
    %v643 = vpop.f32.mrf.mxu0
    %v644 = vadd.f32 %v539, %v643
    %v645 = vand.u32 %v211, 4294901760
    %v646 = vsub.f32 %v211, %v645
    %v647 = vand.u32 %v646, 4294901760
    %648 = vmatmul.f32.gmra.mxu0 %v647
    %v649 = vpop.f32.mrf.mxu0
    %v650 = vadd.f32 %v544, %v649
    %v651 = vand.u32 %v214, 4294901760
    %v652 = vsub.f32 %v214, %v651
    %v653 = vand.u32 %v652, 4294901760
    %654 = vmatmul.f32.gmra.mxu0 %v653
    %v655 = vpop.f32.mrf.mxu0
    %v656 = vadd.f32 %v549, %v655
    %v657 = vand.u32 %v217, 4294901760
    %v658 = vsub.f32 %v217, %v657
    %v659 = vand.u32 %v658, 4294901760
    %660 = vmatmul.f32.gmra.mxu0 %v659
    %v661 = vpop.f32.mrf.mxu0
    %v662 = vadd.f32 %v554, %v661
    %v663 = vand.u32 %v220, 4294901760
    %v664 = vsub.f32 %v220, %v663
    %v665 = vand.u32 %v664, 4294901760
    %666 = vmatmul.f32.gmra.mxu0 %v665
    %v667 = vpop.f32.mrf.mxu0
    %v668 = vadd.f32 %v559, %v667
    %v669 = vand.u32 %v223, 4294901760
    %v670 = vsub.f32 %v223, %v669
    %v671 = vand.u32 %v670, 4294901760
    %672 = vmatmul.f32.gmra.mxu0 %v671
    %v673 = vpop.f32.mrf.mxu0
    %v674 = vadd.f32 %v564, %v673
    %v675 = vand.u32 %v226, 4294901760
    %v676 = vsub.f32 %v226, %v675
    %v677 = vand.u32 %v676, 4294901760
    %678 = vmatmul.f32.gmra.mxu0 %v677
    %v679 = vpop.f32.mrf.mxu0
    %v680 = vadd.f32 %v569, %v679
    %v681 = vand.u32 %v229, 4294901760
    %v682 = vsub.f32 %v229, %v681
    %v683 = vand.u32 %v682, 4294901760
    %684 = vmatmul.f32.gmra.mxu0 %v683
    %v685 = vpop.f32.mrf.mxu0
    %v686 = vadd.f32 %v574, %v685
    %v687 = vand.u32 %v232, 4294901760
    %v688 = vsub.f32 %v232, %v687
    %v689 = vand.u32 %v688, 4294901760
    %690 = vmatmul.f32.gmra.mxu0 %v689
    %v691 = vpop.f32.mrf.mxu0
    %v692 = vadd.f32 %v579, %v691
    %v693 = vand.u32 %v235, 4294901760
    %v694 = vsub.f32 %v235, %v693
    %v695 = vand.u32 %v694, 4294901760
    %696 = vmatmul.f32.gmra.mxu0 %v695
    %v697 = vpop.f32.mrf.mxu0
    %v698 = vadd.f32 %v584, %v697
    %v699 = vand.u32 %v238, 4294901760
    %v700 = vsub.f32 %v238, %v699
    %v701 = vand.u32 %v700, 4294901760
    %702 = vmatmul.f32.gmra.mxu0 %v701
    %v703 = vpop.f32.mrf.mxu0
    %v704 = vadd.f32 %v589, %v703
    %v705 = vand.u32 %v241, 4294901760
    %v706 = vsub.f32 %v241, %v705
    %v707 = vand.u32 %v706, 4294901760
    %708 = vmatmul.f32.gmra.mxu0 %v707
    %v709 = vpop.f32.mrf.mxu0
    %v710 = vadd.f32 %v594, %v709
    %v711 = vand.u32 %v244, 4294901760
    %v712 = vsub.f32 %v244, %v711
    %v713 = vand.u32 %v712, 4294901760
    %714 = vmatmul.f32.gmra.mxu0 %v713
    %v715 = vpop.f32.mrf.mxu0
    %v716 = vadd.f32 %v599, %v715
    %717 = vdwg.mxu0
    %718 = vmatpush.msra.mxu0 0.0
    %719 = vmatpush.msra.mxu0 0.0
    %720 = vmatpush.msra.mxu0 0.0
    %721 = vmatpush.msra.mxu0 0.0
    %722 = vmatpush.msra.mxu0 0.0
    %723 = vmatpush.msra.mxu0 0.0
    %724 = vmatpush.msra.mxu0 0.0
    %725 = vmatpush.msra.mxu0 0.0
    %726 = vmatpush.msra.mxu0 0.0
    %727 = vmatpush.msra.mxu0 0.0
    %728 = vmatpush.msra.mxu0 0.0
    %729 = vmatpush.msra.mxu0 0.0
    %v730 = vand.u32 %v192, 4294901760
    %v731 = vsub.f32 %v192, %v730
    %v732 = vand.u32 %v731, 4294901760
    %733 = vmatpush.msra.mxu0 %v732
    %v734 = vand.u32 %v191, 4294901760
    %v735 = vsub.f32 %v191, %v734
    %v736 = vand.u32 %v735, 4294901760
    %737 = vmatpush.msra.mxu0 %v736
    %v738 = vand.u32 %v190, 4294901760
    %v739 = vsub.f32 %v190, %v738
    %v740 = vand.u32 %v739, 4294901760
    %741 = vmatpush.msra.mxu0 %v740
    %v742 = vand.u32 %v189, 4294901760
    %v743 = vsub.f32 %v189, %v742
    %v744 = vand.u32 %v743, 4294901760
    %745 = vmatpush.msra.mxu0 %v744
    %v746 = vand.u32 %v199, 4294901760
    %747 = vmatmul.f32.gmra.mxu0 %v746
    %v748 = vpop.f32.mrf.mxu0
    %v749 = vadd.f32 %v626, %v748
    %v750 = vand.u32 %v202, 4294901760
    %751 = vmatmul.f32.gmra.mxu0 %v750
    %v752 = vpop.f32.mrf.mxu0
    %v753 = vadd.f32 %v632, %v752
    %v754 = vand.u32 %v205, 4294901760
    %755 = vmatmul.f32.gmra.mxu0 %v754
    %v756 = vpop.f32.mrf.mxu0
    %v757 = vadd.f32 %v638, %v756
    %v758 = vand.u32 %v208, 4294901760
    %759 = vmatmul.f32.gmra.mxu0 %v758
    %v760 = vpop.f32.mrf.mxu0
    %v761 = vadd.f32 %v644, %v760
    %v762 = vand.u32 %v211, 4294901760
    %763 = vmatmul.f32.gmra.mxu0 %v762
    %v764 = vpop.f32.mrf.mxu0
    %v765 = vadd.f32 %v650, %v764
    %v766 = vand.u32 %v214, 4294901760
    %767 = vmatmul.f32.gmra.mxu0 %v766
    %v768 = vpop.f32.mrf.mxu0
    %v769 = vadd.f32 %v656, %v768
    %v770 = vand.u32 %v217, 4294901760
    %771 = vmatmul.f32.gmra.mxu0 %v770
    %v772 = vpop.f32.mrf.mxu0
    %v773 = vadd.f32 %v662, %v772
    %v774 = vand.u32 %v220, 4294901760
    %775 = vmatmul.f32.gmra.mxu0 %v774
    %v776 = vpop.f32.mrf.mxu0
    %v777 = vadd.f32 %v668, %v776
    %v778 = vand.u32 %v223, 4294901760
    %779 = vmatmul.f32.gmra.mxu0 %v778
    %v780 = vpop.f32.mrf.mxu0
    %v781 = vadd.f32 %v674, %v780
    %v782 = vand.u32 %v226, 4294901760
    %783 = vmatmul.f32.gmra.mxu0 %v782
    %v784 = vpop.f32.mrf.mxu0
    %v785 = vadd.f32 %v680, %v784
    %v786 = vand.u32 %v229, 4294901760
    %787 = vmatmul.f32.gmra.mxu0 %v786
    %v788 = vpop.f32.mrf.mxu0
    %v789 = vadd.f32 %v686, %v788
    %v790 = vand.u32 %v232, 4294901760
    %791 = vmatmul.f32.gmra.mxu0 %v790
    %v792 = vpop.f32.mrf.mxu0
    %v793 = vadd.f32 %v692, %v792
    %v794 = vand.u32 %v235, 4294901760
    %795 = vmatmul.f32.gmra.mxu0 %v794
    %v796 = vpop.f32.mrf.mxu0
    %v797 = vadd.f32 %v698, %v796
    %v798 = vand.u32 %v238, 4294901760
    %799 = vmatmul.f32.gmra.mxu0 %v798
    %v800 = vpop.f32.mrf.mxu0
    %v801 = vadd.f32 %v704, %v800
    %v802 = vand.u32 %v241, 4294901760
    %803 = vmatmul.f32.gmra.mxu0 %v802
    %v804 = vpop.f32.mrf.mxu0
    %v805 = vadd.f32 %v710, %v804
    %v806 = vand.u32 %v244, 4294901760
    %807 = vmatmul.f32.gmra.mxu0 %v806
    %v808 = vpop.f32.mrf.mxu0
    %v809 = vadd.f32 %v716, %v808
    %810 = vdwg.mxu0
    %811 = vmatpush.msra.mxu0 0.0
    %812 = vmatpush.msra.mxu0 0.0
    %813 = vmatpush.msra.mxu0 0.0
    %814 = vmatpush.msra.mxu0 0.0
    %815 = vmatpush.msra.mxu0 0.0
    %816 = vmatpush.msra.mxu0 0.0
    %817 = vmatpush.msra.mxu0 0.0
    %818 = vmatpush.msra.mxu0 0.0
    %819 = vmatpush.msra.mxu0 0.0
    %820 = vmatpush.msra.mxu0 0.0
    %821 = vmatpush.msra.mxu0 0.0
    %822 = vmatpush.msra.mxu0 0.0
    %v823 = vand.u32 %v192, 4294901760
    %824 = vmatpush.msra.mxu0 %v823
    %v825 = vand.u32 %v191, 4294901760
    %826 = vmatpush.msra.mxu0 %v825
    %v827 = vand.u32 %v190, 4294901760
    %828 = vmatpush.msra.mxu0 %v827
    %v829 = vand.u32 %v189, 4294901760
    %830 = vmatpush.msra.mxu0 %v829
    %v831 = vand.u32 %v199, 4294901760
    %832 = vmatmul.f32.gmra.mxu0 %v831
    %v833 = vpop.f32.mrf.mxu0
    %v834 = vadd.f32 %v749, %v833
    %v835 = vand.u32 %v202, 4294901760
    %836 = vmatmul.f32.gmra.mxu0 %v835
    %v837 = vpop.f32.mrf.mxu0
    %v838 = vadd.f32 %v753, %v837
    %v839 = vand.u32 %v205, 4294901760
    %840 = vmatmul.f32.gmra.mxu0 %v839
    %v841 = vpop.f32.mrf.mxu0
    %v842 = vadd.f32 %v757, %v841
    %v843 = vand.u32 %v208, 4294901760
    %844 = vmatmul.f32.gmra.mxu0 %v843
    %v845 = vpop.f32.mrf.mxu0
    %v846 = vadd.f32 %v761, %v845
    %v847 = vand.u32 %v211, 4294901760
    %848 = vmatmul.f32.gmra.mxu0 %v847
    %v849 = vpop.f32.mrf.mxu0
    %v850 = vadd.f32 %v765, %v849
    %v851 = vand.u32 %v214, 4294901760
    %852 = vmatmul.f32.gmra.mxu0 %v851
    %v853 = vpop.f32.mrf.mxu0
    %v854 = vadd.f32 %v769, %v853
    %v855 = vand.u32 %v217, 4294901760
    %856 = vmatmul.f32.gmra.mxu0 %v855
    %v857 = vpop.f32.mrf.mxu0
    %v858 = vadd.f32 %v773, %v857
    %v859 = vand.u32 %v220, 4294901760
    %860 = vmatmul.f32.gmra.mxu0 %v859
    %v861 = vpop.f32.mrf.mxu0
    %v862 = vadd.f32 %v777, %v861
    %v863 = vand.u32 %v223, 4294901760
    %864 = vmatmul.f32.gmra.mxu0 %v863
    %v865 = vpop.f32.mrf.mxu0
    %v866 = vadd.f32 %v781, %v865
    %v867 = vand.u32 %v226, 4294901760
    %868 = vmatmul.f32.gmra.mxu0 %v867
    %v869 = vpop.f32.mrf.mxu0
    %v870 = vadd.f32 %v785, %v869
    %v871 = vand.u32 %v229, 4294901760
    %872 = vmatmul.f32.gmra.mxu0 %v871
    %v873 = vpop.f32.mrf.mxu0
    %v874 = vadd.f32 %v789, %v873
    %v875 = vand.u32 %v232, 4294901760
    %876 = vmatmul.f32.gmra.mxu0 %v875
    %v877 = vpop.f32.mrf.mxu0
    %v878 = vadd.f32 %v793, %v877
    %v879 = vand.u32 %v235, 4294901760
    %880 = vmatmul.f32.gmra.mxu0 %v879
    %v881 = vpop.f32.mrf.mxu0
    %v882 = vadd.f32 %v797, %v881
    %v883 = vand.u32 %v238, 4294901760
    %884 = vmatmul.f32.gmra.mxu0 %v883
    %v885 = vpop.f32.mrf.mxu0
    %v886 = vadd.f32 %v801, %v885
    %v887 = vand.u32 %v241, 4294901760
    %888 = vmatmul.f32.gmra.mxu0 %v887
    %v889 = vpop.f32.mrf.mxu0
    %v890 = vadd.f32 %v805, %v889
    %v891 = vand.u32 %v244, 4294901760
    %892 = vmatmul.f32.gmra.mxu0 %v891
    %v893 = vpop.f32.mrf.mxu0
    %v894 = vadd.f32 %v809, %v893
    %895 = vdwg.mxu0
    %v896 = vld [vmem:[#allocation6] sm:$0xff]
    %v897 = vld [vmem:[#allocation6 + $0x8] sm:$0xff]
    %v898 = vld [vmem:[#allocation6 + $0x10] sm:$0xff]
    %v899 = vld [vmem:[#allocation6 + $0x18] sm:$0xff]
    %v900 = vld [vmem:[#allocation6 + $0x20] sm:$0xff]
    %v901 = vld [vmem:[#allocation6 + $0x28] sm:$0xff]
    %v902 = vld [vmem:[#allocation6 + $0x30] sm:$0xff]
    %v903 = vld [vmem:[#allocation12] sm:$0xff]
    %v904 = vld [vmem:[#allocation12 + $0x8] sm:$0xff]
    %v905 = vld [vmem:[#allocation12 + $0x10] sm:$0xff]
    %v906 = vld [vmem:[#allocation12 + $0x18] sm:$0xff]
    %v907 = vld [vmem:[%s10] sm:$0x1]
    %v909 = vperm.slane %v907, 0
    %v912 = vsel %vm197, %v896, 0
    %v915 = vsel %vm197, %v897, 0
    %v918 = vsel %vm197, %v898, 0
    %v921 = vsel %vm197, %v899, 0
    %v924 = vsel %vm197, %v900, 0
    %v927 = vsel %vm197, %v901, 0
    %v930 = vsel %vm197, %v902, 0
    %932 = vmatpush.msra.mxu0 0.0
    %933 = vmatpush.msra.mxu0 0.0
    %934 = vmatpush.msra.mxu0 0.0
    %935 = vmatpush.msra.mxu0 0.0
    %936 = vmatpush.msra.mxu0 0.0
    %937 = vmatpush.msra.mxu0 0.0
    %938 = vmatpush.msra.mxu0 0.0
    %939 = vmatpush.msra.mxu0 0.0
    %940 = vmatpush.msra.mxu0 0.0
    %941 = vmatpush.msra.mxu0 0.0
    %942 = vmatpush.msra.mxu0 0.0
    %943 = vmatpush.msra.mxu0 0.0
    %v944 = vand.u32 %v906, 4294901760
    %945 = vmatpush.msra.mxu0 %v944
    %v946 = vand.u32 %v905, 4294901760
    %947 = vmatpush.msra.mxu0 %v946
    %v948 = vand.u32 %v904, 4294901760
    %949 = vmatpush.msra.mxu0 %v948
    %v950 = vand.u32 %v903, 4294901760
    %951 = vmatpush.msra.mxu0 %v950
    %v952 = vand.u32 %v912, 4294901760
    %v953 = vsub.f32 %v912, %v952
    %v954 = vand.u32 %v953, 4294901760
    %v955 = vsub.f32 %v953, %v954
    %v956 = vand.u32 %v955, 4294901760
    %957 = vmatmul.f32.gmra.mxu0 %v956
    %v958 = vpop.f32.mrf.mxu0
    %v959 = vadd.f32 %v909, %v958
    %v960 = vand.u32 %v915, 4294901760
    %v961 = vsub.f32 %v915, %v960
    %v962 = vand.u32 %v961, 4294901760
    %v963 = vsub.f32 %v961, %v962
    %v964 = vand.u32 %v963, 4294901760
    %965 = vmatmul.f32.gmra.mxu0 %v964
    %v966 = vpop.f32.mrf.mxu0
    %v967 = vadd.f32 %v909, %v966
    %v968 = vand.u32 %v918, 4294901760
    %v969 = vsub.f32 %v918, %v968
    %v970 = vand.u32 %v969, 4294901760
    %v971 = vsub.f32 %v969, %v970
    %v972 = vand.u32 %v971, 4294901760
    %973 = vmatmul.f32.gmra.mxu0 %v972
    %v974 = vpop.f32.mrf.mxu0
    %v975 = vadd.f32 %v909, %v974
    %v976 = vand.u32 %v921, 4294901760
    %v977 = vsub.f32 %v921, %v976
    %v978 = vand.u32 %v977, 4294901760
    %v979 = vsub.f32 %v977, %v978
    %v980 = vand.u32 %v979, 4294901760
    %981 = vmatmul.f32.gmra.mxu0 %v980
    %v982 = vpop.f32.mrf.mxu0
    %v983 = vadd.f32 %v909, %v982
    %v984 = vand.u32 %v924, 4294901760
    %v985 = vsub.f32 %v924, %v984
    %v986 = vand.u32 %v985, 4294901760
    %v987 = vsub.f32 %v985, %v986
    %v988 = vand.u32 %v987, 4294901760
    %989 = vmatmul.f32.gmra.mxu0 %v988
    %v990 = vpop.f32.mrf.mxu0
    %v991 = vadd.f32 %v909, %v990
    %v992 = vand.u32 %v927, 4294901760
    %v993 = vsub.f32 %v927, %v992
    %v994 = vand.u32 %v993, 4294901760
    %v995 = vsub.f32 %v993, %v994
    %v996 = vand.u32 %v995, 4294901760
    %997 = vmatmul.f32.gmra.mxu0 %v996
    %v998 = vpop.f32.mrf.mxu0
    %v999 = vadd.f32 %v909, %v998
    %v1000 = vand.u32 %v930, 4294901760
    %v1001 = vsub.f32 %v930, %v1000
    %v1002 = vand.u32 %v1001, 4294901760
    %v1003 = vsub.f32 %v1001, %v1002
    %v1004 = vand.u32 %v1003, 4294901760
    %1005 = vmatmul.f32.gmra.mxu0 %v1004
    %v1006 = vpop.f32.mrf.mxu0
    %v1007 = vadd.f32 %v909, %v1006
    %1008 = vdwg.mxu0
    %1009 = vmatpush.msra.mxu0 0.0
    %1010 = vmatpush.msra.mxu0 0.0
    %1011 = vmatpush.msra.mxu0 0.0
    %1012 = vmatpush.msra.mxu0 0.0
    %1013 = vmatpush.msra.mxu0 0.0
    %1014 = vmatpush.msra.mxu0 0.0
    %1015 = vmatpush.msra.mxu0 0.0
    %1016 = vmatpush.msra.mxu0 0.0
    %1017 = vmatpush.msra.mxu0 0.0
    %1018 = vmatpush.msra.mxu0 0.0
    %1019 = vmatpush.msra.mxu0 0.0
    %1020 = vmatpush.msra.mxu0 0.0
    %v1021 = vand.u32 %v906, 4294901760
    %v1022 = vsub.f32 %v906, %v1021
    %v1023 = vand.u32 %v1022, 4294901760
    %v1024 = vsub.f32 %v1022, %v1023
    %v1025 = vand.u32 %v1024, 4294901760
    %1026 = vmatpush.msra.mxu0 %v1025
    %v1027 = vand.u32 %v905, 4294901760
    %v1028 = vsub.f32 %v905, %v1027
    %v1029 = vand.u32 %v1028, 4294901760
    %v1030 = vsub.f32 %v1028, %v1029
    %v1031 = vand.u32 %v1030, 4294901760
    %1032 = vmatpush.msra.mxu0 %v1031
    %v1033 = vand.u32 %v904, 4294901760
    %v1034 = vsub.f32 %v904, %v1033
    %v1035 = vand.u32 %v1034, 4294901760
    %v1036 = vsub.f32 %v1034, %v1035
    %v1037 = vand.u32 %v1036, 4294901760
    %1038 = vmatpush.msra.mxu0 %v1037
    %v1039 = vand.u32 %v903, 4294901760
    %v1040 = vsub.f32 %v903, %v1039
    %v1041 = vand.u32 %v1040, 4294901760
    %v1042 = vsub.f32 %v1040, %v1041
    %v1043 = vand.u32 %v1042, 4294901760
    %1044 = vmatpush.msra.mxu0 %v1043
    %v1045 = vand.u32 %v912, 4294901760
    %1046 = vmatmul.f32.gmra.mxu0 %v1045
    %v1047 = vpop.f32.mrf.mxu0
    %v1048 = vadd.f32 %v959, %v1047
    %v1049 = vand.u32 %v915, 4294901760
    %1050 = vmatmul.f32.gmra.mxu0 %v1049
    %v1051 = vpop.f32.mrf.mxu0
    %v1052 = vadd.f32 %v967, %v1051
    %v1053 = vand.u32 %v918, 4294901760
    %1054 = vmatmul.f32.gmra.mxu0 %v1053
    %v1055 = vpop.f32.mrf.mxu0
    %v1056 = vadd.f32 %v975, %v1055
    %v1057 = vand.u32 %v921, 4294901760
    %1058 = vmatmul.f32.gmra.mxu0 %v1057
    %v1059 = vpop.f32.mrf.mxu0
    %v1060 = vadd.f32 %v983, %v1059
    %v1061 = vand.u32 %v924, 4294901760
    %1062 = vmatmul.f32.gmra.mxu0 %v1061
    %v1063 = vpop.f32.mrf.mxu0
    %v1064 = vadd.f32 %v991, %v1063
    %v1065 = vand.u32 %v927, 4294901760
    %1066 = vmatmul.f32.gmra.mxu0 %v1065
    %v1067 = vpop.f32.mrf.mxu0
    %v1068 = vadd.f32 %v999, %v1067
    %v1069 = vand.u32 %v930, 4294901760
    %1070 = vmatmul.f32.gmra.mxu0 %v1069
    %v1071 = vpop.f32.mrf.mxu0
    %v1072 = vadd.f32 %v1007, %v1071
    %1073 = vdwg.mxu0
    %1074 = vmatpush.msra.mxu0 0.0
    %1075 = vmatpush.msra.mxu0 0.0
    %1076 = vmatpush.msra.mxu0 0.0
    %1077 = vmatpush.msra.mxu0 0.0
    %1078 = vmatpush.msra.mxu0 0.0
    %1079 = vmatpush.msra.mxu0 0.0
    %1080 = vmatpush.msra.mxu0 0.0
    %1081 = vmatpush.msra.mxu0 0.0
    %1082 = vmatpush.msra.mxu0 0.0
    %1083 = vmatpush.msra.mxu0 0.0
    %1084 = vmatpush.msra.mxu0 0.0
    %1085 = vmatpush.msra.mxu0 0.0
    %v1086 = vand.u32 %v906, 4294901760
    %v1087 = vsub.f32 %v906, %v1086
    %1088 = vmatpush.msra.mxu0 %v1087
    %v1089 = vand.u32 %v905, 4294901760
    %v1090 = vsub.f32 %v905, %v1089
    %1091 = vmatpush.msra.mxu0 %v1090
    %v1092 = vand.u32 %v904, 4294901760
    %v1093 = vsub.f32 %v904, %v1092
    %1094 = vmatpush.msra.mxu0 %v1093
    %v1095 = vand.u32 %v903, 4294901760
    %v1096 = vsub.f32 %v903, %v1095
    %1097 = vmatpush.msra.mxu0 %v1096
    %v1098 = vand.u32 %v912, 4294901760
    %v1099 = vsub.f32 %v912, %v1098
    %1100 = vmatmul.f32.gmra.mxu0 %v1099
    %v1101 = vpop.f32.mrf.mxu0
    %v1102 = vadd.f32 %v1048, %v1101
    %v1103 = vand.u32 %v915, 4294901760
    %v1104 = vsub.f32 %v915, %v1103
    %1105 = vmatmul.f32.gmra.mxu0 %v1104
    %v1106 = vpop.f32.mrf.mxu0
    %v1107 = vadd.f32 %v1052, %v1106
    %v1108 = vand.u32 %v918, 4294901760
    %v1109 = vsub.f32 %v918, %v1108
    %1110 = vmatmul.f32.gmra.mxu0 %v1109
    %v1111 = vpop.f32.mrf.mxu0
    %v1112 = vadd.f32 %v1056, %v1111
    %v1113 = vand.u32 %v921, 4294901760
    %v1114 = vsub.f32 %v921, %v1113
    %1115 = vmatmul.f32.gmra.mxu0 %v1114
    %v1116 = vpop.f32.mrf.mxu0
    %v1117 = vadd.f32 %v1060, %v1116
    %v1118 = vand.u32 %v924, 4294901760
    %v1119 = vsub.f32 %v924, %v1118
    %1120 = vmatmul.f32.gmra.mxu0 %v1119
    %v1121 = vpop.f32.mrf.mxu0
    %v1122 = vadd.f32 %v1064, %v1121
    %v1123 = vand.u32 %v927, 4294901760
    %v1124 = vsub.f32 %v927, %v1123
    %1125 = vmatmul.f32.gmra.mxu0 %v1124
    %v1126 = vpop.f32.mrf.mxu0
    %v1127 = vadd.f32 %v1068, %v1126
    %v1128 = vand.u32 %v930, 4294901760
    %v1129 = vsub.f32 %v930, %v1128
    %1130 = vmatmul.f32.gmra.mxu0 %v1129
    %v1131 = vpop.f32.mrf.mxu0
    %v1132 = vadd.f32 %v1072, %v1131
    %1133 = vdwg.mxu0
    %1134 = vmatpush.msra.mxu0 0.0
    %1135 = vmatpush.msra.mxu0 0.0
    %1136 = vmatpush.msra.mxu0 0.0
    %1137 = vmatpush.msra.mxu0 0.0
    %1138 = vmatpush.msra.mxu0 0.0
    %1139 = vmatpush.msra.mxu0 0.0
    %1140 = vmatpush.msra.mxu0 0.0
    %1141 = vmatpush.msra.mxu0 0.0
    %1142 = vmatpush.msra.mxu0 0.0
    %1143 = vmatpush.msra.mxu0 0.0
    %1144 = vmatpush.msra.mxu0 0.0
    %1145 = vmatpush.msra.mxu0 0.0
    %v1146 = vand.u32 %v906, 4294901760
    %1147 = vmatpush.msra.mxu0 %v1146
    %v1148 = vand.u32 %v905, 4294901760
    %1149 = vmatpush.msra.mxu0 %v1148
    %v1150 = vand.u32 %v904, 4294901760
    %1151 = vmatpush.msra.mxu0 %v1150
    %v1152 = vand.u32 %v903, 4294901760
    %1153 = vmatpush.msra.mxu0 %v1152
    %v1154 = vand.u32 %v912, 4294901760
    %v1155 = vsub.f32 %v912, %v1154
    %v1156 = vand.u32 %v1155, 4294901760
    %1157 = vmatmul.f32.gmra.mxu0 %v1156
    %v1158 = vpop.f32.mrf.mxu0
    %v1159 = vadd.f32 %v1102, %v1158
    %v1160 = vand.u32 %v915, 4294901760
    %v1161 = vsub.f32 %v915, %v1160
    %v1162 = vand.u32 %v1161, 4294901760
    %1163 = vmatmul.f32.gmra.mxu0 %v1162
    %v1164 = vpop.f32.mrf.mxu0
    %v1165 = vadd.f32 %v1107, %v1164
    %v1166 = vand.u32 %v918, 4294901760
    %v1167 = vsub.f32 %v918, %v1166
    %v1168 = vand.u32 %v1167, 4294901760
    %1169 = vmatmul.f32.gmra.mxu0 %v1168
    %v1170 = vpop.f32.mrf.mxu0
    %v1171 = vadd.f32 %v1112, %v1170
    %v1172 = vand.u32 %v921, 4294901760
    %v1173 = vsub.f32 %v921, %v1172
    %v1174 = vand.u32 %v1173, 4294901760
    %1175 = vmatmul.f32.gmra.mxu0 %v1174
    %v1176 = vpop.f32.mrf.mxu0
    %v1177 = vadd.f32 %v1117, %v1176
    %v1178 = vand.u32 %v924, 4294901760
    %v1179 = vsub.f32 %v924, %v1178
    %v1180 = vand.u32 %v1179, 4294901760
    %1181 = vmatmul.f32.gmra.mxu0 %v1180
    %v1182 = vpop.f32.mrf.mxu0
    %v1183 = vadd.f32 %v1122, %v1182
    %v1184 = vand.u32 %v927, 4294901760
    %v1185 = vsub.f32 %v927, %v1184
    %v1186 = vand.u32 %v1185, 4294901760
    %1187 = vmatmul.f32.gmra.mxu0 %v1186
    %v1188 = vpop.f32.mrf.mxu0
    %v1189 = vadd.f32 %v1127, %v1188
    %v1190 = vand.u32 %v930, 4294901760
    %v1191 = vsub.f32 %v930, %v1190
    %v1192 = vand.u32 %v1191, 4294901760
    %1193 = vmatmul.f32.gmra.mxu0 %v1192
    %v1194 = vpop.f32.mrf.mxu0
    %v1195 = vadd.f32 %v1132, %v1194
    %1196 = vdwg.mxu0
    %1197 = vmatpush.msra.mxu0 0.0
    %1198 = vmatpush.msra.mxu0 0.0
    %1199 = vmatpush.msra.mxu0 0.0
    %1200 = vmatpush.msra.mxu0 0.0
    %1201 = vmatpush.msra.mxu0 0.0
    %1202 = vmatpush.msra.mxu0 0.0
    %1203 = vmatpush.msra.mxu0 0.0
    %1204 = vmatpush.msra.mxu0 0.0
    %1205 = vmatpush.msra.mxu0 0.0
    %1206 = vmatpush.msra.mxu0 0.0
    %1207 = vmatpush.msra.mxu0 0.0
    %1208 = vmatpush.msra.mxu0 0.0
    %v1209 = vand.u32 %v906, 4294901760
    %v1210 = vsub.f32 %v906, %v1209
    %v1211 = vand.u32 %v1210, 4294901760
    %1212 = vmatpush.msra.mxu0 %v1211
    %v1213 = vand.u32 %v905, 4294901760
    %v1214 = vsub.f32 %v905, %v1213
    %v1215 = vand.u32 %v1214, 4294901760
    %1216 = vmatpush.msra.mxu0 %v1215
    %v1217 = vand.u32 %v904, 4294901760
    %v1218 = vsub.f32 %v904, %v1217
    %v1219 = vand.u32 %v1218, 4294901760
    %1220 = vmatpush.msra.mxu0 %v1219
    %v1221 = vand.u32 %v903, 4294901760
    %v1222 = vsub.f32 %v903, %v1221
    %v1223 = vand.u32 %v1222, 4294901760
    %1224 = vmatpush.msra.mxu0 %v1223
    %v1225 = vand.u32 %v912, 4294901760
    %1226 = vmatmul.f32.gmra.mxu0 %v1225
    %v1227 = vpop.f32.mrf.mxu0
    %v1228 = vadd.f32 %v1159, %v1227
    %v1229 = vand.u32 %v915, 4294901760
    %1230 = vmatmul.f32.gmra.mxu0 %v1229
    %v1231 = vpop.f32.mrf.mxu0
    %v1232 = vadd.f32 %v1165, %v1231
    %v1233 = vand.u32 %v918, 4294901760
    %1234 = vmatmul.f32.gmra.mxu0 %v1233
    %v1235 = vpop.f32.mrf.mxu0
    %v1236 = vadd.f32 %v1171, %v1235
    %v1237 = vand.u32 %v921, 4294901760
    %1238 = vmatmul.f32.gmra.mxu0 %v1237
    %v1239 = vpop.f32.mrf.mxu0
    %v1240 = vadd.f32 %v1177, %v1239
    %v1241 = vand.u32 %v924, 4294901760
    %1242 = vmatmul.f32.gmra.mxu0 %v1241
    %v1243 = vpop.f32.mrf.mxu0
    %v1244 = vadd.f32 %v1183, %v1243
    %v1245 = vand.u32 %v927, 4294901760
    %1246 = vmatmul.f32.gmra.mxu0 %v1245
    %v1247 = vpop.f32.mrf.mxu0
    %v1248 = vadd.f32 %v1189, %v1247
    %v1249 = vand.u32 %v930, 4294901760
    %1250 = vmatmul.f32.gmra.mxu0 %v1249
    %v1251 = vpop.f32.mrf.mxu0
    %v1252 = vadd.f32 %v1195, %v1251
    %1253 = vdwg.mxu0
    %1254 = vmatpush.msra.mxu0 0.0
    %1255 = vmatpush.msra.mxu0 0.0
    %1256 = vmatpush.msra.mxu0 0.0
    %1257 = vmatpush.msra.mxu0 0.0
    %1258 = vmatpush.msra.mxu0 0.0
    %1259 = vmatpush.msra.mxu0 0.0
    %1260 = vmatpush.msra.mxu0 0.0
    %1261 = vmatpush.msra.mxu0 0.0
    %1262 = vmatpush.msra.mxu0 0.0
    %1263 = vmatpush.msra.mxu0 0.0
    %1264 = vmatpush.msra.mxu0 0.0
    %1265 = vmatpush.msra.mxu0 0.0
    %v1266 = vand.u32 %v906, 4294901760
    %1267 = vmatpush.msra.mxu0 %v1266
    %v1268 = vand.u32 %v905, 4294901760
    %1269 = vmatpush.msra.mxu0 %v1268
    %v1270 = vand.u32 %v904, 4294901760
    %1271 = vmatpush.msra.mxu0 %v1270
    %v1272 = vand.u32 %v903, 4294901760
    %1273 = vmatpush.msra.mxu0 %v1272
    %v1274 = vand.u32 %v912, 4294901760
    %1275 = vmatmul.f32.gmra.mxu0 %v1274
    %v1276 = vpop.f32.mrf.mxu0
    %v1277 = vadd.f32 %v1228, %v1276
    %v1278 = vand.u32 %v915, 4294901760
    %1279 = vmatmul.f32.gmra.mxu0 %v1278
    %v1280 = vpop.f32.mrf.mxu0
    %v1281 = vadd.f32 %v1232, %v1280
    %v1282 = vand.u32 %v918, 4294901760
    %1283 = vmatmul.f32.gmra.mxu0 %v1282
    %v1284 = vpop.f32.mrf.mxu0
    %v1285 = vadd.f32 %v1236, %v1284
    %v1286 = vand.u32 %v921, 4294901760
    %1287 = vmatmul.f32.gmra.mxu0 %v1286
    %v1288 = vpop.f32.mrf.mxu0
    %v1289 = vadd.f32 %v1240, %v1288
    %v1290 = vand.u32 %v924, 4294901760
    %1291 = vmatmul.f32.gmra.mxu0 %v1290
    %v1292 = vpop.f32.mrf.mxu0
    %v1293 = vadd.f32 %v1244, %v1292
    %v1294 = vand.u32 %v927, 4294901760
    %1295 = vmatmul.f32.gmra.mxu0 %v1294
    %v1296 = vpop.f32.mrf.mxu0
    %v1297 = vadd.f32 %v1248, %v1296
    %v1298 = vand.u32 %v930, 4294901760
    %1299 = vmatmul.f32.gmra.mxu0 %v1298
    %v1300 = vpop.f32.mrf.mxu0
    %v1301 = vadd.f32 %v1252, %v1300
    %1302 = vdwg.mxu0
    %1303 = vst [vmem:[#allocation2] sm:$0xff] %v1277
    %1304 = vst [vmem:[#allocation2 + $0x8] sm:$0xff] %v1281
    %1305 = vst [vmem:[#allocation2 + $0x10] sm:$0xff] %v1285
    %1306 = vst [vmem:[#allocation2 + $0x18] sm:$0xff] %v1289
    %1307 = vst [vmem:[#allocation2 + $0x20] sm:$0xff] %v1293
    %1308 = vst [vmem:[#allocation2 + $0x28] sm:$0xff] %v1297
    %1309 = vst [vmem:[#allocation2 + $0x30] sm:$0xff] %v1301
    %v1310 = vsel %vm197, %v173, 0.0
    %v1311 = vsel %vm197, %v174, 0.0
    %v1312 = vadd.f32 %v1310, %v1311
    %v1313 = vrot.slane %v1312, 4
    %v1314 = vadd.f32 %v1312, %v1313
    %v1315 = vrot.slane %v1314, 2
    %v1316 = vadd.f32 %v1314, %v1315
    %v1317 = vrot.slane %v1316, 1
    %v1318 = vadd.f32 %v1316, %v1317
    %v1319 = vsel %vm197, %v175, 0.0
    %v1320 = vsel %vm197, %v176, 0.0
    %v1321 = vadd.f32 %v1319, %v1320
    %v1322 = vrot.slane %v1321, 4
    %v1323 = vadd.f32 %v1321, %v1322
    %v1324 = vrot.slane %v1323, 2
    %v1325 = vadd.f32 %v1323, %v1324
    %v1326 = vrot.slane %v1325, 1
    %v1327 = vadd.f32 %v1325, %v1326
    %v1328 = vsel %vm197, %v177, 0.0
    %v1329 = vsel %vm197, %v178, 0.0
    %v1330 = vadd.f32 %v1328, %v1329
    %v1331 = vrot.slane %v1330, 4
    %v1332 = vadd.f32 %v1330, %v1331
    %v1333 = vrot.slane %v1332, 2
    %v1334 = vadd.f32 %v1332, %v1333
    %v1335 = vrot.slane %v1334, 1
    %v1336 = vadd.f32 %v1334, %v1335
    %v1337 = vsel %vm197, %v179, 0.0
    %v1338 = vsel %vm197, %v180, 0.0
    %v1339 = vadd.f32 %v1337, %v1338
    %v1340 = vrot.slane %v1339, 4
    %v1341 = vadd.f32 %v1339, %v1340
    %v1342 = vrot.slane %v1341, 2
    %v1343 = vadd.f32 %v1341, %v1342
    %v1344 = vrot.slane %v1343, 1
    %v1345 = vadd.f32 %v1343, %v1344
    %v1346 = vsel %vm197, %v181, 0.0
    %v1347 = vsel %vm197, %v182, 0.0
    %v1348 = vadd.f32 %v1346, %v1347
    %v1349 = vrot.slane %v1348, 4
    %v1350 = vadd.f32 %v1348, %v1349
    %v1351 = vrot.slane %v1350, 2
    %v1352 = vadd.f32 %v1350, %v1351
    %v1353 = vrot.slane %v1352, 1
    %v1354 = vadd.f32 %v1352, %v1353
    %v1355 = vsel %vm197, %v183, 0.0
    %v1356 = vsel %vm197, %v184, 0.0
    %v1357 = vadd.f32 %v1355, %v1356
    %v1358 = vrot.slane %v1357, 4
    %v1359 = vadd.f32 %v1357, %v1358
    %v1360 = vrot.slane %v1359, 2
    %v1361 = vadd.f32 %v1359, %v1360
    %v1362 = vrot.slane %v1361, 1
    %v1363 = vadd.f32 %v1361, %v1362
    %v1364 = vsel %vm197, %v185, 0.0
    %v1365 = vsel %vm197, %v186, 0.0
    %v1366 = vadd.f32 %v1364, %v1365
    %v1367 = vrot.slane %v1366, 4
    %v1368 = vadd.f32 %v1366, %v1367
    %v1369 = vrot.slane %v1368, 2
    %v1370 = vadd.f32 %v1368, %v1369
    %v1371 = vrot.slane %v1370, 1
    %v1372 = vadd.f32 %v1370, %v1371
    %v1373 = vsel %vm197, %v187, 0.0
    %v1374 = vsel %vm197, %v188, 0.0
    %v1375 = vadd.f32 %v1373, %v1374
    %v1376 = vrot.slane %v1375, 4
    %v1377 = vadd.f32 %v1375, %v1376
    %v1378 = vrot.slane %v1377, 2
    %v1379 = vadd.f32 %v1377, %v1378
    %v1380 = vrot.slane %v1379, 1
    %v1381 = vadd.f32 %v1379, %v1380
    %v1382 = vld [vmem:[#allocation9] sm:$0xff]
    %v1383 = vld [vmem:[#allocation9 + $0x8] sm:$0xff]
    %v1384 = vld [vmem:[#allocation9 + $0x10] sm:$0xff]
    %v1385 = vld [vmem:[#allocation9 + $0x18] sm:$0xff]
    %v1386 = vld [vmem:[%s6] sm:$0x1]
    %v1388 = vperm.slane %v1386, 0
    %vm1398 = vcmask 1041409
    %v1399 = vsel %vm1398, %v1327, %v1318
    %vm1400 = vcmask 1042434
    %v1401 = vsel %vm1400, %v1336, %v1399
    %vm1402 = vcmask 1043459
    %v1403 = vsel %vm1402, %v1345, %v1401
    %vm1404 = vcmask 1044484
    %v1405 = vsel %vm1404, %v1354, %v1403
    %vm1406 = vcmask 1045509
    %v1407 = vsel %vm1406, %v1363, %v1405
    %vm1408 = vcmask 1046534
    %v1409 = vsel %vm1408, %v1372, %v1407
    %vm1410 = vcmask 1047559
    %v1411 = vsel %vm1410, %v1381, %v1409
    %v1412 = vsel %vm197, %v1411, 0
    %1414 = vmatpush.msra.mxu0 0.0
    %1415 = vmatpush.msra.mxu0 0.0
    %1416 = vmatpush.msra.mxu0 0.0
    %1417 = vmatpush.msra.mxu0 0.0
    %1418 = vmatpush.msra.mxu0 0.0
    %1419 = vmatpush.msra.mxu0 0.0
    %1420 = vmatpush.msra.mxu0 0.0
    %1421 = vmatpush.msra.mxu0 0.0
    %1422 = vmatpush.msra.mxu0 0.0
    %1423 = vmatpush.msra.mxu0 0.0
    %1424 = vmatpush.msra.mxu0 0.0
    %1425 = vmatpush.msra.mxu0 0.0
    %v1426 = vand.u32 %v1385, 4294901760
    %1427 = vmatpush.msra.mxu0 %v1426
    %v1428 = vand.u32 %v1384, 4294901760
    %1429 = vmatpush.msra.mxu0 %v1428
    %v1430 = vand.u32 %v1383, 4294901760
    %1431 = vmatpush.msra.mxu0 %v1430
    %v1432 = vand.u32 %v1382, 4294901760
    %1433 = vmatpush.msra.mxu0 %v1432
    %v1434 = vand.u32 %v1412, 4294901760
    %v1435 = vsub.f32 %v1412, %v1434
    %v1436 = vand.u32 %v1435, 4294901760
    %v1437 = vsub.f32 %v1435, %v1436
    %v1438 = vand.u32 %v1437, 4294901760
    %1439 = vmatmul.f32.gmra.mxu0 %v1438
    %v1440 = vpop.f32.mrf.mxu0
    %v1441 = vadd.f32 %v1388, %v1440
    %1442 = vdwg.mxu0
    %1443 = vmatpush.msra.mxu0 0.0
    %1444 = vmatpush.msra.mxu0 0.0
    %1445 = vmatpush.msra.mxu0 0.0
    %1446 = vmatpush.msra.mxu0 0.0
    %1447 = vmatpush.msra.mxu0 0.0
    %1448 = vmatpush.msra.mxu0 0.0
    %1449 = vmatpush.msra.mxu0 0.0
    %1450 = vmatpush.msra.mxu0 0.0
    %1451 = vmatpush.msra.mxu0 0.0
    %1452 = vmatpush.msra.mxu0 0.0
    %1453 = vmatpush.msra.mxu0 0.0
    %1454 = vmatpush.msra.mxu0 0.0
    %v1455 = vand.u32 %v1385, 4294901760
    %v1456 = vsub.f32 %v1385, %v1455
    %v1457 = vand.u32 %v1456, 4294901760
    %v1458 = vsub.f32 %v1456, %v1457
    %v1459 = vand.u32 %v1458, 4294901760
    %1460 = vmatpush.msra.mxu0 %v1459
    %v1461 = vand.u32 %v1384, 4294901760
    %v1462 = vsub.f32 %v1384, %v1461
    %v1463 = vand.u32 %v1462, 4294901760
    %v1464 = vsub.f32 %v1462, %v1463
    %v1465 = vand.u32 %v1464, 4294901760
    %1466 = vmatpush.msra.mxu0 %v1465
    %v1467 = vand.u32 %v1383, 4294901760
    %v1468 = vsub.f32 %v1383, %v1467
    %v1469 = vand.u32 %v1468, 4294901760
    %v1470 = vsub.f32 %v1468, %v1469
    %v1471 = vand.u32 %v1470, 4294901760
    %1472 = vmatpush.msra.mxu0 %v1471
    %v1473 = vand.u32 %v1382, 4294901760
    %v1474 = vsub.f32 %v1382, %v1473
    %v1475 = vand.u32 %v1474, 4294901760
    %v1476 = vsub.f32 %v1474, %v1475
    %v1477 = vand.u32 %v1476, 4294901760
    %1478 = vmatpush.msra.mxu0 %v1477
    %v1479 = vand.u32 %v1412, 4294901760
    %1480 = vmatmul.f32.gmra.mxu0 %v1479
    %v1481 = vpop.f32.mrf.mxu0
    %v1482 = vadd.f32 %v1441, %v1481
    %1483 = vdwg.mxu0
    %1484 = vmatpush.msra.mxu0 0.0
    %1485 = vmatpush.msra.mxu0 0.0
    %1486 = vmatpush.msra.mxu0 0.0
    %1487 = vmatpush.msra.mxu0 0.0
    %1488 = vmatpush.msra.mxu0 0.0
    %1489 = vmatpush.msra.mxu0 0.0
    %1490 = vmatpush.msra.mxu0 0.0
    %1491 = vmatpush.msra.mxu0 0.0
    %1492 = vmatpush.msra.mxu0 0.0
    %1493 = vmatpush.msra.mxu0 0.0
    %1494 = vmatpush.msra.mxu0 0.0
    %1495 = vmatpush.msra.mxu0 0.0
    %v1496 = vand.u32 %v1385, 4294901760
    %v1497 = vsub.f32 %v1385, %v1496
    %1498 = vmatpush.msra.mxu0 %v1497
    %v1499 = vand.u32 %v1384, 4294901760
    %v1500 = vsub.f32 %v1384, %v1499
    %1501 = vmatpush.msra.mxu0 %v1500
    %v1502 = vand.u32 %v1383, 4294901760
    %v1503 = vsub.f32 %v1383, %v1502
    %1504 = vmatpush.msra.mxu0 %v1503
    %v1505 = vand.u32 %v1382, 4294901760
    %v1506 = vsub.f32 %v1382, %v1505
    %1507 = vmatpush.msra.mxu0 %v1506
    %v1508 = vand.u32 %v1412, 4294901760
    %v1509 = vsub.f32 %v1412, %v1508
    %1510 = vmatmul.f32.gmra.mxu0 %v1509
    %v1511 = vpop.f32.mrf.mxu0
    %v1512 = vadd.f32 %v1482, %v1511
    %1513 = vdwg.mxu0
    %1514 = vmatpush.msra.mxu0 0.0
    %1515 = vmatpush.msra.mxu0 0.0
    %1516 = vmatpush.msra.mxu0 0.0
    %1517 = vmatpush.msra.mxu0 0.0
    %1518 = vmatpush.msra.mxu0 0.0
    %1519 = vmatpush.msra.mxu0 0.0
    %1520 = vmatpush.msra.mxu0 0.0
    %1521 = vmatpush.msra.mxu0 0.0
    %1522 = vmatpush.msra.mxu0 0.0
    %1523 = vmatpush.msra.mxu0 0.0
    %1524 = vmatpush.msra.mxu0 0.0
    %1525 = vmatpush.msra.mxu0 0.0
    %v1526 = vand.u32 %v1385, 4294901760
    %1527 = vmatpush.msra.mxu0 %v1526
    %v1528 = vand.u32 %v1384, 4294901760
    %1529 = vmatpush.msra.mxu0 %v1528
    %v1530 = vand.u32 %v1383, 4294901760
    %1531 = vmatpush.msra.mxu0 %v1530
    %v1532 = vand.u32 %v1382, 4294901760
    %1533 = vmatpush.msra.mxu0 %v1532
    %v1534 = vand.u32 %v1412, 4294901760
    %v1535 = vsub.f32 %v1412, %v1534
    %v1536 = vand.u32 %v1535, 4294901760
    %1537 = vmatmul.f32.gmra.mxu0 %v1536
    %v1538 = vpop.f32.mrf.mxu0
    %v1539 = vadd.f32 %v1512, %v1538
    %1540 = vdwg.mxu0
    %1541 = vmatpush.msra.mxu0 0.0
    %1542 = vmatpush.msra.mxu0 0.0
    %1543 = vmatpush.msra.mxu0 0.0
    %1544 = vmatpush.msra.mxu0 0.0
    %1545 = vmatpush.msra.mxu0 0.0
    %1546 = vmatpush.msra.mxu0 0.0
    %1547 = vmatpush.msra.mxu0 0.0
    %1548 = vmatpush.msra.mxu0 0.0
    %1549 = vmatpush.msra.mxu0 0.0
    %1550 = vmatpush.msra.mxu0 0.0
    %1551 = vmatpush.msra.mxu0 0.0
    %1552 = vmatpush.msra.mxu0 0.0
    %v1553 = vand.u32 %v1385, 4294901760
    %v1554 = vsub.f32 %v1385, %v1553
    %v1555 = vand.u32 %v1554, 4294901760
    %1556 = vmatpush.msra.mxu0 %v1555
    %v1557 = vand.u32 %v1384, 4294901760
    %v1558 = vsub.f32 %v1384, %v1557
    %v1559 = vand.u32 %v1558, 4294901760
    %1560 = vmatpush.msra.mxu0 %v1559
    %v1561 = vand.u32 %v1383, 4294901760
    %v1562 = vsub.f32 %v1383, %v1561
    %v1563 = vand.u32 %v1562, 4294901760
    %1564 = vmatpush.msra.mxu0 %v1563
    %v1565 = vand.u32 %v1382, 4294901760
    %v1566 = vsub.f32 %v1382, %v1565
    %v1567 = vand.u32 %v1566, 4294901760
    %1568 = vmatpush.msra.mxu0 %v1567
    %v1569 = vand.u32 %v1412, 4294901760
    %1570 = vmatmul.f32.gmra.mxu0 %v1569
    %v1571 = vpop.f32.mrf.mxu0
    %v1572 = vadd.f32 %v1539, %v1571
    %1573 = vdwg.mxu0
    %1574 = vmatpush.msra.mxu0 0.0
    %1575 = vmatpush.msra.mxu0 0.0
    %1576 = vmatpush.msra.mxu0 0.0
    %1577 = vmatpush.msra.mxu0 0.0
    %1578 = vmatpush.msra.mxu0 0.0
    %1579 = vmatpush.msra.mxu0 0.0
    %1580 = vmatpush.msra.mxu0 0.0
    %1581 = vmatpush.msra.mxu0 0.0
    %1582 = vmatpush.msra.mxu0 0.0
    %1583 = vmatpush.msra.mxu0 0.0
    %1584 = vmatpush.msra.mxu0 0.0
    %1585 = vmatpush.msra.mxu0 0.0
    %v1586 = vand.u32 %v1385, 4294901760
    %1587 = vmatpush.msra.mxu0 %v1586
    %v1588 = vand.u32 %v1384, 4294901760
    %1589 = vmatpush.msra.mxu0 %v1588
    %v1590 = vand.u32 %v1383, 4294901760
    %1591 = vmatpush.msra.mxu0 %v1590
    %v1592 = vand.u32 %v1382, 4294901760
    %1593 = vmatpush.msra.mxu0 %v1592
    %v1594 = vand.u32 %v1412, 4294901760
    %1595 = vmatmul.f32.gmra.mxu0 %v1594
    %v1596 = vpop.f32.mrf.mxu0
    %v1597 = vadd.f32 %v1572, %v1596
    %1598 = vdwg.mxu0
    %v1599 = vld [vmem:[#allocation11] sm:$0xff]
    %v1600 = vld [vmem:[#allocation11 + $0x8] sm:$0xff]
    %v1601 = vld [vmem:[#allocation11 + $0x10] sm:$0xff]
    %v1602 = vld [vmem:[#allocation11 + $0x18] sm:$0xff]
    %v1603 = vld [vmem:[%s8] sm:$0x1]
    %v1605 = vperm.slane %v1603, 0
    %1607 = vmatpush.msra.mxu0 0.0
    %1608 = vmatpush.msra.mxu0 0.0
    %1609 = vmatpush.msra.mxu0 0.0
    %1610 = vmatpush.msra.mxu0 0.0
    %1611 = vmatpush.msra.mxu0 0.0
    %1612 = vmatpush.msra.mxu0 0.0
    %1613 = vmatpush.msra.mxu0 0.0
    %1614 = vmatpush.msra.mxu0 0.0
    %1615 = vmatpush.msra.mxu0 0.0
    %1616 = vmatpush.msra.mxu0 0.0
    %1617 = vmatpush.msra.mxu0 0.0
    %1618 = vmatpush.msra.mxu0 0.0
    %v1619 = vand.u32 %v1602, 4294901760
    %1620 = vmatpush.msra.mxu0 %v1619
    %v1621 = vand.u32 %v1601, 4294901760
    %1622 = vmatpush.msra.mxu0 %v1621
    %v1623 = vand.u32 %v1600, 4294901760
    %1624 = vmatpush.msra.mxu0 %v1623
    %v1625 = vand.u32 %v1599, 4294901760
    %1626 = vmatpush.msra.mxu0 %v1625
    %v1627 = vand.u32 %v1412, 4294901760
    %v1628 = vsub.f32 %v1412, %v1627
    %v1629 = vand.u32 %v1628, 4294901760
    %v1630 = vsub.f32 %v1628, %v1629
    %v1631 = vand.u32 %v1630, 4294901760
    %1632 = vmatmul.f32.gmra.mxu0 %v1631
    %v1633 = vpop.f32.mrf.mxu0
    %v1634 = vadd.f32 %v1605, %v1633
    %1635 = vdwg.mxu0
    %1636 = vmatpush.msra.mxu0 0.0
    %1637 = vmatpush.msra.mxu0 0.0
    %1638 = vmatpush.msra.mxu0 0.0
    %1639 = vmatpush.msra.mxu0 0.0
    %1640 = vmatpush.msra.mxu0 0.0
    %1641 = vmatpush.msra.mxu0 0.0
    %1642 = vmatpush.msra.mxu0 0.0
    %1643 = vmatpush.msra.mxu0 0.0
    %1644 = vmatpush.msra.mxu0 0.0
    %1645 = vmatpush.msra.mxu0 0.0
    %1646 = vmatpush.msra.mxu0 0.0
    %1647 = vmatpush.msra.mxu0 0.0
    %v1648 = vand.u32 %v1602, 4294901760
    %v1649 = vsub.f32 %v1602, %v1648
    %v1650 = vand.u32 %v1649, 4294901760
    %v1651 = vsub.f32 %v1649, %v1650
    %v1652 = vand.u32 %v1651, 4294901760
    %1653 = vmatpush.msra.mxu0 %v1652
    %v1654 = vand.u32 %v1601, 4294901760
    %v1655 = vsub.f32 %v1601, %v1654
    %v1656 = vand.u32 %v1655, 4294901760
    %v1657 = vsub.f32 %v1655, %v1656
    %v1658 = vand.u32 %v1657, 4294901760
    %1659 = vmatpush.msra.mxu0 %v1658
    %v1660 = vand.u32 %v1600, 4294901760
    %v1661 = vsub.f32 %v1600, %v1660
    %v1662 = vand.u32 %v1661, 4294901760
    %v1663 = vsub.f32 %v1661, %v1662
    %v1664 = vand.u32 %v1663, 4294901760
    %1665 = vmatpush.msra.mxu0 %v1664
    %v1666 = vand.u32 %v1599, 4294901760
    %v1667 = vsub.f32 %v1599, %v1666
    %v1668 = vand.u32 %v1667, 4294901760
    %v1669 = vsub.f32 %v1667, %v1668
    %v1670 = vand.u32 %v1669, 4294901760
    %1671 = vmatpush.msra.mxu0 %v1670
    %v1672 = vand.u32 %v1412, 4294901760
    %1673 = vmatmul.f32.gmra.mxu0 %v1672
    %v1674 = vpop.f32.mrf.mxu0
    %v1675 = vadd.f32 %v1634, %v1674
    %1676 = vdwg.mxu0
    %1677 = vmatpush.msra.mxu0 0.0
    %1678 = vmatpush.msra.mxu0 0.0
    %1679 = vmatpush.msra.mxu0 0.0
    %1680 = vmatpush.msra.mxu0 0.0
    %1681 = vmatpush.msra.mxu0 0.0
    %1682 = vmatpush.msra.mxu0 0.0
    %1683 = vmatpush.msra.mxu0 0.0
    %1684 = vmatpush.msra.mxu0 0.0
    %1685 = vmatpush.msra.mxu0 0.0
    %1686 = vmatpush.msra.mxu0 0.0
    %1687 = vmatpush.msra.mxu0 0.0
    %1688 = vmatpush.msra.mxu0 0.0
    %v1689 = vand.u32 %v1602, 4294901760
    %v1690 = vsub.f32 %v1602, %v1689
    %1691 = vmatpush.msra.mxu0 %v1690
    %v1692 = vand.u32 %v1601, 4294901760
    %v1693 = vsub.f32 %v1601, %v1692
    %1694 = vmatpush.msra.mxu0 %v1693
    %v1695 = vand.u32 %v1600, 4294901760
    %v1696 = vsub.f32 %v1600, %v1695
    %1697 = vmatpush.msra.mxu0 %v1696
    %v1698 = vand.u32 %v1599, 4294901760
    %v1699 = vsub.f32 %v1599, %v1698
    %1700 = vmatpush.msra.mxu0 %v1699
    %v1701 = vand.u32 %v1412, 4294901760
    %v1702 = vsub.f32 %v1412, %v1701
    %1703 = vmatmul.f32.gmra.mxu0 %v1702
    %v1704 = vpop.f32.mrf.mxu0
    %v1705 = vadd.f32 %v1675, %v1704
    %1706 = vdwg.mxu0
    %1707 = vmatpush.msra.mxu0 0.0
    %1708 = vmatpush.msra.mxu0 0.0
    %1709 = vmatpush.msra.mxu0 0.0
    %1710 = vmatpush.msra.mxu0 0.0
    %1711 = vmatpush.msra.mxu0 0.0
    %1712 = vmatpush.msra.mxu0 0.0
    %1713 = vmatpush.msra.mxu0 0.0
    %1714 = vmatpush.msra.mxu0 0.0
    %1715 = vmatpush.msra.mxu0 0.0
    %1716 = vmatpush.msra.mxu0 0.0
    %1717 = vmatpush.msra.mxu0 0.0
    %1718 = vmatpush.msra.mxu0 0.0
    %v1719 = vand.u32 %v1602, 4294901760
    %1720 = vmatpush.msra.mxu0 %v1719
    %v1721 = vand.u32 %v1601, 4294901760
    %1722 = vmatpush.msra.mxu0 %v1721
    %v1723 = vand.u32 %v1600, 4294901760
    %1724 = vmatpush.msra.mxu0 %v1723
    %v1725 = vand.u32 %v1599, 4294901760
    %1726 = vmatpush.msra.mxu0 %v1725
    %v1727 = vand.u32 %v1412, 4294901760
    %v1728 = vsub.f32 %v1412, %v1727
    %v1729 = vand.u32 %v1728, 4294901760
    %1730 = vmatmul.f32.gmra.mxu0 %v1729
    %v1731 = vpop.f32.mrf.mxu0
    %v1732 = vadd.f32 %v1705, %v1731
    %1733 = vdwg.mxu0
    %1734 = vmatpush.msra.mxu0 0.0
    %1735 = vmatpush.msra.mxu0 0.0
    %1736 = vmatpush.msra.mxu0 0.0
    %1737 = vmatpush.msra.mxu0 0.0
    %1738 = vmatpush.msra.mxu0 0.0
    %1739 = vmatpush.msra.mxu0 0.0
    %1740 = vmatpush.msra.mxu0 0.0
    %1741 = vmatpush.msra.mxu0 0.0
    %1742 = vmatpush.msra.mxu0 0.0
    %1743 = vmatpush.msra.mxu0 0.0
    %1744 = vmatpush.msra.mxu0 0.0
    %1745 = vmatpush.msra.mxu0 0.0
    %v1746 = vand.u32 %v1602, 4294901760
    %v1747 = vsub.f32 %v1602, %v1746
    %v1748 = vand.u32 %v1747, 4294901760
    %1749 = vmatpush.msra.mxu0 %v1748
    %v1750 = vand.u32 %v1601, 4294901760
    %v1751 = vsub.f32 %v1601, %v1750
    %v1752 = vand.u32 %v1751, 4294901760
    %1753 = vmatpush.msra.mxu0 %v1752
    %v1754 = vand.u32 %v1600, 4294901760
    %v1755 = vsub.f32 %v1600, %v1754
    %v1756 = vand.u32 %v1755, 4294901760
    %1757 = vmatpush.msra.mxu0 %v1756
    %v1758 = vand.u32 %v1599, 4294901760
    %v1759 = vsub.f32 %v1599, %v1758
    %v1760 = vand.u32 %v1759, 4294901760
    %1761 = vmatpush.msra.mxu0 %v1760
    %v1762 = vand.u32 %v1412, 4294901760
    %1763 = vmatmul.f32.gmra.mxu0 %v1762
    %v1764 = vpop.f32.mrf.mxu0
    %v1765 = vadd.f32 %v1732, %v1764
    %1766 = vdwg.mxu0
    %1767 = vmatpush.msra.mxu0 0.0
    %1768 = vmatpush.msra.mxu0 0.0
    %1769 = vmatpush.msra.mxu0 0.0
    %1770 = vmatpush.msra.mxu0 0.0
    %1771 = vmatpush.msra.mxu0 0.0
    %1772 = vmatpush.msra.mxu0 0.0
    %1773 = vmatpush.msra.mxu0 0.0
    %1774 = vmatpush.msra.mxu0 0.0
    %1775 = vmatpush.msra.mxu0 0.0
    %1776 = vmatpush.msra.mxu0 0.0
    %1777 = vmatpush.msra.mxu0 0.0
    %1778 = vmatpush.msra.mxu0 0.0
    %v1779 = vand.u32 %v1602, 4294901760
    %1780 = vmatpush.msra.mxu0 %v1779
    %v1781 = vand.u32 %v1601, 4294901760
    %1782 = vmatpush.msra.mxu0 %v1781
    %v1783 = vand.u32 %v1600, 4294901760
    %1784 = vmatpush.msra.mxu0 %v1783
    %v1785 = vand.u32 %v1599, 4294901760
    %1786 = vmatpush.msra.mxu0 %v1785
    %v1787 = vand.u32 %v1412, 4294901760
    %1788 = vmatmul.f32.gmra.mxu0 %v1787
    %v1789 = vpop.f32.mrf.mxu0
    %v1790 = vadd.f32 %v1765, %v1789
    %1791 = vdwg.mxu0
    %v1792 = vld [vmem:[%s4] sm:$0x1]
    %v1793 = vld [vmem:[#allocation14] sm:$0xff]
    %v1794 = vld [vmem:[#allocation14 + $0x8] sm:$0xff]
    %v1795 = vld [vmem:[#allocation14 + $0x10] sm:$0xff]
    %v1796 = vld [vmem:[#allocation14 + $0x18] sm:$0xff]
    %v1797 = vld [vmem:[#allocation15] sm:$0xff]
    %v1798 = vld [vmem:[#allocation15 + $0x8] sm:$0xff]
    %v1799 = vld [vmem:[#allocation15 + $0x10] sm:$0xff]
    %v1800 = vld [vmem:[#allocation15 + $0x18] sm:$0xff]
    %v1801 = vld [vmem:[#allocation15 + $0x20] sm:$0xff]
    %v1802 = vld [vmem:[#allocation15 + $0x28] sm:$0xff]
    %v1803 = vld [vmem:[#allocation15 + $0x30] sm:$0xff]
    %v1804 = vld [vmem:[#allocation15 + $0x38] sm:$0xff]
    %v1806 = vsel %vm197, %v1597, 0
    %1808 = vmatpush.msra.mxu0 0.0
    %1809 = vmatpush.msra.mxu0 0.0
    %1810 = vmatpush.msra.mxu0 0.0
    %1811 = vmatpush.msra.mxu0 0.0
    %1812 = vmatpush.msra.mxu0 0.0
    %1813 = vmatpush.msra.mxu0 0.0
    %1814 = vmatpush.msra.mxu0 0.0
    %1815 = vmatpush.msra.mxu0 0.0
    %1816 = vmatpush.msra.mxu0 0.0
    %1817 = vmatpush.msra.mxu0 0.0
    %1818 = vmatpush.msra.mxu0 0.0
    %1819 = vmatpush.msra.mxu0 0.0
    %v1820 = vand.u32 %v1803, 4294901760
    %1821 = vmatpush.msra.mxu0 %v1820
    %v1822 = vand.u32 %v1801, 4294901760
    %1823 = vmatpush.msra.mxu0 %v1822
    %v1824 = vand.u32 %v1799, 4294901760
    %1825 = vmatpush.msra.mxu0 %v1824
    %v1826 = vand.u32 %v1797, 4294901760
    %1827 = vmatpush.msra.mxu0 %v1826
    %v1828 = vand.u32 %v1806, 4294901760
    %v1829 = vsub.f32 %v1806, %v1828
    %v1830 = vand.u32 %v1829, 4294901760
    %v1831 = vsub.f32 %v1829, %v1830
    %v1832 = vand.u32 %v1831, 4294901760
    %1833 = vmatmul.f32.gmra.mxu0 %v1832
    %v1834 = vpop.f32.mrf.mxu0
    %v1835 = vadd.f32 0.0, %v1834
    %1836 = vdwg.mxu0
    %1837 = vmatpush.msra.mxu0 0.0
    %1838 = vmatpush.msra.mxu0 0.0
    %1839 = vmatpush.msra.mxu0 0.0
    %1840 = vmatpush.msra.mxu0 0.0
    %1841 = vmatpush.msra.mxu0 0.0
    %1842 = vmatpush.msra.mxu0 0.0
    %1843 = vmatpush.msra.mxu0 0.0
    %1844 = vmatpush.msra.mxu0 0.0
    %1845 = vmatpush.msra.mxu0 0.0
    %1846 = vmatpush.msra.mxu0 0.0
    %1847 = vmatpush.msra.mxu0 0.0
    %1848 = vmatpush.msra.mxu0 0.0
    %v1849 = vand.u32 %v1803, 4294901760
    %v1850 = vsub.f32 %v1803, %v1849
    %v1851 = vand.u32 %v1850, 4294901760
    %v1852 = vsub.f32 %v1850, %v1851
    %v1853 = vand.u32 %v1852, 4294901760
    %1854 = vmatpush.msra.mxu0 %v1853
    %v1855 = vand.u32 %v1801, 4294901760
    %v1856 = vsub.f32 %v1801, %v1855
    %v1857 = vand.u32 %v1856, 4294901760
    %v1858 = vsub.f32 %v1856, %v1857
    %v1859 = vand.u32 %v1858, 4294901760
    %1860 = vmatpush.msra.mxu0 %v1859
    %v1861 = vand.u32 %v1799, 4294901760
    %v1862 = vsub.f32 %v1799, %v1861
    %v1863 = vand.u32 %v1862, 4294901760
    %v1864 = vsub.f32 %v1862, %v1863
    %v1865 = vand.u32 %v1864, 4294901760
    %1866 = vmatpush.msra.mxu0 %v1865
    %v1867 = vand.u32 %v1797, 4294901760
    %v1868 = vsub.f32 %v1797, %v1867
    %v1869 = vand.u32 %v1868, 4294901760
    %v1870 = vsub.f32 %v1868, %v1869
    %v1871 = vand.u32 %v1870, 4294901760
    %1872 = vmatpush.msra.mxu0 %v1871
    %v1873 = vand.u32 %v1806, 4294901760
    %1874 = vmatmul.f32.gmra.mxu0 %v1873
    %v1875 = vpop.f32.mrf.mxu0
    %v1876 = vadd.f32 %v1835, %v1875
    %1877 = vdwg.mxu0
    %1878 = vmatpush.msra.mxu0 0.0
    %1879 = vmatpush.msra.mxu0 0.0
    %1880 = vmatpush.msra.mxu0 0.0
    %1881 = vmatpush.msra.mxu0 0.0
    %1882 = vmatpush.msra.mxu0 0.0
    %1883 = vmatpush.msra.mxu0 0.0
    %1884 = vmatpush.msra.mxu0 0.0
    %1885 = vmatpush.msra.mxu0 0.0
    %1886 = vmatpush.msra.mxu0 0.0
    %1887 = vmatpush.msra.mxu0 0.0
    %1888 = vmatpush.msra.mxu0 0.0
    %1889 = vmatpush.msra.mxu0 0.0
    %v1890 = vand.u32 %v1803, 4294901760
    %v1891 = vsub.f32 %v1803, %v1890
    %1892 = vmatpush.msra.mxu0 %v1891
    %v1893 = vand.u32 %v1801, 4294901760
    %v1894 = vsub.f32 %v1801, %v1893
    %1895 = vmatpush.msra.mxu0 %v1894
    %v1896 = vand.u32 %v1799, 4294901760
    %v1897 = vsub.f32 %v1799, %v1896
    %1898 = vmatpush.msra.mxu0 %v1897
    %v1899 = vand.u32 %v1797, 4294901760
    %v1900 = vsub.f32 %v1797, %v1899
    %1901 = vmatpush.msra.mxu0 %v1900
    %v1902 = vand.u32 %v1806, 4294901760
    %v1903 = vsub.f32 %v1806, %v1902
    %1904 = vmatmul.f32.gmra.mxu0 %v1903
    %v1905 = vpop.f32.mrf.mxu0
    %v1906 = vadd.f32 %v1876, %v1905
    %1907 = vdwg.mxu0
    %1908 = vmatpush.msra.mxu0 0.0
    %1909 = vmatpush.msra.mxu0 0.0
    %1910 = vmatpush.msra.mxu0 0.0
    %1911 = vmatpush.msra.mxu0 0.0
    %1912 = vmatpush.msra.mxu0 0.0
    %1913 = vmatpush.msra.mxu0 0.0
    %1914 = vmatpush.msra.mxu0 0.0
    %1915 = vmatpush.msra.mxu0 0.0
    %1916 = vmatpush.msra.mxu0 0.0
    %1917 = vmatpush.msra.mxu0 0.0
    %1918 = vmatpush.msra.mxu0 0.0
    %1919 = vmatpush.msra.mxu0 0.0
    %v1920 = vand.u32 %v1803, 4294901760
    %1921 = vmatpush.msra.mxu0 %v1920
    %v1922 = vand.u32 %v1801, 4294901760
    %1923 = vmatpush.msra.mxu0 %v1922
    %v1924 = vand.u32 %v1799, 4294901760
    %1925 = vmatpush.msra.mxu0 %v1924
    %v1926 = vand.u32 %v1797, 4294901760
    %1927 = vmatpush.msra.mxu0 %v1926
    %v1928 = vand.u32 %v1806, 4294901760
    %v1929 = vsub.f32 %v1806, %v1928
    %v1930 = vand.u32 %v1929, 4294901760
    %1931 = vmatmul.f32.gmra.mxu0 %v1930
    %v1932 = vpop.f32.mrf.mxu0
    %v1933 = vadd.f32 %v1906, %v1932
    %1934 = vdwg.mxu0
    %1935 = vmatpush.msra.mxu0 0.0
    %1936 = vmatpush.msra.mxu0 0.0
    %1937 = vmatpush.msra.mxu0 0.0
    %1938 = vmatpush.msra.mxu0 0.0
    %1939 = vmatpush.msra.mxu0 0.0
    %1940 = vmatpush.msra.mxu0 0.0
    %1941 = vmatpush.msra.mxu0 0.0
    %1942 = vmatpush.msra.mxu0 0.0
    %1943 = vmatpush.msra.mxu0 0.0
    %1944 = vmatpush.msra.mxu0 0.0
    %1945 = vmatpush.msra.mxu0 0.0
    %1946 = vmatpush.msra.mxu0 0.0
    %v1947 = vand.u32 %v1803, 4294901760
    %v1948 = vsub.f32 %v1803, %v1947
    %v1949 = vand.u32 %v1948, 4294901760
    %1950 = vmatpush.msra.mxu0 %v1949
    %v1951 = vand.u32 %v1801, 4294901760
    %v1952 = vsub.f32 %v1801, %v1951
    %v1953 = vand.u32 %v1952, 4294901760
    %1954 = vmatpush.msra.mxu0 %v1953
    %v1955 = vand.u32 %v1799, 4294901760
    %v1956 = vsub.f32 %v1799, %v1955
    %v1957 = vand.u32 %v1956, 4294901760
    %1958 = vmatpush.msra.mxu0 %v1957
    %v1959 = vand.u32 %v1797, 4294901760
    %v1960 = vsub.f32 %v1797, %v1959
    %v1961 = vand.u32 %v1960, 4294901760
    %1962 = vmatpush.msra.mxu0 %v1961
    %v1963 = vand.u32 %v1806, 4294901760
    %1964 = vmatmul.f32.gmra.mxu0 %v1963
    %v1965 = vpop.f32.mrf.mxu0
    %v1966 = vadd.f32 %v1933, %v1965
    %1967 = vdwg.mxu0
    %1968 = vmatpush.msra.mxu0 0.0
    %1969 = vmatpush.msra.mxu0 0.0
    %1970 = vmatpush.msra.mxu0 0.0
    %1971 = vmatpush.msra.mxu0 0.0
    %1972 = vmatpush.msra.mxu0 0.0
    %1973 = vmatpush.msra.mxu0 0.0
    %1974 = vmatpush.msra.mxu0 0.0
    %1975 = vmatpush.msra.mxu0 0.0
    %1976 = vmatpush.msra.mxu0 0.0
    %1977 = vmatpush.msra.mxu0 0.0
    %1978 = vmatpush.msra.mxu0 0.0
    %1979 = vmatpush.msra.mxu0 0.0
    %v1980 = vand.u32 %v1803, 4294901760
    %1981 = vmatpush.msra.mxu0 %v1980
    %v1982 = vand.u32 %v1801, 4294901760
    %1983 = vmatpush.msra.mxu0 %v1982
    %v1984 = vand.u32 %v1799, 4294901760
    %1985 = vmatpush.msra.mxu0 %v1984
    %v1986 = vand.u32 %v1797, 4294901760
    %1987 = vmatpush.msra.mxu0 %v1986
    %v1988 = vand.u32 %v1806, 4294901760
    %1989 = vmatmul.f32.gmra.mxu0 %v1988
    %v1990 = vpop.f32.mrf.mxu0
    %v1991 = vadd.f32 %v1966, %v1990
    %1992 = vdwg.mxu0
    %1993 = vmatpush.msra.mxu0 0.0
    %1994 = vmatpush.msra.mxu0 0.0
    %1995 = vmatpush.msra.mxu0 0.0
    %1996 = vmatpush.msra.mxu0 0.0
    %1997 = vmatpush.msra.mxu0 0.0
    %1998 = vmatpush.msra.mxu0 0.0
    %1999 = vmatpush.msra.mxu0 0.0
    %2000 = vmatpush.msra.mxu0 0.0
    %2001 = vmatpush.msra.mxu0 0.0
    %2002 = vmatpush.msra.mxu0 0.0
    %2003 = vmatpush.msra.mxu0 0.0
    %2004 = vmatpush.msra.mxu0 0.0
    %v2005 = vand.u32 %v1804, 4294901760
    %2006 = vmatpush.msra.mxu0 %v2005
    %v2007 = vand.u32 %v1802, 4294901760
    %2008 = vmatpush.msra.mxu0 %v2007
    %v2009 = vand.u32 %v1800, 4294901760
    %2010 = vmatpush.msra.mxu0 %v2009
    %v2011 = vand.u32 %v1798, 4294901760
    %2012 = vmatpush.msra.mxu0 %v2011
    %v2013 = vand.u32 %v1806, 4294901760
    %v2014 = vsub.f32 %v1806, %v2013
    %v2015 = vand.u32 %v2014, 4294901760
    %v2016 = vsub.f32 %v2014, %v2015
    %v2017 = vand.u32 %v2016, 4294901760
    %2018 = vmatmul.f32.gmra.mxu0 %v2017
    %v2019 = vpop.f32.mrf.mxu0
    %v2020 = vadd.f32 0.0, %v2019
    %2021 = vdwg.mxu0
    %2022 = vmatpush.msra.mxu0 0.0
    %2023 = vmatpush.msra.mxu0 0.0
    %2024 = vmatpush.msra.mxu0 0.0
    %2025 = vmatpush.msra.mxu0 0.0
    %2026 = vmatpush.msra.mxu0 0.0
    %2027 = vmatpush.msra.mxu0 0.0
    %2028 = vmatpush.msra.mxu0 0.0
    %2029 = vmatpush.msra.mxu0 0.0
    %2030 = vmatpush.msra.mxu0 0.0
    %2031 = vmatpush.msra.mxu0 0.0
    %2032 = vmatpush.msra.mxu0 0.0
    %2033 = vmatpush.msra.mxu0 0.0
    %v2034 = vand.u32 %v1804, 4294901760
    %v2035 = vsub.f32 %v1804, %v2034
    %v2036 = vand.u32 %v2035, 4294901760
    %v2037 = vsub.f32 %v2035, %v2036
    %v2038 = vand.u32 %v2037, 4294901760
    %2039 = vmatpush.msra.mxu0 %v2038
    %v2040 = vand.u32 %v1802, 4294901760
    %v2041 = vsub.f32 %v1802, %v2040
    %v2042 = vand.u32 %v2041, 4294901760
    %v2043 = vsub.f32 %v2041, %v2042
    %v2044 = vand.u32 %v2043, 4294901760
    %2045 = vmatpush.msra.mxu0 %v2044
    %v2046 = vand.u32 %v1800, 4294901760
    %v2047 = vsub.f32 %v1800, %v2046
    %v2048 = vand.u32 %v2047, 4294901760
    %v2049 = vsub.f32 %v2047, %v2048
    %v2050 = vand.u32 %v2049, 4294901760
    %2051 = vmatpush.msra.mxu0 %v2050
    %v2052 = vand.u32 %v1798, 4294901760
    %v2053 = vsub.f32 %v1798, %v2052
    %v2054 = vand.u32 %v2053, 4294901760
    %v2055 = vsub.f32 %v2053, %v2054
    %v2056 = vand.u32 %v2055, 4294901760
    %2057 = vmatpush.msra.mxu0 %v2056
    %v2058 = vand.u32 %v1806, 4294901760
    %2059 = vmatmul.f32.gmra.mxu0 %v2058
    %v2060 = vpop.f32.mrf.mxu0
    %v2061 = vadd.f32 %v2020, %v2060
    %2062 = vdwg.mxu0
    %2063 = vmatpush.msra.mxu0 0.0
    %2064 = vmatpush.msra.mxu0 0.0
    %2065 = vmatpush.msra.mxu0 0.0
    %2066 = vmatpush.msra.mxu0 0.0
    %2067 = vmatpush.msra.mxu0 0.0
    %2068 = vmatpush.msra.mxu0 0.0
    %2069 = vmatpush.msra.mxu0 0.0
    %2070 = vmatpush.msra.mxu0 0.0
    %2071 = vmatpush.msra.mxu0 0.0
    %2072 = vmatpush.msra.mxu0 0.0
    %2073 = vmatpush.msra.mxu0 0.0
    %2074 = vmatpush.msra.mxu0 0.0
    %v2075 = vand.u32 %v1804, 4294901760
    %v2076 = vsub.f32 %v1804, %v2075
    %2077 = vmatpush.msra.mxu0 %v2076
    %v2078 = vand.u32 %v1802, 4294901760
    %v2079 = vsub.f32 %v1802, %v2078
    %2080 = vmatpush.msra.mxu0 %v2079
    %v2081 = vand.u32 %v1800, 4294901760
    %v2082 = vsub.f32 %v1800, %v2081
    %2083 = vmatpush.msra.mxu0 %v2082
    %v2084 = vand.u32 %v1798, 4294901760
    %v2085 = vsub.f32 %v1798, %v2084
    %2086 = vmatpush.msra.mxu0 %v2085
    %v2087 = vand.u32 %v1806, 4294901760
    %v2088 = vsub.f32 %v1806, %v2087
    %2089 = vmatmul.f32.gmra.mxu0 %v2088
    %v2090 = vpop.f32.mrf.mxu0
    %v2091 = vadd.f32 %v2061, %v2090
    %2092 = vdwg.mxu0
    %2093 = vmatpush.msra.mxu0 0.0
    %2094 = vmatpush.msra.mxu0 0.0
    %2095 = vmatpush.msra.mxu0 0.0
    %2096 = vmatpush.msra.mxu0 0.0
    %2097 = vmatpush.msra.mxu0 0.0
    %2098 = vmatpush.msra.mxu0 0.0
    %2099 = vmatpush.msra.mxu0 0.0
    %2100 = vmatpush.msra.mxu0 0.0
    %2101 = vmatpush.msra.mxu0 0.0
    %2102 = vmatpush.msra.mxu0 0.0
    %2103 = vmatpush.msra.mxu0 0.0
    %2104 = vmatpush.msra.mxu0 0.0
    %v2105 = vand.u32 %v1804, 4294901760
    %2106 = vmatpush.msra.mxu0 %v2105
    %v2107 = vand.u32 %v1802, 4294901760
    %2108 = vmatpush.msra.mxu0 %v2107
    %v2109 = vand.u32 %v1800, 4294901760
    %2110 = vmatpush.msra.mxu0 %v2109
    %v2111 = vand.u32 %v1798, 4294901760
    %2112 = vmatpush.msra.mxu0 %v2111
    %v2113 = vand.u32 %v1806, 4294901760
    %v2114 = vsub.f32 %v1806, %v2113
    %v2115 = vand.u32 %v2114, 4294901760
    %2116 = vmatmul.f32.gmra.mxu0 %v2115
    %v2117 = vpop.f32.mrf.mxu0
    %v2118 = vadd.f32 %v2091, %v2117
    %2119 = vdwg.mxu0
    %2120 = vmatpush.msra.mxu0 0.0
    %2121 = vmatpush.msra.mxu0 0.0
    %2122 = vmatpush.msra.mxu0 0.0
    %2123 = vmatpush.msra.mxu0 0.0
    %2124 = vmatpush.msra.mxu0 0.0
    %2125 = vmatpush.msra.mxu0 0.0
    %2126 = vmatpush.msra.mxu0 0.0
    %2127 = vmatpush.msra.mxu0 0.0
    %2128 = vmatpush.msra.mxu0 0.0
    %2129 = vmatpush.msra.mxu0 0.0
    %2130 = vmatpush.msra.mxu0 0.0
    %2131 = vmatpush.msra.mxu0 0.0
    %v2132 = vand.u32 %v1804, 4294901760
    %v2133 = vsub.f32 %v1804, %v2132
    %v2134 = vand.u32 %v2133, 4294901760
    %2135 = vmatpush.msra.mxu0 %v2134
    %v2136 = vand.u32 %v1802, 4294901760
    %v2137 = vsub.f32 %v1802, %v2136
    %v2138 = vand.u32 %v2137, 4294901760
    %2139 = vmatpush.msra.mxu0 %v2138
    %v2140 = vand.u32 %v1800, 4294901760
    %v2141 = vsub.f32 %v1800, %v2140
    %v2142 = vand.u32 %v2141, 4294901760
    %2143 = vmatpush.msra.mxu0 %v2142
    %v2144 = vand.u32 %v1798, 4294901760
    %v2145 = vsub.f32 %v1798, %v2144
    %v2146 = vand.u32 %v2145, 4294901760
    %2147 = vmatpush.msra.mxu0 %v2146
    %v2148 = vand.u32 %v1806, 4294901760
    %2149 = vmatmul.f32.gmra.mxu0 %v2148
    %v2150 = vpop.f32.mrf.mxu0
    %v2151 = vadd.f32 %v2118, %v2150
    %2152 = vdwg.mxu0
    %2153 = vmatpush.msra.mxu0 0.0
    %2154 = vmatpush.msra.mxu0 0.0
    %2155 = vmatpush.msra.mxu0 0.0
    %2156 = vmatpush.msra.mxu0 0.0
    %2157 = vmatpush.msra.mxu0 0.0
    %2158 = vmatpush.msra.mxu0 0.0
    %2159 = vmatpush.msra.mxu0 0.0
    %2160 = vmatpush.msra.mxu0 0.0
    %2161 = vmatpush.msra.mxu0 0.0
    %2162 = vmatpush.msra.mxu0 0.0
    %2163 = vmatpush.msra.mxu0 0.0
    %2164 = vmatpush.msra.mxu0 0.0
    %v2165 = vand.u32 %v1804, 4294901760
    %2166 = vmatpush.msra.mxu0 %v2165
    %v2167 = vand.u32 %v1802, 4294901760
    %2168 = vmatpush.msra.mxu0 %v2167
    %v2169 = vand.u32 %v1800, 4294901760
    %2170 = vmatpush.msra.mxu0 %v2169
    %v2171 = vand.u32 %v1798, 4294901760
    %2172 = vmatpush.msra.mxu0 %v2171
    %v2173 = vand.u32 %v1806, 4294901760
    %2174 = vmatmul.f32.gmra.mxu0 %v2173
    %v2175 = vpop.f32.mrf.mxu0
    %v2176 = vadd.f32 %v2151, %v2175
    %2177 = vdwg.mxu0
    %v2179 = vrot.slane %v2176, 1
    %v2180 = vrot.slane %v2176, 2
    %v2181 = vrot.slane %v2176, 3
    %v2182 = vrot.slane %v2176, 4
    %v2183 = vrot.slane %v2176, 5
    %v2184 = vrot.slane %v2176, 6
    %v2185 = vrot.slane %v2176, 7
    %v2186 = vperm.slane %v2176, 0
    %v2187 = vperm.slane %v2179, 0
    %v2188 = vperm.slane %v2180, 0
    %v2189 = vperm.slane %v2181, 0
    %v2190 = vperm.slane %v2182, 0
    %v2191 = vperm.slane %v2183, 0
    %v2192 = vperm.slane %v2184, 0
    %v2193 = vperm.slane %v2185, 0
    %v2202 = vadd.f32 %v834, %v2186
    %v2203 = vadd.f32 %v838, %v2186
    %v2204 = vadd.f32 %v842, %v2187
    %v2205 = vadd.f32 %v846, %v2187
    %v2206 = vadd.f32 %v850, %v2188
    %v2207 = vadd.f32 %v854, %v2188
    %v2208 = vadd.f32 %v858, %v2189
    %v2209 = vadd.f32 %v862, %v2189
    %v2210 = vadd.f32 %v866, %v2190
    %v2211 = vadd.f32 %v870, %v2190
    %v2212 = vadd.f32 %v874, %v2191
    %v2213 = vadd.f32 %v878, %v2191
    %v2214 = vadd.f32 %v882, %v2192
    %v2215 = vadd.f32 %v886, %v2192
    %v2216 = vadd.f32 %v890, %v2193
    %v2217 = vadd.f32 %v894, %v2193
    %v2218 = vtanh.pop %v2202
    %v2219 = vtanh.pop %v2203
    %v2220 = vtanh.pop %v2204
    %v2221 = vtanh.pop %v2205
    %v2222 = vtanh.pop %v2206
    %v2223 = vtanh.pop %v2207
    %v2224 = vtanh.pop %v2208
    %v2225 = vtanh.pop %v2209
    %v2226 = vtanh.pop %v2210
    %v2227 = vtanh.pop %v2211
    %v2228 = vtanh.pop %v2212
    %v2229 = vtanh.pop %v2213
    %v2230 = vtanh.pop %v2214
    %v2231 = vtanh.pop %v2215
    %v2232 = vtanh.pop %v2216
    %v2233 = vtanh.pop %v2217
    %v2235 = vperm.slane %v1792, 0
    %v2237 = vmul.f32 %v2218, %v2235
    %v2238 = vmul.f32 %v2219, %v2235
    %v2239 = vmul.f32 %v2220, %v2235
    %v2240 = vmul.f32 %v2221, %v2235
    %v2241 = vmul.f32 %v2222, %v2235
    %v2242 = vmul.f32 %v2223, %v2235
    %v2243 = vmul.f32 %v2224, %v2235
    %v2244 = vmul.f32 %v2225, %v2235
    %v2245 = vmul.f32 %v2226, %v2235
    %v2246 = vmul.f32 %v2227, %v2235
    %v2247 = vmul.f32 %v2228, %v2235
    %v2248 = vmul.f32 %v2229, %v2235
    %v2249 = vmul.f32 %v2230, %v2235
    %v2250 = vmul.f32 %v2231, %v2235
    %v2251 = vmul.f32 %v2232, %v2235
    %v2252 = vmul.f32 %v2233, %v2235
    %v2253 = vsel %vm197, %v2237, 0.0
    %2254 = vadd.xlane.f32.xlu0 %v2253
    %v2255 = vpop.xlane.xlu0 %2254
    %v2256 = vsel %vm197, %v2238, 0.0
    %2257 = vadd.xlane.f32.xlu0 %v2256
    %v2258 = vpop.xlane.xlu0 %2257
    %v2259 = vsel %vm197, %v2239, 0.0
    %2260 = vadd.xlane.f32.xlu0 %v2259
    %v2261 = vpop.xlane.xlu0 %2260
    %v2262 = vsel %vm197, %v2240, 0.0
    %2263 = vadd.xlane.f32.xlu0 %v2262
    %v2264 = vpop.xlane.xlu0 %2263
    %v2265 = vsel %vm197, %v2241, 0.0
    %2266 = vadd.xlane.f32.xlu0 %v2265
    %v2267 = vpop.xlane.xlu0 %2266
    %v2268 = vsel %vm197, %v2242, 0.0
    %2269 = vadd.xlane.f32.xlu0 %v2268
    %v2270 = vpop.xlane.xlu0 %2269
    %v2271 = vsel %vm197, %v2243, 0.0
    %2272 = vadd.xlane.f32.xlu0 %v2271
    %v2273 = vpop.xlane.xlu0 %2272
    %v2274 = vsel %vm197, %v2244, 0.0
    %2275 = vadd.xlane.f32.xlu0 %v2274
    %v2276 = vpop.xlane.xlu0 %2275
    %v2277 = vsel %vm197, %v2245, 0.0
    %2278 = vadd.xlane.f32.xlu0 %v2277
    %v2279 = vpop.xlane.xlu0 %2278
    %v2280 = vsel %vm197, %v2246, 0.0
    %2281 = vadd.xlane.f32.xlu0 %v2280
    %v2282 = vpop.xlane.xlu0 %2281
    %v2283 = vsel %vm197, %v2247, 0.0
    %2284 = vadd.xlane.f32.xlu0 %v2283
    %v2285 = vpop.xlane.xlu0 %2284
    %v2286 = vsel %vm197, %v2248, 0.0
    %2287 = vadd.xlane.f32.xlu0 %v2286
    %v2288 = vpop.xlane.xlu0 %2287
    %v2289 = vsel %vm197, %v2249, 0.0
    %2290 = vadd.xlane.f32.xlu0 %v2289
    %v2291 = vpop.xlane.xlu0 %2290
    %v2292 = vsel %vm197, %v2250, 0.0
    %2293 = vadd.xlane.f32.xlu0 %v2292
    %v2294 = vpop.xlane.xlu0 %2293
    %v2295 = vsel %vm197, %v2251, 0.0
    %2296 = vadd.xlane.f32.xlu0 %v2295
    %v2297 = vpop.xlane.xlu0 %2296
    %v2298 = vsel %vm197, %v2252, 0.0
    %2299 = vadd.xlane.f32.xlu0 %v2298
    %v2300 = vpop.xlane.xlu0 %2299
    %v2317 = vlaneseq
    %v2318 = vand.u32 %v2317, 127
    %v2319 = vperm.slane %v2255, %v2318
    %v2320 = vadd.s32 %v2318, 4294967288
    %v2321 = vperm.slane %v2258, %v2320
    %vm2322 = vcmask 130112
    %v2323 = vsel %vm2322, %v2321, %v2319
    %v2324 = vperm.slane %v2261, %v2318
    %v2325 = vperm.slane %v2264, %v2320
    %v2326 = vsel %vm2322, %v2325, %v2324
    %v2327 = vperm.slane %v2267, %v2318
    %v2328 = vperm.slane %v2270, %v2320
    %v2329 = vsel %vm2322, %v2328, %v2327
    %v2330 = vperm.slane %v2273, %v2318
    %v2331 = vperm.slane %v2276, %v2320
    %v2332 = vsel %vm2322, %v2331, %v2330
    %v2333 = vperm.slane %v2279, %v2318
    %v2334 = vperm.slane %v2282, %v2320
    %v2335 = vsel %vm2322, %v2334, %v2333
    %v2336 = vperm.slane %v2285, %v2318
    %v2337 = vperm.slane %v2288, %v2320
    %v2338 = vsel %vm2322, %v2337, %v2336
    %v2339 = vperm.slane %v2291, %v2318
    %v2340 = vperm.slane %v2294, %v2320
    %v2341 = vsel %vm2322, %v2340, %v2339
    %v2342 = vperm.slane %v2297, %v2318
    %v2343 = vperm.slane %v2300, %v2320
    %v2344 = vsel %vm2322, %v2343, %v2342
    %v2345 = vsel %vm1398, %v2326, %v2323
    %v2346 = vsel %vm1400, %v2329, %v2345
    %v2347 = vsel %vm1402, %v2332, %v2346
    %v2348 = vsel %vm1404, %v2335, %v2347
    %v2349 = vsel %vm1406, %v2338, %v2348
    %v2350 = vsel %vm1408, %v2341, %v2349
    %v2351 = vsel %vm1410, %v2344, %v2350
    %vm2353 = vcmask 130048
    %v2354 = vsel %vm2353, %v2351, -inf
    %2355 = vmax.xlane.f32.xlu0 %v2354
    %v2356 = vpop.xlane.xlu0 %2355
    %v2358 = vperm.slane %v2356, 0
    %v2359 = vperm.slane %v2356, 1
    %v2360 = vperm.slane %v2356, 2
    %v2361 = vperm.slane %v2356, 3
    %v2362 = vperm.slane %v2356, 4
    %v2363 = vperm.slane %v2356, 5
    %v2364 = vperm.slane %v2356, 6
    %v2365 = vperm.slane %v2356, 7
    %v2374 = vsub.f32 %v2255, %v2358
    %v2375 = vsub.f32 %v2258, %v2358
    %v2376 = vsub.f32 %v2261, %v2359
    %v2377 = vsub.f32 %v2264, %v2359
    %v2378 = vsub.f32 %v2267, %v2360
    %v2379 = vsub.f32 %v2270, %v2360
    %v2380 = vsub.f32 %v2273, %v2361
    %v2381 = vsub.f32 %v2276, %v2361
    %v2382 = vsub.f32 %v2279, %v2362
    %v2383 = vsub.f32 %v2282, %v2362
    %v2384 = vsub.f32 %v2285, %v2363
    %v2385 = vsub.f32 %v2288, %v2363
    %v2386 = vsub.f32 %v2291, %v2364
    %v2387 = vsub.f32 %v2294, %v2364
    %v2388 = vsub.f32 %v2297, %v2365
    %v2389 = vsub.f32 %v2300, %v2365
    %v2390 = vmul.f32 %v2374, 1.442695
    %v2391 = vpow.pop %v2390
    %v2392 = vmul.f32 %v2375, 1.442695
    %v2393 = vpow.pop %v2392
    %v2394 = vmul.f32 %v2376, 1.442695
    %v2395 = vpow.pop %v2394
    %v2396 = vmul.f32 %v2377, 1.442695
    %v2397 = vpow.pop %v2396
    %v2398 = vmul.f32 %v2378, 1.442695
    %v2399 = vpow.pop %v2398
    %v2400 = vmul.f32 %v2379, 1.442695
    %v2401 = vpow.pop %v2400
    %v2402 = vmul.f32 %v2380, 1.442695
    %v2403 = vpow.pop %v2402
    %v2404 = vmul.f32 %v2381, 1.442695
    %v2405 = vpow.pop %v2404
    %v2406 = vmul.f32 %v2382, 1.442695
    %v2407 = vpow.pop %v2406
    %v2408 = vmul.f32 %v2383, 1.442695
    %v2409 = vpow.pop %v2408
    %v2410 = vmul.f32 %v2384, 1.442695
    %v2411 = vpow.pop %v2410
    %v2412 = vmul.f32 %v2385, 1.442695
    %v2413 = vpow.pop %v2412
    %v2414 = vmul.f32 %v2386, 1.442695
    %v2415 = vpow.pop %v2414
    %v2416 = vmul.f32 %v2387, 1.442695
    %v2417 = vpow.pop %v2416
    %v2418 = vmul.f32 %v2388, 1.442695
    %v2419 = vpow.pop %v2418
    %v2420 = vmul.f32 %v2389, 1.442695
    %v2421 = vpow.pop %v2420
    %2438 = vset.pattern.permute.xlu0 0
    %2439 = vperm.xlu0 %2438, %v2391
    %v2440 = vpop.permute.xlu0 %2439
    %2441 = vset.pattern.permute.xlu0 0
    %2442 = vperm.xlu0 %2441, %v2393
    %v2443 = vpop.permute.xlu0 %2442
    %2444 = vset.pattern.permute.xlu0 0
    %2445 = vperm.xlu0 %2444, %v2395
    %v2446 = vpop.permute.xlu0 %2445
    %2447 = vset.pattern.permute.xlu0 0
    %2448 = vperm.xlu0 %2447, %v2397
    %v2449 = vpop.permute.xlu0 %2448
    %2450 = vset.pattern.permute.xlu0 0
    %2451 = vperm.xlu0 %2450, %v2399
    %v2452 = vpop.permute.xlu0 %2451
    %2453 = vset.pattern.permute.xlu0 0
    %2454 = vperm.xlu0 %2453, %v2401
    %v2455 = vpop.permute.xlu0 %2454
    %2456 = vset.pattern.permute.xlu0 0
    %2457 = vperm.xlu0 %2456, %v2403
    %v2458 = vpop.permute.xlu0 %2457
    %2459 = vset.pattern.permute.xlu0 0
    %2460 = vperm.xlu0 %2459, %v2405
    %v2461 = vpop.permute.xlu0 %2460
    %2462 = vset.pattern.permute.xlu0 0
    %2463 = vperm.xlu0 %2462, %v2407
    %v2464 = vpop.permute.xlu0 %2463
    %2465 = vset.pattern.permute.xlu0 0
    %2466 = vperm.xlu0 %2465, %v2409
    %v2467 = vpop.permute.xlu0 %2466
    %2468 = vset.pattern.permute.xlu0 0
    %2469 = vperm.xlu0 %2468, %v2411
    %v2470 = vpop.permute.xlu0 %2469
    %2471 = vset.pattern.permute.xlu0 0
    %2472 = vperm.xlu0 %2471, %v2413
    %v2473 = vpop.permute.xlu0 %2472
    %2474 = vset.pattern.permute.xlu0 0
    %2475 = vperm.xlu0 %2474, %v2415
    %v2476 = vpop.permute.xlu0 %2475
    %2477 = vset.pattern.permute.xlu0 0
    %2478 = vperm.xlu0 %2477, %v2417
    %v2479 = vpop.permute.xlu0 %2478
    %2480 = vset.pattern.permute.xlu0 0
    %2481 = vperm.xlu0 %2480, %v2419
    %v2482 = vpop.permute.xlu0 %2481
    %2483 = vset.pattern.permute.xlu0 0
    %2484 = vperm.xlu0 %2483, %v2421
    %v2485 = vpop.permute.xlu0 %2484
    %v2486 = vperm.slane %v2440, %v2318
    %v2487 = vperm.slane %v2443, %v2320
    %v2488 = vsel %vm2322, %v2487, %v2486
    %v2489 = vperm.slane %v2446, %v2318
    %v2490 = vperm.slane %v2449, %v2320
    %v2491 = vsel %vm2322, %v2490, %v2489
    %v2492 = vperm.slane %v2452, %v2318
    %v2493 = vperm.slane %v2455, %v2320
    %v2494 = vsel %vm2322, %v2493, %v2492
    %v2495 = vperm.slane %v2458, %v2318
    %v2496 = vperm.slane %v2461, %v2320
    %v2497 = vsel %vm2322, %v2496, %v2495
    %v2498 = vperm.slane %v2464, %v2318
    %v2499 = vperm.slane %v2467, %v2320
    %v2500 = vsel %vm2322, %v2499, %v2498
    %v2501 = vperm.slane %v2470, %v2318
    %v2502 = vperm.slane %v2473, %v2320
    %v2503 = vsel %vm2322, %v2502, %v2501
    %v2504 = vperm.slane %v2476, %v2318
    %v2505 = vperm.slane %v2479, %v2320
    %v2506 = vsel %vm2322, %v2505, %v2504
    %v2507 = vperm.slane %v2482, %v2318
    %v2508 = vperm.slane %v2485, %v2320
    %v2509 = vsel %vm2322, %v2508, %v2507
    %v2510 = vsel %vm1398, %v2491, %v2488
    %v2511 = vsel %vm1400, %v2494, %v2510
    %v2512 = vsel %vm1402, %v2497, %v2511
    %v2513 = vsel %vm1404, %v2500, %v2512
    %v2514 = vsel %vm1406, %v2503, %v2513
    %v2515 = vsel %vm1408, %v2506, %v2514
    %v2516 = vsel %vm1410, %v2509, %v2515
    %v2518 = vsel %vm2353, %v2516, 0.0
    %2519 = vadd.xlane.f32.xlu0 %v2518
    %v2520 = vpop.xlane.xlu0 %2519
    %v2522 = vperm.slane %v2520, 0
    %v2523 = vperm.slane %v2520, 1
    %v2524 = vperm.slane %v2520, 2
    %v2525 = vperm.slane %v2520, 3
    %v2526 = vperm.slane %v2520, 4
    %v2527 = vperm.slane %v2520, 5
    %v2528 = vperm.slane %v2520, 6
    %v2529 = vperm.slane %v2520, 7
    %v2538 = vrcp.pop %v2522
    %v2539 = vmul.f32 %v2522, %v2538
    %v2540 = vsub.f32 1.0, %v2539
    %v2541 = vmul.f32 %v2538, %v2540
    %v2542 = vadd.f32 %v2538, %v2541
    %vm2543 = vweird.f32 %v2522
    %vm2544 = vweird.f32 %v2538
    %vm2545 = vmor %vm2543, %vm2544
    %v2546 = vsel %vm2545, %v2538, %v2542
    %v2547 = vand.u32 2147483647, %v2522
    %vm2548 = vcmp.eq.f32.partialorder %v2547, 8.507059e+37
    %v2549 = vand.u32 %v2522, 2147483648
    %v2550 = vor.u32 1.1754944e-38, %v2549
    %v2551 = vsel %vm2548, %v2550, %v2546
    %v2552 = vmul.f32 %v2391, %v2551
    %v2553 = vmul.f32 %v2393, %v2551
    %v2554 = vrcp.pop %v2523
    %v2555 = vmul.f32 %v2523, %v2554
    %v2556 = vsub.f32 1.0, %v2555
    %v2557 = vmul.f32 %v2554, %v2556
    %v2558 = vadd.f32 %v2554, %v2557
    %vm2559 = vweird.f32 %v2523
    %vm2560 = vweird.f32 %v2554
    %vm2561 = vmor %vm2559, %vm2560
    %v2562 = vsel %vm2561, %v2554, %v2558
    %v2563 = vand.u32 2147483647, %v2523
    %vm2564 = vcmp.eq.f32.partialorder %v2563, 8.507059e+37
    %v2565 = vand.u32 %v2523, 2147483648
    %v2566 = vor.u32 1.1754944e-38, %v2565
    %v2567 = vsel %vm2564, %v2566, %v2562
    %v2568 = vmul.f32 %v2395, %v2567
    %v2569 = vmul.f32 %v2397, %v2567
    %v2570 = vrcp.pop %v2524
    %v2571 = vmul.f32 %v2524, %v2570
    %v2572 = vsub.f32 1.0, %v2571
    %v2573 = vmul.f32 %v2570, %v2572
    %v2574 = vadd.f32 %v2570, %v2573
    %vm2575 = vweird.f32 %v2524
    %vm2576 = vweird.f32 %v2570
    %vm2577 = vmor %vm2575, %vm2576
    %v2578 = vsel %vm2577, %v2570, %v2574
    %v2579 = vand.u32 2147483647, %v2524
    %vm2580 = vcmp.eq.f32.partialorder %v2579, 8.507059e+37
    %v2581 = vand.u32 %v2524, 2147483648
    %v2582 = vor.u32 1.1754944e-38, %v2581
    %v2583 = vsel %vm2580, %v2582, %v2578
    %v2584 = vmul.f32 %v2399, %v2583
    %v2585 = vmul.f32 %v2401, %v2583
    %v2586 = vrcp.pop %v2525
    %v2587 = vmul.f32 %v2525, %v2586
    %v2588 = vsub.f32 1.0, %v2587
    %v2589 = vmul.f32 %v2586, %v2588
    %v2590 = vadd.f32 %v2586, %v2589
    %vm2591 = vweird.f32 %v2525
    %vm2592 = vweird.f32 %v2586
    %vm2593 = vmor %vm2591, %vm2592
    %v2594 = vsel %vm2593, %v2586, %v2590
    %v2595 = vand.u32 2147483647, %v2525
    %vm2596 = vcmp.eq.f32.partialorder %v2595, 8.507059e+37
    %v2597 = vand.u32 %v2525, 2147483648
    %v2598 = vor.u32 1.1754944e-38, %v2597
    %v2599 = vsel %vm2596, %v2598, %v2594
    %v2600 = vmul.f32 %v2403, %v2599
    %v2601 = vmul.f32 %v2405, %v2599
    %v2602 = vrcp.pop %v2526
    %v2603 = vmul.f32 %v2526, %v2602
    %v2604 = vsub.f32 1.0, %v2603
    %v2605 = vmul.f32 %v2602, %v2604
    %v2606 = vadd.f32 %v2602, %v2605
    %vm2607 = vweird.f32 %v2526
    %vm2608 = vweird.f32 %v2602
    %vm2609 = vmor %vm2607, %vm2608
    %v2610 = vsel %vm2609, %v2602, %v2606
    %v2611 = vand.u32 2147483647, %v2526
    %vm2612 = vcmp.eq.f32.partialorder %v2611, 8.507059e+37
    %v2613 = vand.u32 %v2526, 2147483648
    %v2614 = vor.u32 1.1754944e-38, %v2613
    %v2615 = vsel %vm2612, %v2614, %v2610
    %v2616 = vmul.f32 %v2407, %v2615
    %v2617 = vmul.f32 %v2409, %v2615
    %v2618 = vrcp.pop %v2527
    %v2619 = vmul.f32 %v2527, %v2618
    %v2620 = vsub.f32 1.0, %v2619
    %v2621 = vmul.f32 %v2618, %v2620
    %v2622 = vadd.f32 %v2618, %v2621
    %vm2623 = vweird.f32 %v2527
    %vm2624 = vweird.f32 %v2618
    %vm2625 = vmor %vm2623, %vm2624
    %v2626 = vsel %vm2625, %v2618, %v2622
    %v2627 = vand.u32 2147483647, %v2527
    %vm2628 = vcmp.eq.f32.partialorder %v2627, 8.507059e+37
    %v2629 = vand.u32 %v2527, 2147483648
    %v2630 = vor.u32 1.1754944e-38, %v2629
    %v2631 = vsel %vm2628, %v2630, %v2626
    %v2632 = vmul.f32 %v2411, %v2631
    %v2633 = vmul.f32 %v2413, %v2631
    %v2634 = vrcp.pop %v2528
    %v2635 = vmul.f32 %v2528, %v2634
    %v2636 = vsub.f32 1.0, %v2635
    %v2637 = vmul.f32 %v2634, %v2636
    %v2638 = vadd.f32 %v2634, %v2637
    %vm2639 = vweird.f32 %v2528
    %vm2640 = vweird.f32 %v2634
    %vm2641 = vmor %vm2639, %vm2640
    %v2642 = vsel %vm2641, %v2634, %v2638
    %v2643 = vand.u32 2147483647, %v2528
    %vm2644 = vcmp.eq.f32.partialorder %v2643, 8.507059e+37
    %v2645 = vand.u32 %v2528, 2147483648
    %v2646 = vor.u32 1.1754944e-38, %v2645
    %v2647 = vsel %vm2644, %v2646, %v2642
    %v2648 = vmul.f32 %v2415, %v2647
    %v2649 = vmul.f32 %v2417, %v2647
    %v2650 = vrcp.pop %v2529
    %v2651 = vmul.f32 %v2529, %v2650
    %v2652 = vsub.f32 1.0, %v2651
    %v2653 = vmul.f32 %v2650, %v2652
    %v2654 = vadd.f32 %v2650, %v2653
    %vm2655 = vweird.f32 %v2529
    %vm2656 = vweird.f32 %v2650
    %vm2657 = vmor %vm2655, %vm2656
    %v2658 = vsel %vm2657, %v2650, %v2654
    %v2659 = vand.u32 2147483647, %v2529
    %vm2660 = vcmp.eq.f32.partialorder %v2659, 8.507059e+37
    %v2661 = vand.u32 %v2529, 2147483648
    %v2662 = vor.u32 1.1754944e-38, %v2661
    %v2663 = vsel %vm2660, %v2662, %v2658
    %v2664 = vmul.f32 %v2419, %v2663
    %v2665 = vmul.f32 %v2421, %v2663
    %2667 = vset.pattern.permute.xlu0 0
    %2668 = vperm.xlu0 %2667, %v2552
    %v2669 = vpop.permute.xlu0 %2668
    %2672 = vset.pattern.permute.xlu0 0
    %2673 = vperm.xlu0 %2672, %v2553
    %v2674 = vpop.permute.xlu0 %2673
    %2677 = vset.pattern.permute.xlu0 0
    %2678 = vperm.xlu0 %2677, %v2568
    %v2679 = vpop.permute.xlu0 %2678
    %2682 = vset.pattern.permute.xlu0 0
    %2683 = vperm.xlu0 %2682, %v2569
    %v2684 = vpop.permute.xlu0 %2683
    %2687 = vset.pattern.permute.xlu0 0
    %2688 = vperm.xlu0 %2687, %v2584
    %v2689 = vpop.permute.xlu0 %2688
    %2692 = vset.pattern.permute.xlu0 0
    %2693 = vperm.xlu0 %2692, %v2585
    %v2694 = vpop.permute.xlu0 %2693
    %2697 = vset.pattern.permute.xlu0 0
    %2698 = vperm.xlu0 %2697, %v2600
    %v2699 = vpop.permute.xlu0 %2698
    %2702 = vset.pattern.permute.xlu0 0
    %2703 = vperm.xlu0 %2702, %v2601
    %v2704 = vpop.permute.xlu0 %2703
    %2707 = vset.pattern.permute.xlu0 0
    %2708 = vperm.xlu0 %2707, %v2616
    %v2709 = vpop.permute.xlu0 %2708
    %2712 = vset.pattern.permute.xlu0 0
    %2713 = vperm.xlu0 %2712, %v2617
    %v2714 = vpop.permute.xlu0 %2713
    %2717 = vset.pattern.permute.xlu0 0
    %2718 = vperm.xlu0 %2717, %v2632
    %v2719 = vpop.permute.xlu0 %2718
    %2722 = vset.pattern.permute.xlu0 0
    %2723 = vperm.xlu0 %2722, %v2633
    %v2724 = vpop.permute.xlu0 %2723
    %2727 = vset.pattern.permute.xlu0 0
    %2728 = vperm.xlu0 %2727, %v2648
    %v2729 = vpop.permute.xlu0 %2728
    %2732 = vset.pattern.permute.xlu0 0
    %2733 = vperm.xlu0 %2732, %v2649
    %v2734 = vpop.permute.xlu0 %2733
    %2737 = vset.pattern.permute.xlu0 0
    %2738 = vperm.xlu0 %2737, %v2664
    %v2739 = vpop.permute.xlu0 %2738
    %2742 = vset.pattern.permute.xlu0 0
    %2743 = vperm.xlu0 %2742, %v2665
    %v2744 = vpop.permute.xlu0 %2743
    %v2746 = vmul.f32 %v173, %v2669
    %v2747 = vmul.f32 %v174, %v2674
    %v2748 = vmul.f32 %v175, %v2679
    %v2749 = vmul.f32 %v176, %v2684
    %v2750 = vmul.f32 %v177, %v2689
    %v2751 = vmul.f32 %v178, %v2694
    %v2752 = vmul.f32 %v179, %v2699
    %v2753 = vmul.f32 %v180, %v2704
    %v2754 = vmul.f32 %v181, %v2709
    %v2755 = vmul.f32 %v182, %v2714
    %v2756 = vmul.f32 %v183, %v2719
    %v2757 = vmul.f32 %v184, %v2724
    %v2758 = vmul.f32 %v185, %v2729
    %v2759 = vmul.f32 %v186, %v2734
    %v2760 = vmul.f32 %v187, %v2739
    %v2761 = vmul.f32 %v188, %v2744
    %v2762 = vsel %vm197, %v2746, 0.0
    %v2763 = vsel %vm197, %v2747, 0.0
    %v2764 = vadd.f32 %v2762, %v2763
    %v2765 = vrot.slane %v2764, 4
    %v2766 = vadd.f32 %v2764, %v2765
    %v2767 = vrot.slane %v2766, 2
    %v2768 = vadd.f32 %v2766, %v2767
    %v2769 = vrot.slane %v2768, 1
    %v2770 = vadd.f32 %v2768, %v2769
    %v2771 = vsel %vm197, %v2748, 0.0
    %v2772 = vsel %vm197, %v2749, 0.0
    %v2773 = vadd.f32 %v2771, %v2772
    %v2774 = vrot.slane %v2773, 4
    %v2775 = vadd.f32 %v2773, %v2774
    %v2776 = vrot.slane %v2775, 2
    %v2777 = vadd.f32 %v2775, %v2776
    %v2778 = vrot.slane %v2777, 1
    %v2779 = vadd.f32 %v2777, %v2778
    %v2780 = vsel %vm197, %v2750, 0.0
    %v2781 = vsel %vm197, %v2751, 0.0
    %v2782 = vadd.f32 %v2780, %v2781
    %v2783 = vrot.slane %v2782, 4
    %v2784 = vadd.f32 %v2782, %v2783
    %v2785 = vrot.slane %v2784, 2
    %v2786 = vadd.f32 %v2784, %v2785
    %v2787 = vrot.slane %v2786, 1
    %v2788 = vadd.f32 %v2786, %v2787
    %v2789 = vsel %vm197, %v2752, 0.0
    %v2790 = vsel %vm197, %v2753, 0.0
    %v2791 = vadd.f32 %v2789, %v2790
    %v2792 = vrot.slane %v2791, 4
    %v2793 = vadd.f32 %v2791, %v2792
    %v2794 = vrot.slane %v2793, 2
    %v2795 = vadd.f32 %v2793, %v2794
    %v2796 = vrot.slane %v2795, 1
    %v2797 = vadd.f32 %v2795, %v2796
    %v2798 = vsel %vm197, %v2754, 0.0
    %v2799 = vsel %vm197, %v2755, 0.0
    %v2800 = vadd.f32 %v2798, %v2799
    %v2801 = vrot.slane %v2800, 4
    %v2802 = vadd.f32 %v2800, %v2801
    %v2803 = vrot.slane %v2802, 2
    %v2804 = vadd.f32 %v2802, %v2803
    %v2805 = vrot.slane %v2804, 1
    %v2806 = vadd.f32 %v2804, %v2805
    %v2807 = vsel %vm197, %v2756, 0.0
    %v2808 = vsel %vm197, %v2757, 0.0
    %v2809 = vadd.f32 %v2807, %v2808
    %v2810 = vrot.slane %v2809, 4
    %v2811 = vadd.f32 %v2809, %v2810
    %v2812 = vrot.slane %v2811, 2
    %v2813 = vadd.f32 %v2811, %v2812
    %v2814 = vrot.slane %v2813, 1
    %v2815 = vadd.f32 %v2813, %v2814
    %v2816 = vsel %vm197, %v2758, 0.0
    %v2817 = vsel %vm197, %v2759, 0.0
    %v2818 = vadd.f32 %v2816, %v2817
    %v2819 = vrot.slane %v2818, 4
    %v2820 = vadd.f32 %v2818, %v2819
    %v2821 = vrot.slane %v2820, 2
    %v2822 = vadd.f32 %v2820, %v2821
    %v2823 = vrot.slane %v2822, 1
    %v2824 = vadd.f32 %v2822, %v2823
    %v2825 = vsel %vm197, %v2760, 0.0
    %v2826 = vsel %vm197, %v2761, 0.0
    %v2827 = vadd.f32 %v2825, %v2826
    %v2828 = vrot.slane %v2827, 4
    %v2829 = vadd.f32 %v2827, %v2828
    %v2830 = vrot.slane %v2829, 2
    %v2831 = vadd.f32 %v2829, %v2830
    %v2832 = vrot.slane %v2831, 1
    %v2833 = vadd.f32 %v2831, %v2832
    %v2834 = vld [vmem:[#allocation2] sm:$0xff]
    %v2835 = vadd.f32 %v2834, %v1991
    %v2844 = vsel %vm1398, %v2779, %v2770
    %v2845 = vsel %vm1400, %v2788, %v2844
    %v2846 = vsel %vm1402, %v2797, %v2845
    %v2847 = vsel %vm1404, %v2806, %v2846
    %v2848 = vsel %vm1406, %v2815, %v2847
    %v2849 = vsel %vm1408, %v2824, %v2848
    %v2850 = vsel %vm1410, %v2833, %v2849
    %v2851 = vsel %vm197, %v2850, 0
    %2853 = vmatpush.msra.mxu0 0.0
    %2854 = vmatpush.msra.mxu0 0.0
    %2855 = vmatpush.msra.mxu0 0.0
    %2856 = vmatpush.msra.mxu0 0.0
    %2857 = vmatpush.msra.mxu0 0.0
    %2858 = vmatpush.msra.mxu0 0.0
    %2859 = vmatpush.msra.mxu0 0.0
    %2860 = vmatpush.msra.mxu0 0.0
    %2861 = vmatpush.msra.mxu0 0.0
    %2862 = vmatpush.msra.mxu0 0.0
    %2863 = vmatpush.msra.mxu0 0.0
    %2864 = vmatpush.msra.mxu0 0.0
    %v2865 = vand.u32 %v1796, 4294901760
    %2866 = vmatpush.msra.mxu0 %v2865
    %v2867 = vand.u32 %v1795, 4294901760
    %2868 = vmatpush.msra.mxu0 %v2867
    %v2869 = vand.u32 %v1794, 4294901760
    %2870 = vmatpush.msra.mxu0 %v2869
    %v2871 = vand.u32 %v1793, 4294901760
    %2872 = vmatpush.msra.mxu0 %v2871
    %v2873 = vand.u32 %v2851, 4294901760
    %v2874 = vsub.f32 %v2851, %v2873
    %v2875 = vand.u32 %v2874, 4294901760
    %v2876 = vsub.f32 %v2874, %v2875
    %v2877 = vand.u32 %v2876, 4294901760
    %2878 = vmatmul.f32.gmra.mxu0 %v2877
    %v2879 = vpop.f32.mrf.mxu0
    %v2880 = vadd.f32 0.0, %v2879
    %2881 = vdwg.mxu0
    %2882 = vmatpush.msra.mxu0 0.0
    %2883 = vmatpush.msra.mxu0 0.0
    %2884 = vmatpush.msra.mxu0 0.0
    %2885 = vmatpush.msra.mxu0 0.0
    %2886 = vmatpush.msra.mxu0 0.0
    %2887 = vmatpush.msra.mxu0 0.0
    %2888 = vmatpush.msra.mxu0 0.0
    %2889 = vmatpush.msra.mxu0 0.0
    %2890 = vmatpush.msra.mxu0 0.0
    %2891 = vmatpush.msra.mxu0 0.0
    %2892 = vmatpush.msra.mxu0 0.0
    %2893 = vmatpush.msra.mxu0 0.0
    %v2894 = vand.u32 %v1796, 4294901760
    %v2895 = vsub.f32 %v1796, %v2894
    %v2896 = vand.u32 %v2895, 4294901760
    %v2897 = vsub.f32 %v2895, %v2896
    %v2898 = vand.u32 %v2897, 4294901760
    %2899 = vmatpush.msra.mxu0 %v2898
    %v2900 = vand.u32 %v1795, 4294901760
    %v2901 = vsub.f32 %v1795, %v2900
    %v2902 = vand.u32 %v2901, 4294901760
    %v2903 = vsub.f32 %v2901, %v2902
    %v2904 = vand.u32 %v2903, 4294901760
    %2905 = vmatpush.msra.mxu0 %v2904
    %v2906 = vand.u32 %v1794, 4294901760
    %v2907 = vsub.f32 %v1794, %v2906
    %v2908 = vand.u32 %v2907, 4294901760
    %v2909 = vsub.f32 %v2907, %v2908
    %v2910 = vand.u32 %v2909, 4294901760
    %2911 = vmatpush.msra.mxu0 %v2910
    %v2912 = vand.u32 %v1793, 4294901760
    %v2913 = vsub.f32 %v1793, %v2912
    %v2914 = vand.u32 %v2913, 4294901760
    %v2915 = vsub.f32 %v2913, %v2914
    %v2916 = vand.u32 %v2915, 4294901760
    %2917 = vmatpush.msra.mxu0 %v2916
    %v2918 = vand.u32 %v2851, 4294901760
    %2919 = vmatmul.f32.gmra.mxu0 %v2918
    %v2920 = vpop.f32.mrf.mxu0
    %v2921 = vadd.f32 %v2880, %v2920
    %2922 = vdwg.mxu0
    %2923 = vmatpush.msra.mxu0 0.0
    %2924 = vmatpush.msra.mxu0 0.0
    %2925 = vmatpush.msra.mxu0 0.0
    %2926 = vmatpush.msra.mxu0 0.0
    %2927 = vmatpush.msra.mxu0 0.0
    %2928 = vmatpush.msra.mxu0 0.0
    %2929 = vmatpush.msra.mxu0 0.0
    %2930 = vmatpush.msra.mxu0 0.0
    %2931 = vmatpush.msra.mxu0 0.0
    %2932 = vmatpush.msra.mxu0 0.0
    %2933 = vmatpush.msra.mxu0 0.0
    %2934 = vmatpush.msra.mxu0 0.0
    %v2935 = vand.u32 %v1796, 4294901760
    %v2936 = vsub.f32 %v1796, %v2935
    %2937 = vmatpush.msra.mxu0 %v2936
    %v2938 = vand.u32 %v1795, 4294901760
    %v2939 = vsub.f32 %v1795, %v2938
    %2940 = vmatpush.msra.mxu0 %v2939
    %v2941 = vand.u32 %v1794, 4294901760
    %v2942 = vsub.f32 %v1794, %v2941
    %2943 = vmatpush.msra.mxu0 %v2942
    %v2944 = vand.u32 %v1793, 4294901760
    %v2945 = vsub.f32 %v1793, %v2944
    %2946 = vmatpush.msra.mxu0 %v2945
    %v2947 = vand.u32 %v2851, 4294901760
    %v2948 = vsub.f32 %v2851, %v2947
    %2949 = vmatmul.f32.gmra.mxu0 %v2948
    %v2950 = vpop.f32.mrf.mxu0
    %v2951 = vadd.f32 %v2921, %v2950
    %2952 = vdwg.mxu0
    %2953 = vmatpush.msra.mxu0 0.0
    %2954 = vmatpush.msra.mxu0 0.0
    %2955 = vmatpush.msra.mxu0 0.0
    %2956 = vmatpush.msra.mxu0 0.0
    %2957 = vmatpush.msra.mxu0 0.0
    %2958 = vmatpush.msra.mxu0 0.0
    %2959 = vmatpush.msra.mxu0 0.0
    %2960 = vmatpush.msra.mxu0 0.0
    %2961 = vmatpush.msra.mxu0 0.0
    %2962 = vmatpush.msra.mxu0 0.0
    %2963 = vmatpush.msra.mxu0 0.0
    %2964 = vmatpush.msra.mxu0 0.0
    %v2965 = vand.u32 %v1796, 4294901760
    %2966 = vmatpush.msra.mxu0 %v2965
    %v2967 = vand.u32 %v1795, 4294901760
    %2968 = vmatpush.msra.mxu0 %v2967
    %v2969 = vand.u32 %v1794, 4294901760
    %2970 = vmatpush.msra.mxu0 %v2969
    %v2971 = vand.u32 %v1793, 4294901760
    %2972 = vmatpush.msra.mxu0 %v2971
    %v2973 = vand.u32 %v2851, 4294901760
    %v2974 = vsub.f32 %v2851, %v2973
    %v2975 = vand.u32 %v2974, 4294901760
    %2976 = vmatmul.f32.gmra.mxu0 %v2975
    %v2977 = vpop.f32.mrf.mxu0
    %v2978 = vadd.f32 %v2951, %v2977
    %2979 = vdwg.mxu0
    %2980 = vmatpush.msra.mxu0 0.0
    %2981 = vmatpush.msra.mxu0 0.0
    %2982 = vmatpush.msra.mxu0 0.0
    %2983 = vmatpush.msra.mxu0 0.0
    %2984 = vmatpush.msra.mxu0 0.0
    %2985 = vmatpush.msra.mxu0 0.0
    %2986 = vmatpush.msra.mxu0 0.0
    %2987 = vmatpush.msra.mxu0 0.0
    %2988 = vmatpush.msra.mxu0 0.0
    %2989 = vmatpush.msra.mxu0 0.0
    %2990 = vmatpush.msra.mxu0 0.0
    %2991 = vmatpush.msra.mxu0 0.0
    %v2992 = vand.u32 %v1796, 4294901760
    %v2993 = vsub.f32 %v1796, %v2992
    %v2994 = vand.u32 %v2993, 4294901760
    %2995 = vmatpush.msra.mxu0 %v2994
    %v2996 = vand.u32 %v1795, 4294901760
    %v2997 = vsub.f32 %v1795, %v2996
    %v2998 = vand.u32 %v2997, 4294901760
    %2999 = vmatpush.msra.mxu0 %v2998
    %v3000 = vand.u32 %v1794, 4294901760
    %v3001 = vsub.f32 %v1794, %v3000
    %v3002 = vand.u32 %v3001, 4294901760
    %3003 = vmatpush.msra.mxu0 %v3002
    %v3004 = vand.u32 %v1793, 4294901760
    %v3005 = vsub.f32 %v1793, %v3004
    %v3006 = vand.u32 %v3005, 4294901760
    %3007 = vmatpush.msra.mxu0 %v3006
    %v3008 = vand.u32 %v2851, 4294901760
    %3009 = vmatmul.f32.gmra.mxu0 %v3008
    %v3010 = vpop.f32.mrf.mxu0
    %v3011 = vadd.f32 %v2978, %v3010
    %3012 = vdwg.mxu0
    %3013 = vmatpush.msra.mxu0 0.0
    %3014 = vmatpush.msra.mxu0 0.0
    %3015 = vmatpush.msra.mxu0 0.0
    %3016 = vmatpush.msra.mxu0 0.0
    %3017 = vmatpush.msra.mxu0 0.0
    %3018 = vmatpush.msra.mxu0 0.0
    %3019 = vmatpush.msra.mxu0 0.0
    %3020 = vmatpush.msra.mxu0 0.0
    %3021 = vmatpush.msra.mxu0 0.0
    %3022 = vmatpush.msra.mxu0 0.0
    %3023 = vmatpush.msra.mxu0 0.0
    %3024 = vmatpush.msra.mxu0 0.0
    %v3025 = vand.u32 %v1796, 4294901760
    %3026 = vmatpush.msra.mxu0 %v3025
    %v3027 = vand.u32 %v1795, 4294901760
    %3028 = vmatpush.msra.mxu0 %v3027
    %v3029 = vand.u32 %v1794, 4294901760
    %3030 = vmatpush.msra.mxu0 %v3029
    %v3031 = vand.u32 %v1793, 4294901760
    %3032 = vmatpush.msra.mxu0 %v3031
    %v3033 = vand.u32 %v2851, 4294901760
    %3034 = vmatmul.f32.gmra.mxu0 %v3033
    %v3035 = vpop.f32.mrf.mxu0
    %v3036 = vadd.f32 %v3011, %v3035
    %3037 = vdwg.mxu0
    %v3038 = vadd.f32 %v2835, %v3036
    %v3039 = vxor.u32 %v3038, 2147483648
    %v3040 = vmul.f32 %v3039, 1.442695
    %v3041 = vpow.pop %v3040
    %v3042 = vadd.f32 %v3041, 1.0
    %v3043 = vrcp.pop %v3042
    %v3044 = vmul.f32 %v3042, %v3043
    %v3045 = vsub.f32 1.0, %v3044
    %v3046 = vmul.f32 %v3043, %v3045
    %v3047 = vadd.f32 %v3043, %v3046
    %vm3048 = vweird.f32 %v3042
    %vm3049 = vweird.f32 %v3043
    %vm3050 = vmor %vm3048, %vm3049
    %v3051 = vsel %vm3050, %v3043, %v3047
    %v3052 = vand.u32 2147483647, %v3042
    %vm3053 = vcmp.eq.f32.partialorder %v3052, 8.507059e+37
    %v3054 = vand.u32 %v3042, 2147483648
    %v3055 = vor.u32 1.1754944e-38, %v3054
    %v3056 = vsel %vm3053, %v3055, %v3051
    %v3057 = vmul.f32 1.0, %v3056
    %v3058 = vtanh.pop %v3038
    %3060 = vrot.lane.b32.xlu0 %v1790, 32
    %v3061 = vpop.permute.xlu0 %3060
    %v3063 = vmul.f32 %v3057, %v3061
    %3065 = vrot.lane.b32.xlu0 %v3058, 64
    %v3066 = vpop.permute.xlu0 %3065
    %v3068 = vmul.f32 %v3057, %v3066
    %3070 = vrot.lane.b32.xlu0 %v3068, 32
    %v3071 = vpop.permute.xlu0 %3070
    %v3073 = vadd.f32 %v3063, %v3071
    %v3074 = vtanh.pop %v3073
    %3076 = vrot.lane.b32.xlu0 %v3074, 64
    %v3077 = vpop.permute.xlu0 %3076
    %v3079 = vmul.f32 %v3057, %v3077
    %3081 = vrot.lane.b32.xlu0 %v3079, 32
    %v3082 = vpop.permute.xlu0 %3081
    %3084 = vst.msk [vmem:[#allocation17] sm:$0xff] %vm197, %v3082
    %v3085 = vperm.slane %v2669, %v2318
    %v3086 = vperm.slane %v2674, %v2320
    %v3087 = vsel %vm2322, %v3086, %v3085
    %v3088 = vperm.slane %v2679, %v2318
    %v3089 = vperm.slane %v2684, %v2320
    %v3090 = vsel %vm2322, %v3089, %v3088
    %v3091 = vperm.slane %v2689, %v2318
    %v3092 = vperm.slane %v2694, %v2320
    %v3093 = vsel %vm2322, %v3092, %v3091
    %v3094 = vperm.slane %v2699, %v2318
    %v3095 = vperm.slane %v2704, %v2320
    %v3096 = vsel %vm2322, %v3095, %v3094
    %v3097 = vperm.slane %v2709, %v2318
    %v3098 = vperm.slane %v2714, %v2320
    %v3099 = vsel %vm2322, %v3098, %v3097
    %v3100 = vperm.slane %v2719, %v2318
    %v3101 = vperm.slane %v2724, %v2320
    %v3102 = vsel %vm2322, %v3101, %v3100
    %v3103 = vperm.slane %v2729, %v2318
    %v3104 = vperm.slane %v2734, %v2320
    %v3105 = vsel %vm2322, %v3104, %v3103
    %v3106 = vperm.slane %v2739, %v2318
    %v3107 = vperm.slane %v2744, %v2320
    %v3108 = vsel %vm2322, %v3107, %v3106
    %v3109 = vsel %vm1398, %v3090, %v3087
    %v3110 = vsel %vm1400, %v3093, %v3109
    %v3111 = vsel %vm1402, %v3096, %v3110
    %v3112 = vsel %vm1404, %v3099, %v3111
    %v3113 = vsel %vm1406, %v3102, %v3112
    %v3114 = vsel %vm1408, %v3105, %v3113
    %v3115 = vsel %vm1410, %v3108, %v3114
    %3117 = vst.msk [vmem:[#allocation18] sm:$0xff] %vm2353, %v3115
    %v3118 = vsel %vm197, %v3082, 0
    %3120 = vmatpush.msra.mxu0 0.0
    %3121 = vmatpush.msra.mxu0 0.0
    %3122 = vmatpush.msra.mxu0 0.0
    %3123 = vmatpush.msra.mxu0 0.0
    %3124 = vmatpush.msra.mxu0 0.0
    %3125 = vmatpush.msra.mxu0 0.0
    %3126 = vmatpush.msra.mxu0 0.0
    %3127 = vmatpush.msra.mxu0 0.0
    %3128 = vmatpush.msra.mxu0 0.0
    %3129 = vmatpush.msra.mxu0 0.0
    %3130 = vmatpush.msra.mxu0 0.0
    %3131 = vmatpush.msra.mxu0 0.0
    %v3132 = vand.u32 %v1803, 4294901760
    %3133 = vmatpush.msra.mxu0 %v3132
    %v3134 = vand.u32 %v1801, 4294901760
    %3135 = vmatpush.msra.mxu0 %v3134
    %v3136 = vand.u32 %v1799, 4294901760
    %3137 = vmatpush.msra.mxu0 %v3136
    %v3138 = vand.u32 %v1797, 4294901760
    %3139 = vmatpush.msra.mxu0 %v3138
    %v3140 = vand.u32 %v3118, 4294901760
    %v3141 = vsub.f32 %v3118, %v3140
    %v3142 = vand.u32 %v3141, 4294901760
    %v3143 = vsub.f32 %v3141, %v3142
    %v3144 = vand.u32 %v3143, 4294901760
    %3145 = vmatmul.f32.gmra.mxu0 %v3144
    %v3146 = vpop.f32.mrf.mxu0
    %v3147 = vadd.f32 0.0, %v3146
    %3148 = vdwg.mxu0
    %3149 = vmatpush.msra.mxu0 0.0
    %3150 = vmatpush.msra.mxu0 0.0
    %3151 = vmatpush.msra.mxu0 0.0
    %3152 = vmatpush.msra.mxu0 0.0
    %3153 = vmatpush.msra.mxu0 0.0
    %3154 = vmatpush.msra.mxu0 0.0
    %3155 = vmatpush.msra.mxu0 0.0
    %3156 = vmatpush.msra.mxu0 0.0
    %3157 = vmatpush.msra.mxu0 0.0
    %3158 = vmatpush.msra.mxu0 0.0
    %3159 = vmatpush.msra.mxu0 0.0
    %3160 = vmatpush.msra.mxu0 0.0
    %v3161 = vand.u32 %v1803, 4294901760
    %v3162 = vsub.f32 %v1803, %v3161
    %v3163 = vand.u32 %v3162, 4294901760
    %v3164 = vsub.f32 %v3162, %v3163
    %v3165 = vand.u32 %v3164, 4294901760
    %3166 = vmatpush.msra.mxu0 %v3165
    %v3167 = vand.u32 %v1801, 4294901760
    %v3168 = vsub.f32 %v1801, %v3167
    %v3169 = vand.u32 %v3168, 4294901760
    %v3170 = vsub.f32 %v3168, %v3169
    %v3171 = vand.u32 %v3170, 4294901760
    %3172 = vmatpush.msra.mxu0 %v3171
    %v3173 = vand.u32 %v1799, 4294901760
    %v3174 = vsub.f32 %v1799, %v3173
    %v3175 = vand.u32 %v3174, 4294901760
    %v3176 = vsub.f32 %v3174, %v3175
    %v3177 = vand.u32 %v3176, 4294901760
    %3178 = vmatpush.msra.mxu0 %v3177
    %v3179 = vand.u32 %v1797, 4294901760
    %v3180 = vsub.f32 %v1797, %v3179
    %v3181 = vand.u32 %v3180, 4294901760
    %v3182 = vsub.f32 %v3180, %v3181
    %v3183 = vand.u32 %v3182, 4294901760
    %3184 = vmatpush.msra.mxu0 %v3183
    %v3185 = vand.u32 %v3118, 4294901760
    %3186 = vmatmul.f32.gmra.mxu0 %v3185
    %v3187 = vpop.f32.mrf.mxu0
    %v3188 = vadd.f32 %v3147, %v3187
    %3189 = vdwg.mxu0
    %3190 = vmatpush.msra.mxu0 0.0
    %3191 = vmatpush.msra.mxu0 0.0
    %3192 = vmatpush.msra.mxu0 0.0
    %3193 = vmatpush.msra.mxu0 0.0
    %3194 = vmatpush.msra.mxu0 0.0
    %3195 = vmatpush.msra.mxu0 0.0
    %3196 = vmatpush.msra.mxu0 0.0
    %3197 = vmatpush.msra.mxu0 0.0
    %3198 = vmatpush.msra.mxu0 0.0
    %3199 = vmatpush.msra.mxu0 0.0
    %3200 = vmatpush.msra.mxu0 0.0
    %3201 = vmatpush.msra.mxu0 0.0
    %v3202 = vand.u32 %v1803, 4294901760
    %v3203 = vsub.f32 %v1803, %v3202
    %3204 = vmatpush.msra.mxu0 %v3203
    %v3205 = vand.u32 %v1801, 4294901760
    %v3206 = vsub.f32 %v1801, %v3205
    %3207 = vmatpush.msra.mxu0 %v3206
    %v3208 = vand.u32 %v1799, 4294901760
    %v3209 = vsub.f32 %v1799, %v3208
    %3210 = vmatpush.msra.mxu0 %v3209
    %v3211 = vand.u32 %v1797, 4294901760
    %v3212 = vsub.f32 %v1797, %v3211
    %3213 = vmatpush.msra.mxu0 %v3212
    %v3214 = vand.u32 %v3118, 4294901760
    %v3215 = vsub.f32 %v3118, %v3214
    %3216 = vmatmul.f32.gmra.mxu0 %v3215
    %v3217 = vpop.f32.mrf.mxu0
    %v3218 = vadd.f32 %v3188, %v3217
    %3219 = vdwg.mxu0
    %3220 = vmatpush.msra.mxu0 0.0
    %3221 = vmatpush.msra.mxu0 0.0
    %3222 = vmatpush.msra.mxu0 0.0
    %3223 = vmatpush.msra.mxu0 0.0
    %3224 = vmatpush.msra.mxu0 0.0
    %3225 = vmatpush.msra.mxu0 0.0
    %3226 = vmatpush.msra.mxu0 0.0
    %3227 = vmatpush.msra.mxu0 0.0
    %3228 = vmatpush.msra.mxu0 0.0
    %3229 = vmatpush.msra.mxu0 0.0
    %3230 = vmatpush.msra.mxu0 0.0
    %3231 = vmatpush.msra.mxu0 0.0
    %v3232 = vand.u32 %v1803, 4294901760
    %3233 = vmatpush.msra.mxu0 %v3232
    %v3234 = vand.u32 %v1801, 4294901760
    %3235 = vmatpush.msra.mxu0 %v3234
    %v3236 = vand.u32 %v1799, 4294901760
    %3237 = vmatpush.msra.mxu0 %v3236
    %v3238 = vand.u32 %v1797, 4294901760
    %3239 = vmatpush.msra.mxu0 %v3238
    %v3240 = vand.u32 %v3118, 4294901760
    %v3241 = vsub.f32 %v3118, %v3240
    %v3242 = vand.u32 %v3241, 4294901760
    %3243 = vmatmul.f32.gmra.mxu0 %v3242
    %v3244 = vpop.f32.mrf.mxu0
    %v3245 = vadd.f32 %v3218, %v3244
    %3246 = vdwg.mxu0
    %3247 = vmatpush.msra.mxu0 0.0
    %3248 = vmatpush.msra.mxu0 0.0
    %3249 = vmatpush.msra.mxu0 0.0
    %3250 = vmatpush.msra.mxu0 0.0
    %3251 = vmatpush.msra.mxu0 0.0
    %3252 = vmatpush.msra.mxu0 0.0
    %3253 = vmatpush.msra.mxu0 0.0
    %3254 = vmatpush.msra.mxu0 0.0
    %3255 = vmatpush.msra.mxu0 0.0
    %3256 = vmatpush.msra.mxu0 0.0
    %3257 = vmatpush.msra.mxu0 0.0
    %3258 = vmatpush.msra.mxu0 0.0
    %v3259 = vand.u32 %v1803, 4294901760
    %v3260 = vsub.f32 %v1803, %v3259
    %v3261 = vand.u32 %v3260, 4294901760
    %3262 = vmatpush.msra.mxu0 %v3261
    %v3263 = vand.u32 %v1801, 4294901760
    %v3264 = vsub.f32 %v1801, %v3263
    %v3265 = vand.u32 %v3264, 4294901760
    %3266 = vmatpush.msra.mxu0 %v3265
    %v3267 = vand.u32 %v1799, 4294901760
    %v3268 = vsub.f32 %v1799, %v3267
    %v3269 = vand.u32 %v3268, 4294901760
    %3270 = vmatpush.msra.mxu0 %v3269
    %v3271 = vand.u32 %v1797, 4294901760
    %v3272 = vsub.f32 %v1797, %v3271
    %v3273 = vand.u32 %v3272, 4294901760
    %3274 = vmatpush.msra.mxu0 %v3273
    %v3275 = vand.u32 %v3118, 4294901760
    %3276 = vmatmul.f32.gmra.mxu0 %v3275
    %v3277 = vpop.f32.mrf.mxu0
    %v3278 = vadd.f32 %v3245, %v3277
    %3279 = vdwg.mxu0
    %3280 = vmatpush.msra.mxu0 0.0
    %3281 = vmatpush.msra.mxu0 0.0
    %3282 = vmatpush.msra.mxu0 0.0
    %3283 = vmatpush.msra.mxu0 0.0
    %3284 = vmatpush.msra.mxu0 0.0
    %3285 = vmatpush.msra.mxu0 0.0
    %3286 = vmatpush.msra.mxu0 0.0
    %3287 = vmatpush.msra.mxu0 0.0
    %3288 = vmatpush.msra.mxu0 0.0
    %3289 = vmatpush.msra.mxu0 0.0
    %3290 = vmatpush.msra.mxu0 0.0
    %3291 = vmatpush.msra.mxu0 0.0
    %v3292 = vand.u32 %v1803, 4294901760
    %3293 = vmatpush.msra.mxu0 %v3292
    %v3294 = vand.u32 %v1801, 4294901760
    %3295 = vmatpush.msra.mxu0 %v3294
    %v3296 = vand.u32 %v1799, 4294901760
    %3297 = vmatpush.msra.mxu0 %v3296
    %v3298 = vand.u32 %v1797, 4294901760
    %3299 = vmatpush.msra.mxu0 %v3298
    %v3300 = vand.u32 %v3118, 4294901760
    %3301 = vmatmul.f32.gmra.mxu0 %v3300
    %v3302 = vpop.f32.mrf.mxu0
    %v3303 = vadd.f32 %v3278, %v3302
    %3304 = vdwg.mxu0
    %3305 = vmatpush.msra.mxu0 0.0
    %3306 = vmatpush.msra.mxu0 0.0
    %3307 = vmatpush.msra.mxu0 0.0
    %3308 = vmatpush.msra.mxu0 0.0
    %3309 = vmatpush.msra.mxu0 0.0
    %3310 = vmatpush.msra.mxu0 0.0
    %3311 = vmatpush.msra.mxu0 0.0
    %3312 = vmatpush.msra.mxu0 0.0
    %3313 = vmatpush.msra.mxu0 0.0
    %3314 = vmatpush.msra.mxu0 0.0
    %3315 = vmatpush.msra.mxu0 0.0
    %3316 = vmatpush.msra.mxu0 0.0
    %v3317 = vand.u32 %v1804, 4294901760
    %3318 = vmatpush.msra.mxu0 %v3317
    %v3319 = vand.u32 %v1802, 4294901760
    %3320 = vmatpush.msra.mxu0 %v3319
    %v3321 = vand.u32 %v1800, 4294901760
    %3322 = vmatpush.msra.mxu0 %v3321
    %v3323 = vand.u32 %v1798, 4294901760
    %3324 = vmatpush.msra.mxu0 %v3323
    %v3325 = vand.u32 %v3118, 4294901760
    %v3326 = vsub.f32 %v3118, %v3325
    %v3327 = vand.u32 %v3326, 4294901760
    %v3328 = vsub.f32 %v3326, %v3327
    %v3329 = vand.u32 %v3328, 4294901760
    %3330 = vmatmul.f32.gmra.mxu0 %v3329
    %v3331 = vpop.f32.mrf.mxu0
    %v3332 = vadd.f32 0.0, %v3331
    %3333 = vdwg.mxu0
    %3334 = vmatpush.msra.mxu0 0.0
    %3335 = vmatpush.msra.mxu0 0.0
    %3336 = vmatpush.msra.mxu0 0.0
    %3337 = vmatpush.msra.mxu0 0.0
    %3338 = vmatpush.msra.mxu0 0.0
    %3339 = vmatpush.msra.mxu0 0.0
    %3340 = vmatpush.msra.mxu0 0.0
    %3341 = vmatpush.msra.mxu0 0.0
    %3342 = vmatpush.msra.mxu0 0.0
    %3343 = vmatpush.msra.mxu0 0.0
    %3344 = vmatpush.msra.mxu0 0.0
    %3345 = vmatpush.msra.mxu0 0.0
    %v3346 = vand.u32 %v1804, 4294901760
    %v3347 = vsub.f32 %v1804, %v3346
    %v3348 = vand.u32 %v3347, 4294901760
    %v3349 = vsub.f32 %v3347, %v3348
    %v3350 = vand.u32 %v3349, 4294901760
    %3351 = vmatpush.msra.mxu0 %v3350
    %v3352 = vand.u32 %v1802, 4294901760
    %v3353 = vsub.f32 %v1802, %v3352
    %v3354 = vand.u32 %v3353, 4294901760
    %v3355 = vsub.f32 %v3353, %v3354
    %v3356 = vand.u32 %v3355, 4294901760
    %3357 = vmatpush.msra.mxu0 %v3356
    %v3358 = vand.u32 %v1800, 4294901760
    %v3359 = vsub.f32 %v1800, %v3358
    %v3360 = vand.u32 %v3359, 4294901760
    %v3361 = vsub.f32 %v3359, %v3360
    %v3362 = vand.u32 %v3361, 4294901760
    %3363 = vmatpush.msra.mxu0 %v3362
    %v3364 = vand.u32 %v1798, 4294901760
    %v3365 = vsub.f32 %v1798, %v3364
    %v3366 = vand.u32 %v3365, 4294901760
    %v3367 = vsub.f32 %v3365, %v3366
    %v3368 = vand.u32 %v3367, 4294901760
    %3369 = vmatpush.msra.mxu0 %v3368
    %v3370 = vand.u32 %v3118, 4294901760
    %3371 = vmatmul.f32.gmra.mxu0 %v3370
    %v3372 = vpop.f32.mrf.mxu0
    %v3373 = vadd.f32 %v3332, %v3372
    %3374 = vdwg.mxu0
    %3375 = vmatpush.msra.mxu0 0.0
    %3376 = vmatpush.msra.mxu0 0.0
    %3377 = vmatpush.msra.mxu0 0.0
    %3378 = vmatpush.msra.mxu0 0.0
    %3379 = vmatpush.msra.mxu0 0.0
    %3380 = vmatpush.msra.mxu0 0.0
    %3381 = vmatpush.msra.mxu0 0.0
    %3382 = vmatpush.msra.mxu0 0.0
    %3383 = vmatpush.msra.mxu0 0.0
    %3384 = vmatpush.msra.mxu0 0.0
    %3385 = vmatpush.msra.mxu0 0.0
    %3386 = vmatpush.msra.mxu0 0.0
    %v3387 = vand.u32 %v1804, 4294901760
    %v3388 = vsub.f32 %v1804, %v3387
    %3389 = vmatpush.msra.mxu0 %v3388
    %v3390 = vand.u32 %v1802, 4294901760
    %v3391 = vsub.f32 %v1802, %v3390
    %3392 = vmatpush.msra.mxu0 %v3391
    %v3393 = vand.u32 %v1800, 4294901760
    %v3394 = vsub.f32 %v1800, %v3393
    %3395 = vmatpush.msra.mxu0 %v3394
    %v3396 = vand.u32 %v1798, 4294901760
    %v3397 = vsub.f32 %v1798, %v3396
    %3398 = vmatpush.msra.mxu0 %v3397
    %v3399 = vand.u32 %v3118, 4294901760
    %v3400 = vsub.f32 %v3118, %v3399
    %3401 = vmatmul.f32.gmra.mxu0 %v3400
    %v3402 = vpop.f32.mrf.mxu0
    %v3403 = vadd.f32 %v3373, %v3402
    %3404 = vdwg.mxu0
    %3405 = vmatpush.msra.mxu0 0.0
    %3406 = vmatpush.msra.mxu0 0.0
    %3407 = vmatpush.msra.mxu0 0.0
    %3408 = vmatpush.msra.mxu0 0.0
    %3409 = vmatpush.msra.mxu0 0.0
    %3410 = vmatpush.msra.mxu0 0.0
    %3411 = vmatpush.msra.mxu0 0.0
    %3412 = vmatpush.msra.mxu0 0.0
    %3413 = vmatpush.msra.mxu0 0.0
    %3414 = vmatpush.msra.mxu0 0.0
    %3415 = vmatpush.msra.mxu0 0.0
    %3416 = vmatpush.msra.mxu0 0.0
    %v3417 = vand.u32 %v1804, 4294901760
    %3418 = vmatpush.msra.mxu0 %v3417
    %v3419 = vand.u32 %v1802, 4294901760
    %3420 = vmatpush.msra.mxu0 %v3419
    %v3421 = vand.u32 %v1800, 4294901760
    %3422 = vmatpush.msra.mxu0 %v3421
    %v3423 = vand.u32 %v1798, 4294901760
    %3424 = vmatpush.msra.mxu0 %v3423
    %v3425 = vand.u32 %v3118, 4294901760
    %v3426 = vsub.f32 %v3118, %v3425
    %v3427 = vand.u32 %v3426, 4294901760
    %3428 = vmatmul.f32.gmra.mxu0 %v3427
    %v3429 = vpop.f32.mrf.mxu0
    %v3430 = vadd.f32 %v3403, %v3429
    %3431 = vdwg.mxu0
    %3432 = vmatpush.msra.mxu0 0.0
    %3433 = vmatpush.msra.mxu0 0.0
    %3434 = vmatpush.msra.mxu0 0.0
    %3435 = vmatpush.msra.mxu0 0.0
    %3436 = vmatpush.msra.mxu0 0.0
    %3437 = vmatpush.msra.mxu0 0.0
    %3438 = vmatpush.msra.mxu0 0.0
    %3439 = vmatpush.msra.mxu0 0.0
    %3440 = vmatpush.msra.mxu0 0.0
    %3441 = vmatpush.msra.mxu0 0.0
    %3442 = vmatpush.msra.mxu0 0.0
    %3443 = vmatpush.msra.mxu0 0.0
    %v3444 = vand.u32 %v1804, 4294901760
    %v3445 = vsub.f32 %v1804, %v3444
    %v3446 = vand.u32 %v3445, 4294901760
    %3447 = vmatpush.msra.mxu0 %v3446
    %v3448 = vand.u32 %v1802, 4294901760
    %v3449 = vsub.f32 %v1802, %v3448
    %v3450 = vand.u32 %v3449, 4294901760
    %3451 = vmatpush.msra.mxu0 %v3450
    %v3452 = vand.u32 %v1800, 4294901760
    %v3453 = vsub.f32 %v1800, %v3452
    %v3454 = vand.u32 %v3453, 4294901760
    %3455 = vmatpush.msra.mxu0 %v3454
    %v3456 = vand.u32 %v1798, 4294901760
    %v3457 = vsub.f32 %v1798, %v3456
    %v3458 = vand.u32 %v3457, 4294901760
    %3459 = vmatpush.msra.mxu0 %v3458
    %v3460 = vand.u32 %v3118, 4294901760
    %3461 = vmatmul.f32.gmra.mxu0 %v3460
    %v3462 = vpop.f32.mrf.mxu0
    %v3463 = vadd.f32 %v3430, %v3462
    %3464 = vdwg.mxu0
    %3465 = vmatpush.msra.mxu0 0.0
    %3466 = vmatpush.msra.mxu0 0.0
    %3467 = vmatpush.msra.mxu0 0.0
    %3468 = vmatpush.msra.mxu0 0.0
    %3469 = vmatpush.msra.mxu0 0.0
    %3470 = vmatpush.msra.mxu0 0.0
    %3471 = vmatpush.msra.mxu0 0.0
    %3472 = vmatpush.msra.mxu0 0.0
    %3473 = vmatpush.msra.mxu0 0.0
    %3474 = vmatpush.msra.mxu0 0.0
    %3475 = vmatpush.msra.mxu0 0.0
    %3476 = vmatpush.msra.mxu0 0.0
    %v3477 = vand.u32 %v1804, 4294901760
    %3478 = vmatpush.msra.mxu0 %v3477
    %v3479 = vand.u32 %v1802, 4294901760
    %3480 = vmatpush.msra.mxu0 %v3479
    %v3481 = vand.u32 %v1800, 4294901760
    %3482 = vmatpush.msra.mxu0 %v3481
    %v3483 = vand.u32 %v1798, 4294901760
    %3484 = vmatpush.msra.mxu0 %v3483
    %v3485 = vand.u32 %v3118, 4294901760
    %3486 = vmatmul.f32.gmra.mxu0 %v3485
    %v3487 = vpop.f32.mrf.mxu0
    %v3488 = vadd.f32 %v3463, %v3487
    %3489 = vdwg.mxu0
    %v3491 = vrot.slane %v3488, 1
    %v3492 = vrot.slane %v3488, 2
    %v3493 = vrot.slane %v3488, 3
    %v3494 = vrot.slane %v3488, 4
    %v3495 = vrot.slane %v3488, 5
    %v3496 = vrot.slane %v3488, 6
    %v3497 = vrot.slane %v3488, 7
    %v3498 = vperm.slane %v3488, 0
    %v3499 = vperm.slane %v3491, 0
    %v3500 = vperm.slane %v3492, 0
    %v3501 = vperm.slane %v3493, 0
    %v3502 = vperm.slane %v3494, 0
    %v3503 = vperm.slane %v3495, 0
    %v3504 = vperm.slane %v3496, 0
    %v3505 = vperm.slane %v3497, 0
    %v3514 = vadd.f32 %v834, %v3498
    %v3515 = vadd.f32 %v838, %v3498
    %v3516 = vadd.f32 %v842, %v3499
    %v3517 = vadd.f32 %v846, %v3499
    %v3518 = vadd.f32 %v850, %v3500
    %v3519 = vadd.f32 %v854, %v3500
    %v3520 = vadd.f32 %v858, %v3501
    %v3521 = vadd.f32 %v862, %v3501
    %v3522 = vadd.f32 %v866, %v3502
    %v3523 = vadd.f32 %v870, %v3502
    %v3524 = vadd.f32 %v874, %v3503
    %v3525 = vadd.f32 %v878, %v3503
    %v3526 = vadd.f32 %v882, %v3504
    %v3527 = vadd.f32 %v886, %v3504
    %v3528 = vadd.f32 %v890, %v3505
    %v3529 = vadd.f32 %v894, %v3505
    %v3530 = vtanh.pop %v3514
    %v3531 = vtanh.pop %v3515
    %v3532 = vtanh.pop %v3516
    %v3533 = vtanh.pop %v3517
    %v3534 = vtanh.pop %v3518
    %v3535 = vtanh.pop %v3519
    %v3536 = vtanh.pop %v3520
    %v3537 = vtanh.pop %v3521
    %v3538 = vtanh.pop %v3522
    %v3539 = vtanh.pop %v3523
    %v3540 = vtanh.pop %v3524
    %v3541 = vtanh.pop %v3525
    %v3542 = vtanh.pop %v3526
    %v3543 = vtanh.pop %v3527
    %v3544 = vtanh.pop %v3528
    %v3545 = vtanh.pop %v3529
    %v3546 = vmul.f32 %v3530, %v2235
    %v3547 = vmul.f32 %v3531, %v2235
    %v3548 = vmul.f32 %v3532, %v2235
    %v3549 = vmul.f32 %v3533, %v2235
    %v3550 = vmul.f32 %v3534, %v2235
    %v3551 = vmul.f32 %v3535, %v2235
    %v3552 = vmul.f32 %v3536, %v2235
    %v3553 = vmul.f32 %v3537, %v2235
    %v3554 = vmul.f32 %v3538, %v2235
    %v3555 = vmul.f32 %v3539, %v2235
    %v3556 = vmul.f32 %v3540, %v2235
    %v3557 = vmul.f32 %v3541, %v2235
    %v3558 = vmul.f32 %v3542, %v2235
    %v3559 = vmul.f32 %v3543, %v2235
    %v3560 = vmul.f32 %v3544, %v2235
    %v3561 = vmul.f32 %v3545, %v2235
    %v3562 = vsel %vm197, %v3546, 0.0
    %3563 = vadd.xlane.f32.xlu0 %v3562
    %v3564 = vpop.xlane.xlu0 %3563
    %v3565 = vsel %vm197, %v3547, 0.0
    %3566 = vadd.xlane.f32.xlu0 %v3565
    %v3567 = vpop.xlane.xlu0 %3566
    %v3568 = vsel %vm197, %v3548, 0.0
    %3569 = vadd.xlane.f32.xlu0 %v3568
    %v3570 = vpop.xlane.xlu0 %3569
    %v3571 = vsel %vm197, %v3549, 0.0
    %3572 = vadd.xlane.f32.xlu0 %v3571
    %v3573 = vpop.xlane.xlu0 %3572
    %v3574 = vsel %vm197, %v3550, 0.0
    %3575 = vadd.xlane.f32.xlu0 %v3574
    %v3576 = vpop.xlane.xlu0 %3575
    %v3577 = vsel %vm197, %v3551, 0.0
    %3578 = vadd.xlane.f32.xlu0 %v3577
    %v3579 = vpop.xlane.xlu0 %3578
    %v3580 = vsel %vm197, %v3552, 0.0
    %3581 = vadd.xlane.f32.xlu0 %v3580
    %v3582 = vpop.xlane.xlu0 %3581
    %v3583 = vsel %vm197, %v3553, 0.0
    %3584 = vadd.xlane.f32.xlu0 %v3583
    %v3585 = vpop.xlane.xlu0 %3584
    %v3586 = vsel %vm197, %v3554, 0.0
    %3587 = vadd.xlane.f32.xlu0 %v3586
    %v3588 = vpop.xlane.xlu0 %3587
    %v3589 = vsel %vm197, %v3555, 0.0
    %3590 = vadd.xlane.f32.xlu0 %v3589
    %v3591 = vpop.xlane.xlu0 %3590
    %v3592 = vsel %vm197, %v3556, 0.0
    %3593 = vadd.xlane.f32.xlu0 %v3592
    %v3594 = vpop.xlane.xlu0 %3593
    %v3595 = vsel %vm197, %v3557, 0.0
    %3596 = vadd.xlane.f32.xlu0 %v3595
    %v3597 = vpop.xlane.xlu0 %3596
    %v3598 = vsel %vm197, %v3558, 0.0
    %3599 = vadd.xlane.f32.xlu0 %v3598
    %v3600 = vpop.xlane.xlu0 %3599
    %v3601 = vsel %vm197, %v3559, 0.0
    %3602 = vadd.xlane.f32.xlu0 %v3601
    %v3603 = vpop.xlane.xlu0 %3602
    %v3604 = vsel %vm197, %v3560, 0.0
    %3605 = vadd.xlane.f32.xlu0 %v3604
    %v3606 = vpop.xlane.xlu0 %3605
    %v3607 = vsel %vm197, %v3561, 0.0
    %3608 = vadd.xlane.f32.xlu0 %v3607
    %v3609 = vpop.xlane.xlu0 %3608
    %v3626 = vperm.slane %v3564, %v2318
    %v3627 = vperm.slane %v3567, %v2320
    %v3628 = vsel %vm2322, %v3627, %v3626
    %v3629 = vperm.slane %v3570, %v2318
    %v3630 = vperm.slane %v3573, %v2320
    %v3631 = vsel %vm2322, %v3630, %v3629
    %v3632 = vperm.slane %v3576, %v2318
    %v3633 = vperm.slane %v3579, %v2320
    %v3634 = vsel %vm2322, %v3633, %v3632
    %v3635 = vperm.slane %v3582, %v2318
    %v3636 = vperm.slane %v3585, %v2320
    %v3637 = vsel %vm2322, %v3636, %v3635
    %v3638 = vperm.slane %v3588, %v2318
    %v3639 = vperm.slane %v3591, %v2320
    %v3640 = vsel %vm2322, %v3639, %v3638
    %v3641 = vperm.slane %v3594, %v2318
    %v3642 = vperm.slane %v3597, %v2320
    %v3643 = vsel %vm2322, %v3642, %v3641
    %v3644 = vperm.slane %v3600, %v2318
    %v3645 = vperm.slane %v3603, %v2320
    %v3646 = vsel %vm2322, %v3645, %v3644
    %v3647 = vperm.slane %v3606, %v2318
    %v3648 = vperm.slane %v3609, %v2320
    %v3649 = vsel %vm2322, %v3648, %v3647
    %v3650 = vsel %vm1398, %v3631, %v3628
    %v3651 = vsel %vm1400, %v3634, %v3650
    %v3652 = vsel %vm1402, %v3637, %v3651
    %v3653 = vsel %vm1404, %v3640, %v3652
    %v3654 = vsel %vm1406, %v3643, %v3653
    %v3655 = vsel %vm1408, %v3646, %v3654
    %v3656 = vsel %vm1410, %v3649, %v3655
    %v3658 = vsel %vm2353, %v3656, -inf
    %3659 = vmax.xlane.f32.xlu0 %v3658
    %v3660 = vpop.xlane.xlu0 %3659
    %v3662 = vperm.slane %v3660, 0
    %v3663 = vperm.slane %v3660, 1
    %v3664 = vperm.slane %v3660, 2
    %v3665 = vperm.slane %v3660, 3
    %v3666 = vperm.slane %v3660, 4
    %v3667 = vperm.slane %v3660, 5
    %v3668 = vperm.slane %v3660, 6
    %v3669 = vperm.slane %v3660, 7
    %v3678 = vsub.f32 %v3564, %v3662
    %v3679 = vsub.f32 %v3567, %v3662
    %v3680 = vsub.f32 %v3570, %v3663
    %v3681 = vsub.f32 %v3573, %v3663
    %v3682 = vsub.f32 %v3576, %v3664
    %v3683 = vsub.f32 %v3579, %v3664
    %v3684 = vsub.f32 %v3582, %v3665
    %v3685 = vsub.f32 %v3585, %v3665
    %v3686 = vsub.f32 %v3588, %v3666
    %v3687 = vsub.f32 %v3591, %v3666
    %v3688 = vsub.f32 %v3594, %v3667
    %v3689 = vsub.f32 %v3597, %v3667
    %v3690 = vsub.f32 %v3600, %v3668
    %v3691 = vsub.f32 %v3603, %v3668
    %v3692 = vsub.f32 %v3606, %v3669
    %v3693 = vsub.f32 %v3609, %v3669
    %v3694 = vmul.f32 %v3678, 1.442695
    %v3695 = vpow.pop %v3694
    %v3696 = vmul.f32 %v3679, 1.442695
    %v3697 = vpow.pop %v3696
    %v3698 = vmul.f32 %v3680, 1.442695
    %v3699 = vpow.pop %v3698
    %v3700 = vmul.f32 %v3681, 1.442695
    %v3701 = vpow.pop %v3700
    %v3702 = vmul.f32 %v3682, 1.442695
    %v3703 = vpow.pop %v3702
    %v3704 = vmul.f32 %v3683, 1.442695
    %v3705 = vpow.pop %v3704
    %v3706 = vmul.f32 %v3684, 1.442695
    %v3707 = vpow.pop %v3706
    %v3708 = vmul.f32 %v3685, 1.442695
    %v3709 = vpow.pop %v3708
    %v3710 = vmul.f32 %v3686, 1.442695
    %v3711 = vpow.pop %v3710
    %v3712 = vmul.f32 %v3687, 1.442695
    %v3713 = vpow.pop %v3712
    %v3714 = vmul.f32 %v3688, 1.442695
    %v3715 = vpow.pop %v3714
    %v3716 = vmul.f32 %v3689, 1.442695
    %v3717 = vpow.pop %v3716
    %v3718 = vmul.f32 %v3690, 1.442695
    %v3719 = vpow.pop %v3718
    %v3720 = vmul.f32 %v3691, 1.442695
    %v3721 = vpow.pop %v3720
    %v3722 = vmul.f32 %v3692, 1.442695
    %v3723 = vpow.pop %v3722
    %v3724 = vmul.f32 %v3693, 1.442695
    %v3725 = vpow.pop %v3724
    %3742 = vset.pattern.permute.xlu0 0
    %3743 = vperm.xlu0 %3742, %v3695
    %v3744 = vpop.permute.xlu0 %3743
    %3745 = vset.pattern.permute.xlu0 0
    %3746 = vperm.xlu0 %3745, %v3697
    %v3747 = vpop.permute.xlu0 %3746
    %3748 = vset.pattern.permute.xlu0 0
    %3749 = vperm.xlu0 %3748, %v3699
    %v3750 = vpop.permute.xlu0 %3749
    %3751 = vset.pattern.permute.xlu0 0
    %3752 = vperm.xlu0 %3751, %v3701
    %v3753 = vpop.permute.xlu0 %3752
    %3754 = vset.pattern.permute.xlu0 0
    %3755 = vperm.xlu0 %3754, %v3703
    %v3756 = vpop.permute.xlu0 %3755
    %3757 = vset.pattern.permute.xlu0 0
    %3758 = vperm.xlu0 %3757, %v3705
    %v3759 = vpop.permute.xlu0 %3758
    %3760 = vset.pattern.permute.xlu0 0
    %3761 = vperm.xlu0 %3760, %v3707
    %v3762 = vpop.permute.xlu0 %3761
    %3763 = vset.pattern.permute.xlu0 0
    %3764 = vperm.xlu0 %3763, %v3709
    %v3765 = vpop.permute.xlu0 %3764
    %3766 = vset.pattern.permute.xlu0 0
    %3767 = vperm.xlu0 %3766, %v3711
    %v3768 = vpop.permute.xlu0 %3767
    %3769 = vset.pattern.permute.xlu0 0
    %3770 = vperm.xlu0 %3769, %v3713
    %v3771 = vpop.permute.xlu0 %3770
    %3772 = vset.pattern.permute.xlu0 0
    %3773 = vperm.xlu0 %3772, %v3715
    %v3774 = vpop.permute.xlu0 %3773
    %3775 = vset.pattern.permute.xlu0 0
    %3776 = vperm.xlu0 %3775, %v3717
    %v3777 = vpop.permute.xlu0 %3776
    %3778 = vset.pattern.permute.xlu0 0
    %3779 = vperm.xlu0 %3778, %v3719
    %v3780 = vpop.permute.xlu0 %3779
    %3781 = vset.pattern.permute.xlu0 0
    %3782 = vperm.xlu0 %3781, %v3721
    %v3783 = vpop.permute.xlu0 %3782
    %3784 = vset.pattern.permute.xlu0 0
    %3785 = vperm.xlu0 %3784, %v3723
    %v3786 = vpop.permute.xlu0 %3785
    %3787 = vset.pattern.permute.xlu0 0
    %3788 = vperm.xlu0 %3787, %v3725
    %v3789 = vpop.permute.xlu0 %3788
    %v3790 = vperm.slane %v3744, %v2318
    %v3791 = vperm.slane %v3747, %v2320
    %v3792 = vsel %vm2322, %v3791, %v3790
    %v3793 = vperm.slane %v3750, %v2318
    %v3794 = vperm.slane %v3753, %v2320
    %v3795 = vsel %vm2322, %v3794, %v3793
    %v3796 = vperm.slane %v3756, %v2318
    %v3797 = vperm.slane %v3759, %v2320
    %v3798 = vsel %vm2322, %v3797, %v3796
    %v3799 = vperm.slane %v3762, %v2318
    %v3800 = vperm.slane %v3765, %v2320
    %v3801 = vsel %vm2322, %v3800, %v3799
    %v3802 = vperm.slane %v3768, %v2318
    %v3803 = vperm.slane %v3771, %v2320
    %v3804 = vsel %vm2322, %v3803, %v3802
    %v3805 = vperm.slane %v3774, %v2318
    %v3806 = vperm.slane %v3777, %v2320
    %v3807 = vsel %vm2322, %v3806, %v3805
    %v3808 = vperm.slane %v3780, %v2318
    %v3809 = vperm.slane %v3783, %v2320
    %v3810 = vsel %vm2322, %v3809, %v3808
    %v3811 = vperm.slane %v3786, %v2318
    %v3812 = vperm.slane %v3789, %v2320
    %v3813 = vsel %vm2322, %v3812, %v3811
    %v3814 = vsel %vm1398, %v3795, %v3792
    %v3815 = vsel %vm1400, %v3798, %v3814
    %v3816 = vsel %vm1402, %v3801, %v3815
    %v3817 = vsel %vm1404, %v3804, %v3816
    %v3818 = vsel %vm1406, %v3807, %v3817
    %v3819 = vsel %vm1408, %v3810, %v3818
    %v3820 = vsel %vm1410, %v3813, %v3819
    %v3822 = vsel %vm2353, %v3820, 0.0
    %3823 = vadd.xlane.f32.xlu0 %v3822
    %v3824 = vpop.xlane.xlu0 %3823
    %v3826 = vperm.slane %v3824, 0
    %v3827 = vperm.slane %v3824, 1
    %v3828 = vperm.slane %v3824, 2
    %v3829 = vperm.slane %v3824, 3
    %v3830 = vperm.slane %v3824, 4
    %v3831 = vperm.slane %v3824, 5
    %v3832 = vperm.slane %v3824, 6
    %v3833 = vperm.slane %v3824, 7
    %v3842 = vrcp.pop %v3826
    %v3843 = vmul.f32 %v3826, %v3842
    %v3844 = vsub.f32 1.0, %v3843
    %v3845 = vmul.f32 %v3842, %v3844
    %v3846 = vadd.f32 %v3842, %v3845
    %vm3847 = vweird.f32 %v3826
    %vm3848 = vweird.f32 %v3842
    %vm3849 = vmor %vm3847, %vm3848
    %v3850 = vsel %vm3849, %v3842, %v3846
    %v3851 = vand.u32 2147483647, %v3826
    %vm3852 = vcmp.eq.f32.partialorder %v3851, 8.507059e+37
    %v3853 = vand.u32 %v3826, 2147483648
    %v3854 = vor.u32 1.1754944e-38, %v3853
    %v3855 = vsel %vm3852, %v3854, %v3850
    %v3856 = vmul.f32 %v3695, %v3855
    %v3857 = vmul.f32 %v3697, %v3855
    %v3858 = vrcp.pop %v3827
    %v3859 = vmul.f32 %v3827, %v3858
    %v3860 = vsub.f32 1.0, %v3859
    %v3861 = vmul.f32 %v3858, %v3860
    %v3862 = vadd.f32 %v3858, %v3861
    %vm3863 = vweird.f32 %v3827
    %vm3864 = vweird.f32 %v3858
    %vm3865 = vmor %vm3863, %vm3864
    %v3866 = vsel %vm3865, %v3858, %v3862
    %v3867 = vand.u32 2147483647, %v3827
    %vm3868 = vcmp.eq.f32.partialorder %v3867, 8.507059e+37
    %v3869 = vand.u32 %v3827, 2147483648
    %v3870 = vor.u32 1.1754944e-38, %v3869
    %v3871 = vsel %vm3868, %v3870, %v3866
    %v3872 = vmul.f32 %v3699, %v3871
    %v3873 = vmul.f32 %v3701, %v3871
    %v3874 = vrcp.pop %v3828
    %v3875 = vmul.f32 %v3828, %v3874
    %v3876 = vsub.f32 1.0, %v3875
    %v3877 = vmul.f32 %v3874, %v3876
    %v3878 = vadd.f32 %v3874, %v3877
    %vm3879 = vweird.f32 %v3828
    %vm3880 = vweird.f32 %v3874
    %vm3881 = vmor %vm3879, %vm3880
    %v3882 = vsel %vm3881, %v3874, %v3878
    %v3883 = vand.u32 2147483647, %v3828
    %vm3884 = vcmp.eq.f32.partialorder %v3883, 8.507059e+37
    %v3885 = vand.u32 %v3828, 2147483648
    %v3886 = vor.u32 1.1754944e-38, %v3885
    %v3887 = vsel %vm3884, %v3886, %v3882
    %v3888 = vmul.f32 %v3703, %v3887
    %v3889 = vmul.f32 %v3705, %v3887
    %v3890 = vrcp.pop %v3829
    %v3891 = vmul.f32 %v3829, %v3890
    %v3892 = vsub.f32 1.0, %v3891
    %v3893 = vmul.f32 %v3890, %v3892
    %v3894 = vadd.f32 %v3890, %v3893
    %vm3895 = vweird.f32 %v3829
    %vm3896 = vweird.f32 %v3890
    %vm3897 = vmor %vm3895, %vm3896
    %v3898 = vsel %vm3897, %v3890, %v3894
    %v3899 = vand.u32 2147483647, %v3829
    %vm3900 = vcmp.eq.f32.partialorder %v3899, 8.507059e+37
    %v3901 = vand.u32 %v3829, 2147483648
    %v3902 = vor.u32 1.1754944e-38, %v3901
    %v3903 = vsel %vm3900, %v3902, %v3898
    %v3904 = vmul.f32 %v3707, %v3903
    %v3905 = vmul.f32 %v3709, %v3903
    %v3906 = vrcp.pop %v3830
    %v3907 = vmul.f32 %v3830, %v3906
    %v3908 = vsub.f32 1.0, %v3907
    %v3909 = vmul.f32 %v3906, %v3908
    %v3910 = vadd.f32 %v3906, %v3909
    %vm3911 = vweird.f32 %v3830
    %vm3912 = vweird.f32 %v3906
    %vm3913 = vmor %vm3911, %vm3912
    %v3914 = vsel %vm3913, %v3906, %v3910
    %v3915 = vand.u32 2147483647, %v3830
    %vm3916 = vcmp.eq.f32.partialorder %v3915, 8.507059e+37
    %v3917 = vand.u32 %v3830, 2147483648
    %v3918 = vor.u32 1.1754944e-38, %v3917
    %v3919 = vsel %vm3916, %v3918, %v3914
    %v3920 = vmul.f32 %v3711, %v3919
    %v3921 = vmul.f32 %v3713, %v3919
    %v3922 = vrcp.pop %v3831
    %v3923 = vmul.f32 %v3831, %v3922
    %v3924 = vsub.f32 1.0, %v3923
    %v3925 = vmul.f32 %v3922, %v3924
    %v3926 = vadd.f32 %v3922, %v3925
    %vm3927 = vweird.f32 %v3831
    %vm3928 = vweird.f32 %v3922
    %vm3929 = vmor %vm3927, %vm3928
    %v3930 = vsel %vm3929, %v3922, %v3926
    %v3931 = vand.u32 2147483647, %v3831
    %vm3932 = vcmp.eq.f32.partialorder %v3931, 8.507059e+37
    %v3933 = vand.u32 %v3831, 2147483648
    %v3934 = vor.u32 1.1754944e-38, %v3933
    %v3935 = vsel %vm3932, %v3934, %v3930
    %v3936 = vmul.f32 %v3715, %v3935
    %v3937 = vmul.f32 %v3717, %v3935
    %v3938 = vrcp.pop %v3832
    %v3939 = vmul.f32 %v3832, %v3938
    %v3940 = vsub.f32 1.0, %v3939
    %v3941 = vmul.f32 %v3938, %v3940
    %v3942 = vadd.f32 %v3938, %v3941
    %vm3943 = vweird.f32 %v3832
    %vm3944 = vweird.f32 %v3938
    %vm3945 = vmor %vm3943, %vm3944
    %v3946 = vsel %vm3945, %v3938, %v3942
    %v3947 = vand.u32 2147483647, %v3832
    %vm3948 = vcmp.eq.f32.partialorder %v3947, 8.507059e+37
    %v3949 = vand.u32 %v3832, 2147483648
    %v3950 = vor.u32 1.1754944e-38, %v3949
    %v3951 = vsel %vm3948, %v3950, %v3946
    %v3952 = vmul.f32 %v3719, %v3951
    %v3953 = vmul.f32 %v3721, %v3951
    %v3954 = vrcp.pop %v3833
    %v3955 = vmul.f32 %v3833, %v3954
    %v3956 = vsub.f32 1.0, %v3955
    %v3957 = vmul.f32 %v3954, %v3956
    %v3958 = vadd.f32 %v3954, %v3957
    %vm3959 = vweird.f32 %v3833
    %vm3960 = vweird.f32 %v3954
    %vm3961 = vmor %vm3959, %vm3960
    %v3962 = vsel %vm3961, %v3954, %v3958
    %v3963 = vand.u32 2147483647, %v3833
    %vm3964 = vcmp.eq.f32.partialorder %v3963, 8.507059e+37
    %v3965 = vand.u32 %v3833, 2147483648
    %v3966 = vor.u32 1.1754944e-38, %v3965
    %v3967 = vsel %vm3964, %v3966, %v3962
    %v3968 = vmul.f32 %v3723, %v3967
    %v3969 = vmul.f32 %v3725, %v3967
    %3971 = vset.pattern.permute.xlu0 0
    %3972 = vperm.xlu0 %3971, %v3856
    %v3973 = vpop.permute.xlu0 %3972
    %3976 = vset.pattern.permute.xlu0 0
    %3977 = vperm.xlu0 %3976, %v3857
    %v3978 = vpop.permute.xlu0 %3977
    %3981 = vset.pattern.permute.xlu0 0
    %3982 = vperm.xlu0 %3981, %v3872
    %v3983 = vpop.permute.xlu0 %3982
    %3986 = vset.pattern.permute.xlu0 0
    %3987 = vperm.xlu0 %3986, %v3873
    %v3988 = vpop.permute.xlu0 %3987
    %3991 = vset.pattern.permute.xlu0 0
    %3992 = vperm.xlu0 %3991, %v3888
    %v3993 = vpop.permute.xlu0 %3992
    %3996 = vset.pattern.permute.xlu0 0
    %3997 = vperm.xlu0 %3996, %v3889
    %v3998 = vpop.permute.xlu0 %3997
    %4001 = vset.pattern.permute.xlu0 0
    %4002 = vperm.xlu0 %4001, %v3904
    %v4003 = vpop.permute.xlu0 %4002
    %4006 = vset.pattern.permute.xlu0 0
    %4007 = vperm.xlu0 %4006, %v3905
    %v4008 = vpop.permute.xlu0 %4007
    %4011 = vset.pattern.permute.xlu0 0
    %4012 = vperm.xlu0 %4011, %v3920
    %v4013 = vpop.permute.xlu0 %4012
    %4016 = vset.pattern.permute.xlu0 0
    %4017 = vperm.xlu0 %4016, %v3921
    %v4018 = vpop.permute.xlu0 %4017
    %4021 = vset.pattern.permute.xlu0 0
    %4022 = vperm.xlu0 %4021, %v3936
    %v4023 = vpop.permute.xlu0 %4022
    %4026 = vset.pattern.permute.xlu0 0
    %4027 = vperm.xlu0 %4026, %v3937
    %v4028 = vpop.permute.xlu0 %4027
    %4031 = vset.pattern.permute.xlu0 0
    %4032 = vperm.xlu0 %4031, %v3952
    %v4033 = vpop.permute.xlu0 %4032
    %4036 = vset.pattern.permute.xlu0 0
    %4037 = vperm.xlu0 %4036, %v3953
    %v4038 = vpop.permute.xlu0 %4037
    %4041 = vset.pattern.permute.xlu0 0
    %4042 = vperm.xlu0 %4041, %v3968
    %v4043 = vpop.permute.xlu0 %4042
    %4046 = vset.pattern.permute.xlu0 0
    %4047 = vperm.xlu0 %4046, %v3969
    %v4048 = vpop.permute.xlu0 %4047
    %v4050 = vmul.f32 %v173, %v3973
    %v4051 = vmul.f32 %v174, %v3978
    %v4052 = vmul.f32 %v175, %v3983
    %v4053 = vmul.f32 %v176, %v3988
    %v4054 = vmul.f32 %v177, %v3993
    %v4055 = vmul.f32 %v178, %v3998
    %v4056 = vmul.f32 %v179, %v4003
    %v4057 = vmul.f32 %v180, %v4008
    %v4058 = vmul.f32 %v181, %v4013
    %v4059 = vmul.f32 %v182, %v4018
    %v4060 = vmul.f32 %v183, %v4023
    %v4061 = vmul.f32 %v184, %v4028
    %v4062 = vmul.f32 %v185, %v4033
    %v4063 = vmul.f32 %v186, %v4038
    %v4064 = vmul.f32 %v187, %v4043
    %v4065 = vmul.f32 %v188, %v4048
    %v4066 = vsel %vm197, %v4050, 0.0
    %v4067 = vsel %vm197, %v4051, 0.0
    %v4068 = vadd.f32 %v4066, %v4067
    %v4069 = vrot.slane %v4068, 4
    %v4070 = vadd.f32 %v4068, %v4069
    %v4071 = vrot.slane %v4070, 2
    %v4072 = vadd.f32 %v4070, %v4071
    %v4073 = vrot.slane %v4072, 1
    %v4074 = vadd.f32 %v4072, %v4073
    %v4075 = vsel %vm197, %v4052, 0.0
    %v4076 = vsel %vm197, %v4053, 0.0
    %v4077 = vadd.f32 %v4075, %v4076
    %v4078 = vrot.slane %v4077, 4
    %v4079 = vadd.f32 %v4077, %v4078
    %v4080 = vrot.slane %v4079, 2
    %v4081 = vadd.f32 %v4079, %v4080
    %v4082 = vrot.slane %v4081, 1
    %v4083 = vadd.f32 %v4081, %v4082
    %v4084 = vsel %vm197, %v4054, 0.0
    %v4085 = vsel %vm197, %v4055, 0.0
    %v4086 = vadd.f32 %v4084, %v4085
    %v4087 = vrot.slane %v4086, 4
    %v4088 = vadd.f32 %v4086, %v4087
    %v4089 = vrot.slane %v4088, 2
    %v4090 = vadd.f32 %v4088, %v4089
    %v4091 = vrot.slane %v4090, 1
    %v4092 = vadd.f32 %v4090, %v4091
    %v4093 = vsel %vm197, %v4056, 0.0
    %v4094 = vsel %vm197, %v4057, 0.0
    %v4095 = vadd.f32 %v4093, %v4094
    %v4096 = vrot.slane %v4095, 4
    %v4097 = vadd.f32 %v4095, %v4096
    %v4098 = vrot.slane %v4097, 2
    %v4099 = vadd.f32 %v4097, %v4098
    %v4100 = vrot.slane %v4099, 1
    %v4101 = vadd.f32 %v4099, %v4100
    %v4102 = vsel %vm197, %v4058, 0.0
    %v4103 = vsel %vm197, %v4059, 0.0
    %v4104 = vadd.f32 %v4102, %v4103
    %v4105 = vrot.slane %v4104, 4
    %v4106 = vadd.f32 %v4104, %v4105
    %v4107 = vrot.slane %v4106, 2
    %v4108 = vadd.f32 %v4106, %v4107
    %v4109 = vrot.slane %v4108, 1
    %v4110 = vadd.f32 %v4108, %v4109
    %v4111 = vsel %vm197, %v4060, 0.0
    %v4112 = vsel %vm197, %v4061, 0.0
    %v4113 = vadd.f32 %v4111, %v4112
    %v4114 = vrot.slane %v4113, 4
    %v4115 = vadd.f32 %v4113, %v4114
    %v4116 = vrot.slane %v4115, 2
    %v4117 = vadd.f32 %v4115, %v4116
    %v4118 = vrot.slane %v4117, 1
    %v4119 = vadd.f32 %v4117, %v4118
    %v4120 = vsel %vm197, %v4062, 0.0
    %v4121 = vsel %vm197, %v4063, 0.0
    %v4122 = vadd.f32 %v4120, %v4121
    %v4123 = vrot.slane %v4122, 4
    %v4124 = vadd.f32 %v4122, %v4123
    %v4125 = vrot.slane %v4124, 2
    %v4126 = vadd.f32 %v4124, %v4125
    %v4127 = vrot.slane %v4126, 1
    %v4128 = vadd.f32 %v4126, %v4127
    %v4129 = vsel %vm197, %v4064, 0.0
    %v4130 = vsel %vm197, %v4065, 0.0
    %v4131 = vadd.f32 %v4129, %v4130
    %v4132 = vrot.slane %v4131, 4
    %v4133 = vadd.f32 %v4131, %v4132
    %v4134 = vrot.slane %v4133, 2
    %v4135 = vadd.f32 %v4133, %v4134
    %v4136 = vrot.slane %v4135, 1
    %v4137 = vadd.f32 %v4135, %v4136
    %s4138 = scalar_lea.vmem [#allocation2], 8
    %v4139 = vld [vmem:[%s4138] sm:$0xff]
    %v4140 = vadd.f32 %v4139, %v3303
    %v4149 = vsel %vm1398, %v4083, %v4074
    %v4150 = vsel %vm1400, %v4092, %v4149
    %v4151 = vsel %vm1402, %v4101, %v4150
    %v4152 = vsel %vm1404, %v4110, %v4151
    %v4153 = vsel %vm1406, %v4119, %v4152
    %v4154 = vsel %vm1408, %v4128, %v4153
    %v4155 = vsel %vm1410, %v4137, %v4154
    %v4156 = vsel %vm197, %v4155, 0
    %4158 = vmatpush.msra.mxu0 0.0
    %4159 = vmatpush.msra.mxu0 0.0
    %4160 = vmatpush.msra.mxu0 0.0
    %4161 = vmatpush.msra.mxu0 0.0
    %4162 = vmatpush.msra.mxu0 0.0
    %4163 = vmatpush.msra.mxu0 0.0
    %4164 = vmatpush.msra.mxu0 0.0
    %4165 = vmatpush.msra.mxu0 0.0
    %4166 = vmatpush.msra.mxu0 0.0
    %4167 = vmatpush.msra.mxu0 0.0
    %4168 = vmatpush.msra.mxu0 0.0
    %4169 = vmatpush.msra.mxu0 0.0
    %v4170 = vand.u32 %v1796, 4294901760
    %4171 = vmatpush.msra.mxu0 %v4170
    %v4172 = vand.u32 %v1795, 4294901760
    %4173 = vmatpush.msra.mxu0 %v4172
    %v4174 = vand.u32 %v1794, 4294901760
    %4175 = vmatpush.msra.mxu0 %v4174
    %v4176 = vand.u32 %v1793, 4294901760
    %4177 = vmatpush.msra.mxu0 %v4176
    %v4178 = vand.u32 %v4156, 4294901760
    %v4179 = vsub.f32 %v4156, %v4178
    %v4180 = vand.u32 %v4179, 4294901760
    %v4181 = vsub.f32 %v4179, %v4180
    %v4182 = vand.u32 %v4181, 4294901760
    %4183 = vmatmul.f32.gmra.mxu0 %v4182
    %v4184 = vpop.f32.mrf.mxu0
    %v4185 = vadd.f32 0.0, %v4184
    %4186 = vdwg.mxu0
    %4187 = vmatpush.msra.mxu0 0.0
    %4188 = vmatpush.msra.mxu0 0.0
    %4189 = vmatpush.msra.mxu0 0.0
    %4190 = vmatpush.msra.mxu0 0.0
    %4191 = vmatpush.msra.mxu0 0.0
    %4192 = vmatpush.msra.mxu0 0.0
    %4193 = vmatpush.msra.mxu0 0.0
    %4194 = vmatpush.msra.mxu0 0.0
    %4195 = vmatpush.msra.mxu0 0.0
    %4196 = vmatpush.msra.mxu0 0.0
    %4197 = vmatpush.msra.mxu0 0.0
    %4198 = vmatpush.msra.mxu0 0.0
    %v4199 = vand.u32 %v1796, 4294901760
    %v4200 = vsub.f32 %v1796, %v4199
    %v4201 = vand.u32 %v4200, 4294901760
    %v4202 = vsub.f32 %v4200, %v4201
    %v4203 = vand.u32 %v4202, 4294901760
    %4204 = vmatpush.msra.mxu0 %v4203
    %v4205 = vand.u32 %v1795, 4294901760
    %v4206 = vsub.f32 %v1795, %v4205
    %v4207 = vand.u32 %v4206, 4294901760
    %v4208 = vsub.f32 %v4206, %v4207
    %v4209 = vand.u32 %v4208, 4294901760
    %4210 = vmatpush.msra.mxu0 %v4209
    %v4211 = vand.u32 %v1794, 4294901760
    %v4212 = vsub.f32 %v1794, %v4211
    %v4213 = vand.u32 %v4212, 4294901760
    %v4214 = vsub.f32 %v4212, %v4213
    %v4215 = vand.u32 %v4214, 4294901760
    %4216 = vmatpush.msra.mxu0 %v4215
    %v4217 = vand.u32 %v1793, 4294901760
    %v4218 = vsub.f32 %v1793, %v4217
    %v4219 = vand.u32 %v4218, 4294901760
    %v4220 = vsub.f32 %v4218, %v4219
    %v4221 = vand.u32 %v4220, 4294901760
    %4222 = vmatpush.msra.mxu0 %v4221
    %v4223 = vand.u32 %v4156, 4294901760
    %4224 = vmatmul.f32.gmra.mxu0 %v4223
    %v4225 = vpop.f32.mrf.mxu0
    %v4226 = vadd.f32 %v4185, %v4225
    %4227 = vdwg.mxu0
    %4228 = vmatpush.msra.mxu0 0.0
    %4229 = vmatpush.msra.mxu0 0.0
    %4230 = vmatpush.msra.mxu0 0.0
    %4231 = vmatpush.msra.mxu0 0.0
    %4232 = vmatpush.msra.mxu0 0.0
    %4233 = vmatpush.msra.mxu0 0.0
    %4234 = vmatpush.msra.mxu0 0.0
    %4235 = vmatpush.msra.mxu0 0.0
    %4236 = vmatpush.msra.mxu0 0.0
    %4237 = vmatpush.msra.mxu0 0.0
    %4238 = vmatpush.msra.mxu0 0.0
    %4239 = vmatpush.msra.mxu0 0.0
    %v4240 = vand.u32 %v1796, 4294901760
    %v4241 = vsub.f32 %v1796, %v4240
    %4242 = vmatpush.msra.mxu0 %v4241
    %v4243 = vand.u32 %v1795, 4294901760
    %v4244 = vsub.f32 %v1795, %v4243
    %4245 = vmatpush.msra.mxu0 %v4244
    %v4246 = vand.u32 %v1794, 4294901760
    %v4247 = vsub.f32 %v1794, %v4246
    %4248 = vmatpush.msra.mxu0 %v4247
    %v4249 = vand.u32 %v1793, 4294901760
    %v4250 = vsub.f32 %v1793, %v4249
    %4251 = vmatpush.msra.mxu0 %v4250
    %v4252 = vand.u32 %v4156, 4294901760
    %v4253 = vsub.f32 %v4156, %v4252
    %4254 = vmatmul.f32.gmra.mxu0 %v4253
    %v4255 = vpop.f32.mrf.mxu0
    %v4256 = vadd.f32 %v4226, %v4255
    %4257 = vdwg.mxu0
    %4258 = vmatpush.msra.mxu0 0.0
    %4259 = vmatpush.msra.mxu0 0.0
    %4260 = vmatpush.msra.mxu0 0.0
    %4261 = vmatpush.msra.mxu0 0.0
    %4262 = vmatpush.msra.mxu0 0.0
    %4263 = vmatpush.msra.mxu0 0.0
    %4264 = vmatpush.msra.mxu0 0.0
    %4265 = vmatpush.msra.mxu0 0.0
    %4266 = vmatpush.msra.mxu0 0.0
    %4267 = vmatpush.msra.mxu0 0.0
    %4268 = vmatpush.msra.mxu0 0.0
    %4269 = vmatpush.msra.mxu0 0.0
    %v4270 = vand.u32 %v1796, 4294901760
    %4271 = vmatpush.msra.mxu0 %v4270
    %v4272 = vand.u32 %v1795, 4294901760
    %4273 = vmatpush.msra.mxu0 %v4272
    %v4274 = vand.u32 %v1794, 4294901760
    %4275 = vmatpush.msra.mxu0 %v4274
    %v4276 = vand.u32 %v1793, 4294901760
    %4277 = vmatpush.msra.mxu0 %v4276
    %v4278 = vand.u32 %v4156, 4294901760
    %v4279 = vsub.f32 %v4156, %v4278
    %v4280 = vand.u32 %v4279, 4294901760
    %4281 = vmatmul.f32.gmra.mxu0 %v4280
    %v4282 = vpop.f32.mrf.mxu0
    %v4283 = vadd.f32 %v4256, %v4282
    %4284 = vdwg.mxu0
    %4285 = vmatpush.msra.mxu0 0.0
    %4286 = vmatpush.msra.mxu0 0.0
    %4287 = vmatpush.msra.mxu0 0.0
    %4288 = vmatpush.msra.mxu0 0.0
    %4289 = vmatpush.msra.mxu0 0.0
    %4290 = vmatpush.msra.mxu0 0.0
    %4291 = vmatpush.msra.mxu0 0.0
    %4292 = vmatpush.msra.mxu0 0.0
    %4293 = vmatpush.msra.mxu0 0.0
    %4294 = vmatpush.msra.mxu0 0.0
    %4295 = vmatpush.msra.mxu0 0.0
    %4296 = vmatpush.msra.mxu0 0.0
    %v4297 = vand.u32 %v1796, 4294901760
    %v4298 = vsub.f32 %v1796, %v4297
    %v4299 = vand.u32 %v4298, 4294901760
    %4300 = vmatpush.msra.mxu0 %v4299
    %v4301 = vand.u32 %v1795, 4294901760
    %v4302 = vsub.f32 %v1795, %v4301
    %v4303 = vand.u32 %v4302, 4294901760
    %4304 = vmatpush.msra.mxu0 %v4303
    %v4305 = vand.u32 %v1794, 4294901760
    %v4306 = vsub.f32 %v1794, %v4305
    %v4307 = vand.u32 %v4306, 4294901760
    %4308 = vmatpush.msra.mxu0 %v4307
    %v4309 = vand.u32 %v1793, 4294901760
    %v4310 = vsub.f32 %v1793, %v4309
    %v4311 = vand.u32 %v4310, 4294901760
    %4312 = vmatpush.msra.mxu0 %v4311
    %v4313 = vand.u32 %v4156, 4294901760
    %4314 = vmatmul.f32.gmra.mxu0 %v4313
    %v4315 = vpop.f32.mrf.mxu0
    %v4316 = vadd.f32 %v4283, %v4315
    %4317 = vdwg.mxu0
    %4318 = vmatpush.msra.mxu0 0.0
    %4319 = vmatpush.msra.mxu0 0.0
    %4320 = vmatpush.msra.mxu0 0.0
    %4321 = vmatpush.msra.mxu0 0.0
    %4322 = vmatpush.msra.mxu0 0.0
    %4323 = vmatpush.msra.mxu0 0.0
    %4324 = vmatpush.msra.mxu0 0.0
    %4325 = vmatpush.msra.mxu0 0.0
    %4326 = vmatpush.msra.mxu0 0.0
    %4327 = vmatpush.msra.mxu0 0.0
    %4328 = vmatpush.msra.mxu0 0.0
    %4329 = vmatpush.msra.mxu0 0.0
    %v4330 = vand.u32 %v1796, 4294901760
    %4331 = vmatpush.msra.mxu0 %v4330
    %v4332 = vand.u32 %v1795, 4294901760
    %4333 = vmatpush.msra.mxu0 %v4332
    %v4334 = vand.u32 %v1794, 4294901760
    %4335 = vmatpush.msra.mxu0 %v4334
    %v4336 = vand.u32 %v1793, 4294901760
    %4337 = vmatpush.msra.mxu0 %v4336
    %v4338 = vand.u32 %v4156, 4294901760
    %4339 = vmatmul.f32.gmra.mxu0 %v4338
    %v4340 = vpop.f32.mrf.mxu0
    %v4341 = vadd.f32 %v4316, %v4340
    %4342 = vdwg.mxu0
    %v4343 = vadd.f32 %v4140, %v4341
    %v4344 = vxor.u32 %v4343, 2147483648
    %v4345 = vmul.f32 %v4344, 1.442695
    %v4346 = vpow.pop %v4345
    %v4347 = vadd.f32 %v4346, 1.0
    %v4348 = vrcp.pop %v4347
    %v4349 = vmul.f32 %v4347, %v4348
    %v4350 = vsub.f32 1.0, %v4349
    %v4351 = vmul.f32 %v4348, %v4350
    %v4352 = vadd.f32 %v4348, %v4351
    %vm4353 = vweird.f32 %v4347
    %vm4354 = vweird.f32 %v4348
    %vm4355 = vmor %vm4353, %vm4354
    %v4356 = vsel %vm4355, %v4348, %v4352
    %v4357 = vand.u32 2147483647, %v4347
    %vm4358 = vcmp.eq.f32.partialorder %v4357, 8.507059e+37
    %v4359 = vand.u32 %v4347, 2147483648
    %v4360 = vor.u32 1.1754944e-38, %v4359
    %v4361 = vsel %vm4358, %v4360, %v4356
    %v4362 = vmul.f32 1.0, %v4361
    %v4363 = vtanh.pop %v4343
    %v4364 = vmul.f32 %v4362, %v3073
    %4366 = vrot.lane.b32.xlu0 %v4363, 64
    %v4367 = vpop.permute.xlu0 %4366
    %v4369 = vmul.f32 %v4362, %v4367
    %4371 = vrot.lane.b32.xlu0 %v4369, 32
    %v4372 = vpop.permute.xlu0 %4371
    %v4374 = vadd.f32 %v4364, %v4372
    %v4375 = vtanh.pop %v4374
    %4377 = vrot.lane.b32.xlu0 %v4375, 64
    %v4378 = vpop.permute.xlu0 %4377
    %v4380 = vmul.f32 %v4362, %v4378
    %4382 = vrot.lane.b32.xlu0 %v4380, 32
    %v4383 = vpop.permute.xlu0 %4382
    %s4385 = scalar_lea.vmem [#allocation17], 8
    %4386 = vst.msk [vmem:[%s4385] sm:$0xff] %vm197, %v4383
    %v4387 = vperm.slane %v3973, %v2318
    %v4388 = vperm.slane %v3978, %v2320
    %v4389 = vsel %vm2322, %v4388, %v4387
    %v4390 = vperm.slane %v3983, %v2318
    %v4391 = vperm.slane %v3988, %v2320
    %v4392 = vsel %vm2322, %v4391, %v4390
    %v4393 = vperm.slane %v3993, %v2318
    %v4394 = vperm.slane %v3998, %v2320
    %v4395 = vsel %vm2322, %v4394, %v4393
    %v4396 = vperm.slane %v4003, %v2318
    %v4397 = vperm.slane %v4008, %v2320
    %v4398 = vsel %vm2322, %v4397, %v4396
    %v4399 = vperm.slane %v4013, %v2318
    %v4400 = vperm.slane %v4018, %v2320
    %v4401 = vsel %vm2322, %v4400, %v4399
    %v4402 = vperm.slane %v4023, %v2318
    %v4403 = vperm.slane %v4028, %v2320
    %v4404 = vsel %vm2322, %v4403, %v4402
    %v4405 = vperm.slane %v4033, %v2318
    %v4406 = vperm.slane %v4038, %v2320
    %v4407 = vsel %vm2322, %v4406, %v4405
    %v4408 = vperm.slane %v4043, %v2318
    %v4409 = vperm.slane %v4048, %v2320
    %v4410 = vsel %vm2322, %v4409, %v4408
    %v4411 = vsel %vm1398, %v4392, %v4389
    %v4412 = vsel %vm1400, %v4395, %v4411
    %v4413 = vsel %vm1402, %v4398, %v4412
    %v4414 = vsel %vm1404, %v4401, %v4413
    %v4415 = vsel %vm1406, %v4404, %v4414
    %v4416 = vsel %vm1408, %v4407, %v4415
    %v4417 = vsel %vm1410, %v4410, %v4416
    %s4419 = scalar_lea.vmem [#allocation18], 8
    %4420 = vst.msk [vmem:[%s4419] sm:$0xff] %vm2353, %v4417
    %v4421 = vsel %vm197, %v4383, 0
    %4423 = vmatpush.msra.mxu0 0.0
    %4424 = vmatpush.msra.mxu0 0.0
    %4425 = vmatpush.msra.mxu0 0.0
    %4426 = vmatpush.msra.mxu0 0.0
    %4427 = vmatpush.msra.mxu0 0.0
    %4428 = vmatpush.msra.mxu0 0.0
    %4429 = vmatpush.msra.mxu0 0.0
    %4430 = vmatpush.msra.mxu0 0.0
    %4431 = vmatpush.msra.mxu0 0.0
    %4432 = vmatpush.msra.mxu0 0.0
    %4433 = vmatpush.msra.mxu0 0.0
    %4434 = vmatpush.msra.mxu0 0.0
    %v4435 = vand.u32 %v1803, 4294901760
    %4436 = vmatpush.msra.mxu0 %v4435
    %v4437 = vand.u32 %v1801, 4294901760
    %4438 = vmatpush.msra.mxu0 %v4437
    %v4439 = vand.u32 %v1799, 4294901760
    %4440 = vmatpush.msra.mxu0 %v4439
    %v4441 = vand.u32 %v1797, 4294901760
    %4442 = vmatpush.msra.mxu0 %v4441
    %v4443 = vand.u32 %v4421, 4294901760
    %v4444 = vsub.f32 %v4421, %v4443
    %v4445 = vand.u32 %v4444, 4294901760
    %v4446 = vsub.f32 %v4444, %v4445
    %v4447 = vand.u32 %v4446, 4294901760
    %4448 = vmatmul.f32.gmra.mxu0 %v4447
    %v4449 = vpop.f32.mrf.mxu0
    %v4450 = vadd.f32 0.0, %v4449
    %4451 = vdwg.mxu0
    %4452 = vmatpush.msra.mxu0 0.0
    %4453 = vmatpush.msra.mxu0 0.0
    %4454 = vmatpush.msra.mxu0 0.0
    %4455 = vmatpush.msra.mxu0 0.0
    %4456 = vmatpush.msra.mxu0 0.0
    %4457 = vmatpush.msra.mxu0 0.0
    %4458 = vmatpush.msra.mxu0 0.0
    %4459 = vmatpush.msra.mxu0 0.0
    %4460 = vmatpush.msra.mxu0 0.0
    %4461 = vmatpush.msra.mxu0 0.0
    %4462 = vmatpush.msra.mxu0 0.0
    %4463 = vmatpush.msra.mxu0 0.0
    %v4464 = vand.u32 %v1803, 4294901760
    %v4465 = vsub.f32 %v1803, %v4464
    %v4466 = vand.u32 %v4465, 4294901760
    %v4467 = vsub.f32 %v4465, %v4466
    %v4468 = vand.u32 %v4467, 4294901760
    %4469 = vmatpush.msra.mxu0 %v4468
    %v4470 = vand.u32 %v1801, 4294901760
    %v4471 = vsub.f32 %v1801, %v4470
    %v4472 = vand.u32 %v4471, 4294901760
    %v4473 = vsub.f32 %v4471, %v4472
    %v4474 = vand.u32 %v4473, 4294901760
    %4475 = vmatpush.msra.mxu0 %v4474
    %v4476 = vand.u32 %v1799, 4294901760
    %v4477 = vsub.f32 %v1799, %v4476
    %v4478 = vand.u32 %v4477, 4294901760
    %v4479 = vsub.f32 %v4477, %v4478
    %v4480 = vand.u32 %v4479, 4294901760
    %4481 = vmatpush.msra.mxu0 %v4480
    %v4482 = vand.u32 %v1797, 4294901760
    %v4483 = vsub.f32 %v1797, %v4482
    %v4484 = vand.u32 %v4483, 4294901760
    %v4485 = vsub.f32 %v4483, %v4484
    %v4486 = vand.u32 %v4485, 4294901760
    %4487 = vmatpush.msra.mxu0 %v4486
    %v4488 = vand.u32 %v4421, 4294901760
    %4489 = vmatmul.f32.gmra.mxu0 %v4488
    %v4490 = vpop.f32.mrf.mxu0
    %v4491 = vadd.f32 %v4450, %v4490
    %4492 = vdwg.mxu0
    %4493 = vmatpush.msra.mxu0 0.0
    %4494 = vmatpush.msra.mxu0 0.0
    %4495 = vmatpush.msra.mxu0 0.0
    %4496 = vmatpush.msra.mxu0 0.0
    %4497 = vmatpush.msra.mxu0 0.0
    %4498 = vmatpush.msra.mxu0 0.0
    %4499 = vmatpush.msra.mxu0 0.0
    %4500 = vmatpush.msra.mxu0 0.0
    %4501 = vmatpush.msra.mxu0 0.0
    %4502 = vmatpush.msra.mxu0 0.0
    %4503 = vmatpush.msra.mxu0 0.0
    %4504 = vmatpush.msra.mxu0 0.0
    %v4505 = vand.u32 %v1803, 4294901760
    %v4506 = vsub.f32 %v1803, %v4505
    %4507 = vmatpush.msra.mxu0 %v4506
    %v4508 = vand.u32 %v1801, 4294901760
    %v4509 = vsub.f32 %v1801, %v4508
    %4510 = vmatpush.msra.mxu0 %v4509
    %v4511 = vand.u32 %v1799, 4294901760
    %v4512 = vsub.f32 %v1799, %v4511
    %4513 = vmatpush.msra.mxu0 %v4512
    %v4514 = vand.u32 %v1797, 4294901760
    %v4515 = vsub.f32 %v1797, %v4514
    %4516 = vmatpush.msra.mxu0 %v4515
    %v4517 = vand.u32 %v4421, 4294901760
    %v4518 = vsub.f32 %v4421, %v4517
    %4519 = vmatmul.f32.gmra.mxu0 %v4518
    %v4520 = vpop.f32.mrf.mxu0
    %v4521 = vadd.f32 %v4491, %v4520
    %4522 = vdwg.mxu0
    %4523 = vmatpush.msra.mxu0 0.0
    %4524 = vmatpush.msra.mxu0 0.0
    %4525 = vmatpush.msra.mxu0 0.0
    %4526 = vmatpush.msra.mxu0 0.0
    %4527 = vmatpush.msra.mxu0 0.0
    %4528 = vmatpush.msra.mxu0 0.0
    %4529 = vmatpush.msra.mxu0 0.0
    %4530 = vmatpush.msra.mxu0 0.0
    %4531 = vmatpush.msra.mxu0 0.0
    %4532 = vmatpush.msra.mxu0 0.0
    %4533 = vmatpush.msra.mxu0 0.0
    %4534 = vmatpush.msra.mxu0 0.0
    %v4535 = vand.u32 %v1803, 4294901760
    %4536 = vmatpush.msra.mxu0 %v4535
    %v4537 = vand.u32 %v1801, 4294901760
    %4538 = vmatpush.msra.mxu0 %v4537
    %v4539 = vand.u32 %v1799, 4294901760
    %4540 = vmatpush.msra.mxu0 %v4539
    %v4541 = vand.u32 %v1797, 4294901760
    %4542 = vmatpush.msra.mxu0 %v4541
    %v4543 = vand.u32 %v4421, 4294901760
    %v4544 = vsub.f32 %v4421, %v4543
    %v4545 = vand.u32 %v4544, 4294901760
    %4546 = vmatmul.f32.gmra.mxu0 %v4545
    %v4547 = vpop.f32.mrf.mxu0
    %v4548 = vadd.f32 %v4521, %v4547
    %4549 = vdwg.mxu0
    %4550 = vmatpush.msra.mxu0 0.0
    %4551 = vmatpush.msra.mxu0 0.0
    %4552 = vmatpush.msra.mxu0 0.0
    %4553 = vmatpush.msra.mxu0 0.0
    %4554 = vmatpush.msra.mxu0 0.0
    %4555 = vmatpush.msra.mxu0 0.0
    %4556 = vmatpush.msra.mxu0 0.0
    %4557 = vmatpush.msra.mxu0 0.0
    %4558 = vmatpush.msra.mxu0 0.0
    %4559 = vmatpush.msra.mxu0 0.0
    %4560 = vmatpush.msra.mxu0 0.0
    %4561 = vmatpush.msra.mxu0 0.0
    %v4562 = vand.u32 %v1803, 4294901760
    %v4563 = vsub.f32 %v1803, %v4562
    %v4564 = vand.u32 %v4563, 4294901760
    %4565 = vmatpush.msra.mxu0 %v4564
    %v4566 = vand.u32 %v1801, 4294901760
    %v4567 = vsub.f32 %v1801, %v4566
    %v4568 = vand.u32 %v4567, 4294901760
    %4569 = vmatpush.msra.mxu0 %v4568
    %v4570 = vand.u32 %v1799, 4294901760
    %v4571 = vsub.f32 %v1799, %v4570
    %v4572 = vand.u32 %v4571, 4294901760
    %4573 = vmatpush.msra.mxu0 %v4572
    %v4574 = vand.u32 %v1797, 4294901760
    %v4575 = vsub.f32 %v1797, %v4574
    %v4576 = vand.u32 %v4575, 4294901760
    %4577 = vmatpush.msra.mxu0 %v4576
    %v4578 = vand.u32 %v4421, 4294901760
    %4579 = vmatmul.f32.gmra.mxu0 %v4578
    %v4580 = vpop.f32.mrf.mxu0
    %v4581 = vadd.f32 %v4548, %v4580
    %4582 = vdwg.mxu0
    %4583 = vmatpush.msra.mxu0 0.0
    %4584 = vmatpush.msra.mxu0 0.0
    %4585 = vmatpush.msra.mxu0 0.0
    %4586 = vmatpush.msra.mxu0 0.0
    %4587 = vmatpush.msra.mxu0 0.0
    %4588 = vmatpush.msra.mxu0 0.0
    %4589 = vmatpush.msra.mxu0 0.0
    %4590 = vmatpush.msra.mxu0 0.0
    %4591 = vmatpush.msra.mxu0 0.0
    %4592 = vmatpush.msra.mxu0 0.0
    %4593 = vmatpush.msra.mxu0 0.0
    %4594 = vmatpush.msra.mxu0 0.0
    %v4595 = vand.u32 %v1803, 4294901760
    %4596 = vmatpush.msra.mxu0 %v4595
    %v4597 = vand.u32 %v1801, 4294901760
    %4598 = vmatpush.msra.mxu0 %v4597
    %v4599 = vand.u32 %v1799, 4294901760
    %4600 = vmatpush.msra.mxu0 %v4599
    %v4601 = vand.u32 %v1797, 4294901760
    %4602 = vmatpush.msra.mxu0 %v4601
    %v4603 = vand.u32 %v4421, 4294901760
    %4604 = vmatmul.f32.gmra.mxu0 %v4603
    %v4605 = vpop.f32.mrf.mxu0
    %v4606 = vadd.f32 %v4581, %v4605
    %4607 = vdwg.mxu0
    %4608 = vmatpush.msra.mxu0 0.0
    %4609 = vmatpush.msra.mxu0 0.0
    %4610 = vmatpush.msra.mxu0 0.0
    %4611 = vmatpush.msra.mxu0 0.0
    %4612 = vmatpush.msra.mxu0 0.0
    %4613 = vmatpush.msra.mxu0 0.0
    %4614 = vmatpush.msra.mxu0 0.0
    %4615 = vmatpush.msra.mxu0 0.0
    %4616 = vmatpush.msra.mxu0 0.0
    %4617 = vmatpush.msra.mxu0 0.0
    %4618 = vmatpush.msra.mxu0 0.0
    %4619 = vmatpush.msra.mxu0 0.0
    %v4620 = vand.u32 %v1804, 4294901760
    %4621 = vmatpush.msra.mxu0 %v4620
    %v4622 = vand.u32 %v1802, 4294901760
    %4623 = vmatpush.msra.mxu0 %v4622
    %v4624 = vand.u32 %v1800, 4294901760
    %4625 = vmatpush.msra.mxu0 %v4624
    %v4626 = vand.u32 %v1798, 4294901760
    %4627 = vmatpush.msra.mxu0 %v4626
    %v4628 = vand.u32 %v4421, 4294901760
    %v4629 = vsub.f32 %v4421, %v4628
    %v4630 = vand.u32 %v4629, 4294901760
    %v4631 = vsub.f32 %v4629, %v4630
    %v4632 = vand.u32 %v4631, 4294901760
    %4633 = vmatmul.f32.gmra.mxu0 %v4632
    %v4634 = vpop.f32.mrf.mxu0
    %v4635 = vadd.f32 0.0, %v4634
    %4636 = vdwg.mxu0
    %4637 = vmatpush.msra.mxu0 0.0
    %4638 = vmatpush.msra.mxu0 0.0
    %4639 = vmatpush.msra.mxu0 0.0
    %4640 = vmatpush.msra.mxu0 0.0
    %4641 = vmatpush.msra.mxu0 0.0
    %4642 = vmatpush.msra.mxu0 0.0
    %4643 = vmatpush.msra.mxu0 0.0
    %4644 = vmatpush.msra.mxu0 0.0
    %4645 = vmatpush.msra.mxu0 0.0
    %4646 = vmatpush.msra.mxu0 0.0
    %4647 = vmatpush.msra.mxu0 0.0
    %4648 = vmatpush.msra.mxu0 0.0
    %v4649 = vand.u32 %v1804, 4294901760
    %v4650 = vsub.f32 %v1804, %v4649
    %v4651 = vand.u32 %v4650, 4294901760
    %v4652 = vsub.f32 %v4650, %v4651
    %v4653 = vand.u32 %v4652, 4294901760
    %4654 = vmatpush.msra.mxu0 %v4653
    %v4655 = vand.u32 %v1802, 4294901760
    %v4656 = vsub.f32 %v1802, %v4655
    %v4657 = vand.u32 %v4656, 4294901760
    %v4658 = vsub.f32 %v4656, %v4657
    %v4659 = vand.u32 %v4658, 4294901760
    %4660 = vmatpush.msra.mxu0 %v4659
    %v4661 = vand.u32 %v1800, 4294901760
    %v4662 = vsub.f32 %v1800, %v4661
    %v4663 = vand.u32 %v4662, 4294901760
    %v4664 = vsub.f32 %v4662, %v4663
    %v4665 = vand.u32 %v4664, 4294901760
    %4666 = vmatpush.msra.mxu0 %v4665
    %v4667 = vand.u32 %v1798, 4294901760
    %v4668 = vsub.f32 %v1798, %v4667
    %v4669 = vand.u32 %v4668, 4294901760
    %v4670 = vsub.f32 %v4668, %v4669
    %v4671 = vand.u32 %v4670, 4294901760
    %4672 = vmatpush.msra.mxu0 %v4671
    %v4673 = vand.u32 %v4421, 4294901760
    %4674 = vmatmul.f32.gmra.mxu0 %v4673
    %v4675 = vpop.f32.mrf.mxu0
    %v4676 = vadd.f32 %v4635, %v4675
    %4677 = vdwg.mxu0
    %4678 = vmatpush.msra.mxu0 0.0
    %4679 = vmatpush.msra.mxu0 0.0
    %4680 = vmatpush.msra.mxu0 0.0
    %4681 = vmatpush.msra.mxu0 0.0
    %4682 = vmatpush.msra.mxu0 0.0
    %4683 = vmatpush.msra.mxu0 0.0
    %4684 = vmatpush.msra.mxu0 0.0
    %4685 = vmatpush.msra.mxu0 0.0
    %4686 = vmatpush.msra.mxu0 0.0
    %4687 = vmatpush.msra.mxu0 0.0
    %4688 = vmatpush.msra.mxu0 0.0
    %4689 = vmatpush.msra.mxu0 0.0
    %v4690 = vand.u32 %v1804, 4294901760
    %v4691 = vsub.f32 %v1804, %v4690
    %4692 = vmatpush.msra.mxu0 %v4691
    %v4693 = vand.u32 %v1802, 4294901760
    %v4694 = vsub.f32 %v1802, %v4693
    %4695 = vmatpush.msra.mxu0 %v4694
    %v4696 = vand.u32 %v1800, 4294901760
    %v4697 = vsub.f32 %v1800, %v4696
    %4698 = vmatpush.msra.mxu0 %v4697
    %v4699 = vand.u32 %v1798, 4294901760
    %v4700 = vsub.f32 %v1798, %v4699
    %4701 = vmatpush.msra.mxu0 %v4700
    %v4702 = vand.u32 %v4421, 4294901760
    %v4703 = vsub.f32 %v4421, %v4702
    %4704 = vmatmul.f32.gmra.mxu0 %v4703
    %v4705 = vpop.f32.mrf.mxu0
    %v4706 = vadd.f32 %v4676, %v4705
    %4707 = vdwg.mxu0
    %4708 = vmatpush.msra.mxu0 0.0
    %4709 = vmatpush.msra.mxu0 0.0
    %4710 = vmatpush.msra.mxu0 0.0
    %4711 = vmatpush.msra.mxu0 0.0
    %4712 = vmatpush.msra.mxu0 0.0
    %4713 = vmatpush.msra.mxu0 0.0
    %4714 = vmatpush.msra.mxu0 0.0
    %4715 = vmatpush.msra.mxu0 0.0
    %4716 = vmatpush.msra.mxu0 0.0
    %4717 = vmatpush.msra.mxu0 0.0
    %4718 = vmatpush.msra.mxu0 0.0
    %4719 = vmatpush.msra.mxu0 0.0
    %v4720 = vand.u32 %v1804, 4294901760
    %4721 = vmatpush.msra.mxu0 %v4720
    %v4722 = vand.u32 %v1802, 4294901760
    %4723 = vmatpush.msra.mxu0 %v4722
    %v4724 = vand.u32 %v1800, 4294901760
    %4725 = vmatpush.msra.mxu0 %v4724
    %v4726 = vand.u32 %v1798, 4294901760
    %4727 = vmatpush.msra.mxu0 %v4726
    %v4728 = vand.u32 %v4421, 4294901760
    %v4729 = vsub.f32 %v4421, %v4728
    %v4730 = vand.u32 %v4729, 4294901760
    %4731 = vmatmul.f32.gmra.mxu0 %v4730
    %v4732 = vpop.f32.mrf.mxu0
    %v4733 = vadd.f32 %v4706, %v4732
    %4734 = vdwg.mxu0
    %4735 = vmatpush.msra.mxu0 0.0
    %4736 = vmatpush.msra.mxu0 0.0
    %4737 = vmatpush.msra.mxu0 0.0
    %4738 = vmatpush.msra.mxu0 0.0
    %4739 = vmatpush.msra.mxu0 0.0
    %4740 = vmatpush.msra.mxu0 0.0
    %4741 = vmatpush.msra.mxu0 0.0
    %4742 = vmatpush.msra.mxu0 0.0
    %4743 = vmatpush.msra.mxu0 0.0
    %4744 = vmatpush.msra.mxu0 0.0
    %4745 = vmatpush.msra.mxu0 0.0
    %4746 = vmatpush.msra.mxu0 0.0
    %v4747 = vand.u32 %v1804, 4294901760
    %v4748 = vsub.f32 %v1804, %v4747
    %v4749 = vand.u32 %v4748, 4294901760
    %4750 = vmatpush.msra.mxu0 %v4749
    %v4751 = vand.u32 %v1802, 4294901760
    %v4752 = vsub.f32 %v1802, %v4751
    %v4753 = vand.u32 %v4752, 4294901760
    %4754 = vmatpush.msra.mxu0 %v4753
    %v4755 = vand.u32 %v1800, 4294901760
    %v4756 = vsub.f32 %v1800, %v4755
    %v4757 = vand.u32 %v4756, 4294901760
    %4758 = vmatpush.msra.mxu0 %v4757
    %v4759 = vand.u32 %v1798, 4294901760
    %v4760 = vsub.f32 %v1798, %v4759
    %v4761 = vand.u32 %v4760, 4294901760
    %4762 = vmatpush.msra.mxu0 %v4761
    %v4763 = vand.u32 %v4421, 4294901760
    %4764 = vmatmul.f32.gmra.mxu0 %v4763
    %v4765 = vpop.f32.mrf.mxu0
    %v4766 = vadd.f32 %v4733, %v4765
    %4767 = vdwg.mxu0
    %4768 = vmatpush.msra.mxu0 0.0
    %4769 = vmatpush.msra.mxu0 0.0
    %4770 = vmatpush.msra.mxu0 0.0
    %4771 = vmatpush.msra.mxu0 0.0
    %4772 = vmatpush.msra.mxu0 0.0
    %4773 = vmatpush.msra.mxu0 0.0
    %4774 = vmatpush.msra.mxu0 0.0
    %4775 = vmatpush.msra.mxu0 0.0
    %4776 = vmatpush.msra.mxu0 0.0
    %4777 = vmatpush.msra.mxu0 0.0
    %4778 = vmatpush.msra.mxu0 0.0
    %4779 = vmatpush.msra.mxu0 0.0
    %v4780 = vand.u32 %v1804, 4294901760
    %4781 = vmatpush.msra.mxu0 %v4780
    %v4782 = vand.u32 %v1802, 4294901760
    %4783 = vmatpush.msra.mxu0 %v4782
    %v4784 = vand.u32 %v1800, 4294901760
    %4785 = vmatpush.msra.mxu0 %v4784
    %v4786 = vand.u32 %v1798, 4294901760
    %4787 = vmatpush.msra.mxu0 %v4786
    %v4788 = vand.u32 %v4421, 4294901760
    %4789 = vmatmul.f32.gmra.mxu0 %v4788
    %v4790 = vpop.f32.mrf.mxu0
    %v4791 = vadd.f32 %v4766, %v4790
    %4792 = vdwg.mxu0
    %v4794 = vrot.slane %v4791, 1
    %v4795 = vrot.slane %v4791, 2
    %v4796 = vrot.slane %v4791, 3
    %v4797 = vrot.slane %v4791, 4
    %v4798 = vrot.slane %v4791, 5
    %v4799 = vrot.slane %v4791, 6
    %v4800 = vrot.slane %v4791, 7
    %v4801 = vperm.slane %v4791, 0
    %v4802 = vperm.slane %v4794, 0
    %v4803 = vperm.slane %v4795, 0
    %v4804 = vperm.slane %v4796, 0
    %v4805 = vperm.slane %v4797, 0
    %v4806 = vperm.slane %v4798, 0
    %v4807 = vperm.slane %v4799, 0
    %v4808 = vperm.slane %v4800, 0
    %v4817 = vadd.f32 %v834, %v4801
    %v4818 = vadd.f32 %v838, %v4801
    %v4819 = vadd.f32 %v842, %v4802
    %v4820 = vadd.f32 %v846, %v4802
    %v4821 = vadd.f32 %v850, %v4803
    %v4822 = vadd.f32 %v854, %v4803
    %v4823 = vadd.f32 %v858, %v4804
    %v4824 = vadd.f32 %v862, %v4804
    %v4825 = vadd.f32 %v866, %v4805
    %v4826 = vadd.f32 %v870, %v4805
    %v4827 = vadd.f32 %v874, %v4806
    %v4828 = vadd.f32 %v878, %v4806
    %v4829 = vadd.f32 %v882, %v4807
    %v4830 = vadd.f32 %v886, %v4807
    %v4831 = vadd.f32 %v890, %v4808
    %v4832 = vadd.f32 %v894, %v4808
    %v4833 = vtanh.pop %v4817
    %v4834 = vtanh.pop %v4818
    %v4835 = vtanh.pop %v4819
    %v4836 = vtanh.pop %v4820
    %v4837 = vtanh.pop %v4821
    %v4838 = vtanh.pop %v4822
    %v4839 = vtanh.pop %v4823
    %v4840 = vtanh.pop %v4824
    %v4841 = vtanh.pop %v4825
    %v4842 = vtanh.pop %v4826
    %v4843 = vtanh.pop %v4827
    %v4844 = vtanh.pop %v4828
    %v4845 = vtanh.pop %v4829
    %v4846 = vtanh.pop %v4830
    %v4847 = vtanh.pop %v4831
    %v4848 = vtanh.pop %v4832
    %v4849 = vmul.f32 %v4833, %v2235
    %v4850 = vmul.f32 %v4834, %v2235
    %v4851 = vmul.f32 %v4835, %v2235
    %v4852 = vmul.f32 %v4836, %v2235
    %v4853 = vmul.f32 %v4837, %v2235
    %v4854 = vmul.f32 %v4838, %v2235
    %v4855 = vmul.f32 %v4839, %v2235
    %v4856 = vmul.f32 %v4840, %v2235
    %v4857 = vmul.f32 %v4841, %v2235
    %v4858 = vmul.f32 %v4842, %v2235
    %v4859 = vmul.f32 %v4843, %v2235
    %v4860 = vmul.f32 %v4844, %v2235
    %v4861 = vmul.f32 %v4845, %v2235
    %v4862 = vmul.f32 %v4846, %v2235
    %v4863 = vmul.f32 %v4847, %v2235
    %v4864 = vmul.f32 %v4848, %v2235
    %v4865 = vsel %vm197, %v4849, 0.0
    %4866 = vadd.xlane.f32.xlu0 %v4865
    %v4867 = vpop.xlane.xlu0 %4866
    %v4868 = vsel %vm197, %v4850, 0.0
    %4869 = vadd.xlane.f32.xlu0 %v4868
    %v4870 = vpop.xlane.xlu0 %4869
    %v4871 = vsel %vm197, %v4851, 0.0
    %4872 = vadd.xlane.f32.xlu0 %v4871
    %v4873 = vpop.xlane.xlu0 %4872
    %v4874 = vsel %vm197, %v4852, 0.0
    %4875 = vadd.xlane.f32.xlu0 %v4874
    %v4876 = vpop.xlane.xlu0 %4875
    %v4877 = vsel %vm197, %v4853, 0.0
    %4878 = vadd.xlane.f32.xlu0 %v4877
    %v4879 = vpop.xlane.xlu0 %4878
    %v4880 = vsel %vm197, %v4854, 0.0
    %4881 = vadd.xlane.f32.xlu0 %v4880
    %v4882 = vpop.xlane.xlu0 %4881
    %v4883 = vsel %vm197, %v4855, 0.0
    %4884 = vadd.xlane.f32.xlu0 %v4883
    %v4885 = vpop.xlane.xlu0 %4884
    %v4886 = vsel %vm197, %v4856, 0.0
    %4887 = vadd.xlane.f32.xlu0 %v4886
    %v4888 = vpop.xlane.xlu0 %4887
    %v4889 = vsel %vm197, %v4857, 0.0
    %4890 = vadd.xlane.f32.xlu0 %v4889
    %v4891 = vpop.xlane.xlu0 %4890
    %v4892 = vsel %vm197, %v4858, 0.0
    %4893 = vadd.xlane.f32.xlu0 %v4892
    %v4894 = vpop.xlane.xlu0 %4893
    %v4895 = vsel %vm197, %v4859, 0.0
    %4896 = vadd.xlane.f32.xlu0 %v4895
    %v4897 = vpop.xlane.xlu0 %4896
    %v4898 = vsel %vm197, %v4860, 0.0
    %4899 = vadd.xlane.f32.xlu0 %v4898
    %v4900 = vpop.xlane.xlu0 %4899
    %v4901 = vsel %vm197, %v4861, 0.0
    %4902 = vadd.xlane.f32.xlu0 %v4901
    %v4903 = vpop.xlane.xlu0 %4902
    %v4904 = vsel %vm197, %v4862, 0.0
    %4905 = vadd.xlane.f32.xlu0 %v4904
    %v4906 = vpop.xlane.xlu0 %4905
    %v4907 = vsel %vm197, %v4863, 0.0
    %4908 = vadd.xlane.f32.xlu0 %v4907
    %v4909 = vpop.xlane.xlu0 %4908
    %v4910 = vsel %vm197, %v4864, 0.0
    %4911 = vadd.xlane.f32.xlu0 %v4910
    %v4912 = vpop.xlane.xlu0 %4911
    %v4929 = vperm.slane %v4867, %v2318
    %v4930 = vperm.slane %v4870, %v2320
    %v4931 = vsel %vm2322, %v4930, %v4929
    %v4932 = vperm.slane %v4873, %v2318
    %v4933 = vperm.slane %v4876, %v2320
    %v4934 = vsel %vm2322, %v4933, %v4932
    %v4935 = vperm.slane %v4879, %v2318
    %v4936 = vperm.slane %v4882, %v2320
    %v4937 = vsel %vm2322, %v4936, %v4935
    %v4938 = vperm.slane %v4885, %v2318
    %v4939 = vperm.slane %v4888, %v2320
    %v4940 = vsel %vm2322, %v4939, %v4938
    %v4941 = vperm.slane %v4891, %v2318
    %v4942 = vperm.slane %v4894, %v2320
    %v4943 = vsel %vm2322, %v4942, %v4941
    %v4944 = vperm.slane %v4897, %v2318
    %v4945 = vperm.slane %v4900, %v2320
    %v4946 = vsel %vm2322, %v4945, %v4944
    %v4947 = vperm.slane %v4903, %v2318
    %v4948 = vperm.slane %v4906, %v2320
    %v4949 = vsel %vm2322, %v4948, %v4947
    %v4950 = vperm.slane %v4909, %v2318
    %v4951 = vperm.slane %v4912, %v2320
    %v4952 = vsel %vm2322, %v4951, %v4950
    %v4953 = vsel %vm1398, %v4934, %v4931
    %v4954 = vsel %vm1400, %v4937, %v4953
    %v4955 = vsel %vm1402, %v4940, %v4954
    %v4956 = vsel %vm1404, %v4943, %v4955
    %v4957 = vsel %vm1406, %v4946, %v4956
    %v4958 = vsel %vm1408, %v4949, %v4957
    %v4959 = vsel %vm1410, %v4952, %v4958
    %v4961 = vsel %vm2353, %v4959, -inf
    %4962 = vmax.xlane.f32.xlu0 %v4961
    %v4963 = vpop.xlane.xlu0 %4962
    %v4965 = vperm.slane %v4963, 0
    %v4966 = vperm.slane %v4963, 1
    %v4967 = vperm.slane %v4963, 2
    %v4968 = vperm.slane %v4963, 3
    %v4969 = vperm.slane %v4963, 4
    %v4970 = vperm.slane %v4963, 5
    %v4971 = vperm.slane %v4963, 6
    %v4972 = vperm.slane %v4963, 7
    %v4981 = vsub.f32 %v4867, %v4965
    %v4982 = vsub.f32 %v4870, %v4965
    %v4983 = vsub.f32 %v4873, %v4966
    %v4984 = vsub.f32 %v4876, %v4966
    %v4985 = vsub.f32 %v4879, %v4967
    %v4986 = vsub.f32 %v4882, %v4967
    %v4987 = vsub.f32 %v4885, %v4968
    %v4988 = vsub.f32 %v4888, %v4968
    %v4989 = vsub.f32 %v4891, %v4969
    %v4990 = vsub.f32 %v4894, %v4969
    %v4991 = vsub.f32 %v4897, %v4970
    %v4992 = vsub.f32 %v4900, %v4970
    %v4993 = vsub.f32 %v4903, %v4971
    %v4994 = vsub.f32 %v4906, %v4971
    %v4995 = vsub.f32 %v4909, %v4972
    %v4996 = vsub.f32 %v4912, %v4972
    %v4997 = vmul.f32 %v4981, 1.442695
    %v4998 = vpow.pop %v4997
    %v4999 = vmul.f32 %v4982, 1.442695
    %v5000 = vpow.pop %v4999
    %v5001 = vmul.f32 %v4983, 1.442695
    %v5002 = vpow.pop %v5001
    %v5003 = vmul.f32 %v4984, 1.442695
    %v5004 = vpow.pop %v5003
    %v5005 = vmul.f32 %v4985, 1.442695
    %v5006 = vpow.pop %v5005
    %v5007 = vmul.f32 %v4986, 1.442695
    %v5008 = vpow.pop %v5007
    %v5009 = vmul.f32 %v4987, 1.442695
    %v5010 = vpow.pop %v5009
    %v5011 = vmul.f32 %v4988, 1.442695
    %v5012 = vpow.pop %v5011
    %v5013 = vmul.f32 %v4989, 1.442695
    %v5014 = vpow.pop %v5013
    %v5015 = vmul.f32 %v4990, 1.442695
    %v5016 = vpow.pop %v5015
    %v5017 = vmul.f32 %v4991, 1.442695
    %v5018 = vpow.pop %v5017
    %v5019 = vmul.f32 %v4992, 1.442695
    %v5020 = vpow.pop %v5019
    %v5021 = vmul.f32 %v4993, 1.442695
    %v5022 = vpow.pop %v5021
    %v5023 = vmul.f32 %v4994, 1.442695
    %v5024 = vpow.pop %v5023
    %v5025 = vmul.f32 %v4995, 1.442695
    %v5026 = vpow.pop %v5025
    %v5027 = vmul.f32 %v4996, 1.442695
    %v5028 = vpow.pop %v5027
    %5045 = vset.pattern.permute.xlu0 0
    %5046 = vperm.xlu0 %5045, %v4998
    %v5047 = vpop.permute.xlu0 %5046
    %5048 = vset.pattern.permute.xlu0 0
    %5049 = vperm.xlu0 %5048, %v5000
    %v5050 = vpop.permute.xlu0 %5049
    %5051 = vset.pattern.permute.xlu0 0
    %5052 = vperm.xlu0 %5051, %v5002
    %v5053 = vpop.permute.xlu0 %5052
    %5054 = vset.pattern.permute.xlu0 0
    %5055 = vperm.xlu0 %5054, %v5004
    %v5056 = vpop.permute.xlu0 %5055
    %5057 = vset.pattern.permute.xlu0 0
    %5058 = vperm.xlu0 %5057, %v5006
    %v5059 = vpop.permute.xlu0 %5058
    %5060 = vset.pattern.permute.xlu0 0
    %5061 = vperm.xlu0 %5060, %v5008
    %v5062 = vpop.permute.xlu0 %5061
    %5063 = vset.pattern.permute.xlu0 0
    %5064 = vperm.xlu0 %5063, %v5010
    %v5065 = vpop.permute.xlu0 %5064
    %5066 = vset.pattern.permute.xlu0 0
    %5067 = vperm.xlu0 %5066, %v5012
    %v5068 = vpop.permute.xlu0 %5067
    %5069 = vset.pattern.permute.xlu0 0
    %5070 = vperm.xlu0 %5069, %v5014
    %v5071 = vpop.permute.xlu0 %5070
    %5072 = vset.pattern.permute.xlu0 0
    %5073 = vperm.xlu0 %5072, %v5016
    %v5074 = vpop.permute.xlu0 %5073
    %5075 = vset.pattern.permute.xlu0 0
    %5076 = vperm.xlu0 %5075, %v5018
    %v5077 = vpop.permute.xlu0 %5076
    %5078 = vset.pattern.permute.xlu0 0
    %5079 = vperm.xlu0 %5078, %v5020
    %v5080 = vpop.permute.xlu0 %5079
    %5081 = vset.pattern.permute.xlu0 0
    %5082 = vperm.xlu0 %5081, %v5022
    %v5083 = vpop.permute.xlu0 %5082
    %5084 = vset.pattern.permute.xlu0 0
    %5085 = vperm.xlu0 %5084, %v5024
    %v5086 = vpop.permute.xlu0 %5085
    %5087 = vset.pattern.permute.xlu0 0
    %5088 = vperm.xlu0 %5087, %v5026
    %v5089 = vpop.permute.xlu0 %5088
    %5090 = vset.pattern.permute.xlu0 0
    %5091 = vperm.xlu0 %5090, %v5028
    %v5092 = vpop.permute.xlu0 %5091
    %v5093 = vperm.slane %v5047, %v2318
    %v5094 = vperm.slane %v5050, %v2320
    %v5095 = vsel %vm2322, %v5094, %v5093
    %v5096 = vperm.slane %v5053, %v2318
    %v5097 = vperm.slane %v5056, %v2320
    %v5098 = vsel %vm2322, %v5097, %v5096
    %v5099 = vperm.slane %v5059, %v2318
    %v5100 = vperm.slane %v5062, %v2320
    %v5101 = vsel %vm2322, %v5100, %v5099
    %v5102 = vperm.slane %v5065, %v2318
    %v5103 = vperm.slane %v5068, %v2320
    %v5104 = vsel %vm2322, %v5103, %v5102
    %v5105 = vperm.slane %v5071, %v2318
    %v5106 = vperm.slane %v5074, %v2320
    %v5107 = vsel %vm2322, %v5106, %v5105
    %v5108 = vperm.slane %v5077, %v2318
    %v5109 = vperm.slane %v5080, %v2320
    %v5110 = vsel %vm2322, %v5109, %v5108
    %v5111 = vperm.slane %v5083, %v2318
    %v5112 = vperm.slane %v5086, %v2320
    %v5113 = vsel %vm2322, %v5112, %v5111
    %v5114 = vperm.slane %v5089, %v2318
    %v5115 = vperm.slane %v5092, %v2320
    %v5116 = vsel %vm2322, %v5115, %v5114
    %v5117 = vsel %vm1398, %v5098, %v5095
    %v5118 = vsel %vm1400, %v5101, %v5117
    %v5119 = vsel %vm1402, %v5104, %v5118
    %v5120 = vsel %vm1404, %v5107, %v5119
    %v5121 = vsel %vm1406, %v5110, %v5120
    %v5122 = vsel %vm1408, %v5113, %v5121
    %v5123 = vsel %vm1410, %v5116, %v5122
    %v5125 = vsel %vm2353, %v5123, 0.0
    %5126 = vadd.xlane.f32.xlu0 %v5125
    %v5127 = vpop.xlane.xlu0 %5126
    %v5129 = vperm.slane %v5127, 0
    %v5130 = vperm.slane %v5127, 1
    %v5131 = vperm.slane %v5127, 2
    %v5132 = vperm.slane %v5127, 3
    %v5133 = vperm.slane %v5127, 4
    %v5134 = vperm.slane %v5127, 5
    %v5135 = vperm.slane %v5127, 6
    %v5136 = vperm.slane %v5127, 7
    %v5145 = vrcp.pop %v5129
    %v5146 = vmul.f32 %v5129, %v5145
    %v5147 = vsub.f32 1.0, %v5146
    %v5148 = vmul.f32 %v5145, %v5147
    %v5149 = vadd.f32 %v5145, %v5148
    %vm5150 = vweird.f32 %v5129
    %vm5151 = vweird.f32 %v5145
    %vm5152 = vmor %vm5150, %vm5151
    %v5153 = vsel %vm5152, %v5145, %v5149
    %v5154 = vand.u32 2147483647, %v5129
    %vm5155 = vcmp.eq.f32.partialorder %v5154, 8.507059e+37
    %v5156 = vand.u32 %v5129, 2147483648
    %v5157 = vor.u32 1.1754944e-38, %v5156
    %v5158 = vsel %vm5155, %v5157, %v5153
    %v5159 = vmul.f32 %v4998, %v5158
    %v5160 = vmul.f32 %v5000, %v5158
    %v5161 = vrcp.pop %v5130
    %v5162 = vmul.f32 %v5130, %v5161
    %v5163 = vsub.f32 1.0, %v5162
    %v5164 = vmul.f32 %v5161, %v5163
    %v5165 = vadd.f32 %v5161, %v5164
    %vm5166 = vweird.f32 %v5130
    %vm5167 = vweird.f32 %v5161
    %vm5168 = vmor %vm5166, %vm5167
    %v5169 = vsel %vm5168, %v5161, %v5165
    %v5170 = vand.u32 2147483647, %v5130
    %vm5171 = vcmp.eq.f32.partialorder %v5170, 8.507059e+37
    %v5172 = vand.u32 %v5130, 2147483648
    %v5173 = vor.u32 1.1754944e-38, %v5172
    %v5174 = vsel %vm5171, %v5173, %v5169
    %v5175 = vmul.f32 %v5002, %v5174
    %v5176 = vmul.f32 %v5004, %v5174
    %v5177 = vrcp.pop %v5131
    %v5178 = vmul.f32 %v5131, %v5177
    %v5179 = vsub.f32 1.0, %v5178
    %v5180 = vmul.f32 %v5177, %v5179
    %v5181 = vadd.f32 %v5177, %v5180
    %vm5182 = vweird.f32 %v5131
    %vm5183 = vweird.f32 %v5177
    %vm5184 = vmor %vm5182, %vm5183
    %v5185 = vsel %vm5184, %v5177, %v5181
    %v5186 = vand.u32 2147483647, %v5131
    %vm5187 = vcmp.eq.f32.partialorder %v5186, 8.507059e+37
    %v5188 = vand.u32 %v5131, 2147483648
    %v5189 = vor.u32 1.1754944e-38, %v5188
    %v5190 = vsel %vm5187, %v5189, %v5185
    %v5191 = vmul.f32 %v5006, %v5190
    %v5192 = vmul.f32 %v5008, %v5190
    %v5193 = vrcp.pop %v5132
    %v5194 = vmul.f32 %v5132, %v5193
    %v5195 = vsub.f32 1.0, %v5194
    %v5196 = vmul.f32 %v5193, %v5195
    %v5197 = vadd.f32 %v5193, %v5196
    %vm5198 = vweird.f32 %v5132
    %vm5199 = vweird.f32 %v5193
    %vm5200 = vmor %vm5198, %vm5199
    %v5201 = vsel %vm5200, %v5193, %v5197
    %v5202 = vand.u32 2147483647, %v5132
    %vm5203 = vcmp.eq.f32.partialorder %v5202, 8.507059e+37
    %v5204 = vand.u32 %v5132, 2147483648
    %v5205 = vor.u32 1.1754944e-38, %v5204
    %v5206 = vsel %vm5203, %v5205, %v5201
    %v5207 = vmul.f32 %v5010, %v5206
    %v5208 = vmul.f32 %v5012, %v5206
    %v5209 = vrcp.pop %v5133
    %v5210 = vmul.f32 %v5133, %v5209
    %v5211 = vsub.f32 1.0, %v5210
    %v5212 = vmul.f32 %v5209, %v5211
    %v5213 = vadd.f32 %v5209, %v5212
    %vm5214 = vweird.f32 %v5133
    %vm5215 = vweird.f32 %v5209
    %vm5216 = vmor %vm5214, %vm5215
    %v5217 = vsel %vm5216, %v5209, %v5213
    %v5218 = vand.u32 2147483647, %v5133
    %vm5219 = vcmp.eq.f32.partialorder %v5218, 8.507059e+37
    %v5220 = vand.u32 %v5133, 2147483648
    %v5221 = vor.u32 1.1754944e-38, %v5220
    %v5222 = vsel %vm5219, %v5221, %v5217
    %v5223 = vmul.f32 %v5014, %v5222
    %v5224 = vmul.f32 %v5016, %v5222
    %v5225 = vrcp.pop %v5134
    %v5226 = vmul.f32 %v5134, %v5225
    %v5227 = vsub.f32 1.0, %v5226
    %v5228 = vmul.f32 %v5225, %v5227
    %v5229 = vadd.f32 %v5225, %v5228
    %vm5230 = vweird.f32 %v5134
    %vm5231 = vweird.f32 %v5225
    %vm5232 = vmor %vm5230, %vm5231
    %v5233 = vsel %vm5232, %v5225, %v5229
    %v5234 = vand.u32 2147483647, %v5134
    %vm5235 = vcmp.eq.f32.partialorder %v5234, 8.507059e+37
    %v5236 = vand.u32 %v5134, 2147483648
    %v5237 = vor.u32 1.1754944e-38, %v5236
    %v5238 = vsel %vm5235, %v5237, %v5233
    %v5239 = vmul.f32 %v5018, %v5238
    %v5240 = vmul.f32 %v5020, %v5238
    %v5241 = vrcp.pop %v5135
    %v5242 = vmul.f32 %v5135, %v5241
    %v5243 = vsub.f32 1.0, %v5242
    %v5244 = vmul.f32 %v5241, %v5243
    %v5245 = vadd.f32 %v5241, %v5244
    %vm5246 = vweird.f32 %v5135
    %vm5247 = vweird.f32 %v5241
    %vm5248 = vmor %vm5246, %vm5247
    %v5249 = vsel %vm5248, %v5241, %v5245
    %v5250 = vand.u32 2147483647, %v5135
    %vm5251 = vcmp.eq.f32.partialorder %v5250, 8.507059e+37
    %v5252 = vand.u32 %v5135, 2147483648
    %v5253 = vor.u32 1.1754944e-38, %v5252
    %v5254 = vsel %vm5251, %v5253, %v5249
    %v5255 = vmul.f32 %v5022, %v5254
    %v5256 = vmul.f32 %v5024, %v5254
    %v5257 = vrcp.pop %v5136
    %v5258 = vmul.f32 %v5136, %v5257
    %v5259 = vsub.f32 1.0, %v5258
    %v5260 = vmul.f32 %v5257, %v5259
    %v5261 = vadd.f32 %v5257, %v5260
    %vm5262 = vweird.f32 %v5136
    %vm5263 = vweird.f32 %v5257
    %vm5264 = vmor %vm5262, %vm5263
    %v5265 = vsel %vm5264, %v5257, %v5261
    %v5266 = vand.u32 2147483647, %v5136
    %vm5267 = vcmp.eq.f32.partialorder %v5266, 8.507059e+37
    %v5268 = vand.u32 %v5136, 2147483648
    %v5269 = vor.u32 1.1754944e-38, %v5268
    %v5270 = vsel %vm5267, %v5269, %v5265
    %v5271 = vmul.f32 %v5026, %v5270
    %v5272 = vmul.f32 %v5028, %v5270
    %5274 = vset.pattern.permute.xlu0 0
    %5275 = vperm.xlu0 %5274, %v5159
    %v5276 = vpop.permute.xlu0 %5275
    %5279 = vset.pattern.permute.xlu0 0
    %5280 = vperm.xlu0 %5279, %v5160
    %v5281 = vpop.permute.xlu0 %5280
    %5284 = vset.pattern.permute.xlu0 0
    %5285 = vperm.xlu0 %5284, %v5175
    %v5286 = vpop.permute.xlu0 %5285
    %5289 = vset.pattern.permute.xlu0 0
    %5290 = vperm.xlu0 %5289, %v5176
    %v5291 = vpop.permute.xlu0 %5290
    %5294 = vset.pattern.permute.xlu0 0
    %5295 = vperm.xlu0 %5294, %v5191
    %v5296 = vpop.permute.xlu0 %5295
    %5299 = vset.pattern.permute.xlu0 0
    %5300 = vperm.xlu0 %5299, %v5192
    %v5301 = vpop.permute.xlu0 %5300
    %5304 = vset.pattern.permute.xlu0 0
    %5305 = vperm.xlu0 %5304, %v5207
    %v5306 = vpop.permute.xlu0 %5305
    %5309 = vset.pattern.permute.xlu0 0
    %5310 = vperm.xlu0 %5309, %v5208
    %v5311 = vpop.permute.xlu0 %5310
    %5314 = vset.pattern.permute.xlu0 0
    %5315 = vperm.xlu0 %5314, %v5223
    %v5316 = vpop.permute.xlu0 %5315
    %5319 = vset.pattern.permute.xlu0 0
    %5320 = vperm.xlu0 %5319, %v5224
    %v5321 = vpop.permute.xlu0 %5320
    %5324 = vset.pattern.permute.xlu0 0
    %5325 = vperm.xlu0 %5324, %v5239
    %v5326 = vpop.permute.xlu0 %5325
    %5329 = vset.pattern.permute.xlu0 0
    %5330 = vperm.xlu0 %5329, %v5240
    %v5331 = vpop.permute.xlu0 %5330
    %5334 = vset.pattern.permute.xlu0 0
    %5335 = vperm.xlu0 %5334, %v5255
    %v5336 = vpop.permute.xlu0 %5335
    %5339 = vset.pattern.permute.xlu0 0
    %5340 = vperm.xlu0 %5339, %v5256
    %v5341 = vpop.permute.xlu0 %5340
    %5344 = vset.pattern.permute.xlu0 0
    %5345 = vperm.xlu0 %5344, %v5271
    %v5346 = vpop.permute.xlu0 %5345
    %5349 = vset.pattern.permute.xlu0 0
    %5350 = vperm.xlu0 %5349, %v5272
    %v5351 = vpop.permute.xlu0 %5350
    %v5353 = vmul.f32 %v173, %v5276
    %v5354 = vmul.f32 %v174, %v5281
    %v5355 = vmul.f32 %v175, %v5286
    %v5356 = vmul.f32 %v176, %v5291
    %v5357 = vmul.f32 %v177, %v5296
    %v5358 = vmul.f32 %v178, %v5301
    %v5359 = vmul.f32 %v179, %v5306
    %v5360 = vmul.f32 %v180, %v5311
    %v5361 = vmul.f32 %v181, %v5316
    %v5362 = vmul.f32 %v182, %v5321
    %v5363 = vmul.f32 %v183, %v5326
    %v5364 = vmul.f32 %v184, %v5331
    %v5365 = vmul.f32 %v185, %v5336
    %v5366 = vmul.f32 %v186, %v5341
    %v5367 = vmul.f32 %v187, %v5346
    %v5368 = vmul.f32 %v188, %v5351
    %v5369 = vsel %vm197, %v5353, 0.0
    %v5370 = vsel %vm197, %v5354, 0.0
    %v5371 = vadd.f32 %v5369, %v5370
    %v5372 = vrot.slane %v5371, 4
    %v5373 = vadd.f32 %v5371, %v5372
    %v5374 = vrot.slane %v5373, 2
    %v5375 = vadd.f32 %v5373, %v5374
    %v5376 = vrot.slane %v5375, 1
    %v5377 = vadd.f32 %v5375, %v5376
    %v5378 = vsel %vm197, %v5355, 0.0
    %v5379 = vsel %vm197, %v5356, 0.0
    %v5380 = vadd.f32 %v5378, %v5379
    %v5381 = vrot.slane %v5380, 4
    %v5382 = vadd.f32 %v5380, %v5381
    %v5383 = vrot.slane %v5382, 2
    %v5384 = vadd.f32 %v5382, %v5383
    %v5385 = vrot.slane %v5384, 1
    %v5386 = vadd.f32 %v5384, %v5385
    %v5387 = vsel %vm197, %v5357, 0.0
    %v5388 = vsel %vm197, %v5358, 0.0
    %v5389 = vadd.f32 %v5387, %v5388
    %v5390 = vrot.slane %v5389, 4
    %v5391 = vadd.f32 %v5389, %v5390
    %v5392 = vrot.slane %v5391, 2
    %v5393 = vadd.f32 %v5391, %v5392
    %v5394 = vrot.slane %v5393, 1
    %v5395 = vadd.f32 %v5393, %v5394
    %v5396 = vsel %vm197, %v5359, 0.0
    %v5397 = vsel %vm197, %v5360, 0.0
    %v5398 = vadd.f32 %v5396, %v5397
    %v5399 = vrot.slane %v5398, 4
    %v5400 = vadd.f32 %v5398, %v5399
    %v5401 = vrot.slane %v5400, 2
    %v5402 = vadd.f32 %v5400, %v5401
    %v5403 = vrot.slane %v5402, 1
    %v5404 = vadd.f32 %v5402, %v5403
    %v5405 = vsel %vm197, %v5361, 0.0
    %v5406 = vsel %vm197, %v5362, 0.0
    %v5407 = vadd.f32 %v5405, %v5406
    %v5408 = vrot.slane %v5407, 4
    %v5409 = vadd.f32 %v5407, %v5408
    %v5410 = vrot.slane %v5409, 2
    %v5411 = vadd.f32 %v5409, %v5410
    %v5412 = vrot.slane %v5411, 1
    %v5413 = vadd.f32 %v5411, %v5412
    %v5414 = vsel %vm197, %v5363, 0.0
    %v5415 = vsel %vm197, %v5364, 0.0
    %v5416 = vadd.f32 %v5414, %v5415
    %v5417 = vrot.slane %v5416, 4
    %v5418 = vadd.f32 %v5416, %v5417
    %v5419 = vrot.slane %v5418, 2
    %v5420 = vadd.f32 %v5418, %v5419
    %v5421 = vrot.slane %v5420, 1
    %v5422 = vadd.f32 %v5420, %v5421
    %v5423 = vsel %vm197, %v5365, 0.0
    %v5424 = vsel %vm197, %v5366, 0.0
    %v5425 = vadd.f32 %v5423, %v5424
    %v5426 = vrot.slane %v5425, 4
    %v5427 = vadd.f32 %v5425, %v5426
    %v5428 = vrot.slane %v5427, 2
    %v5429 = vadd.f32 %v5427, %v5428
    %v5430 = vrot.slane %v5429, 1
    %v5431 = vadd.f32 %v5429, %v5430
    %v5432 = vsel %vm197, %v5367, 0.0
    %v5433 = vsel %vm197, %v5368, 0.0
    %v5434 = vadd.f32 %v5432, %v5433
    %v5435 = vrot.slane %v5434, 4
    %v5436 = vadd.f32 %v5434, %v5435
    %v5437 = vrot.slane %v5436, 2
    %v5438 = vadd.f32 %v5436, %v5437
    %v5439 = vrot.slane %v5438, 1
    %v5440 = vadd.f32 %v5438, %v5439
    %s5441 = scalar_lea.vmem [#allocation2], 16
    %v5442 = vld [vmem:[%s5441] sm:$0xff]
    %v5443 = vadd.f32 %v5442, %v4606
    %v5452 = vsel %vm1398, %v5386, %v5377
    %v5453 = vsel %vm1400, %v5395, %v5452
    %v5454 = vsel %vm1402, %v5404, %v5453
    %v5455 = vsel %vm1404, %v5413, %v5454
    %v5456 = vsel %vm1406, %v5422, %v5455
    %v5457 = vsel %vm1408, %v5431, %v5456
    %v5458 = vsel %vm1410, %v5440, %v5457
    %v5459 = vsel %vm197, %v5458, 0
    %5461 = vmatpush.msra.mxu0 0.0
    %5462 = vmatpush.msra.mxu0 0.0
    %5463 = vmatpush.msra.mxu0 0.0
    %5464 = vmatpush.msra.mxu0 0.0
    %5465 = vmatpush.msra.mxu0 0.0
    %5466 = vmatpush.msra.mxu0 0.0
    %5467 = vmatpush.msra.mxu0 0.0
    %5468 = vmatpush.msra.mxu0 0.0
    %5469 = vmatpush.msra.mxu0 0.0
    %5470 = vmatpush.msra.mxu0 0.0
    %5471 = vmatpush.msra.mxu0 0.0
    %5472 = vmatpush.msra.mxu0 0.0
    %v5473 = vand.u32 %v1796, 4294901760
    %5474 = vmatpush.msra.mxu0 %v5473
    %v5475 = vand.u32 %v1795, 4294901760
    %5476 = vmatpush.msra.mxu0 %v5475
    %v5477 = vand.u32 %v1794, 4294901760
    %5478 = vmatpush.msra.mxu0 %v5477
    %v5479 = vand.u32 %v1793, 4294901760
    %5480 = vmatpush.msra.mxu0 %v5479
    %v5481 = vand.u32 %v5459, 4294901760
    %v5482 = vsub.f32 %v5459, %v5481
    %v5483 = vand.u32 %v5482, 4294901760
    %v5484 = vsub.f32 %v5482, %v5483
    %v5485 = vand.u32 %v5484, 4294901760
    %5486 = vmatmul.f32.gmra.mxu0 %v5485
    %v5487 = vpop.f32.mrf.mxu0
    %v5488 = vadd.f32 0.0, %v5487
    %5489 = vdwg.mxu0
    %5490 = vmatpush.msra.mxu0 0.0
    %5491 = vmatpush.msra.mxu0 0.0
    %5492 = vmatpush.msra.mxu0 0.0
    %5493 = vmatpush.msra.mxu0 0.0
    %5494 = vmatpush.msra.mxu0 0.0
    %5495 = vmatpush.msra.mxu0 0.0
    %5496 = vmatpush.msra.mxu0 0.0
    %5497 = vmatpush.msra.mxu0 0.0
    %5498 = vmatpush.msra.mxu0 0.0
    %5499 = vmatpush.msra.mxu0 0.0
    %5500 = vmatpush.msra.mxu0 0.0
    %5501 = vmatpush.msra.mxu0 0.0
    %v5502 = vand.u32 %v1796, 4294901760
    %v5503 = vsub.f32 %v1796, %v5502
    %v5504 = vand.u32 %v5503, 4294901760
    %v5505 = vsub.f32 %v5503, %v5504
    %v5506 = vand.u32 %v5505, 4294901760
    %5507 = vmatpush.msra.mxu0 %v5506
    %v5508 = vand.u32 %v1795, 4294901760
    %v5509 = vsub.f32 %v1795, %v5508
    %v5510 = vand.u32 %v5509, 4294901760
    %v5511 = vsub.f32 %v5509, %v5510
    %v5512 = vand.u32 %v5511, 4294901760
    %5513 = vmatpush.msra.mxu0 %v5512
    %v5514 = vand.u32 %v1794, 4294901760
    %v5515 = vsub.f32 %v1794, %v5514
    %v5516 = vand.u32 %v5515, 4294901760
    %v5517 = vsub.f32 %v5515, %v5516
    %v5518 = vand.u32 %v5517, 4294901760
    %5519 = vmatpush.msra.mxu0 %v5518
    %v5520 = vand.u32 %v1793, 4294901760
    %v5521 = vsub.f32 %v1793, %v5520
    %v5522 = vand.u32 %v5521, 4294901760
    %v5523 = vsub.f32 %v5521, %v5522
    %v5524 = vand.u32 %v5523, 4294901760
    %5525 = vmatpush.msra.mxu0 %v5524
    %v5526 = vand.u32 %v5459, 4294901760
    %5527 = vmatmul.f32.gmra.mxu0 %v5526
    %v5528 = vpop.f32.mrf.mxu0
    %v5529 = vadd.f32 %v5488, %v5528
    %5530 = vdwg.mxu0
    %5531 = vmatpush.msra.mxu0 0.0
    %5532 = vmatpush.msra.mxu0 0.0
    %5533 = vmatpush.msra.mxu0 0.0
    %5534 = vmatpush.msra.mxu0 0.0
    %5535 = vmatpush.msra.mxu0 0.0
    %5536 = vmatpush.msra.mxu0 0.0
    %5537 = vmatpush.msra.mxu0 0.0
    %5538 = vmatpush.msra.mxu0 0.0
    %5539 = vmatpush.msra.mxu0 0.0
    %5540 = vmatpush.msra.mxu0 0.0
    %5541 = vmatpush.msra.mxu0 0.0
    %5542 = vmatpush.msra.mxu0 0.0
    %v5543 = vand.u32 %v1796, 4294901760
    %v5544 = vsub.f32 %v1796, %v5543
    %5545 = vmatpush.msra.mxu0 %v5544
    %v5546 = vand.u32 %v1795, 4294901760
    %v5547 = vsub.f32 %v1795, %v5546
    %5548 = vmatpush.msra.mxu0 %v5547
    %v5549 = vand.u32 %v1794, 4294901760
    %v5550 = vsub.f32 %v1794, %v5549
    %5551 = vmatpush.msra.mxu0 %v5550
    %v5552 = vand.u32 %v1793, 4294901760
    %v5553 = vsub.f32 %v1793, %v5552
    %5554 = vmatpush.msra.mxu0 %v5553
    %v5555 = vand.u32 %v5459, 4294901760
    %v5556 = vsub.f32 %v5459, %v5555
    %5557 = vmatmul.f32.gmra.mxu0 %v5556
    %v5558 = vpop.f32.mrf.mxu0
    %v5559 = vadd.f32 %v5529, %v5558
    %5560 = vdwg.mxu0
    %5561 = vmatpush.msra.mxu0 0.0
    %5562 = vmatpush.msra.mxu0 0.0
    %5563 = vmatpush.msra.mxu0 0.0
    %5564 = vmatpush.msra.mxu0 0.0
    %5565 = vmatpush.msra.mxu0 0.0
    %5566 = vmatpush.msra.mxu0 0.0
    %5567 = vmatpush.msra.mxu0 0.0
    %5568 = vmatpush.msra.mxu0 0.0
    %5569 = vmatpush.msra.mxu0 0.0
    %5570 = vmatpush.msra.mxu0 0.0
    %5571 = vmatpush.msra.mxu0 0.0
    %5572 = vmatpush.msra.mxu0 0.0
    %v5573 = vand.u32 %v1796, 4294901760
    %5574 = vmatpush.msra.mxu0 %v5573
    %v5575 = vand.u32 %v1795, 4294901760
    %5576 = vmatpush.msra.mxu0 %v5575
    %v5577 = vand.u32 %v1794, 4294901760
    %5578 = vmatpush.msra.mxu0 %v5577
    %v5579 = vand.u32 %v1793, 4294901760
    %5580 = vmatpush.msra.mxu0 %v5579
    %v5581 = vand.u32 %v5459, 4294901760
    %v5582 = vsub.f32 %v5459, %v5581
    %v5583 = vand.u32 %v5582, 4294901760
    %5584 = vmatmul.f32.gmra.mxu0 %v5583
    %v5585 = vpop.f32.mrf.mxu0
    %v5586 = vadd.f32 %v5559, %v5585
    %5587 = vdwg.mxu0
    %5588 = vmatpush.msra.mxu0 0.0
    %5589 = vmatpush.msra.mxu0 0.0
    %5590 = vmatpush.msra.mxu0 0.0
    %5591 = vmatpush.msra.mxu0 0.0
    %5592 = vmatpush.msra.mxu0 0.0
    %5593 = vmatpush.msra.mxu0 0.0
    %5594 = vmatpush.msra.mxu0 0.0
    %5595 = vmatpush.msra.mxu0 0.0
    %5596 = vmatpush.msra.mxu0 0.0
    %5597 = vmatpush.msra.mxu0 0.0
    %5598 = vmatpush.msra.mxu0 0.0
    %5599 = vmatpush.msra.mxu0 0.0
    %v5600 = vand.u32 %v1796, 4294901760
    %v5601 = vsub.f32 %v1796, %v5600
    %v5602 = vand.u32 %v5601, 4294901760
    %5603 = vmatpush.msra.mxu0 %v5602
    %v5604 = vand.u32 %v1795, 4294901760
    %v5605 = vsub.f32 %v1795, %v5604
    %v5606 = vand.u32 %v5605, 4294901760
    %5607 = vmatpush.msra.mxu0 %v5606
    %v5608 = vand.u32 %v1794, 4294901760
    %v5609 = vsub.f32 %v1794, %v5608
    %v5610 = vand.u32 %v5609, 4294901760
    %5611 = vmatpush.msra.mxu0 %v5610
    %v5612 = vand.u32 %v1793, 4294901760
    %v5613 = vsub.f32 %v1793, %v5612
    %v5614 = vand.u32 %v5613, 4294901760
    %5615 = vmatpush.msra.mxu0 %v5614
    %v5616 = vand.u32 %v5459, 4294901760
    %5617 = vmatmul.f32.gmra.mxu0 %v5616
    %v5618 = vpop.f32.mrf.mxu0
    %v5619 = vadd.f32 %v5586, %v5618
    %5620 = vdwg.mxu0
    %5621 = vmatpush.msra.mxu0 0.0
    %5622 = vmatpush.msra.mxu0 0.0
    %5623 = vmatpush.msra.mxu0 0.0
    %5624 = vmatpush.msra.mxu0 0.0
    %5625 = vmatpush.msra.mxu0 0.0
    %5626 = vmatpush.msra.mxu0 0.0
    %5627 = vmatpush.msra.mxu0 0.0
    %5628 = vmatpush.msra.mxu0 0.0
    %5629 = vmatpush.msra.mxu0 0.0
    %5630 = vmatpush.msra.mxu0 0.0
    %5631 = vmatpush.msra.mxu0 0.0
    %5632 = vmatpush.msra.mxu0 0.0
    %v5633 = vand.u32 %v1796, 4294901760
    %5634 = vmatpush.msra.mxu0 %v5633
    %v5635 = vand.u32 %v1795, 4294901760
    %5636 = vmatpush.msra.mxu0 %v5635
    %v5637 = vand.u32 %v1794, 4294901760
    %5638 = vmatpush.msra.mxu0 %v5637
    %v5639 = vand.u32 %v1793, 4294901760
    %5640 = vmatpush.msra.mxu0 %v5639
    %v5641 = vand.u32 %v5459, 4294901760
    %5642 = vmatmul.f32.gmra.mxu0 %v5641
    %v5643 = vpop.f32.mrf.mxu0
    %v5644 = vadd.f32 %v5619, %v5643
    %5645 = vdwg.mxu0
    %v5646 = vadd.f32 %v5443, %v5644
    %v5647 = vxor.u32 %v5646, 2147483648
    %v5648 = vmul.f32 %v5647, 1.442695
    %v5649 = vpow.pop %v5648
    %v5650 = vadd.f32 %v5649, 1.0
    %v5651 = vrcp.pop %v5650
    %v5652 = vmul.f32 %v5650, %v5651
    %v5653 = vsub.f32 1.0, %v5652
    %v5654 = vmul.f32 %v5651, %v5653
    %v5655 = vadd.f32 %v5651, %v5654
    %vm5656 = vweird.f32 %v5650
    %vm5657 = vweird.f32 %v5651
    %vm5658 = vmor %vm5656, %vm5657
    %v5659 = vsel %vm5658, %v5651, %v5655
    %v5660 = vand.u32 2147483647, %v5650
    %vm5661 = vcmp.eq.f32.partialorder %v5660, 8.507059e+37
    %v5662 = vand.u32 %v5650, 2147483648
    %v5663 = vor.u32 1.1754944e-38, %v5662
    %v5664 = vsel %vm5661, %v5663, %v5659
    %v5665 = vmul.f32 1.0, %v5664
    %v5666 = vtanh.pop %v5646
    %v5667 = vmul.f32 %v5665, %v4374
    %5669 = vrot.lane.b32.xlu0 %v5666, 64
    %v5670 = vpop.permute.xlu0 %5669
    %v5672 = vmul.f32 %v5665, %v5670
    %5674 = vrot.lane.b32.xlu0 %v5672, 32
    %v5675 = vpop.permute.xlu0 %5674
    %v5677 = vadd.f32 %v5667, %v5675
    %v5678 = vtanh.pop %v5677
    %5680 = vrot.lane.b32.xlu0 %v5678, 64
    %v5681 = vpop.permute.xlu0 %5680
    %v5683 = vmul.f32 %v5665, %v5681
    %5685 = vrot.lane.b32.xlu0 %v5683, 32
    %v5686 = vpop.permute.xlu0 %5685
    %s5688 = scalar_lea.vmem [#allocation17], 16
    %5689 = vst.msk [vmem:[%s5688] sm:$0xff] %vm197, %v5686
    %v5690 = vperm.slane %v5276, %v2318
    %v5691 = vperm.slane %v5281, %v2320
    %v5692 = vsel %vm2322, %v5691, %v5690
    %v5693 = vperm.slane %v5286, %v2318
    %v5694 = vperm.slane %v5291, %v2320
    %v5695 = vsel %vm2322, %v5694, %v5693
    %v5696 = vperm.slane %v5296, %v2318
    %v5697 = vperm.slane %v5301, %v2320
    %v5698 = vsel %vm2322, %v5697, %v5696
    %v5699 = vperm.slane %v5306, %v2318
    %v5700 = vperm.slane %v5311, %v2320
    %v5701 = vsel %vm2322, %v5700, %v5699
    %v5702 = vperm.slane %v5316, %v2318
    %v5703 = vperm.slane %v5321, %v2320
    %v5704 = vsel %vm2322, %v5703, %v5702
    %v5705 = vperm.slane %v5326, %v2318
    %v5706 = vperm.slane %v5331, %v2320
    %v5707 = vsel %vm2322, %v5706, %v5705
    %v5708 = vperm.slane %v5336, %v2318
    %v5709 = vperm.slane %v5341, %v2320
    %v5710 = vsel %vm2322, %v5709, %v5708
    %v5711 = vperm.slane %v5346, %v2318
    %v5712 = vperm.slane %v5351, %v2320
    %v5713 = vsel %vm2322, %v5712, %v5711
    %v5714 = vsel %vm1398, %v5695, %v5692
    %v5715 = vsel %vm1400, %v5698, %v5714
    %v5716 = vsel %vm1402, %v5701, %v5715
    %v5717 = vsel %vm1404, %v5704, %v5716
    %v5718 = vsel %vm1406, %v5707, %v5717
    %v5719 = vsel %vm1408, %v5710, %v5718
    %v5720 = vsel %vm1410, %v5713, %v5719
    %s5722 = scalar_lea.vmem [#allocation18], 16
    %5723 = vst.msk [vmem:[%s5722] sm:$0xff] %vm2353, %v5720
    %v5724 = vsel %vm197, %v5686, 0
    %5726 = vmatpush.msra.mxu0 0.0
    %5727 = vmatpush.msra.mxu0 0.0
    %5728 = vmatpush.msra.mxu0 0.0
    %5729 = vmatpush.msra.mxu0 0.0
    %5730 = vmatpush.msra.mxu0 0.0
    %5731 = vmatpush.msra.mxu0 0.0
    %5732 = vmatpush.msra.mxu0 0.0
    %5733 = vmatpush.msra.mxu0 0.0
    %5734 = vmatpush.msra.mxu0 0.0
    %5735 = vmatpush.msra.mxu0 0.0
    %5736 = vmatpush.msra.mxu0 0.0
    %5737 = vmatpush.msra.mxu0 0.0
    %v5738 = vand.u32 %v1803, 4294901760
    %5739 = vmatpush.msra.mxu0 %v5738
    %v5740 = vand.u32 %v1801, 4294901760
    %5741 = vmatpush.msra.mxu0 %v5740
    %v5742 = vand.u32 %v1799, 4294901760
    %5743 = vmatpush.msra.mxu0 %v5742
    %v5744 = vand.u32 %v1797, 4294901760
    %5745 = vmatpush.msra.mxu0 %v5744
    %v5746 = vand.u32 %v5724, 4294901760
    %v5747 = vsub.f32 %v5724, %v5746
    %v5748 = vand.u32 %v5747, 4294901760
    %v5749 = vsub.f32 %v5747, %v5748
    %v5750 = vand.u32 %v5749, 4294901760
    %5751 = vmatmul.f32.gmra.mxu0 %v5750
    %v5752 = vpop.f32.mrf.mxu0
    %v5753 = vadd.f32 0.0, %v5752
    %5754 = vdwg.mxu0
    %5755 = vmatpush.msra.mxu0 0.0
    %5756 = vmatpush.msra.mxu0 0.0
    %5757 = vmatpush.msra.mxu0 0.0
    %5758 = vmatpush.msra.mxu0 0.0
    %5759 = vmatpush.msra.mxu0 0.0
    %5760 = vmatpush.msra.mxu0 0.0
    %5761 = vmatpush.msra.mxu0 0.0
    %5762 = vmatpush.msra.mxu0 0.0
    %5763 = vmatpush.msra.mxu0 0.0
    %5764 = vmatpush.msra.mxu0 0.0
    %5765 = vmatpush.msra.mxu0 0.0
    %5766 = vmatpush.msra.mxu0 0.0
    %v5767 = vand.u32 %v1803, 4294901760
    %v5768 = vsub.f32 %v1803, %v5767
    %v5769 = vand.u32 %v5768, 4294901760
    %v5770 = vsub.f32 %v5768, %v5769
    %v5771 = vand.u32 %v5770, 4294901760
    %5772 = vmatpush.msra.mxu0 %v5771
    %v5773 = vand.u32 %v1801, 4294901760
    %v5774 = vsub.f32 %v1801, %v5773
    %v5775 = vand.u32 %v5774, 4294901760
    %v5776 = vsub.f32 %v5774, %v5775
    %v5777 = vand.u32 %v5776, 4294901760
    %5778 = vmatpush.msra.mxu0 %v5777
    %v5779 = vand.u32 %v1799, 4294901760
    %v5780 = vsub.f32 %v1799, %v5779
    %v5781 = vand.u32 %v5780, 4294901760
    %v5782 = vsub.f32 %v5780, %v5781
    %v5783 = vand.u32 %v5782, 4294901760
    %5784 = vmatpush.msra.mxu0 %v5783
    %v5785 = vand.u32 %v1797, 4294901760
    %v5786 = vsub.f32 %v1797, %v5785
    %v5787 = vand.u32 %v5786, 4294901760
    %v5788 = vsub.f32 %v5786, %v5787
    %v5789 = vand.u32 %v5788, 4294901760
    %5790 = vmatpush.msra.mxu0 %v5789
    %v5791 = vand.u32 %v5724, 4294901760
    %5792 = vmatmul.f32.gmra.mxu0 %v5791
    %v5793 = vpop.f32.mrf.mxu0
    %v5794 = vadd.f32 %v5753, %v5793
    %5795 = vdwg.mxu0
    %5796 = vmatpush.msra.mxu0 0.0
    %5797 = vmatpush.msra.mxu0 0.0
    %5798 = vmatpush.msra.mxu0 0.0
    %5799 = vmatpush.msra.mxu0 0.0
    %5800 = vmatpush.msra.mxu0 0.0
    %5801 = vmatpush.msra.mxu0 0.0
    %5802 = vmatpush.msra.mxu0 0.0
    %5803 = vmatpush.msra.mxu0 0.0
    %5804 = vmatpush.msra.mxu0 0.0
    %5805 = vmatpush.msra.mxu0 0.0
    %5806 = vmatpush.msra.mxu0 0.0
    %5807 = vmatpush.msra.mxu0 0.0
    %v5808 = vand.u32 %v1803, 4294901760
    %v5809 = vsub.f32 %v1803, %v5808
    %5810 = vmatpush.msra.mxu0 %v5809
    %v5811 = vand.u32 %v1801, 4294901760
    %v5812 = vsub.f32 %v1801, %v5811
    %5813 = vmatpush.msra.mxu0 %v5812
    %v5814 = vand.u32 %v1799, 4294901760
    %v5815 = vsub.f32 %v1799, %v5814
    %5816 = vmatpush.msra.mxu0 %v5815
    %v5817 = vand.u32 %v1797, 4294901760
    %v5818 = vsub.f32 %v1797, %v5817
    %5819 = vmatpush.msra.mxu0 %v5818
    %v5820 = vand.u32 %v5724, 4294901760
    %v5821 = vsub.f32 %v5724, %v5820
    %5822 = vmatmul.f32.gmra.mxu0 %v5821
    %v5823 = vpop.f32.mrf.mxu0
    %v5824 = vadd.f32 %v5794, %v5823
    %5825 = vdwg.mxu0
    %5826 = vmatpush.msra.mxu0 0.0
    %5827 = vmatpush.msra.mxu0 0.0
    %5828 = vmatpush.msra.mxu0 0.0
    %5829 = vmatpush.msra.mxu0 0.0
    %5830 = vmatpush.msra.mxu0 0.0
    %5831 = vmatpush.msra.mxu0 0.0
    %5832 = vmatpush.msra.mxu0 0.0
    %5833 = vmatpush.msra.mxu0 0.0
    %5834 = vmatpush.msra.mxu0 0.0
    %5835 = vmatpush.msra.mxu0 0.0
    %5836 = vmatpush.msra.mxu0 0.0
    %5837 = vmatpush.msra.mxu0 0.0
    %v5838 = vand.u32 %v1803, 4294901760
    %5839 = vmatpush.msra.mxu0 %v5838
    %v5840 = vand.u32 %v1801, 4294901760
    %5841 = vmatpush.msra.mxu0 %v5840
    %v5842 = vand.u32 %v1799, 4294901760
    %5843 = vmatpush.msra.mxu0 %v5842
    %v5844 = vand.u32 %v1797, 4294901760
    %5845 = vmatpush.msra.mxu0 %v5844
    %v5846 = vand.u32 %v5724, 4294901760
    %v5847 = vsub.f32 %v5724, %v5846
    %v5848 = vand.u32 %v5847, 4294901760
    %5849 = vmatmul.f32.gmra.mxu0 %v5848
    %v5850 = vpop.f32.mrf.mxu0
    %v5851 = vadd.f32 %v5824, %v5850
    %5852 = vdwg.mxu0
    %5853 = vmatpush.msra.mxu0 0.0
    %5854 = vmatpush.msra.mxu0 0.0
    %5855 = vmatpush.msra.mxu0 0.0
    %5856 = vmatpush.msra.mxu0 0.0
    %5857 = vmatpush.msra.mxu0 0.0
    %5858 = vmatpush.msra.mxu0 0.0
    %5859 = vmatpush.msra.mxu0 0.0
    %5860 = vmatpush.msra.mxu0 0.0
    %5861 = vmatpush.msra.mxu0 0.0
    %5862 = vmatpush.msra.mxu0 0.0
    %5863 = vmatpush.msra.mxu0 0.0
    %5864 = vmatpush.msra.mxu0 0.0
    %v5865 = vand.u32 %v1803, 4294901760
    %v5866 = vsub.f32 %v1803, %v5865
    %v5867 = vand.u32 %v5866, 4294901760
    %5868 = vmatpush.msra.mxu0 %v5867
    %v5869 = vand.u32 %v1801, 4294901760
    %v5870 = vsub.f32 %v1801, %v5869
    %v5871 = vand.u32 %v5870, 4294901760
    %5872 = vmatpush.msra.mxu0 %v5871
    %v5873 = vand.u32 %v1799, 4294901760
    %v5874 = vsub.f32 %v1799, %v5873
    %v5875 = vand.u32 %v5874, 4294901760
    %5876 = vmatpush.msra.mxu0 %v5875
    %v5877 = vand.u32 %v1797, 4294901760
    %v5878 = vsub.f32 %v1797, %v5877
    %v5879 = vand.u32 %v5878, 4294901760
    %5880 = vmatpush.msra.mxu0 %v5879
    %v5881 = vand.u32 %v5724, 4294901760
    %5882 = vmatmul.f32.gmra.mxu0 %v5881
    %v5883 = vpop.f32.mrf.mxu0
    %v5884 = vadd.f32 %v5851, %v5883
    %5885 = vdwg.mxu0
    %5886 = vmatpush.msra.mxu0 0.0
    %5887 = vmatpush.msra.mxu0 0.0
    %5888 = vmatpush.msra.mxu0 0.0
    %5889 = vmatpush.msra.mxu0 0.0
    %5890 = vmatpush.msra.mxu0 0.0
    %5891 = vmatpush.msra.mxu0 0.0
    %5892 = vmatpush.msra.mxu0 0.0
    %5893 = vmatpush.msra.mxu0 0.0
    %5894 = vmatpush.msra.mxu0 0.0
    %5895 = vmatpush.msra.mxu0 0.0
    %5896 = vmatpush.msra.mxu0 0.0
    %5897 = vmatpush.msra.mxu0 0.0
    %v5898 = vand.u32 %v1803, 4294901760
    %5899 = vmatpush.msra.mxu0 %v5898
    %v5900 = vand.u32 %v1801, 4294901760
    %5901 = vmatpush.msra.mxu0 %v5900
    %v5902 = vand.u32 %v1799, 4294901760
    %5903 = vmatpush.msra.mxu0 %v5902
    %v5904 = vand.u32 %v1797, 4294901760
    %5905 = vmatpush.msra.mxu0 %v5904
    %v5906 = vand.u32 %v5724, 4294901760
    %5907 = vmatmul.f32.gmra.mxu0 %v5906
    %v5908 = vpop.f32.mrf.mxu0
    %v5909 = vadd.f32 %v5884, %v5908
    %5910 = vdwg.mxu0
    %5911 = vmatpush.msra.mxu0 0.0
    %5912 = vmatpush.msra.mxu0 0.0
    %5913 = vmatpush.msra.mxu0 0.0
    %5914 = vmatpush.msra.mxu0 0.0
    %5915 = vmatpush.msra.mxu0 0.0
    %5916 = vmatpush.msra.mxu0 0.0
    %5917 = vmatpush.msra.mxu0 0.0
    %5918 = vmatpush.msra.mxu0 0.0
    %5919 = vmatpush.msra.mxu0 0.0
    %5920 = vmatpush.msra.mxu0 0.0
    %5921 = vmatpush.msra.mxu0 0.0
    %5922 = vmatpush.msra.mxu0 0.0
    %v5923 = vand.u32 %v1804, 4294901760
    %5924 = vmatpush.msra.mxu0 %v5923
    %v5925 = vand.u32 %v1802, 4294901760
    %5926 = vmatpush.msra.mxu0 %v5925
    %v5927 = vand.u32 %v1800, 4294901760
    %5928 = vmatpush.msra.mxu0 %v5927
    %v5929 = vand.u32 %v1798, 4294901760
    %5930 = vmatpush.msra.mxu0 %v5929
    %v5931 = vand.u32 %v5724, 4294901760
    %v5932 = vsub.f32 %v5724, %v5931
    %v5933 = vand.u32 %v5932, 4294901760
    %v5934 = vsub.f32 %v5932, %v5933
    %v5935 = vand.u32 %v5934, 4294901760
    %5936 = vmatmul.f32.gmra.mxu0 %v5935
    %v5937 = vpop.f32.mrf.mxu0
    %v5938 = vadd.f32 0.0, %v5937
    %5939 = vdwg.mxu0
    %5940 = vmatpush.msra.mxu0 0.0
    %5941 = vmatpush.msra.mxu0 0.0
    %5942 = vmatpush.msra.mxu0 0.0
    %5943 = vmatpush.msra.mxu0 0.0
    %5944 = vmatpush.msra.mxu0 0.0
    %5945 = vmatpush.msra.mxu0 0.0
    %5946 = vmatpush.msra.mxu0 0.0
    %5947 = vmatpush.msra.mxu0 0.0
    %5948 = vmatpush.msra.mxu0 0.0
    %5949 = vmatpush.msra.mxu0 0.0
    %5950 = vmatpush.msra.mxu0 0.0
    %5951 = vmatpush.msra.mxu0 0.0
    %v5952 = vand.u32 %v1804, 4294901760
    %v5953 = vsub.f32 %v1804, %v5952
    %v5954 = vand.u32 %v5953, 4294901760
    %v5955 = vsub.f32 %v5953, %v5954
    %v5956 = vand.u32 %v5955, 4294901760
    %5957 = vmatpush.msra.mxu0 %v5956
    %v5958 = vand.u32 %v1802, 4294901760
    %v5959 = vsub.f32 %v1802, %v5958
    %v5960 = vand.u32 %v5959, 4294901760
    %v5961 = vsub.f32 %v5959, %v5960
    %v5962 = vand.u32 %v5961, 4294901760
    %5963 = vmatpush.msra.mxu0 %v5962
    %v5964 = vand.u32 %v1800, 4294901760
    %v5965 = vsub.f32 %v1800, %v5964
    %v5966 = vand.u32 %v5965, 4294901760
    %v5967 = vsub.f32 %v5965, %v5966
    %v5968 = vand.u32 %v5967, 4294901760
    %5969 = vmatpush.msra.mxu0 %v5968
    %v5970 = vand.u32 %v1798, 4294901760
    %v5971 = vsub.f32 %v1798, %v5970
    %v5972 = vand.u32 %v5971, 4294901760
    %v5973 = vsub.f32 %v5971, %v5972
    %v5974 = vand.u32 %v5973, 4294901760
    %5975 = vmatpush.msra.mxu0 %v5974
    %v5976 = vand.u32 %v5724, 4294901760
    %5977 = vmatmul.f32.gmra.mxu0 %v5976
    %v5978 = vpop.f32.mrf.mxu0
    %v5979 = vadd.f32 %v5938, %v5978
    %5980 = vdwg.mxu0
    %5981 = vmatpush.msra.mxu0 0.0
    %5982 = vmatpush.msra.mxu0 0.0
    %5983 = vmatpush.msra.mxu0 0.0
    %5984 = vmatpush.msra.mxu0 0.0
    %5985 = vmatpush.msra.mxu0 0.0
    %5986 = vmatpush.msra.mxu0 0.0
    %5987 = vmatpush.msra.mxu0 0.0
    %5988 = vmatpush.msra.mxu0 0.0
    %5989 = vmatpush.msra.mxu0 0.0
    %5990 = vmatpush.msra.mxu0 0.0
    %5991 = vmatpush.msra.mxu0 0.0
    %5992 = vmatpush.msra.mxu0 0.0
    %v5993 = vand.u32 %v1804, 4294901760
    %v5994 = vsub.f32 %v1804, %v5993
    %5995 = vmatpush.msra.mxu0 %v5994
    %v5996 = vand.u32 %v1802, 4294901760
    %v5997 = vsub.f32 %v1802, %v5996
    %5998 = vmatpush.msra.mxu0 %v5997
    %v5999 = vand.u32 %v1800, 4294901760
    %v6000 = vsub.f32 %v1800, %v5999
    %6001 = vmatpush.msra.mxu0 %v6000
    %v6002 = vand.u32 %v1798, 4294901760
    %v6003 = vsub.f32 %v1798, %v6002
    %6004 = vmatpush.msra.mxu0 %v6003
    %v6005 = vand.u32 %v5724, 4294901760
    %v6006 = vsub.f32 %v5724, %v6005
    %6007 = vmatmul.f32.gmra.mxu0 %v6006
    %v6008 = vpop.f32.mrf.mxu0
    %v6009 = vadd.f32 %v5979, %v6008
    %6010 = vdwg.mxu0
    %6011 = vmatpush.msra.mxu0 0.0
    %6012 = vmatpush.msra.mxu0 0.0
    %6013 = vmatpush.msra.mxu0 0.0
    %6014 = vmatpush.msra.mxu0 0.0
    %6015 = vmatpush.msra.mxu0 0.0
    %6016 = vmatpush.msra.mxu0 0.0
    %6017 = vmatpush.msra.mxu0 0.0
    %6018 = vmatpush.msra.mxu0 0.0
    %6019 = vmatpush.msra.mxu0 0.0
    %6020 = vmatpush.msra.mxu0 0.0
    %6021 = vmatpush.msra.mxu0 0.0
    %6022 = vmatpush.msra.mxu0 0.0
    %v6023 = vand.u32 %v1804, 4294901760
    %6024 = vmatpush.msra.mxu0 %v6023
    %v6025 = vand.u32 %v1802, 4294901760
    %6026 = vmatpush.msra.mxu0 %v6025
    %v6027 = vand.u32 %v1800, 4294901760
    %6028 = vmatpush.msra.mxu0 %v6027
    %v6029 = vand.u32 %v1798, 4294901760
    %6030 = vmatpush.msra.mxu0 %v6029
    %v6031 = vand.u32 %v5724, 4294901760
    %v6032 = vsub.f32 %v5724, %v6031
    %v6033 = vand.u32 %v6032, 4294901760
    %6034 = vmatmul.f32.gmra.mxu0 %v6033
    %v6035 = vpop.f32.mrf.mxu0
    %v6036 = vadd.f32 %v6009, %v6035
    %6037 = vdwg.mxu0
    %6038 = vmatpush.msra.mxu0 0.0
    %6039 = vmatpush.msra.mxu0 0.0
    %6040 = vmatpush.msra.mxu0 0.0
    %6041 = vmatpush.msra.mxu0 0.0
    %6042 = vmatpush.msra.mxu0 0.0
    %6043 = vmatpush.msra.mxu0 0.0
    %6044 = vmatpush.msra.mxu0 0.0
    %6045 = vmatpush.msra.mxu0 0.0
    %6046 = vmatpush.msra.mxu0 0.0
    %6047 = vmatpush.msra.mxu0 0.0
    %6048 = vmatpush.msra.mxu0 0.0
    %6049 = vmatpush.msra.mxu0 0.0
    %v6050 = vand.u32 %v1804, 4294901760
    %v6051 = vsub.f32 %v1804, %v6050
    %v6052 = vand.u32 %v6051, 4294901760
    %6053 = vmatpush.msra.mxu0 %v6052
    %v6054 = vand.u32 %v1802, 4294901760
    %v6055 = vsub.f32 %v1802, %v6054
    %v6056 = vand.u32 %v6055, 4294901760
    %6057 = vmatpush.msra.mxu0 %v6056
    %v6058 = vand.u32 %v1800, 4294901760
    %v6059 = vsub.f32 %v1800, %v6058
    %v6060 = vand.u32 %v6059, 4294901760
    %6061 = vmatpush.msra.mxu0 %v6060
    %v6062 = vand.u32 %v1798, 4294901760
    %v6063 = vsub.f32 %v1798, %v6062
    %v6064 = vand.u32 %v6063, 4294901760
    %6065 = vmatpush.msra.mxu0 %v6064
    %v6066 = vand.u32 %v5724, 4294901760
    %6067 = vmatmul.f32.gmra.mxu0 %v6066
    %v6068 = vpop.f32.mrf.mxu0
    %v6069 = vadd.f32 %v6036, %v6068
    %6070 = vdwg.mxu0
    %6071 = vmatpush.msra.mxu0 0.0
    %6072 = vmatpush.msra.mxu0 0.0
    %6073 = vmatpush.msra.mxu0 0.0
    %6074 = vmatpush.msra.mxu0 0.0
    %6075 = vmatpush.msra.mxu0 0.0
    %6076 = vmatpush.msra.mxu0 0.0
    %6077 = vmatpush.msra.mxu0 0.0
    %6078 = vmatpush.msra.mxu0 0.0
    %6079 = vmatpush.msra.mxu0 0.0
    %6080 = vmatpush.msra.mxu0 0.0
    %6081 = vmatpush.msra.mxu0 0.0
    %6082 = vmatpush.msra.mxu0 0.0
    %v6083 = vand.u32 %v1804, 4294901760
    %6084 = vmatpush.msra.mxu0 %v6083
    %v6085 = vand.u32 %v1802, 4294901760
    %6086 = vmatpush.msra.mxu0 %v6085
    %v6087 = vand.u32 %v1800, 4294901760
    %6088 = vmatpush.msra.mxu0 %v6087
    %v6089 = vand.u32 %v1798, 4294901760
    %6090 = vmatpush.msra.mxu0 %v6089
    %v6091 = vand.u32 %v5724, 4294901760
    %6092 = vmatmul.f32.gmra.mxu0 %v6091
    %v6093 = vpop.f32.mrf.mxu0
    %v6094 = vadd.f32 %v6069, %v6093
    %6095 = vdwg.mxu0
    %v6097 = vrot.slane %v6094, 1
    %v6098 = vrot.slane %v6094, 2
    %v6099 = vrot.slane %v6094, 3
    %v6100 = vrot.slane %v6094, 4
    %v6101 = vrot.slane %v6094, 5
    %v6102 = vrot.slane %v6094, 6
    %v6103 = vrot.slane %v6094, 7
    %v6104 = vperm.slane %v6094, 0
    %v6105 = vperm.slane %v6097, 0
    %v6106 = vperm.slane %v6098, 0
    %v6107 = vperm.slane %v6099, 0
    %v6108 = vperm.slane %v6100, 0
    %v6109 = vperm.slane %v6101, 0
    %v6110 = vperm.slane %v6102, 0
    %v6111 = vperm.slane %v6103, 0
    %v6120 = vadd.f32 %v834, %v6104
    %v6121 = vadd.f32 %v838, %v6104
    %v6122 = vadd.f32 %v842, %v6105
    %v6123 = vadd.f32 %v846, %v6105
    %v6124 = vadd.f32 %v850, %v6106
    %v6125 = vadd.f32 %v854, %v6106
    %v6126 = vadd.f32 %v858, %v6107
    %v6127 = vadd.f32 %v862, %v6107
    %v6128 = vadd.f32 %v866, %v6108
    %v6129 = vadd.f32 %v870, %v6108
    %v6130 = vadd.f32 %v874, %v6109
    %v6131 = vadd.f32 %v878, %v6109
    %v6132 = vadd.f32 %v882, %v6110
    %v6133 = vadd.f32 %v886, %v6110
    %v6134 = vadd.f32 %v890, %v6111
    %v6135 = vadd.f32 %v894, %v6111
    %v6136 = vtanh.pop %v6120
    %v6137 = vtanh.pop %v6121
    %v6138 = vtanh.pop %v6122
    %v6139 = vtanh.pop %v6123
    %v6140 = vtanh.pop %v6124
    %v6141 = vtanh.pop %v6125
    %v6142 = vtanh.pop %v6126
    %v6143 = vtanh.pop %v6127
    %v6144 = vtanh.pop %v6128
    %v6145 = vtanh.pop %v6129
    %v6146 = vtanh.pop %v6130
    %v6147 = vtanh.pop %v6131
    %v6148 = vtanh.pop %v6132
    %v6149 = vtanh.pop %v6133
    %v6150 = vtanh.pop %v6134
    %v6151 = vtanh.pop %v6135
    %v6152 = vmul.f32 %v6136, %v2235
    %v6153 = vmul.f32 %v6137, %v2235
    %v6154 = vmul.f32 %v6138, %v2235
    %v6155 = vmul.f32 %v6139, %v2235
    %v6156 = vmul.f32 %v6140, %v2235
    %v6157 = vmul.f32 %v6141, %v2235
    %v6158 = vmul.f32 %v6142, %v2235
    %v6159 = vmul.f32 %v6143, %v2235
    %v6160 = vmul.f32 %v6144, %v2235
    %v6161 = vmul.f32 %v6145, %v2235
    %v6162 = vmul.f32 %v6146, %v2235
    %v6163 = vmul.f32 %v6147, %v2235
    %v6164 = vmul.f32 %v6148, %v2235
    %v6165 = vmul.f32 %v6149, %v2235
    %v6166 = vmul.f32 %v6150, %v2235
    %v6167 = vmul.f32 %v6151, %v2235
    %v6168 = vsel %vm197, %v6152, 0.0
    %6169 = vadd.xlane.f32.xlu0 %v6168
    %v6170 = vpop.xlane.xlu0 %6169
    %v6171 = vsel %vm197, %v6153, 0.0
    %6172 = vadd.xlane.f32.xlu0 %v6171
    %v6173 = vpop.xlane.xlu0 %6172
    %v6174 = vsel %vm197, %v6154, 0.0
    %6175 = vadd.xlane.f32.xlu0 %v6174
    %v6176 = vpop.xlane.xlu0 %6175
    %v6177 = vsel %vm197, %v6155, 0.0
    %6178 = vadd.xlane.f32.xlu0 %v6177
    %v6179 = vpop.xlane.xlu0 %6178
    %v6180 = vsel %vm197, %v6156, 0.0
    %6181 = vadd.xlane.f32.xlu0 %v6180
    %v6182 = vpop.xlane.xlu0 %6181
    %v6183 = vsel %vm197, %v6157, 0.0
    %6184 = vadd.xlane.f32.xlu0 %v6183
    %v6185 = vpop.xlane.xlu0 %6184
    %v6186 = vsel %vm197, %v6158, 0.0
    %6187 = vadd.xlane.f32.xlu0 %v6186
    %v6188 = vpop.xlane.xlu0 %6187
    %v6189 = vsel %vm197, %v6159, 0.0
    %6190 = vadd.xlane.f32.xlu0 %v6189
    %v6191 = vpop.xlane.xlu0 %6190
    %v6192 = vsel %vm197, %v6160, 0.0
    %6193 = vadd.xlane.f32.xlu0 %v6192
    %v6194 = vpop.xlane.xlu0 %6193
    %v6195 = vsel %vm197, %v6161, 0.0
    %6196 = vadd.xlane.f32.xlu0 %v6195
    %v6197 = vpop.xlane.xlu0 %6196
    %v6198 = vsel %vm197, %v6162, 0.0
    %6199 = vadd.xlane.f32.xlu0 %v6198
    %v6200 = vpop.xlane.xlu0 %6199
    %v6201 = vsel %vm197, %v6163, 0.0
    %6202 = vadd.xlane.f32.xlu0 %v6201
    %v6203 = vpop.xlane.xlu0 %6202
    %v6204 = vsel %vm197, %v6164, 0.0
    %6205 = vadd.xlane.f32.xlu0 %v6204
    %v6206 = vpop.xlane.xlu0 %6205
    %v6207 = vsel %vm197, %v6165, 0.0
    %6208 = vadd.xlane.f32.xlu0 %v6207
    %v6209 = vpop.xlane.xlu0 %6208
    %v6210 = vsel %vm197, %v6166, 0.0
    %6211 = vadd.xlane.f32.xlu0 %v6210
    %v6212 = vpop.xlane.xlu0 %6211
    %v6213 = vsel %vm197, %v6167, 0.0
    %6214 = vadd.xlane.f32.xlu0 %v6213
    %v6215 = vpop.xlane.xlu0 %6214
    %v6232 = vperm.slane %v6170, %v2318
    %v6233 = vperm.slane %v6173, %v2320
    %v6234 = vsel %vm2322, %v6233, %v6232
    %v6235 = vperm.slane %v6176, %v2318
    %v6236 = vperm.slane %v6179, %v2320
    %v6237 = vsel %vm2322, %v6236, %v6235
    %v6238 = vperm.slane %v6182, %v2318
    %v6239 = vperm.slane %v6185, %v2320
    %v6240 = vsel %vm2322, %v6239, %v6238
    %v6241 = vperm.slane %v6188, %v2318
    %v6242 = vperm.slane %v6191, %v2320
    %v6243 = vsel %vm2322, %v6242, %v6241
    %v6244 = vperm.slane %v6194, %v2318
    %v6245 = vperm.slane %v6197, %v2320
    %v6246 = vsel %vm2322, %v6245, %v6244
    %v6247 = vperm.slane %v6200, %v2318
    %v6248 = vperm.slane %v6203, %v2320
    %v6249 = vsel %vm2322, %v6248, %v6247
    %v6250 = vperm.slane %v6206, %v2318
    %v6251 = vperm.slane %v6209, %v2320
    %v6252 = vsel %vm2322, %v6251, %v6250
    %v6253 = vperm.slane %v6212, %v2318
    %v6254 = vperm.slane %v6215, %v2320
    %v6255 = vsel %vm2322, %v6254, %v6253
    %v6256 = vsel %vm1398, %v6237, %v6234
    %v6257 = vsel %vm1400, %v6240, %v6256
    %v6258 = vsel %vm1402, %v6243, %v6257
    %v6259 = vsel %vm1404, %v6246, %v6258
    %v6260 = vsel %vm1406, %v6249, %v6259
    %v6261 = vsel %vm1408, %v6252, %v6260
    %v6262 = vsel %vm1410, %v6255, %v6261
    %v6264 = vsel %vm2353, %v6262, -inf
    %6265 = vmax.xlane.f32.xlu0 %v6264
    %v6266 = vpop.xlane.xlu0 %6265
    %v6268 = vperm.slane %v6266, 0
    %v6269 = vperm.slane %v6266, 1
    %v6270 = vperm.slane %v6266, 2
    %v6271 = vperm.slane %v6266, 3
    %v6272 = vperm.slane %v6266, 4
    %v6273 = vperm.slane %v6266, 5
    %v6274 = vperm.slane %v6266, 6
    %v6275 = vperm.slane %v6266, 7
    %v6284 = vsub.f32 %v6170, %v6268
    %v6285 = vsub.f32 %v6173, %v6268
    %v6286 = vsub.f32 %v6176, %v6269
    %v6287 = vsub.f32 %v6179, %v6269
    %v6288 = vsub.f32 %v6182, %v6270
    %v6289 = vsub.f32 %v6185, %v6270
    %v6290 = vsub.f32 %v6188, %v6271
    %v6291 = vsub.f32 %v6191, %v6271
    %v6292 = vsub.f32 %v6194, %v6272
    %v6293 = vsub.f32 %v6197, %v6272
    %v6294 = vsub.f32 %v6200, %v6273
    %v6295 = vsub.f32 %v6203, %v6273
    %v6296 = vsub.f32 %v6206, %v6274
    %v6297 = vsub.f32 %v6209, %v6274
    %v6298 = vsub.f32 %v6212, %v6275
    %v6299 = vsub.f32 %v6215, %v6275
    %v6300 = vmul.f32 %v6284, 1.442695
    %v6301 = vpow.pop %v6300
    %v6302 = vmul.f32 %v6285, 1.442695
    %v6303 = vpow.pop %v6302
    %v6304 = vmul.f32 %v6286, 1.442695
    %v6305 = vpow.pop %v6304
    %v6306 = vmul.f32 %v6287, 1.442695
    %v6307 = vpow.pop %v6306
    %v6308 = vmul.f32 %v6288, 1.442695
    %v6309 = vpow.pop %v6308
    %v6310 = vmul.f32 %v6289, 1.442695
    %v6311 = vpow.pop %v6310
    %v6312 = vmul.f32 %v6290, 1.442695
    %v6313 = vpow.pop %v6312
    %v6314 = vmul.f32 %v6291, 1.442695
    %v6315 = vpow.pop %v6314
    %v6316 = vmul.f32 %v6292, 1.442695
    %v6317 = vpow.pop %v6316
    %v6318 = vmul.f32 %v6293, 1.442695
    %v6319 = vpow.pop %v6318
    %v6320 = vmul.f32 %v6294, 1.442695
    %v6321 = vpow.pop %v6320
    %v6322 = vmul.f32 %v6295, 1.442695
    %v6323 = vpow.pop %v6322
    %v6324 = vmul.f32 %v6296, 1.442695
    %v6325 = vpow.pop %v6324
    %v6326 = vmul.f32 %v6297, 1.442695
    %v6327 = vpow.pop %v6326
    %v6328 = vmul.f32 %v6298, 1.442695
    %v6329 = vpow.pop %v6328
    %v6330 = vmul.f32 %v6299, 1.442695
    %v6331 = vpow.pop %v6330
    %6348 = vset.pattern.permute.xlu0 0
    %6349 = vperm.xlu0 %6348, %v6301
    %v6350 = vpop.permute.xlu0 %6349
    %6351 = vset.pattern.permute.xlu0 0
    %6352 = vperm.xlu0 %6351, %v6303
    %v6353 = vpop.permute.xlu0 %6352
    %6354 = vset.pattern.permute.xlu0 0
    %6355 = vperm.xlu0 %6354, %v6305
    %v6356 = vpop.permute.xlu0 %6355
    %6357 = vset.pattern.permute.xlu0 0
    %6358 = vperm.xlu0 %6357, %v6307
    %v6359 = vpop.permute.xlu0 %6358
    %6360 = vset.pattern.permute.xlu0 0
    %6361 = vperm.xlu0 %6360, %v6309
    %v6362 = vpop.permute.xlu0 %6361
    %6363 = vset.pattern.permute.xlu0 0
    %6364 = vperm.xlu0 %6363, %v6311
    %v6365 = vpop.permute.xlu0 %6364
    %6366 = vset.pattern.permute.xlu0 0
    %6367 = vperm.xlu0 %6366, %v6313
    %v6368 = vpop.permute.xlu0 %6367
    %6369 = vset.pattern.permute.xlu0 0
    %6370 = vperm.xlu0 %6369, %v6315
    %v6371 = vpop.permute.xlu0 %6370
    %6372 = vset.pattern.permute.xlu0 0
    %6373 = vperm.xlu0 %6372, %v6317
    %v6374 = vpop.permute.xlu0 %6373
    %6375 = vset.pattern.permute.xlu0 0
    %6376 = vperm.xlu0 %6375, %v6319
    %v6377 = vpop.permute.xlu0 %6376
    %6378 = vset.pattern.permute.xlu0 0
    %6379 = vperm.xlu0 %6378, %v6321
    %v6380 = vpop.permute.xlu0 %6379
    %6381 = vset.pattern.permute.xlu0 0
    %6382 = vperm.xlu0 %6381, %v6323
    %v6383 = vpop.permute.xlu0 %6382
    %6384 = vset.pattern.permute.xlu0 0
    %6385 = vperm.xlu0 %6384, %v6325
    %v6386 = vpop.permute.xlu0 %6385
    %6387 = vset.pattern.permute.xlu0 0
    %6388 = vperm.xlu0 %6387, %v6327
    %v6389 = vpop.permute.xlu0 %6388
    %6390 = vset.pattern.permute.xlu0 0
    %6391 = vperm.xlu0 %6390, %v6329
    %v6392 = vpop.permute.xlu0 %6391
    %6393 = vset.pattern.permute.xlu0 0
    %6394 = vperm.xlu0 %6393, %v6331
    %v6395 = vpop.permute.xlu0 %6394
    %v6396 = vperm.slane %v6350, %v2318
    %v6397 = vperm.slane %v6353, %v2320
    %v6398 = vsel %vm2322, %v6397, %v6396
    %v6399 = vperm.slane %v6356, %v2318
    %v6400 = vperm.slane %v6359, %v2320
    %v6401 = vsel %vm2322, %v6400, %v6399
    %v6402 = vperm.slane %v6362, %v2318
    %v6403 = vperm.slane %v6365, %v2320
    %v6404 = vsel %vm2322, %v6403, %v6402
    %v6405 = vperm.slane %v6368, %v2318
    %v6406 = vperm.slane %v6371, %v2320
    %v6407 = vsel %vm2322, %v6406, %v6405
    %v6408 = vperm.slane %v6374, %v2318
    %v6409 = vperm.slane %v6377, %v2320
    %v6410 = vsel %vm2322, %v6409, %v6408
    %v6411 = vperm.slane %v6380, %v2318
    %v6412 = vperm.slane %v6383, %v2320
    %v6413 = vsel %vm2322, %v6412, %v6411
    %v6414 = vperm.slane %v6386, %v2318
    %v6415 = vperm.slane %v6389, %v2320
    %v6416 = vsel %vm2322, %v6415, %v6414
    %v6417 = vperm.slane %v6392, %v2318
    %v6418 = vperm.slane %v6395, %v2320
    %v6419 = vsel %vm2322, %v6418, %v6417
    %v6420 = vsel %vm1398, %v6401, %v6398
    %v6421 = vsel %vm1400, %v6404, %v6420
    %v6422 = vsel %vm1402, %v6407, %v6421
    %v6423 = vsel %vm1404, %v6410, %v6422
    %v6424 = vsel %vm1406, %v6413, %v6423
    %v6425 = vsel %vm1408, %v6416, %v6424
    %v6426 = vsel %vm1410, %v6419, %v6425
    %v6428 = vsel %vm2353, %v6426, 0.0
    %6429 = vadd.xlane.f32.xlu0 %v6428
    %v6430 = vpop.xlane.xlu0 %6429
    %v6432 = vperm.slane %v6430, 0
    %v6433 = vperm.slane %v6430, 1
    %v6434 = vperm.slane %v6430, 2
    %v6435 = vperm.slane %v6430, 3
    %v6436 = vperm.slane %v6430, 4
    %v6437 = vperm.slane %v6430, 5
    %v6438 = vperm.slane %v6430, 6
    %v6439 = vperm.slane %v6430, 7
    %v6448 = vrcp.pop %v6432
    %v6449 = vmul.f32 %v6432, %v6448
    %v6450 = vsub.f32 1.0, %v6449
    %v6451 = vmul.f32 %v6448, %v6450
    %v6452 = vadd.f32 %v6448, %v6451
    %vm6453 = vweird.f32 %v6432
    %vm6454 = vweird.f32 %v6448
    %vm6455 = vmor %vm6453, %vm6454
    %v6456 = vsel %vm6455, %v6448, %v6452
    %v6457 = vand.u32 2147483647, %v6432
    %vm6458 = vcmp.eq.f32.partialorder %v6457, 8.507059e+37
    %v6459 = vand.u32 %v6432, 2147483648
    %v6460 = vor.u32 1.1754944e-38, %v6459
    %v6461 = vsel %vm6458, %v6460, %v6456
    %v6462 = vmul.f32 %v6301, %v6461
    %v6463 = vmul.f32 %v6303, %v6461
    %v6464 = vrcp.pop %v6433
    %v6465 = vmul.f32 %v6433, %v6464
    %v6466 = vsub.f32 1.0, %v6465
    %v6467 = vmul.f32 %v6464, %v6466
    %v6468 = vadd.f32 %v6464, %v6467
    %vm6469 = vweird.f32 %v6433
    %vm6470 = vweird.f32 %v6464
    %vm6471 = vmor %vm6469, %vm6470
    %v6472 = vsel %vm6471, %v6464, %v6468
    %v6473 = vand.u32 2147483647, %v6433
    %vm6474 = vcmp.eq.f32.partialorder %v6473, 8.507059e+37
    %v6475 = vand.u32 %v6433, 2147483648
    %v6476 = vor.u32 1.1754944e-38, %v6475
    %v6477 = vsel %vm6474, %v6476, %v6472
    %v6478 = vmul.f32 %v6305, %v6477
    %v6479 = vmul.f32 %v6307, %v6477
    %v6480 = vrcp.pop %v6434
    %v6481 = vmul.f32 %v6434, %v6480
    %v6482 = vsub.f32 1.0, %v6481
    %v6483 = vmul.f32 %v6480, %v6482
    %v6484 = vadd.f32 %v6480, %v6483
    %vm6485 = vweird.f32 %v6434
    %vm6486 = vweird.f32 %v6480
    %vm6487 = vmor %vm6485, %vm6486
    %v6488 = vsel %vm6487, %v6480, %v6484
    %v6489 = vand.u32 2147483647, %v6434
    %vm6490 = vcmp.eq.f32.partialorder %v6489, 8.507059e+37
    %v6491 = vand.u32 %v6434, 2147483648
    %v6492 = vor.u32 1.1754944e-38, %v6491
    %v6493 = vsel %vm6490, %v6492, %v6488
    %v6494 = vmul.f32 %v6309, %v6493
    %v6495 = vmul.f32 %v6311, %v6493
    %v6496 = vrcp.pop %v6435
    %v6497 = vmul.f32 %v6435, %v6496
    %v6498 = vsub.f32 1.0, %v6497
    %v6499 = vmul.f32 %v6496, %v6498
    %v6500 = vadd.f32 %v6496, %v6499
    %vm6501 = vweird.f32 %v6435
    %vm6502 = vweird.f32 %v6496
    %vm6503 = vmor %vm6501, %vm6502
    %v6504 = vsel %vm6503, %v6496, %v6500
    %v6505 = vand.u32 2147483647, %v6435
    %vm6506 = vcmp.eq.f32.partialorder %v6505, 8.507059e+37
    %v6507 = vand.u32 %v6435, 2147483648
    %v6508 = vor.u32 1.1754944e-38, %v6507
    %v6509 = vsel %vm6506, %v6508, %v6504
    %v6510 = vmul.f32 %v6313, %v6509
    %v6511 = vmul.f32 %v6315, %v6509
    %v6512 = vrcp.pop %v6436
    %v6513 = vmul.f32 %v6436, %v6512
    %v6514 = vsub.f32 1.0, %v6513
    %v6515 = vmul.f32 %v6512, %v6514
    %v6516 = vadd.f32 %v6512, %v6515
    %vm6517 = vweird.f32 %v6436
    %vm6518 = vweird.f32 %v6512
    %vm6519 = vmor %vm6517, %vm6518
    %v6520 = vsel %vm6519, %v6512, %v6516
    %v6521 = vand.u32 2147483647, %v6436
    %vm6522 = vcmp.eq.f32.partialorder %v6521, 8.507059e+37
    %v6523 = vand.u32 %v6436, 2147483648
    %v6524 = vor.u32 1.1754944e-38, %v6523
    %v6525 = vsel %vm6522, %v6524, %v6520
    %v6526 = vmul.f32 %v6317, %v6525
    %v6527 = vmul.f32 %v6319, %v6525
    %v6528 = vrcp.pop %v6437
    %v6529 = vmul.f32 %v6437, %v6528
    %v6530 = vsub.f32 1.0, %v6529
    %v6531 = vmul.f32 %v6528, %v6530
    %v6532 = vadd.f32 %v6528, %v6531
    %vm6533 = vweird.f32 %v6437
    %vm6534 = vweird.f32 %v6528
    %vm6535 = vmor %vm6533, %vm6534
    %v6536 = vsel %vm6535, %v6528, %v6532
    %v6537 = vand.u32 2147483647, %v6437
    %vm6538 = vcmp.eq.f32.partialorder %v6537, 8.507059e+37
    %v6539 = vand.u32 %v6437, 2147483648
    %v6540 = vor.u32 1.1754944e-38, %v6539
    %v6541 = vsel %vm6538, %v6540, %v6536
    %v6542 = vmul.f32 %v6321, %v6541
    %v6543 = vmul.f32 %v6323, %v6541
    %v6544 = vrcp.pop %v6438
    %v6545 = vmul.f32 %v6438, %v6544
    %v6546 = vsub.f32 1.0, %v6545
    %v6547 = vmul.f32 %v6544, %v6546
    %v6548 = vadd.f32 %v6544, %v6547
    %vm6549 = vweird.f32 %v6438
    %vm6550 = vweird.f32 %v6544
    %vm6551 = vmor %vm6549, %vm6550
    %v6552 = vsel %vm6551, %v6544, %v6548
    %v6553 = vand.u32 2147483647, %v6438
    %vm6554 = vcmp.eq.f32.partialorder %v6553, 8.507059e+37
    %v6555 = vand.u32 %v6438, 2147483648
    %v6556 = vor.u32 1.1754944e-38, %v6555
    %v6557 = vsel %vm6554, %v6556, %v6552
    %v6558 = vmul.f32 %v6325, %v6557
    %v6559 = vmul.f32 %v6327, %v6557
    %v6560 = vrcp.pop %v6439
    %v6561 = vmul.f32 %v6439, %v6560
    %v6562 = vsub.f32 1.0, %v6561
    %v6563 = vmul.f32 %v6560, %v6562
    %v6564 = vadd.f32 %v6560, %v6563
    %vm6565 = vweird.f32 %v6439
    %vm6566 = vweird.f32 %v6560
    %vm6567 = vmor %vm6565, %vm6566
    %v6568 = vsel %vm6567, %v6560, %v6564
    %v6569 = vand.u32 2147483647, %v6439
    %vm6570 = vcmp.eq.f32.partialorder %v6569, 8.507059e+37
    %v6571 = vand.u32 %v6439, 2147483648
    %v6572 = vor.u32 1.1754944e-38, %v6571
    %v6573 = vsel %vm6570, %v6572, %v6568
    %v6574 = vmul.f32 %v6329, %v6573
    %v6575 = vmul.f32 %v6331, %v6573
    %6577 = vset.pattern.permute.xlu0 0
    %6578 = vperm.xlu0 %6577, %v6462
    %v6579 = vpop.permute.xlu0 %6578
    %6582 = vset.pattern.permute.xlu0 0
    %6583 = vperm.xlu0 %6582, %v6463
    %v6584 = vpop.permute.xlu0 %6583
    %6587 = vset.pattern.permute.xlu0 0
    %6588 = vperm.xlu0 %6587, %v6478
    %v6589 = vpop.permute.xlu0 %6588
    %6592 = vset.pattern.permute.xlu0 0
    %6593 = vperm.xlu0 %6592, %v6479
    %v6594 = vpop.permute.xlu0 %6593
    %6597 = vset.pattern.permute.xlu0 0
    %6598 = vperm.xlu0 %6597, %v6494
    %v6599 = vpop.permute.xlu0 %6598
    %6602 = vset.pattern.permute.xlu0 0
    %6603 = vperm.xlu0 %6602, %v6495
    %v6604 = vpop.permute.xlu0 %6603
    %6607 = vset.pattern.permute.xlu0 0
    %6608 = vperm.xlu0 %6607, %v6510
    %v6609 = vpop.permute.xlu0 %6608
    %6612 = vset.pattern.permute.xlu0 0
    %6613 = vperm.xlu0 %6612, %v6511
    %v6614 = vpop.permute.xlu0 %6613
    %6617 = vset.pattern.permute.xlu0 0
    %6618 = vperm.xlu0 %6617, %v6526
    %v6619 = vpop.permute.xlu0 %6618
    %6622 = vset.pattern.permute.xlu0 0
    %6623 = vperm.xlu0 %6622, %v6527
    %v6624 = vpop.permute.xlu0 %6623
    %6627 = vset.pattern.permute.xlu0 0
    %6628 = vperm.xlu0 %6627, %v6542
    %v6629 = vpop.permute.xlu0 %6628
    %6632 = vset.pattern.permute.xlu0 0
    %6633 = vperm.xlu0 %6632, %v6543
    %v6634 = vpop.permute.xlu0 %6633
    %6637 = vset.pattern.permute.xlu0 0
    %6638 = vperm.xlu0 %6637, %v6558
    %v6639 = vpop.permute.xlu0 %6638
    %6642 = vset.pattern.permute.xlu0 0
    %6643 = vperm.xlu0 %6642, %v6559
    %v6644 = vpop.permute.xlu0 %6643
    %6647 = vset.pattern.permute.xlu0 0
    %6648 = vperm.xlu0 %6647, %v6574
    %v6649 = vpop.permute.xlu0 %6648
    %6652 = vset.pattern.permute.xlu0 0
    %6653 = vperm.xlu0 %6652, %v6575
    %v6654 = vpop.permute.xlu0 %6653
    %v6656 = vmul.f32 %v173, %v6579
    %v6657 = vmul.f32 %v174, %v6584
    %v6658 = vmul.f32 %v175, %v6589
    %v6659 = vmul.f32 %v176, %v6594
    %v6660 = vmul.f32 %v177, %v6599
    %v6661 = vmul.f32 %v178, %v6604
    %v6662 = vmul.f32 %v179, %v6609
    %v6663 = vmul.f32 %v180, %v6614
    %v6664 = vmul.f32 %v181, %v6619
    %v6665 = vmul.f32 %v182, %v6624
    %v6666 = vmul.f32 %v183, %v6629
    %v6667 = vmul.f32 %v184, %v6634
    %v6668 = vmul.f32 %v185, %v6639
    %v6669 = vmul.f32 %v186, %v6644
    %v6670 = vmul.f32 %v187, %v6649
    %v6671 = vmul.f32 %v188, %v6654
    %v6672 = vsel %vm197, %v6656, 0.0
    %v6673 = vsel %vm197, %v6657, 0.0
    %v6674 = vadd.f32 %v6672, %v6673
    %v6675 = vrot.slane %v6674, 4
    %v6676 = vadd.f32 %v6674, %v6675
    %v6677 = vrot.slane %v6676, 2
    %v6678 = vadd.f32 %v6676, %v6677
    %v6679 = vrot.slane %v6678, 1
    %v6680 = vadd.f32 %v6678, %v6679
    %v6681 = vsel %vm197, %v6658, 0.0
    %v6682 = vsel %vm197, %v6659, 0.0
    %v6683 = vadd.f32 %v6681, %v6682
    %v6684 = vrot.slane %v6683, 4
    %v6685 = vadd.f32 %v6683, %v6684
    %v6686 = vrot.slane %v6685, 2
    %v6687 = vadd.f32 %v6685, %v6686
    %v6688 = vrot.slane %v6687, 1
    %v6689 = vadd.f32 %v6687, %v6688
    %v6690 = vsel %vm197, %v6660, 0.0
    %v6691 = vsel %vm197, %v6661, 0.0
    %v6692 = vadd.f32 %v6690, %v6691
    %v6693 = vrot.slane %v6692, 4
    %v6694 = vadd.f32 %v6692, %v6693
    %v6695 = vrot.slane %v6694, 2
    %v6696 = vadd.f32 %v6694, %v6695
    %v6697 = vrot.slane %v6696, 1
    %v6698 = vadd.f32 %v6696, %v6697
    %v6699 = vsel %vm197, %v6662, 0.0
    %v6700 = vsel %vm197, %v6663, 0.0
    %v6701 = vadd.f32 %v6699, %v6700
    %v6702 = vrot.slane %v6701, 4
    %v6703 = vadd.f32 %v6701, %v6702
    %v6704 = vrot.slane %v6703, 2
    %v6705 = vadd.f32 %v6703, %v6704
    %v6706 = vrot.slane %v6705, 1
    %v6707 = vadd.f32 %v6705, %v6706
    %v6708 = vsel %vm197, %v6664, 0.0
    %v6709 = vsel %vm197, %v6665, 0.0
    %v6710 = vadd.f32 %v6708, %v6709
    %v6711 = vrot.slane %v6710, 4
    %v6712 = vadd.f32 %v6710, %v6711
    %v6713 = vrot.slane %v6712, 2
    %v6714 = vadd.f32 %v6712, %v6713
    %v6715 = vrot.slane %v6714, 1
    %v6716 = vadd.f32 %v6714, %v6715
    %v6717 = vsel %vm197, %v6666, 0.0
    %v6718 = vsel %vm197, %v6667, 0.0
    %v6719 = vadd.f32 %v6717, %v6718
    %v6720 = vrot.slane %v6719, 4
    %v6721 = vadd.f32 %v6719, %v6720
    %v6722 = vrot.slane %v6721, 2
    %v6723 = vadd.f32 %v6721, %v6722
    %v6724 = vrot.slane %v6723, 1
    %v6725 = vadd.f32 %v6723, %v6724
    %v6726 = vsel %vm197, %v6668, 0.0
    %v6727 = vsel %vm197, %v6669, 0.0
    %v6728 = vadd.f32 %v6726, %v6727
    %v6729 = vrot.slane %v6728, 4
    %v6730 = vadd.f32 %v6728, %v6729
    %v6731 = vrot.slane %v6730, 2
    %v6732 = vadd.f32 %v6730, %v6731
    %v6733 = vrot.slane %v6732, 1
    %v6734 = vadd.f32 %v6732, %v6733
    %v6735 = vsel %vm197, %v6670, 0.0
    %v6736 = vsel %vm197, %v6671, 0.0
    %v6737 = vadd.f32 %v6735, %v6736
    %v6738 = vrot.slane %v6737, 4
    %v6739 = vadd.f32 %v6737, %v6738
    %v6740 = vrot.slane %v6739, 2
    %v6741 = vadd.f32 %v6739, %v6740
    %v6742 = vrot.slane %v6741, 1
    %v6743 = vadd.f32 %v6741, %v6742
    %s6744 = scalar_lea.vmem [#allocation2], 24
    %v6745 = vld [vmem:[%s6744] sm:$0xff]
    %v6746 = vadd.f32 %v6745, %v5909
    %v6755 = vsel %vm1398, %v6689, %v6680
    %v6756 = vsel %vm1400, %v6698, %v6755
    %v6757 = vsel %vm1402, %v6707, %v6756
    %v6758 = vsel %vm1404, %v6716, %v6757
    %v6759 = vsel %vm1406, %v6725, %v6758
    %v6760 = vsel %vm1408, %v6734, %v6759
    %v6761 = vsel %vm1410, %v6743, %v6760
    %v6762 = vsel %vm197, %v6761, 0
    %6764 = vmatpush.msra.mxu0 0.0
    %6765 = vmatpush.msra.mxu0 0.0
    %6766 = vmatpush.msra.mxu0 0.0
    %6767 = vmatpush.msra.mxu0 0.0
    %6768 = vmatpush.msra.mxu0 0.0
    %6769 = vmatpush.msra.mxu0 0.0
    %6770 = vmatpush.msra.mxu0 0.0
    %6771 = vmatpush.msra.mxu0 0.0
    %6772 = vmatpush.msra.mxu0 0.0
    %6773 = vmatpush.msra.mxu0 0.0
    %6774 = vmatpush.msra.mxu0 0.0
    %6775 = vmatpush.msra.mxu0 0.0
    %v6776 = vand.u32 %v1796, 4294901760
    %6777 = vmatpush.msra.mxu0 %v6776
    %v6778 = vand.u32 %v1795, 4294901760
    %6779 = vmatpush.msra.mxu0 %v6778
    %v6780 = vand.u32 %v1794, 4294901760
    %6781 = vmatpush.msra.mxu0 %v6780
    %v6782 = vand.u32 %v1793, 4294901760
    %6783 = vmatpush.msra.mxu0 %v6782
    %v6784 = vand.u32 %v6762, 4294901760
    %v6785 = vsub.f32 %v6762, %v6784
    %v6786 = vand.u32 %v6785, 4294901760
    %v6787 = vsub.f32 %v6785, %v6786
    %v6788 = vand.u32 %v6787, 4294901760
    %6789 = vmatmul.f32.gmra.mxu0 %v6788
    %v6790 = vpop.f32.mrf.mxu0
    %v6791 = vadd.f32 0.0, %v6790
    %6792 = vdwg.mxu0
    %6793 = vmatpush.msra.mxu0 0.0
    %6794 = vmatpush.msra.mxu0 0.0
    %6795 = vmatpush.msra.mxu0 0.0
    %6796 = vmatpush.msra.mxu0 0.0
    %6797 = vmatpush.msra.mxu0 0.0
    %6798 = vmatpush.msra.mxu0 0.0
    %6799 = vmatpush.msra.mxu0 0.0
    %6800 = vmatpush.msra.mxu0 0.0
    %6801 = vmatpush.msra.mxu0 0.0
    %6802 = vmatpush.msra.mxu0 0.0
    %6803 = vmatpush.msra.mxu0 0.0
    %6804 = vmatpush.msra.mxu0 0.0
    %v6805 = vand.u32 %v1796, 4294901760
    %v6806 = vsub.f32 %v1796, %v6805
    %v6807 = vand.u32 %v6806, 4294901760
    %v6808 = vsub.f32 %v6806, %v6807
    %v6809 = vand.u32 %v6808, 4294901760
    %6810 = vmatpush.msra.mxu0 %v6809
    %v6811 = vand.u32 %v1795, 4294901760
    %v6812 = vsub.f32 %v1795, %v6811
    %v6813 = vand.u32 %v6812, 4294901760
    %v6814 = vsub.f32 %v6812, %v6813
    %v6815 = vand.u32 %v6814, 4294901760
    %6816 = vmatpush.msra.mxu0 %v6815
    %v6817 = vand.u32 %v1794, 4294901760
    %v6818 = vsub.f32 %v1794, %v6817
    %v6819 = vand.u32 %v6818, 4294901760
    %v6820 = vsub.f32 %v6818, %v6819
    %v6821 = vand.u32 %v6820, 4294901760
    %6822 = vmatpush.msra.mxu0 %v6821
    %v6823 = vand.u32 %v1793, 4294901760
    %v6824 = vsub.f32 %v1793, %v6823
    %v6825 = vand.u32 %v6824, 4294901760
    %v6826 = vsub.f32 %v6824, %v6825
    %v6827 = vand.u32 %v6826, 4294901760
    %6828 = vmatpush.msra.mxu0 %v6827
    %v6829 = vand.u32 %v6762, 4294901760
    %6830 = vmatmul.f32.gmra.mxu0 %v6829
    %v6831 = vpop.f32.mrf.mxu0
    %v6832 = vadd.f32 %v6791, %v6831
    %6833 = vdwg.mxu0
    %6834 = vmatpush.msra.mxu0 0.0
    %6835 = vmatpush.msra.mxu0 0.0
    %6836 = vmatpush.msra.mxu0 0.0
    %6837 = vmatpush.msra.mxu0 0.0
    %6838 = vmatpush.msra.mxu0 0.0
    %6839 = vmatpush.msra.mxu0 0.0
    %6840 = vmatpush.msra.mxu0 0.0
    %6841 = vmatpush.msra.mxu0 0.0
    %6842 = vmatpush.msra.mxu0 0.0
    %6843 = vmatpush.msra.mxu0 0.0
    %6844 = vmatpush.msra.mxu0 0.0
    %6845 = vmatpush.msra.mxu0 0.0
    %v6846 = vand.u32 %v1796, 4294901760
    %v6847 = vsub.f32 %v1796, %v6846
    %6848 = vmatpush.msra.mxu0 %v6847
    %v6849 = vand.u32 %v1795, 4294901760
    %v6850 = vsub.f32 %v1795, %v6849
    %6851 = vmatpush.msra.mxu0 %v6850
    %v6852 = vand.u32 %v1794, 4294901760
    %v6853 = vsub.f32 %v1794, %v6852
    %6854 = vmatpush.msra.mxu0 %v6853
    %v6855 = vand.u32 %v1793, 4294901760
    %v6856 = vsub.f32 %v1793, %v6855
    %6857 = vmatpush.msra.mxu0 %v6856
    %v6858 = vand.u32 %v6762, 4294901760
    %v6859 = vsub.f32 %v6762, %v6858
    %6860 = vmatmul.f32.gmra.mxu0 %v6859
    %v6861 = vpop.f32.mrf.mxu0
    %v6862 = vadd.f32 %v6832, %v6861
    %6863 = vdwg.mxu0
    %6864 = vmatpush.msra.mxu0 0.0
    %6865 = vmatpush.msra.mxu0 0.0
    %6866 = vmatpush.msra.mxu0 0.0
    %6867 = vmatpush.msra.mxu0 0.0
    %6868 = vmatpush.msra.mxu0 0.0
    %6869 = vmatpush.msra.mxu0 0.0
    %6870 = vmatpush.msra.mxu0 0.0
    %6871 = vmatpush.msra.mxu0 0.0
    %6872 = vmatpush.msra.mxu0 0.0
    %6873 = vmatpush.msra.mxu0 0.0
    %6874 = vmatpush.msra.mxu0 0.0
    %6875 = vmatpush.msra.mxu0 0.0
    %v6876 = vand.u32 %v1796, 4294901760
    %6877 = vmatpush.msra.mxu0 %v6876
    %v6878 = vand.u32 %v1795, 4294901760
    %6879 = vmatpush.msra.mxu0 %v6878
    %v6880 = vand.u32 %v1794, 4294901760
    %6881 = vmatpush.msra.mxu0 %v6880
    %v6882 = vand.u32 %v1793, 4294901760
    %6883 = vmatpush.msra.mxu0 %v6882
    %v6884 = vand.u32 %v6762, 4294901760
    %v6885 = vsub.f32 %v6762, %v6884
    %v6886 = vand.u32 %v6885, 4294901760
    %6887 = vmatmul.f32.gmra.mxu0 %v6886
    %v6888 = vpop.f32.mrf.mxu0
    %v6889 = vadd.f32 %v6862, %v6888
    %6890 = vdwg.mxu0
    %6891 = vmatpush.msra.mxu0 0.0
    %6892 = vmatpush.msra.mxu0 0.0
    %6893 = vmatpush.msra.mxu0 0.0
    %6894 = vmatpush.msra.mxu0 0.0
    %6895 = vmatpush.msra.mxu0 0.0
    %6896 = vmatpush.msra.mxu0 0.0
    %6897 = vmatpush.msra.mxu0 0.0
    %6898 = vmatpush.msra.mxu0 0.0
    %6899 = vmatpush.msra.mxu0 0.0
    %6900 = vmatpush.msra.mxu0 0.0
    %6901 = vmatpush.msra.mxu0 0.0
    %6902 = vmatpush.msra.mxu0 0.0
    %v6903 = vand.u32 %v1796, 4294901760
    %v6904 = vsub.f32 %v1796, %v6903
    %v6905 = vand.u32 %v6904, 4294901760
    %6906 = vmatpush.msra.mxu0 %v6905
    %v6907 = vand.u32 %v1795, 4294901760
    %v6908 = vsub.f32 %v1795, %v6907
    %v6909 = vand.u32 %v6908, 4294901760
    %6910 = vmatpush.msra.mxu0 %v6909
    %v6911 = vand.u32 %v1794, 4294901760
    %v6912 = vsub.f32 %v1794, %v6911
    %v6913 = vand.u32 %v6912, 4294901760
    %6914 = vmatpush.msra.mxu0 %v6913
    %v6915 = vand.u32 %v1793, 4294901760
    %v6916 = vsub.f32 %v1793, %v6915
    %v6917 = vand.u32 %v6916, 4294901760
    %6918 = vmatpush.msra.mxu0 %v6917
    %v6919 = vand.u32 %v6762, 4294901760
    %6920 = vmatmul.f32.gmra.mxu0 %v6919
    %v6921 = vpop.f32.mrf.mxu0
    %v6922 = vadd.f32 %v6889, %v6921
    %6923 = vdwg.mxu0
    %6924 = vmatpush.msra.mxu0 0.0
    %6925 = vmatpush.msra.mxu0 0.0
    %6926 = vmatpush.msra.mxu0 0.0
    %6927 = vmatpush.msra.mxu0 0.0
    %6928 = vmatpush.msra.mxu0 0.0
    %6929 = vmatpush.msra.mxu0 0.0
    %6930 = vmatpush.msra.mxu0 0.0
    %6931 = vmatpush.msra.mxu0 0.0
    %6932 = vmatpush.msra.mxu0 0.0
    %6933 = vmatpush.msra.mxu0 0.0
    %6934 = vmatpush.msra.mxu0 0.0
    %6935 = vmatpush.msra.mxu0 0.0
    %v6936 = vand.u32 %v1796, 4294901760
    %6937 = vmatpush.msra.mxu0 %v6936
    %v6938 = vand.u32 %v1795, 4294901760
    %6939 = vmatpush.msra.mxu0 %v6938
    %v6940 = vand.u32 %v1794, 4294901760
    %6941 = vmatpush.msra.mxu0 %v6940
    %v6942 = vand.u32 %v1793, 4294901760
    %6943 = vmatpush.msra.mxu0 %v6942
    %v6944 = vand.u32 %v6762, 4294901760
    %6945 = vmatmul.f32.gmra.mxu0 %v6944
    %v6946 = vpop.f32.mrf.mxu0
    %v6947 = vadd.f32 %v6922, %v6946
    %6948 = vdwg.mxu0
    %v6949 = vadd.f32 %v6746, %v6947
    %v6950 = vxor.u32 %v6949, 2147483648
    %v6951 = vmul.f32 %v6950, 1.442695
    %v6952 = vpow.pop %v6951
    %v6953 = vadd.f32 %v6952, 1.0
    %v6954 = vrcp.pop %v6953
    %v6955 = vmul.f32 %v6953, %v6954
    %v6956 = vsub.f32 1.0, %v6955
    %v6957 = vmul.f32 %v6954, %v6956
    %v6958 = vadd.f32 %v6954, %v6957
    %vm6959 = vweird.f32 %v6953
    %vm6960 = vweird.f32 %v6954
    %vm6961 = vmor %vm6959, %vm6960
    %v6962 = vsel %vm6961, %v6954, %v6958
    %v6963 = vand.u32 2147483647, %v6953
    %vm6964 = vcmp.eq.f32.partialorder %v6963, 8.507059e+37
    %v6965 = vand.u32 %v6953, 2147483648
    %v6966 = vor.u32 1.1754944e-38, %v6965
    %v6967 = vsel %vm6964, %v6966, %v6962
    %v6968 = vmul.f32 1.0, %v6967
    %v6969 = vtanh.pop %v6949
    %v6970 = vmul.f32 %v6968, %v5677
    %6972 = vrot.lane.b32.xlu0 %v6969, 64
    %v6973 = vpop.permute.xlu0 %6972
    %v6975 = vmul.f32 %v6968, %v6973
    %6977 = vrot.lane.b32.xlu0 %v6975, 32
    %v6978 = vpop.permute.xlu0 %6977
    %v6980 = vadd.f32 %v6970, %v6978
    %v6981 = vtanh.pop %v6980
    %6983 = vrot.lane.b32.xlu0 %v6981, 64
    %v6984 = vpop.permute.xlu0 %6983
    %v6986 = vmul.f32 %v6968, %v6984
    %6988 = vrot.lane.b32.xlu0 %v6986, 32
    %v6989 = vpop.permute.xlu0 %6988
    %s6991 = scalar_lea.vmem [#allocation17], 24
    %6992 = vst.msk [vmem:[%s6991] sm:$0xff] %vm197, %v6989
    %v6993 = vperm.slane %v6579, %v2318
    %v6994 = vperm.slane %v6584, %v2320
    %v6995 = vsel %vm2322, %v6994, %v6993
    %v6996 = vperm.slane %v6589, %v2318
    %v6997 = vperm.slane %v6594, %v2320
    %v6998 = vsel %vm2322, %v6997, %v6996
    %v6999 = vperm.slane %v6599, %v2318
    %v7000 = vperm.slane %v6604, %v2320
    %v7001 = vsel %vm2322, %v7000, %v6999
    %v7002 = vperm.slane %v6609, %v2318
    %v7003 = vperm.slane %v6614, %v2320
    %v7004 = vsel %vm2322, %v7003, %v7002
    %v7005 = vperm.slane %v6619, %v2318
    %v7006 = vperm.slane %v6624, %v2320
    %v7007 = vsel %vm2322, %v7006, %v7005
    %v7008 = vperm.slane %v6629, %v2318
    %v7009 = vperm.slane %v6634, %v2320
    %v7010 = vsel %vm2322, %v7009, %v7008
    %v7011 = vperm.slane %v6639, %v2318
    %v7012 = vperm.slane %v6644, %v2320
    %v7013 = vsel %vm2322, %v7012, %v7011
    %v7014 = vperm.slane %v6649, %v2318
    %v7015 = vperm.slane %v6654, %v2320
    %v7016 = vsel %vm2322, %v7015, %v7014
    %v7017 = vsel %vm1398, %v6998, %v6995
    %v7018 = vsel %vm1400, %v7001, %v7017
    %v7019 = vsel %vm1402, %v7004, %v7018
    %v7020 = vsel %vm1404, %v7007, %v7019
    %v7021 = vsel %vm1406, %v7010, %v7020
    %v7022 = vsel %vm1408, %v7013, %v7021
    %v7023 = vsel %vm1410, %v7016, %v7022
    %s7025 = scalar_lea.vmem [#allocation18], 24
    %7026 = vst.msk [vmem:[%s7025] sm:$0xff] %vm2353, %v7023
    %v7027 = vsel %vm197, %v6989, 0
    %7029 = vmatpush.msra.mxu0 0.0
    %7030 = vmatpush.msra.mxu0 0.0
    %7031 = vmatpush.msra.mxu0 0.0
    %7032 = vmatpush.msra.mxu0 0.0
    %7033 = vmatpush.msra.mxu0 0.0
    %7034 = vmatpush.msra.mxu0 0.0
    %7035 = vmatpush.msra.mxu0 0.0
    %7036 = vmatpush.msra.mxu0 0.0
    %7037 = vmatpush.msra.mxu0 0.0
    %7038 = vmatpush.msra.mxu0 0.0
    %7039 = vmatpush.msra.mxu0 0.0
    %7040 = vmatpush.msra.mxu0 0.0
    %v7041 = vand.u32 %v1803, 4294901760
    %7042 = vmatpush.msra.mxu0 %v7041
    %v7043 = vand.u32 %v1801, 4294901760
    %7044 = vmatpush.msra.mxu0 %v7043
    %v7045 = vand.u32 %v1799, 4294901760
    %7046 = vmatpush.msra.mxu0 %v7045
    %v7047 = vand.u32 %v1797, 4294901760
    %7048 = vmatpush.msra.mxu0 %v7047
    %v7049 = vand.u32 %v7027, 4294901760
    %v7050 = vsub.f32 %v7027, %v7049
    %v7051 = vand.u32 %v7050, 4294901760
    %v7052 = vsub.f32 %v7050, %v7051
    %v7053 = vand.u32 %v7052, 4294901760
    %7054 = vmatmul.f32.gmra.mxu0 %v7053
    %v7055 = vpop.f32.mrf.mxu0
    %v7056 = vadd.f32 0.0, %v7055
    %7057 = vdwg.mxu0
    %7058 = vmatpush.msra.mxu0 0.0
    %7059 = vmatpush.msra.mxu0 0.0
    %7060 = vmatpush.msra.mxu0 0.0
    %7061 = vmatpush.msra.mxu0 0.0
    %7062 = vmatpush.msra.mxu0 0.0
    %7063 = vmatpush.msra.mxu0 0.0
    %7064 = vmatpush.msra.mxu0 0.0
    %7065 = vmatpush.msra.mxu0 0.0
    %7066 = vmatpush.msra.mxu0 0.0
    %7067 = vmatpush.msra.mxu0 0.0
    %7068 = vmatpush.msra.mxu0 0.0
    %7069 = vmatpush.msra.mxu0 0.0
    %v7070 = vand.u32 %v1803, 4294901760
    %v7071 = vsub.f32 %v1803, %v7070
    %v7072 = vand.u32 %v7071, 4294901760
    %v7073 = vsub.f32 %v7071, %v7072
    %v7074 = vand.u32 %v7073, 4294901760
    %7075 = vmatpush.msra.mxu0 %v7074
    %v7076 = vand.u32 %v1801, 4294901760
    %v7077 = vsub.f32 %v1801, %v7076
    %v7078 = vand.u32 %v7077, 4294901760
    %v7079 = vsub.f32 %v7077, %v7078
    %v7080 = vand.u32 %v7079, 4294901760
    %7081 = vmatpush.msra.mxu0 %v7080
    %v7082 = vand.u32 %v1799, 4294901760
    %v7083 = vsub.f32 %v1799, %v7082
    %v7084 = vand.u32 %v7083, 4294901760
    %v7085 = vsub.f32 %v7083, %v7084
    %v7086 = vand.u32 %v7085, 4294901760
    %7087 = vmatpush.msra.mxu0 %v7086
    %v7088 = vand.u32 %v1797, 4294901760
    %v7089 = vsub.f32 %v1797, %v7088
    %v7090 = vand.u32 %v7089, 4294901760
    %v7091 = vsub.f32 %v7089, %v7090
    %v7092 = vand.u32 %v7091, 4294901760
    %7093 = vmatpush.msra.mxu0 %v7092
    %v7094 = vand.u32 %v7027, 4294901760
    %7095 = vmatmul.f32.gmra.mxu0 %v7094
    %v7096 = vpop.f32.mrf.mxu0
    %v7097 = vadd.f32 %v7056, %v7096
    %7098 = vdwg.mxu0
    %7099 = vmatpush.msra.mxu0 0.0
    %7100 = vmatpush.msra.mxu0 0.0
    %7101 = vmatpush.msra.mxu0 0.0
    %7102 = vmatpush.msra.mxu0 0.0
    %7103 = vmatpush.msra.mxu0 0.0
    %7104 = vmatpush.msra.mxu0 0.0
    %7105 = vmatpush.msra.mxu0 0.0
    %7106 = vmatpush.msra.mxu0 0.0
    %7107 = vmatpush.msra.mxu0 0.0
    %7108 = vmatpush.msra.mxu0 0.0
    %7109 = vmatpush.msra.mxu0 0.0
    %7110 = vmatpush.msra.mxu0 0.0
    %v7111 = vand.u32 %v1803, 4294901760
    %v7112 = vsub.f32 %v1803, %v7111
    %7113 = vmatpush.msra.mxu0 %v7112
    %v7114 = vand.u32 %v1801, 4294901760
    %v7115 = vsub.f32 %v1801, %v7114
    %7116 = vmatpush.msra.mxu0 %v7115
    %v7117 = vand.u32 %v1799, 4294901760
    %v7118 = vsub.f32 %v1799, %v7117
    %7119 = vmatpush.msra.mxu0 %v7118
    %v7120 = vand.u32 %v1797, 4294901760
    %v7121 = vsub.f32 %v1797, %v7120
    %7122 = vmatpush.msra.mxu0 %v7121
    %v7123 = vand.u32 %v7027, 4294901760
    %v7124 = vsub.f32 %v7027, %v7123
    %7125 = vmatmul.f32.gmra.mxu0 %v7124
    %v7126 = vpop.f32.mrf.mxu0
    %v7127 = vadd.f32 %v7097, %v7126
    %7128 = vdwg.mxu0
    %7129 = vmatpush.msra.mxu0 0.0
    %7130 = vmatpush.msra.mxu0 0.0
    %7131 = vmatpush.msra.mxu0 0.0
    %7132 = vmatpush.msra.mxu0 0.0
    %7133 = vmatpush.msra.mxu0 0.0
    %7134 = vmatpush.msra.mxu0 0.0
    %7135 = vmatpush.msra.mxu0 0.0
    %7136 = vmatpush.msra.mxu0 0.0
    %7137 = vmatpush.msra.mxu0 0.0
    %7138 = vmatpush.msra.mxu0 0.0
    %7139 = vmatpush.msra.mxu0 0.0
    %7140 = vmatpush.msra.mxu0 0.0
    %v7141 = vand.u32 %v1803, 4294901760
    %7142 = vmatpush.msra.mxu0 %v7141
    %v7143 = vand.u32 %v1801, 4294901760
    %7144 = vmatpush.msra.mxu0 %v7143
    %v7145 = vand.u32 %v1799, 4294901760
    %7146 = vmatpush.msra.mxu0 %v7145
    %v7147 = vand.u32 %v1797, 4294901760
    %7148 = vmatpush.msra.mxu0 %v7147
    %v7149 = vand.u32 %v7027, 4294901760
    %v7150 = vsub.f32 %v7027, %v7149
    %v7151 = vand.u32 %v7150, 4294901760
    %7152 = vmatmul.f32.gmra.mxu0 %v7151
    %v7153 = vpop.f32.mrf.mxu0
    %v7154 = vadd.f32 %v7127, %v7153
    %7155 = vdwg.mxu0
    %7156 = vmatpush.msra.mxu0 0.0
    %7157 = vmatpush.msra.mxu0 0.0
    %7158 = vmatpush.msra.mxu0 0.0
    %7159 = vmatpush.msra.mxu0 0.0
    %7160 = vmatpush.msra.mxu0 0.0
    %7161 = vmatpush.msra.mxu0 0.0
    %7162 = vmatpush.msra.mxu0 0.0
    %7163 = vmatpush.msra.mxu0 0.0
    %7164 = vmatpush.msra.mxu0 0.0
    %7165 = vmatpush.msra.mxu0 0.0
    %7166 = vmatpush.msra.mxu0 0.0
    %7167 = vmatpush.msra.mxu0 0.0
    %v7168 = vand.u32 %v1803, 4294901760
    %v7169 = vsub.f32 %v1803, %v7168
    %v7170 = vand.u32 %v7169, 4294901760
    %7171 = vmatpush.msra.mxu0 %v7170
    %v7172 = vand.u32 %v1801, 4294901760
    %v7173 = vsub.f32 %v1801, %v7172
    %v7174 = vand.u32 %v7173, 4294901760
    %7175 = vmatpush.msra.mxu0 %v7174
    %v7176 = vand.u32 %v1799, 4294901760
    %v7177 = vsub.f32 %v1799, %v7176
    %v7178 = vand.u32 %v7177, 4294901760
    %7179 = vmatpush.msra.mxu0 %v7178
    %v7180 = vand.u32 %v1797, 4294901760
    %v7181 = vsub.f32 %v1797, %v7180
    %v7182 = vand.u32 %v7181, 4294901760
    %7183 = vmatpush.msra.mxu0 %v7182
    %v7184 = vand.u32 %v7027, 4294901760
    %7185 = vmatmul.f32.gmra.mxu0 %v7184
    %v7186 = vpop.f32.mrf.mxu0
    %v7187 = vadd.f32 %v7154, %v7186
    %7188 = vdwg.mxu0
    %7189 = vmatpush.msra.mxu0 0.0
    %7190 = vmatpush.msra.mxu0 0.0
    %7191 = vmatpush.msra.mxu0 0.0
    %7192 = vmatpush.msra.mxu0 0.0
    %7193 = vmatpush.msra.mxu0 0.0
    %7194 = vmatpush.msra.mxu0 0.0
    %7195 = vmatpush.msra.mxu0 0.0
    %7196 = vmatpush.msra.mxu0 0.0
    %7197 = vmatpush.msra.mxu0 0.0
    %7198 = vmatpush.msra.mxu0 0.0
    %7199 = vmatpush.msra.mxu0 0.0
    %7200 = vmatpush.msra.mxu0 0.0
    %v7201 = vand.u32 %v1803, 4294901760
    %7202 = vmatpush.msra.mxu0 %v7201
    %v7203 = vand.u32 %v1801, 4294901760
    %7204 = vmatpush.msra.mxu0 %v7203
    %v7205 = vand.u32 %v1799, 4294901760
    %7206 = vmatpush.msra.mxu0 %v7205
    %v7207 = vand.u32 %v1797, 4294901760
    %7208 = vmatpush.msra.mxu0 %v7207
    %v7209 = vand.u32 %v7027, 4294901760
    %7210 = vmatmul.f32.gmra.mxu0 %v7209
    %v7211 = vpop.f32.mrf.mxu0
    %v7212 = vadd.f32 %v7187, %v7211
    %7213 = vdwg.mxu0
    %7214 = vmatpush.msra.mxu0 0.0
    %7215 = vmatpush.msra.mxu0 0.0
    %7216 = vmatpush.msra.mxu0 0.0
    %7217 = vmatpush.msra.mxu0 0.0
    %7218 = vmatpush.msra.mxu0 0.0
    %7219 = vmatpush.msra.mxu0 0.0
    %7220 = vmatpush.msra.mxu0 0.0
    %7221 = vmatpush.msra.mxu0 0.0
    %7222 = vmatpush.msra.mxu0 0.0
    %7223 = vmatpush.msra.mxu0 0.0
    %7224 = vmatpush.msra.mxu0 0.0
    %7225 = vmatpush.msra.mxu0 0.0
    %v7226 = vand.u32 %v1804, 4294901760
    %7227 = vmatpush.msra.mxu0 %v7226
    %v7228 = vand.u32 %v1802, 4294901760
    %7229 = vmatpush.msra.mxu0 %v7228
    %v7230 = vand.u32 %v1800, 4294901760
    %7231 = vmatpush.msra.mxu0 %v7230
    %v7232 = vand.u32 %v1798, 4294901760
    %7233 = vmatpush.msra.mxu0 %v7232
    %v7234 = vand.u32 %v7027, 4294901760
    %v7235 = vsub.f32 %v7027, %v7234
    %v7236 = vand.u32 %v7235, 4294901760
    %v7237 = vsub.f32 %v7235, %v7236
    %v7238 = vand.u32 %v7237, 4294901760
    %7239 = vmatmul.f32.gmra.mxu0 %v7238
    %v7240 = vpop.f32.mrf.mxu0
    %v7241 = vadd.f32 0.0, %v7240
    %7242 = vdwg.mxu0
    %7243 = vmatpush.msra.mxu0 0.0
    %7244 = vmatpush.msra.mxu0 0.0
    %7245 = vmatpush.msra.mxu0 0.0
    %7246 = vmatpush.msra.mxu0 0.0
    %7247 = vmatpush.msra.mxu0 0.0
    %7248 = vmatpush.msra.mxu0 0.0
    %7249 = vmatpush.msra.mxu0 0.0
    %7250 = vmatpush.msra.mxu0 0.0
    %7251 = vmatpush.msra.mxu0 0.0
    %7252 = vmatpush.msra.mxu0 0.0
    %7253 = vmatpush.msra.mxu0 0.0
    %7254 = vmatpush.msra.mxu0 0.0
    %v7255 = vand.u32 %v1804, 4294901760
    %v7256 = vsub.f32 %v1804, %v7255
    %v7257 = vand.u32 %v7256, 4294901760
    %v7258 = vsub.f32 %v7256, %v7257
    %v7259 = vand.u32 %v7258, 4294901760
    %7260 = vmatpush.msra.mxu0 %v7259
    %v7261 = vand.u32 %v1802, 4294901760
    %v7262 = vsub.f32 %v1802, %v7261
    %v7263 = vand.u32 %v7262, 4294901760
    %v7264 = vsub.f32 %v7262, %v7263
    %v7265 = vand.u32 %v7264, 4294901760
    %7266 = vmatpush.msra.mxu0 %v7265
    %v7267 = vand.u32 %v1800, 4294901760
    %v7268 = vsub.f32 %v1800, %v7267
    %v7269 = vand.u32 %v7268, 4294901760
    %v7270 = vsub.f32 %v7268, %v7269
    %v7271 = vand.u32 %v7270, 4294901760
    %7272 = vmatpush.msra.mxu0 %v7271
    %v7273 = vand.u32 %v1798, 4294901760
    %v7274 = vsub.f32 %v1798, %v7273
    %v7275 = vand.u32 %v7274, 4294901760
    %v7276 = vsub.f32 %v7274, %v7275
    %v7277 = vand.u32 %v7276, 4294901760
    %7278 = vmatpush.msra.mxu0 %v7277
    %v7279 = vand.u32 %v7027, 4294901760
    %7280 = vmatmul.f32.gmra.mxu0 %v7279
    %v7281 = vpop.f32.mrf.mxu0
    %v7282 = vadd.f32 %v7241, %v7281
    %7283 = vdwg.mxu0
    %7284 = vmatpush.msra.mxu0 0.0
    %7285 = vmatpush.msra.mxu0 0.0
    %7286 = vmatpush.msra.mxu0 0.0
    %7287 = vmatpush.msra.mxu0 0.0
    %7288 = vmatpush.msra.mxu0 0.0
    %7289 = vmatpush.msra.mxu0 0.0
    %7290 = vmatpush.msra.mxu0 0.0
    %7291 = vmatpush.msra.mxu0 0.0
    %7292 = vmatpush.msra.mxu0 0.0
    %7293 = vmatpush.msra.mxu0 0.0
    %7294 = vmatpush.msra.mxu0 0.0
    %7295 = vmatpush.msra.mxu0 0.0
    %v7296 = vand.u32 %v1804, 4294901760
    %v7297 = vsub.f32 %v1804, %v7296
    %7298 = vmatpush.msra.mxu0 %v7297
    %v7299 = vand.u32 %v1802, 4294901760
    %v7300 = vsub.f32 %v1802, %v7299
    %7301 = vmatpush.msra.mxu0 %v7300
    %v7302 = vand.u32 %v1800, 4294901760
    %v7303 = vsub.f32 %v1800, %v7302
    %7304 = vmatpush.msra.mxu0 %v7303
    %v7305 = vand.u32 %v1798, 4294901760
    %v7306 = vsub.f32 %v1798, %v7305
    %7307 = vmatpush.msra.mxu0 %v7306
    %v7308 = vand.u32 %v7027, 4294901760
    %v7309 = vsub.f32 %v7027, %v7308
    %7310 = vmatmul.f32.gmra.mxu0 %v7309
    %v7311 = vpop.f32.mrf.mxu0
    %v7312 = vadd.f32 %v7282, %v7311
    %7313 = vdwg.mxu0
    %7314 = vmatpush.msra.mxu0 0.0
    %7315 = vmatpush.msra.mxu0 0.0
    %7316 = vmatpush.msra.mxu0 0.0
    %7317 = vmatpush.msra.mxu0 0.0
    %7318 = vmatpush.msra.mxu0 0.0
    %7319 = vmatpush.msra.mxu0 0.0
    %7320 = vmatpush.msra.mxu0 0.0
    %7321 = vmatpush.msra.mxu0 0.0
    %7322 = vmatpush.msra.mxu0 0.0
    %7323 = vmatpush.msra.mxu0 0.0
    %7324 = vmatpush.msra.mxu0 0.0
    %7325 = vmatpush.msra.mxu0 0.0
    %v7326 = vand.u32 %v1804, 4294901760
    %7327 = vmatpush.msra.mxu0 %v7326
    %v7328 = vand.u32 %v1802, 4294901760
    %7329 = vmatpush.msra.mxu0 %v7328
    %v7330 = vand.u32 %v1800, 4294901760
    %7331 = vmatpush.msra.mxu0 %v7330
    %v7332 = vand.u32 %v1798, 4294901760
    %7333 = vmatpush.msra.mxu0 %v7332
    %v7334 = vand.u32 %v7027, 4294901760
    %v7335 = vsub.f32 %v7027, %v7334
    %v7336 = vand.u32 %v7335, 4294901760
    %7337 = vmatmul.f32.gmra.mxu0 %v7336
    %v7338 = vpop.f32.mrf.mxu0
    %v7339 = vadd.f32 %v7312, %v7338
    %7340 = vdwg.mxu0
    %7341 = vmatpush.msra.mxu0 0.0
    %7342 = vmatpush.msra.mxu0 0.0
    %7343 = vmatpush.msra.mxu0 0.0
    %7344 = vmatpush.msra.mxu0 0.0
    %7345 = vmatpush.msra.mxu0 0.0
    %7346 = vmatpush.msra.mxu0 0.0
    %7347 = vmatpush.msra.mxu0 0.0
    %7348 = vmatpush.msra.mxu0 0.0
    %7349 = vmatpush.msra.mxu0 0.0
    %7350 = vmatpush.msra.mxu0 0.0
    %7351 = vmatpush.msra.mxu0 0.0
    %7352 = vmatpush.msra.mxu0 0.0
    %v7353 = vand.u32 %v1804, 4294901760
    %v7354 = vsub.f32 %v1804, %v7353
    %v7355 = vand.u32 %v7354, 4294901760
    %7356 = vmatpush.msra.mxu0 %v7355
    %v7357 = vand.u32 %v1802, 4294901760
    %v7358 = vsub.f32 %v1802, %v7357
    %v7359 = vand.u32 %v7358, 4294901760
    %7360 = vmatpush.msra.mxu0 %v7359
    %v7361 = vand.u32 %v1800, 4294901760
    %v7362 = vsub.f32 %v1800, %v7361
    %v7363 = vand.u32 %v7362, 4294901760
    %7364 = vmatpush.msra.mxu0 %v7363
    %v7365 = vand.u32 %v1798, 4294901760
    %v7366 = vsub.f32 %v1798, %v7365
    %v7367 = vand.u32 %v7366, 4294901760
    %7368 = vmatpush.msra.mxu0 %v7367
    %v7369 = vand.u32 %v7027, 4294901760
    %7370 = vmatmul.f32.gmra.mxu0 %v7369
    %v7371 = vpop.f32.mrf.mxu0
    %v7372 = vadd.f32 %v7339, %v7371
    %7373 = vdwg.mxu0
    %7374 = vmatpush.msra.mxu0 0.0
    %7375 = vmatpush.msra.mxu0 0.0
    %7376 = vmatpush.msra.mxu0 0.0
    %7377 = vmatpush.msra.mxu0 0.0
    %7378 = vmatpush.msra.mxu0 0.0
    %7379 = vmatpush.msra.mxu0 0.0
    %7380 = vmatpush.msra.mxu0 0.0
    %7381 = vmatpush.msra.mxu0 0.0
    %7382 = vmatpush.msra.mxu0 0.0
    %7383 = vmatpush.msra.mxu0 0.0
    %7384 = vmatpush.msra.mxu0 0.0
    %7385 = vmatpush.msra.mxu0 0.0
    %v7386 = vand.u32 %v1804, 4294901760
    %7387 = vmatpush.msra.mxu0 %v7386
    %v7388 = vand.u32 %v1802, 4294901760
    %7389 = vmatpush.msra.mxu0 %v7388
    %v7390 = vand.u32 %v1800, 4294901760
    %7391 = vmatpush.msra.mxu0 %v7390
    %v7392 = vand.u32 %v1798, 4294901760
    %7393 = vmatpush.msra.mxu0 %v7392
    %v7394 = vand.u32 %v7027, 4294901760
    %7395 = vmatmul.f32.gmra.mxu0 %v7394
    %v7396 = vpop.f32.mrf.mxu0
    %v7397 = vadd.f32 %v7372, %v7396
    %7398 = vdwg.mxu0
    %v7400 = vrot.slane %v7397, 1
    %v7401 = vrot.slane %v7397, 2
    %v7402 = vrot.slane %v7397, 3
    %v7403 = vrot.slane %v7397, 4
    %v7404 = vrot.slane %v7397, 5
    %v7405 = vrot.slane %v7397, 6
    %v7406 = vrot.slane %v7397, 7
    %v7407 = vperm.slane %v7397, 0
    %v7408 = vperm.slane %v7400, 0
    %v7409 = vperm.slane %v7401, 0
    %v7410 = vperm.slane %v7402, 0
    %v7411 = vperm.slane %v7403, 0
    %v7412 = vperm.slane %v7404, 0
    %v7413 = vperm.slane %v7405, 0
    %v7414 = vperm.slane %v7406, 0
    %v7423 = vadd.f32 %v834, %v7407
    %v7424 = vadd.f32 %v838, %v7407
    %v7425 = vadd.f32 %v842, %v7408
    %v7426 = vadd.f32 %v846, %v7408
    %v7427 = vadd.f32 %v850, %v7409
    %v7428 = vadd.f32 %v854, %v7409
    %v7429 = vadd.f32 %v858, %v7410
    %v7430 = vadd.f32 %v862, %v7410
    %v7431 = vadd.f32 %v866, %v7411
    %v7432 = vadd.f32 %v870, %v7411
    %v7433 = vadd.f32 %v874, %v7412
    %v7434 = vadd.f32 %v878, %v7412
    %v7435 = vadd.f32 %v882, %v7413
    %v7436 = vadd.f32 %v886, %v7413
    %v7437 = vadd.f32 %v890, %v7414
    %v7438 = vadd.f32 %v894, %v7414
    %v7439 = vtanh.pop %v7423
    %v7440 = vtanh.pop %v7424
    %v7441 = vtanh.pop %v7425
    %v7442 = vtanh.pop %v7426
    %v7443 = vtanh.pop %v7427
    %v7444 = vtanh.pop %v7428
    %v7445 = vtanh.pop %v7429
    %v7446 = vtanh.pop %v7430
    %v7447 = vtanh.pop %v7431
    %v7448 = vtanh.pop %v7432
    %v7449 = vtanh.pop %v7433
    %v7450 = vtanh.pop %v7434
    %v7451 = vtanh.pop %v7435
    %v7452 = vtanh.pop %v7436
    %v7453 = vtanh.pop %v7437
    %v7454 = vtanh.pop %v7438
    %v7455 = vmul.f32 %v7439, %v2235
    %v7456 = vmul.f32 %v7440, %v2235
    %v7457 = vmul.f32 %v7441, %v2235
    %v7458 = vmul.f32 %v7442, %v2235
    %v7459 = vmul.f32 %v7443, %v2235
    %v7460 = vmul.f32 %v7444, %v2235
    %v7461 = vmul.f32 %v7445, %v2235
    %v7462 = vmul.f32 %v7446, %v2235
    %v7463 = vmul.f32 %v7447, %v2235
    %v7464 = vmul.f32 %v7448, %v2235
    %v7465 = vmul.f32 %v7449, %v2235
    %v7466 = vmul.f32 %v7450, %v2235
    %v7467 = vmul.f32 %v7451, %v2235
    %v7468 = vmul.f32 %v7452, %v2235
    %v7469 = vmul.f32 %v7453, %v2235
    %v7470 = vmul.f32 %v7454, %v2235
    %v7471 = vsel %vm197, %v7455, 0.0
    %7472 = vadd.xlane.f32.xlu0 %v7471
    %v7473 = vpop.xlane.xlu0 %7472
    %v7474 = vsel %vm197, %v7456, 0.0
    %7475 = vadd.xlane.f32.xlu0 %v7474
    %v7476 = vpop.xlane.xlu0 %7475
    %v7477 = vsel %vm197, %v7457, 0.0
    %7478 = vadd.xlane.f32.xlu0 %v7477
    %v7479 = vpop.xlane.xlu0 %7478
    %v7480 = vsel %vm197, %v7458, 0.0
    %7481 = vadd.xlane.f32.xlu0 %v7480
    %v7482 = vpop.xlane.xlu0 %7481
    %v7483 = vsel %vm197, %v7459, 0.0
    %7484 = vadd.xlane.f32.xlu0 %v7483
    %v7485 = vpop.xlane.xlu0 %7484
    %v7486 = vsel %vm197, %v7460, 0.0
    %7487 = vadd.xlane.f32.xlu0 %v7486
    %v7488 = vpop.xlane.xlu0 %7487
    %v7489 = vsel %vm197, %v7461, 0.0
    %7490 = vadd.xlane.f32.xlu0 %v7489
    %v7491 = vpop.xlane.xlu0 %7490
    %v7492 = vsel %vm197, %v7462, 0.0
    %7493 = vadd.xlane.f32.xlu0 %v7492
    %v7494 = vpop.xlane.xlu0 %7493
    %v7495 = vsel %vm197, %v7463, 0.0
    %7496 = vadd.xlane.f32.xlu0 %v7495
    %v7497 = vpop.xlane.xlu0 %7496
    %v7498 = vsel %vm197, %v7464, 0.0
    %7499 = vadd.xlane.f32.xlu0 %v7498
    %v7500 = vpop.xlane.xlu0 %7499
    %v7501 = vsel %vm197, %v7465, 0.0
    %7502 = vadd.xlane.f32.xlu0 %v7501
    %v7503 = vpop.xlane.xlu0 %7502
    %v7504 = vsel %vm197, %v7466, 0.0
    %7505 = vadd.xlane.f32.xlu0 %v7504
    %v7506 = vpop.xlane.xlu0 %7505
    %v7507 = vsel %vm197, %v7467, 0.0
    %7508 = vadd.xlane.f32.xlu0 %v7507
    %v7509 = vpop.xlane.xlu0 %7508
    %v7510 = vsel %vm197, %v7468, 0.0
    %7511 = vadd.xlane.f32.xlu0 %v7510
    %v7512 = vpop.xlane.xlu0 %7511
    %v7513 = vsel %vm197, %v7469, 0.0
    %7514 = vadd.xlane.f32.xlu0 %v7513
    %v7515 = vpop.xlane.xlu0 %7514
    %v7516 = vsel %vm197, %v7470, 0.0
    %7517 = vadd.xlane.f32.xlu0 %v7516
    %v7518 = vpop.xlane.xlu0 %7517
    %v7535 = vperm.slane %v7473, %v2318
    %v7536 = vperm.slane %v7476, %v2320
    %v7537 = vsel %vm2322, %v7536, %v7535
    %v7538 = vperm.slane %v7479, %v2318
    %v7539 = vperm.slane %v7482, %v2320
    %v7540 = vsel %vm2322, %v7539, %v7538
    %v7541 = vperm.slane %v7485, %v2318
    %v7542 = vperm.slane %v7488, %v2320
    %v7543 = vsel %vm2322, %v7542, %v7541
    %v7544 = vperm.slane %v7491, %v2318
    %v7545 = vperm.slane %v7494, %v2320
    %v7546 = vsel %vm2322, %v7545, %v7544
    %v7547 = vperm.slane %v7497, %v2318
    %v7548 = vperm.slane %v7500, %v2320
    %v7549 = vsel %vm2322, %v7548, %v7547
    %v7550 = vperm.slane %v7503, %v2318
    %v7551 = vperm.slane %v7506, %v2320
    %v7552 = vsel %vm2322, %v7551, %v7550
    %v7553 = vperm.slane %v7509, %v2318
    %v7554 = vperm.slane %v7512, %v2320
    %v7555 = vsel %vm2322, %v7554, %v7553
    %v7556 = vperm.slane %v7515, %v2318
    %v7557 = vperm.slane %v7518, %v2320
    %v7558 = vsel %vm2322, %v7557, %v7556
    %v7559 = vsel %vm1398, %v7540, %v7537
    %v7560 = vsel %vm1400, %v7543, %v7559
    %v7561 = vsel %vm1402, %v7546, %v7560
    %v7562 = vsel %vm1404, %v7549, %v7561
    %v7563 = vsel %vm1406, %v7552, %v7562
    %v7564 = vsel %vm1408, %v7555, %v7563
    %v7565 = vsel %vm1410, %v7558, %v7564
    %v7567 = vsel %vm2353, %v7565, -inf
    %7568 = vmax.xlane.f32.xlu0 %v7567
    %v7569 = vpop.xlane.xlu0 %7568
    %v7571 = vperm.slane %v7569, 0
    %v7572 = vperm.slane %v7569, 1
    %v7573 = vperm.slane %v7569, 2
    %v7574 = vperm.slane %v7569, 3
    %v7575 = vperm.slane %v7569, 4
    %v7576 = vperm.slane %v7569, 5
    %v7577 = vperm.slane %v7569, 6
    %v7578 = vperm.slane %v7569, 7
    %v7587 = vsub.f32 %v7473, %v7571
    %v7588 = vsub.f32 %v7476, %v7571
    %v7589 = vsub.f32 %v7479, %v7572
    %v7590 = vsub.f32 %v7482, %v7572
    %v7591 = vsub.f32 %v7485, %v7573
    %v7592 = vsub.f32 %v7488, %v7573
    %v7593 = vsub.f32 %v7491, %v7574
    %v7594 = vsub.f32 %v7494, %v7574
    %v7595 = vsub.f32 %v7497, %v7575
    %v7596 = vsub.f32 %v7500, %v7575
    %v7597 = vsub.f32 %v7503, %v7576
    %v7598 = vsub.f32 %v7506, %v7576
    %v7599 = vsub.f32 %v7509, %v7577
    %v7600 = vsub.f32 %v7512, %v7577
    %v7601 = vsub.f32 %v7515, %v7578
    %v7602 = vsub.f32 %v7518, %v7578
    %v7603 = vmul.f32 %v7587, 1.442695
    %v7604 = vpow.pop %v7603
    %v7605 = vmul.f32 %v7588, 1.442695
    %v7606 = vpow.pop %v7605
    %v7607 = vmul.f32 %v7589, 1.442695
    %v7608 = vpow.pop %v7607
    %v7609 = vmul.f32 %v7590, 1.442695
    %v7610 = vpow.pop %v7609
    %v7611 = vmul.f32 %v7591, 1.442695
    %v7612 = vpow.pop %v7611
    %v7613 = vmul.f32 %v7592, 1.442695
    %v7614 = vpow.pop %v7613
    %v7615 = vmul.f32 %v7593, 1.442695
    %v7616 = vpow.pop %v7615
    %v7617 = vmul.f32 %v7594, 1.442695
    %v7618 = vpow.pop %v7617
    %v7619 = vmul.f32 %v7595, 1.442695
    %v7620 = vpow.pop %v7619
    %v7621 = vmul.f32 %v7596, 1.442695
    %v7622 = vpow.pop %v7621
    %v7623 = vmul.f32 %v7597, 1.442695
    %v7624 = vpow.pop %v7623
    %v7625 = vmul.f32 %v7598, 1.442695
    %v7626 = vpow.pop %v7625
    %v7627 = vmul.f32 %v7599, 1.442695
    %v7628 = vpow.pop %v7627
    %v7629 = vmul.f32 %v7600, 1.442695
    %v7630 = vpow.pop %v7629
    %v7631 = vmul.f32 %v7601, 1.442695
    %v7632 = vpow.pop %v7631
    %v7633 = vmul.f32 %v7602, 1.442695
    %v7634 = vpow.pop %v7633
    %7651 = vset.pattern.permute.xlu0 0
    %7652 = vperm.xlu0 %7651, %v7604
    %v7653 = vpop.permute.xlu0 %7652
    %7654 = vset.pattern.permute.xlu0 0
    %7655 = vperm.xlu0 %7654, %v7606
    %v7656 = vpop.permute.xlu0 %7655
    %7657 = vset.pattern.permute.xlu0 0
    %7658 = vperm.xlu0 %7657, %v7608
    %v7659 = vpop.permute.xlu0 %7658
    %7660 = vset.pattern.permute.xlu0 0
    %7661 = vperm.xlu0 %7660, %v7610
    %v7662 = vpop.permute.xlu0 %7661
    %7663 = vset.pattern.permute.xlu0 0
    %7664 = vperm.xlu0 %7663, %v7612
    %v7665 = vpop.permute.xlu0 %7664
    %7666 = vset.pattern.permute.xlu0 0
    %7667 = vperm.xlu0 %7666, %v7614
    %v7668 = vpop.permute.xlu0 %7667
    %7669 = vset.pattern.permute.xlu0 0
    %7670 = vperm.xlu0 %7669, %v7616
    %v7671 = vpop.permute.xlu0 %7670
    %7672 = vset.pattern.permute.xlu0 0
    %7673 = vperm.xlu0 %7672, %v7618
    %v7674 = vpop.permute.xlu0 %7673
    %7675 = vset.pattern.permute.xlu0 0
    %7676 = vperm.xlu0 %7675, %v7620
    %v7677 = vpop.permute.xlu0 %7676
    %7678 = vset.pattern.permute.xlu0 0
    %7679 = vperm.xlu0 %7678, %v7622
    %v7680 = vpop.permute.xlu0 %7679
    %7681 = vset.pattern.permute.xlu0 0
    %7682 = vperm.xlu0 %7681, %v7624
    %v7683 = vpop.permute.xlu0 %7682
    %7684 = vset.pattern.permute.xlu0 0
    %7685 = vperm.xlu0 %7684, %v7626
    %v7686 = vpop.permute.xlu0 %7685
    %7687 = vset.pattern.permute.xlu0 0
    %7688 = vperm.xlu0 %7687, %v7628
    %v7689 = vpop.permute.xlu0 %7688
    %7690 = vset.pattern.permute.xlu0 0
    %7691 = vperm.xlu0 %7690, %v7630
    %v7692 = vpop.permute.xlu0 %7691
    %7693 = vset.pattern.permute.xlu0 0
    %7694 = vperm.xlu0 %7693, %v7632
    %v7695 = vpop.permute.xlu0 %7694
    %7696 = vset.pattern.permute.xlu0 0
    %7697 = vperm.xlu0 %7696, %v7634
    %v7698 = vpop.permute.xlu0 %7697
    %v7699 = vperm.slane %v7653, %v2318
    %v7700 = vperm.slane %v7656, %v2320
    %v7701 = vsel %vm2322, %v7700, %v7699
    %v7702 = vperm.slane %v7659, %v2318
    %v7703 = vperm.slane %v7662, %v2320
    %v7704 = vsel %vm2322, %v7703, %v7702
    %v7705 = vperm.slane %v7665, %v2318
    %v7706 = vperm.slane %v7668, %v2320
    %v7707 = vsel %vm2322, %v7706, %v7705
    %v7708 = vperm.slane %v7671, %v2318
    %v7709 = vperm.slane %v7674, %v2320
    %v7710 = vsel %vm2322, %v7709, %v7708
    %v7711 = vperm.slane %v7677, %v2318
    %v7712 = vperm.slane %v7680, %v2320
    %v7713 = vsel %vm2322, %v7712, %v7711
    %v7714 = vperm.slane %v7683, %v2318
    %v7715 = vperm.slane %v7686, %v2320
    %v7716 = vsel %vm2322, %v7715, %v7714
    %v7717 = vperm.slane %v7689, %v2318
    %v7718 = vperm.slane %v7692, %v2320
    %v7719 = vsel %vm2322, %v7718, %v7717
    %v7720 = vperm.slane %v7695, %v2318
    %v7721 = vperm.slane %v7698, %v2320
    %v7722 = vsel %vm2322, %v7721, %v7720
    %v7723 = vsel %vm1398, %v7704, %v7701
    %v7724 = vsel %vm1400, %v7707, %v7723
    %v7725 = vsel %vm1402, %v7710, %v7724
    %v7726 = vsel %vm1404, %v7713, %v7725
    %v7727 = vsel %vm1406, %v7716, %v7726
    %v7728 = vsel %vm1408, %v7719, %v7727
    %v7729 = vsel %vm1410, %v7722, %v7728
    %v7731 = vsel %vm2353, %v7729, 0.0
    %7732 = vadd.xlane.f32.xlu0 %v7731
    %v7733 = vpop.xlane.xlu0 %7732
    %v7735 = vperm.slane %v7733, 0
    %v7736 = vperm.slane %v7733, 1
    %v7737 = vperm.slane %v7733, 2
    %v7738 = vperm.slane %v7733, 3
    %v7739 = vperm.slane %v7733, 4
    %v7740 = vperm.slane %v7733, 5
    %v7741 = vperm.slane %v7733, 6
    %v7742 = vperm.slane %v7733, 7
    %v7751 = vrcp.pop %v7735
    %v7752 = vmul.f32 %v7735, %v7751
    %v7753 = vsub.f32 1.0, %v7752
    %v7754 = vmul.f32 %v7751, %v7753
    %v7755 = vadd.f32 %v7751, %v7754
    %vm7756 = vweird.f32 %v7735
    %vm7757 = vweird.f32 %v7751
    %vm7758 = vmor %vm7756, %vm7757
    %v7759 = vsel %vm7758, %v7751, %v7755
    %v7760 = vand.u32 2147483647, %v7735
    %vm7761 = vcmp.eq.f32.partialorder %v7760, 8.507059e+37
    %v7762 = vand.u32 %v7735, 2147483648
    %v7763 = vor.u32 1.1754944e-38, %v7762
    %v7764 = vsel %vm7761, %v7763, %v7759
    %v7765 = vmul.f32 %v7604, %v7764
    %v7766 = vmul.f32 %v7606, %v7764
    %v7767 = vrcp.pop %v7736
    %v7768 = vmul.f32 %v7736, %v7767
    %v7769 = vsub.f32 1.0, %v7768
    %v7770 = vmul.f32 %v7767, %v7769
    %v7771 = vadd.f32 %v7767, %v7770
    %vm7772 = vweird.f32 %v7736
    %vm7773 = vweird.f32 %v7767
    %vm7774 = vmor %vm7772, %vm7773
    %v7775 = vsel %vm7774, %v7767, %v7771
    %v7776 = vand.u32 2147483647, %v7736
    %vm7777 = vcmp.eq.f32.partialorder %v7776, 8.507059e+37
    %v7778 = vand.u32 %v7736, 2147483648
    %v7779 = vor.u32 1.1754944e-38, %v7778
    %v7780 = vsel %vm7777, %v7779, %v7775
    %v7781 = vmul.f32 %v7608, %v7780
    %v7782 = vmul.f32 %v7610, %v7780
    %v7783 = vrcp.pop %v7737
    %v7784 = vmul.f32 %v7737, %v7783
    %v7785 = vsub.f32 1.0, %v7784
    %v7786 = vmul.f32 %v7783, %v7785
    %v7787 = vadd.f32 %v7783, %v7786
    %vm7788 = vweird.f32 %v7737
    %vm7789 = vweird.f32 %v7783
    %vm7790 = vmor %vm7788, %vm7789
    %v7791 = vsel %vm7790, %v7783, %v7787
    %v7792 = vand.u32 2147483647, %v7737
    %vm7793 = vcmp.eq.f32.partialorder %v7792, 8.507059e+37
    %v7794 = vand.u32 %v7737, 2147483648
    %v7795 = vor.u32 1.1754944e-38, %v7794
    %v7796 = vsel %vm7793, %v7795, %v7791
    %v7797 = vmul.f32 %v7612, %v7796
    %v7798 = vmul.f32 %v7614, %v7796
    %v7799 = vrcp.pop %v7738
    %v7800 = vmul.f32 %v7738, %v7799
    %v7801 = vsub.f32 1.0, %v7800
    %v7802 = vmul.f32 %v7799, %v7801
    %v7803 = vadd.f32 %v7799, %v7802
    %vm7804 = vweird.f32 %v7738
    %vm7805 = vweird.f32 %v7799
    %vm7806 = vmor %vm7804, %vm7805
    %v7807 = vsel %vm7806, %v7799, %v7803
    %v7808 = vand.u32 2147483647, %v7738
    %vm7809 = vcmp.eq.f32.partialorder %v7808, 8.507059e+37
    %v7810 = vand.u32 %v7738, 2147483648
    %v7811 = vor.u32 1.1754944e-38, %v7810
    %v7812 = vsel %vm7809, %v7811, %v7807
    %v7813 = vmul.f32 %v7616, %v7812
    %v7814 = vmul.f32 %v7618, %v7812
    %v7815 = vrcp.pop %v7739
    %v7816 = vmul.f32 %v7739, %v7815
    %v7817 = vsub.f32 1.0, %v7816
    %v7818 = vmul.f32 %v7815, %v7817
    %v7819 = vadd.f32 %v7815, %v7818
    %vm7820 = vweird.f32 %v7739
    %vm7821 = vweird.f32 %v7815
    %vm7822 = vmor %vm7820, %vm7821
    %v7823 = vsel %vm7822, %v7815, %v7819
    %v7824 = vand.u32 2147483647, %v7739
    %vm7825 = vcmp.eq.f32.partialorder %v7824, 8.507059e+37
    %v7826 = vand.u32 %v7739, 2147483648
    %v7827 = vor.u32 1.1754944e-38, %v7826
    %v7828 = vsel %vm7825, %v7827, %v7823
    %v7829 = vmul.f32 %v7620, %v7828
    %v7830 = vmul.f32 %v7622, %v7828
    %v7831 = vrcp.pop %v7740
    %v7832 = vmul.f32 %v7740, %v7831
    %v7833 = vsub.f32 1.0, %v7832
    %v7834 = vmul.f32 %v7831, %v7833
    %v7835 = vadd.f32 %v7831, %v7834
    %vm7836 = vweird.f32 %v7740
    %vm7837 = vweird.f32 %v7831
    %vm7838 = vmor %vm7836, %vm7837
    %v7839 = vsel %vm7838, %v7831, %v7835
    %v7840 = vand.u32 2147483647, %v7740
    %vm7841 = vcmp.eq.f32.partialorder %v7840, 8.507059e+37
    %v7842 = vand.u32 %v7740, 2147483648
    %v7843 = vor.u32 1.1754944e-38, %v7842
    %v7844 = vsel %vm7841, %v7843, %v7839
    %v7845 = vmul.f32 %v7624, %v7844
    %v7846 = vmul.f32 %v7626, %v7844
    %v7847 = vrcp.pop %v7741
    %v7848 = vmul.f32 %v7741, %v7847
    %v7849 = vsub.f32 1.0, %v7848
    %v7850 = vmul.f32 %v7847, %v7849
    %v7851 = vadd.f32 %v7847, %v7850
    %vm7852 = vweird.f32 %v7741
    %vm7853 = vweird.f32 %v7847
    %vm7854 = vmor %vm7852, %vm7853
    %v7855 = vsel %vm7854, %v7847, %v7851
    %v7856 = vand.u32 2147483647, %v7741
    %vm7857 = vcmp.eq.f32.partialorder %v7856, 8.507059e+37
    %v7858 = vand.u32 %v7741, 2147483648
    %v7859 = vor.u32 1.1754944e-38, %v7858
    %v7860 = vsel %vm7857, %v7859, %v7855
    %v7861 = vmul.f32 %v7628, %v7860
    %v7862 = vmul.f32 %v7630, %v7860
    %v7863 = vrcp.pop %v7742
    %v7864 = vmul.f32 %v7742, %v7863
    %v7865 = vsub.f32 1.0, %v7864
    %v7866 = vmul.f32 %v7863, %v7865
    %v7867 = vadd.f32 %v7863, %v7866
    %vm7868 = vweird.f32 %v7742
    %vm7869 = vweird.f32 %v7863
    %vm7870 = vmor %vm7868, %vm7869
    %v7871 = vsel %vm7870, %v7863, %v7867
    %v7872 = vand.u32 2147483647, %v7742
    %vm7873 = vcmp.eq.f32.partialorder %v7872, 8.507059e+37
    %v7874 = vand.u32 %v7742, 2147483648
    %v7875 = vor.u32 1.1754944e-38, %v7874
    %v7876 = vsel %vm7873, %v7875, %v7871
    %v7877 = vmul.f32 %v7632, %v7876
    %v7878 = vmul.f32 %v7634, %v7876
    %7880 = vset.pattern.permute.xlu0 0
    %7881 = vperm.xlu0 %7880, %v7765
    %v7882 = vpop.permute.xlu0 %7881
    %7885 = vset.pattern.permute.xlu0 0
    %7886 = vperm.xlu0 %7885, %v7766
    %v7887 = vpop.permute.xlu0 %7886
    %7890 = vset.pattern.permute.xlu0 0
    %7891 = vperm.xlu0 %7890, %v7781
    %v7892 = vpop.permute.xlu0 %7891
    %7895 = vset.pattern.permute.xlu0 0
    %7896 = vperm.xlu0 %7895, %v7782
    %v7897 = vpop.permute.xlu0 %7896
    %7900 = vset.pattern.permute.xlu0 0
    %7901 = vperm.xlu0 %7900, %v7797
    %v7902 = vpop.permute.xlu0 %7901
    %7905 = vset.pattern.permute.xlu0 0
    %7906 = vperm.xlu0 %7905, %v7798
    %v7907 = vpop.permute.xlu0 %7906
    %7910 = vset.pattern.permute.xlu0 0
    %7911 = vperm.xlu0 %7910, %v7813
    %v7912 = vpop.permute.xlu0 %7911
    %7915 = vset.pattern.permute.xlu0 0
    %7916 = vperm.xlu0 %7915, %v7814
    %v7917 = vpop.permute.xlu0 %7916
    %7920 = vset.pattern.permute.xlu0 0
    %7921 = vperm.xlu0 %7920, %v7829
    %v7922 = vpop.permute.xlu0 %7921
    %7925 = vset.pattern.permute.xlu0 0
    %7926 = vperm.xlu0 %7925, %v7830
    %v7927 = vpop.permute.xlu0 %7926
    %7930 = vset.pattern.permute.xlu0 0
    %7931 = vperm.xlu0 %7930, %v7845
    %v7932 = vpop.permute.xlu0 %7931
    %7935 = vset.pattern.permute.xlu0 0
    %7936 = vperm.xlu0 %7935, %v7846
    %v7937 = vpop.permute.xlu0 %7936
    %7940 = vset.pattern.permute.xlu0 0
    %7941 = vperm.xlu0 %7940, %v7861
    %v7942 = vpop.permute.xlu0 %7941
    %7945 = vset.pattern.permute.xlu0 0
    %7946 = vperm.xlu0 %7945, %v7862
    %v7947 = vpop.permute.xlu0 %7946
    %7950 = vset.pattern.permute.xlu0 0
    %7951 = vperm.xlu0 %7950, %v7877
    %v7952 = vpop.permute.xlu0 %7951
    %7955 = vset.pattern.permute.xlu0 0
    %7956 = vperm.xlu0 %7955, %v7878
    %v7957 = vpop.permute.xlu0 %7956
    %v7959 = vmul.f32 %v173, %v7882
    %v7960 = vmul.f32 %v174, %v7887
    %v7961 = vmul.f32 %v175, %v7892
    %v7962 = vmul.f32 %v176, %v7897
    %v7963 = vmul.f32 %v177, %v7902
    %v7964 = vmul.f32 %v178, %v7907
    %v7965 = vmul.f32 %v179, %v7912
    %v7966 = vmul.f32 %v180, %v7917
    %v7967 = vmul.f32 %v181, %v7922
    %v7968 = vmul.f32 %v182, %v7927
    %v7969 = vmul.f32 %v183, %v7932
    %v7970 = vmul.f32 %v184, %v7937
    %v7971 = vmul.f32 %v185, %v7942
    %v7972 = vmul.f32 %v186, %v7947
    %v7973 = vmul.f32 %v187, %v7952
    %v7974 = vmul.f32 %v188, %v7957
    %v7975 = vsel %vm197, %v7959, 0.0
    %v7976 = vsel %vm197, %v7960, 0.0
    %v7977 = vadd.f32 %v7975, %v7976
    %v7978 = vrot.slane %v7977, 4
    %v7979 = vadd.f32 %v7977, %v7978
    %v7980 = vrot.slane %v7979, 2
    %v7981 = vadd.f32 %v7979, %v7980
    %v7982 = vrot.slane %v7981, 1
    %v7983 = vadd.f32 %v7981, %v7982
    %v7984 = vsel %vm197, %v7961, 0.0
    %v7985 = vsel %vm197, %v7962, 0.0
    %v7986 = vadd.f32 %v7984, %v7985
    %v7987 = vrot.slane %v7986, 4
    %v7988 = vadd.f32 %v7986, %v7987
    %v7989 = vrot.slane %v7988, 2
    %v7990 = vadd.f32 %v7988, %v7989
    %v7991 = vrot.slane %v7990, 1
    %v7992 = vadd.f32 %v7990, %v7991
    %v7993 = vsel %vm197, %v7963, 0.0
    %v7994 = vsel %vm197, %v7964, 0.0
    %v7995 = vadd.f32 %v7993, %v7994
    %v7996 = vrot.slane %v7995, 4
    %v7997 = vadd.f32 %v7995, %v7996
    %v7998 = vrot.slane %v7997, 2
    %v7999 = vadd.f32 %v7997, %v7998
    %v8000 = vrot.slane %v7999, 1
    %v8001 = vadd.f32 %v7999, %v8000
    %v8002 = vsel %vm197, %v7965, 0.0
    %v8003 = vsel %vm197, %v7966, 0.0
    %v8004 = vadd.f32 %v8002, %v8003
    %v8005 = vrot.slane %v8004, 4
    %v8006 = vadd.f32 %v8004, %v8005
    %v8007 = vrot.slane %v8006, 2
    %v8008 = vadd.f32 %v8006, %v8007
    %v8009 = vrot.slane %v8008, 1
    %v8010 = vadd.f32 %v8008, %v8009
    %v8011 = vsel %vm197, %v7967, 0.0
    %v8012 = vsel %vm197, %v7968, 0.0
    %v8013 = vadd.f32 %v8011, %v8012
    %v8014 = vrot.slane %v8013, 4
    %v8015 = vadd.f32 %v8013, %v8014
    %v8016 = vrot.slane %v8015, 2
    %v8017 = vadd.f32 %v8015, %v8016
    %v8018 = vrot.slane %v8017, 1
    %v8019 = vadd.f32 %v8017, %v8018
    %v8020 = vsel %vm197, %v7969, 0.0
    %v8021 = vsel %vm197, %v7970, 0.0
    %v8022 = vadd.f32 %v8020, %v8021
    %v8023 = vrot.slane %v8022, 4
    %v8024 = vadd.f32 %v8022, %v8023
    %v8025 = vrot.slane %v8024, 2
    %v8026 = vadd.f32 %v8024, %v8025
    %v8027 = vrot.slane %v8026, 1
    %v8028 = vadd.f32 %v8026, %v8027
    %v8029 = vsel %vm197, %v7971, 0.0
    %v8030 = vsel %vm197, %v7972, 0.0
    %v8031 = vadd.f32 %v8029, %v8030
    %v8032 = vrot.slane %v8031, 4
    %v8033 = vadd.f32 %v8031, %v8032
    %v8034 = vrot.slane %v8033, 2
    %v8035 = vadd.f32 %v8033, %v8034
    %v8036 = vrot.slane %v8035, 1
    %v8037 = vadd.f32 %v8035, %v8036
    %v8038 = vsel %vm197, %v7973, 0.0
    %v8039 = vsel %vm197, %v7974, 0.0
    %v8040 = vadd.f32 %v8038, %v8039
    %v8041 = vrot.slane %v8040, 4
    %v8042 = vadd.f32 %v8040, %v8041
    %v8043 = vrot.slane %v8042, 2
    %v8044 = vadd.f32 %v8042, %v8043
    %v8045 = vrot.slane %v8044, 1
    %v8046 = vadd.f32 %v8044, %v8045
    %s8047 = scalar_lea.vmem [#allocation2], 32
    %v8048 = vld [vmem:[%s8047] sm:$0xff]
    %v8049 = vadd.f32 %v8048, %v7212
    %v8058 = vsel %vm1398, %v7992, %v7983
    %v8059 = vsel %vm1400, %v8001, %v8058
    %v8060 = vsel %vm1402, %v8010, %v8059
    %v8061 = vsel %vm1404, %v8019, %v8060
    %v8062 = vsel %vm1406, %v8028, %v8061
    %v8063 = vsel %vm1408, %v8037, %v8062
    %v8064 = vsel %vm1410, %v8046, %v8063
    %v8065 = vsel %vm197, %v8064, 0
    %8067 = vmatpush.msra.mxu0 0.0
    %8068 = vmatpush.msra.mxu0 0.0
    %8069 = vmatpush.msra.mxu0 0.0
    %8070 = vmatpush.msra.mxu0 0.0
    %8071 = vmatpush.msra.mxu0 0.0
    %8072 = vmatpush.msra.mxu0 0.0
    %8073 = vmatpush.msra.mxu0 0.0
    %8074 = vmatpush.msra.mxu0 0.0
    %8075 = vmatpush.msra.mxu0 0.0
    %8076 = vmatpush.msra.mxu0 0.0
    %8077 = vmatpush.msra.mxu0 0.0
    %8078 = vmatpush.msra.mxu0 0.0
    %v8079 = vand.u32 %v1796, 4294901760
    %8080 = vmatpush.msra.mxu0 %v8079
    %v8081 = vand.u32 %v1795, 4294901760
    %8082 = vmatpush.msra.mxu0 %v8081
    %v8083 = vand.u32 %v1794, 4294901760
    %8084 = vmatpush.msra.mxu0 %v8083
    %v8085 = vand.u32 %v1793, 4294901760
    %8086 = vmatpush.msra.mxu0 %v8085
    %v8087 = vand.u32 %v8065, 4294901760
    %v8088 = vsub.f32 %v8065, %v8087
    %v8089 = vand.u32 %v8088, 4294901760
    %v8090 = vsub.f32 %v8088, %v8089
    %v8091 = vand.u32 %v8090, 4294901760
    %8092 = vmatmul.f32.gmra.mxu0 %v8091
    %v8093 = vpop.f32.mrf.mxu0
    %v8094 = vadd.f32 0.0, %v8093
    %8095 = vdwg.mxu0
    %8096 = vmatpush.msra.mxu0 0.0
    %8097 = vmatpush.msra.mxu0 0.0
    %8098 = vmatpush.msra.mxu0 0.0
    %8099 = vmatpush.msra.mxu0 0.0
    %8100 = vmatpush.msra.mxu0 0.0
    %8101 = vmatpush.msra.mxu0 0.0
    %8102 = vmatpush.msra.mxu0 0.0
    %8103 = vmatpush.msra.mxu0 0.0
    %8104 = vmatpush.msra.mxu0 0.0
    %8105 = vmatpush.msra.mxu0 0.0
    %8106 = vmatpush.msra.mxu0 0.0
    %8107 = vmatpush.msra.mxu0 0.0
    %v8108 = vand.u32 %v1796, 4294901760
    %v8109 = vsub.f32 %v1796, %v8108
    %v8110 = vand.u32 %v8109, 4294901760
    %v8111 = vsub.f32 %v8109, %v8110
    %v8112 = vand.u32 %v8111, 4294901760
    %8113 = vmatpush.msra.mxu0 %v8112
    %v8114 = vand.u32 %v1795, 4294901760
    %v8115 = vsub.f32 %v1795, %v8114
    %v8116 = vand.u32 %v8115, 4294901760
    %v8117 = vsub.f32 %v8115, %v8116
    %v8118 = vand.u32 %v8117, 4294901760
    %8119 = vmatpush.msra.mxu0 %v8118
    %v8120 = vand.u32 %v1794, 4294901760
    %v8121 = vsub.f32 %v1794, %v8120
    %v8122 = vand.u32 %v8121, 4294901760
    %v8123 = vsub.f32 %v8121, %v8122
    %v8124 = vand.u32 %v8123, 4294901760
    %8125 = vmatpush.msra.mxu0 %v8124
    %v8126 = vand.u32 %v1793, 4294901760
    %v8127 = vsub.f32 %v1793, %v8126
    %v8128 = vand.u32 %v8127, 4294901760
    %v8129 = vsub.f32 %v8127, %v8128
    %v8130 = vand.u32 %v8129, 4294901760
    %8131 = vmatpush.msra.mxu0 %v8130
    %v8132 = vand.u32 %v8065, 4294901760
    %8133 = vmatmul.f32.gmra.mxu0 %v8132
    %v8134 = vpop.f32.mrf.mxu0
    %v8135 = vadd.f32 %v8094, %v8134
    %8136 = vdwg.mxu0
    %8137 = vmatpush.msra.mxu0 0.0
    %8138 = vmatpush.msra.mxu0 0.0
    %8139 = vmatpush.msra.mxu0 0.0
    %8140 = vmatpush.msra.mxu0 0.0
    %8141 = vmatpush.msra.mxu0 0.0
    %8142 = vmatpush.msra.mxu0 0.0
    %8143 = vmatpush.msra.mxu0 0.0
    %8144 = vmatpush.msra.mxu0 0.0
    %8145 = vmatpush.msra.mxu0 0.0
    %8146 = vmatpush.msra.mxu0 0.0
    %8147 = vmatpush.msra.mxu0 0.0
    %8148 = vmatpush.msra.mxu0 0.0
    %v8149 = vand.u32 %v1796, 4294901760
    %v8150 = vsub.f32 %v1796, %v8149
    %8151 = vmatpush.msra.mxu0 %v8150
    %v8152 = vand.u32 %v1795, 4294901760
    %v8153 = vsub.f32 %v1795, %v8152
    %8154 = vmatpush.msra.mxu0 %v8153
    %v8155 = vand.u32 %v1794, 4294901760
    %v8156 = vsub.f32 %v1794, %v8155
    %8157 = vmatpush.msra.mxu0 %v8156
    %v8158 = vand.u32 %v1793, 4294901760
    %v8159 = vsub.f32 %v1793, %v8158
    %8160 = vmatpush.msra.mxu0 %v8159
    %v8161 = vand.u32 %v8065, 4294901760
    %v8162 = vsub.f32 %v8065, %v8161
    %8163 = vmatmul.f32.gmra.mxu0 %v8162
    %v8164 = vpop.f32.mrf.mxu0
    %v8165 = vadd.f32 %v8135, %v8164
    %8166 = vdwg.mxu0
    %8167 = vmatpush.msra.mxu0 0.0
    %8168 = vmatpush.msra.mxu0 0.0
    %8169 = vmatpush.msra.mxu0 0.0
    %8170 = vmatpush.msra.mxu0 0.0
    %8171 = vmatpush.msra.mxu0 0.0
    %8172 = vmatpush.msra.mxu0 0.0
    %8173 = vmatpush.msra.mxu0 0.0
    %8174 = vmatpush.msra.mxu0 0.0
    %8175 = vmatpush.msra.mxu0 0.0
    %8176 = vmatpush.msra.mxu0 0.0
    %8177 = vmatpush.msra.mxu0 0.0
    %8178 = vmatpush.msra.mxu0 0.0
    %v8179 = vand.u32 %v1796, 4294901760
    %8180 = vmatpush.msra.mxu0 %v8179
    %v8181 = vand.u32 %v1795, 4294901760
    %8182 = vmatpush.msra.mxu0 %v8181
    %v8183 = vand.u32 %v1794, 4294901760
    %8184 = vmatpush.msra.mxu0 %v8183
    %v8185 = vand.u32 %v1793, 4294901760
    %8186 = vmatpush.msra.mxu0 %v8185
    %v8187 = vand.u32 %v8065, 4294901760
    %v8188 = vsub.f32 %v8065, %v8187
    %v8189 = vand.u32 %v8188, 4294901760
    %8190 = vmatmul.f32.gmra.mxu0 %v8189
    %v8191 = vpop.f32.mrf.mxu0
    %v8192 = vadd.f32 %v8165, %v8191
    %8193 = vdwg.mxu0
    %8194 = vmatpush.msra.mxu0 0.0
    %8195 = vmatpush.msra.mxu0 0.0
    %8196 = vmatpush.msra.mxu0 0.0
    %8197 = vmatpush.msra.mxu0 0.0
    %8198 = vmatpush.msra.mxu0 0.0
    %8199 = vmatpush.msra.mxu0 0.0
    %8200 = vmatpush.msra.mxu0 0.0
    %8201 = vmatpush.msra.mxu0 0.0
    %8202 = vmatpush.msra.mxu0 0.0
    %8203 = vmatpush.msra.mxu0 0.0
    %8204 = vmatpush.msra.mxu0 0.0
    %8205 = vmatpush.msra.mxu0 0.0
    %v8206 = vand.u32 %v1796, 4294901760
    %v8207 = vsub.f32 %v1796, %v8206
    %v8208 = vand.u32 %v8207, 4294901760
    %8209 = vmatpush.msra.mxu0 %v8208
    %v8210 = vand.u32 %v1795, 4294901760
    %v8211 = vsub.f32 %v1795, %v8210
    %v8212 = vand.u32 %v8211, 4294901760
    %8213 = vmatpush.msra.mxu0 %v8212
    %v8214 = vand.u32 %v1794, 4294901760
    %v8215 = vsub.f32 %v1794, %v8214
    %v8216 = vand.u32 %v8215, 4294901760
    %8217 = vmatpush.msra.mxu0 %v8216
    %v8218 = vand.u32 %v1793, 4294901760
    %v8219 = vsub.f32 %v1793, %v8218
    %v8220 = vand.u32 %v8219, 4294901760
    %8221 = vmatpush.msra.mxu0 %v8220
    %v8222 = vand.u32 %v8065, 4294901760
    %8223 = vmatmul.f32.gmra.mxu0 %v8222
    %v8224 = vpop.f32.mrf.mxu0
    %v8225 = vadd.f32 %v8192, %v8224
    %8226 = vdwg.mxu0
    %8227 = vmatpush.msra.mxu0 0.0
    %8228 = vmatpush.msra.mxu0 0.0
    %8229 = vmatpush.msra.mxu0 0.0
    %8230 = vmatpush.msra.mxu0 0.0
    %8231 = vmatpush.msra.mxu0 0.0
    %8232 = vmatpush.msra.mxu0 0.0
    %8233 = vmatpush.msra.mxu0 0.0
    %8234 = vmatpush.msra.mxu0 0.0
    %8235 = vmatpush.msra.mxu0 0.0
    %8236 = vmatpush.msra.mxu0 0.0
    %8237 = vmatpush.msra.mxu0 0.0
    %8238 = vmatpush.msra.mxu0 0.0
    %v8239 = vand.u32 %v1796, 4294901760
    %8240 = vmatpush.msra.mxu0 %v8239
    %v8241 = vand.u32 %v1795, 4294901760
    %8242 = vmatpush.msra.mxu0 %v8241
    %v8243 = vand.u32 %v1794, 4294901760
    %8244 = vmatpush.msra.mxu0 %v8243
    %v8245 = vand.u32 %v1793, 4294901760
    %8246 = vmatpush.msra.mxu0 %v8245
    %v8247 = vand.u32 %v8065, 4294901760
    %8248 = vmatmul.f32.gmra.mxu0 %v8247
    %v8249 = vpop.f32.mrf.mxu0
    %v8250 = vadd.f32 %v8225, %v8249
    %8251 = vdwg.mxu0
    %v8252 = vadd.f32 %v8049, %v8250
    %v8253 = vxor.u32 %v8252, 2147483648
    %v8254 = vmul.f32 %v8253, 1.442695
    %v8255 = vpow.pop %v8254
    %v8256 = vadd.f32 %v8255, 1.0
    %v8257 = vrcp.pop %v8256
    %v8258 = vmul.f32 %v8256, %v8257
    %v8259 = vsub.f32 1.0, %v8258
    %v8260 = vmul.f32 %v8257, %v8259
    %v8261 = vadd.f32 %v8257, %v8260
    %vm8262 = vweird.f32 %v8256
    %vm8263 = vweird.f32 %v8257
    %vm8264 = vmor %vm8262, %vm8263
    %v8265 = vsel %vm8264, %v8257, %v8261
    %v8266 = vand.u32 2147483647, %v8256
    %vm8267 = vcmp.eq.f32.partialorder %v8266, 8.507059e+37
    %v8268 = vand.u32 %v8256, 2147483648
    %v8269 = vor.u32 1.1754944e-38, %v8268
    %v8270 = vsel %vm8267, %v8269, %v8265
    %v8271 = vmul.f32 1.0, %v8270
    %v8272 = vtanh.pop %v8252
    %v8273 = vmul.f32 %v8271, %v6980
    %8275 = vrot.lane.b32.xlu0 %v8272, 64
    %v8276 = vpop.permute.xlu0 %8275
    %v8278 = vmul.f32 %v8271, %v8276
    %8280 = vrot.lane.b32.xlu0 %v8278, 32
    %v8281 = vpop.permute.xlu0 %8280
    %v8283 = vadd.f32 %v8273, %v8281
    %v8284 = vtanh.pop %v8283
    %8286 = vrot.lane.b32.xlu0 %v8284, 64
    %v8287 = vpop.permute.xlu0 %8286
    %v8289 = vmul.f32 %v8271, %v8287
    %8291 = vrot.lane.b32.xlu0 %v8289, 32
    %v8292 = vpop.permute.xlu0 %8291
    %s8294 = scalar_lea.vmem [#allocation17], 32
    %8295 = vst.msk [vmem:[%s8294] sm:$0xff] %vm197, %v8292
    %v8296 = vperm.slane %v7882, %v2318
    %v8297 = vperm.slane %v7887, %v2320
    %v8298 = vsel %vm2322, %v8297, %v8296
    %v8299 = vperm.slane %v7892, %v2318
    %v8300 = vperm.slane %v7897, %v2320
    %v8301 = vsel %vm2322, %v8300, %v8299
    %v8302 = vperm.slane %v7902, %v2318
    %v8303 = vperm.slane %v7907, %v2320
    %v8304 = vsel %vm2322, %v8303, %v8302
    %v8305 = vperm.slane %v7912, %v2318
    %v8306 = vperm.slane %v7917, %v2320
    %v8307 = vsel %vm2322, %v8306, %v8305
    %v8308 = vperm.slane %v7922, %v2318
    %v8309 = vperm.slane %v7927, %v2320
    %v8310 = vsel %vm2322, %v8309, %v8308
    %v8311 = vperm.slane %v7932, %v2318
    %v8312 = vperm.slane %v7937, %v2320
    %v8313 = vsel %vm2322, %v8312, %v8311
    %v8314 = vperm.slane %v7942, %v2318
    %v8315 = vperm.slane %v7947, %v2320
    %v8316 = vsel %vm2322, %v8315, %v8314
    %v8317 = vperm.slane %v7952, %v2318
    %v8318 = vperm.slane %v7957, %v2320
    %v8319 = vsel %vm2322, %v8318, %v8317
    %v8320 = vsel %vm1398, %v8301, %v8298
    %v8321 = vsel %vm1400, %v8304, %v8320
    %v8322 = vsel %vm1402, %v8307, %v8321
    %v8323 = vsel %vm1404, %v8310, %v8322
    %v8324 = vsel %vm1406, %v8313, %v8323
    %v8325 = vsel %vm1408, %v8316, %v8324
    %v8326 = vsel %vm1410, %v8319, %v8325
    %s8328 = scalar_lea.vmem [#allocation18], 32
    %8329 = vst.msk [vmem:[%s8328] sm:$0xff] %vm2353, %v8326
    %v8330 = vsel %vm197, %v8292, 0
    %8332 = vmatpush.msra.mxu0 0.0
    %8333 = vmatpush.msra.mxu0 0.0
    %8334 = vmatpush.msra.mxu0 0.0
    %8335 = vmatpush.msra.mxu0 0.0
    %8336 = vmatpush.msra.mxu0 0.0
    %8337 = vmatpush.msra.mxu0 0.0
    %8338 = vmatpush.msra.mxu0 0.0
    %8339 = vmatpush.msra.mxu0 0.0
    %8340 = vmatpush.msra.mxu0 0.0
    %8341 = vmatpush.msra.mxu0 0.0
    %8342 = vmatpush.msra.mxu0 0.0
    %8343 = vmatpush.msra.mxu0 0.0
    %v8344 = vand.u32 %v1803, 4294901760
    %8345 = vmatpush.msra.mxu0 %v8344
    %v8346 = vand.u32 %v1801, 4294901760
    %8347 = vmatpush.msra.mxu0 %v8346
    %v8348 = vand.u32 %v1799, 4294901760
    %8349 = vmatpush.msra.mxu0 %v8348
    %v8350 = vand.u32 %v1797, 4294901760
    %8351 = vmatpush.msra.mxu0 %v8350
    %v8352 = vand.u32 %v8330, 4294901760
    %v8353 = vsub.f32 %v8330, %v8352
    %v8354 = vand.u32 %v8353, 4294901760
    %v8355 = vsub.f32 %v8353, %v8354
    %v8356 = vand.u32 %v8355, 4294901760
    %8357 = vmatmul.f32.gmra.mxu0 %v8356
    %v8358 = vpop.f32.mrf.mxu0
    %v8359 = vadd.f32 0.0, %v8358
    %8360 = vdwg.mxu0
    %8361 = vmatpush.msra.mxu0 0.0
    %8362 = vmatpush.msra.mxu0 0.0
    %8363 = vmatpush.msra.mxu0 0.0
    %8364 = vmatpush.msra.mxu0 0.0
    %8365 = vmatpush.msra.mxu0 0.0
    %8366 = vmatpush.msra.mxu0 0.0
    %8367 = vmatpush.msra.mxu0 0.0
    %8368 = vmatpush.msra.mxu0 0.0
    %8369 = vmatpush.msra.mxu0 0.0
    %8370 = vmatpush.msra.mxu0 0.0
    %8371 = vmatpush.msra.mxu0 0.0
    %8372 = vmatpush.msra.mxu0 0.0
    %v8373 = vand.u32 %v1803, 4294901760
    %v8374 = vsub.f32 %v1803, %v8373
    %v8375 = vand.u32 %v8374, 4294901760
    %v8376 = vsub.f32 %v8374, %v8375
    %v8377 = vand.u32 %v8376, 4294901760
    %8378 = vmatpush.msra.mxu0 %v8377
    %v8379 = vand.u32 %v1801, 4294901760
    %v8380 = vsub.f32 %v1801, %v8379
    %v8381 = vand.u32 %v8380, 4294901760
    %v8382 = vsub.f32 %v8380, %v8381
    %v8383 = vand.u32 %v8382, 4294901760
    %8384 = vmatpush.msra.mxu0 %v8383
    %v8385 = vand.u32 %v1799, 4294901760
    %v8386 = vsub.f32 %v1799, %v8385
    %v8387 = vand.u32 %v8386, 4294901760
    %v8388 = vsub.f32 %v8386, %v8387
    %v8389 = vand.u32 %v8388, 4294901760
    %8390 = vmatpush.msra.mxu0 %v8389
    %v8391 = vand.u32 %v1797, 4294901760
    %v8392 = vsub.f32 %v1797, %v8391
    %v8393 = vand.u32 %v8392, 4294901760
    %v8394 = vsub.f32 %v8392, %v8393
    %v8395 = vand.u32 %v8394, 4294901760
    %8396 = vmatpush.msra.mxu0 %v8395
    %v8397 = vand.u32 %v8330, 4294901760
    %8398 = vmatmul.f32.gmra.mxu0 %v8397
    %v8399 = vpop.f32.mrf.mxu0
    %v8400 = vadd.f32 %v8359, %v8399
    %8401 = vdwg.mxu0
    %8402 = vmatpush.msra.mxu0 0.0
    %8403 = vmatpush.msra.mxu0 0.0
    %8404 = vmatpush.msra.mxu0 0.0
    %8405 = vmatpush.msra.mxu0 0.0
    %8406 = vmatpush.msra.mxu0 0.0
    %8407 = vmatpush.msra.mxu0 0.0
    %8408 = vmatpush.msra.mxu0 0.0
    %8409 = vmatpush.msra.mxu0 0.0
    %8410 = vmatpush.msra.mxu0 0.0
    %8411 = vmatpush.msra.mxu0 0.0
    %8412 = vmatpush.msra.mxu0 0.0
    %8413 = vmatpush.msra.mxu0 0.0
    %v8414 = vand.u32 %v1803, 4294901760
    %v8415 = vsub.f32 %v1803, %v8414
    %8416 = vmatpush.msra.mxu0 %v8415
    %v8417 = vand.u32 %v1801, 4294901760
    %v8418 = vsub.f32 %v1801, %v8417
    %8419 = vmatpush.msra.mxu0 %v8418
    %v8420 = vand.u32 %v1799, 4294901760
    %v8421 = vsub.f32 %v1799, %v8420
    %8422 = vmatpush.msra.mxu0 %v8421
    %v8423 = vand.u32 %v1797, 4294901760
    %v8424 = vsub.f32 %v1797, %v8423
    %8425 = vmatpush.msra.mxu0 %v8424
    %v8426 = vand.u32 %v8330, 4294901760
    %v8427 = vsub.f32 %v8330, %v8426
    %8428 = vmatmul.f32.gmra.mxu0 %v8427
    %v8429 = vpop.f32.mrf.mxu0
    %v8430 = vadd.f32 %v8400, %v8429
    %8431 = vdwg.mxu0
    %8432 = vmatpush.msra.mxu0 0.0
    %8433 = vmatpush.msra.mxu0 0.0
    %8434 = vmatpush.msra.mxu0 0.0
    %8435 = vmatpush.msra.mxu0 0.0
    %8436 = vmatpush.msra.mxu0 0.0
    %8437 = vmatpush.msra.mxu0 0.0
    %8438 = vmatpush.msra.mxu0 0.0
    %8439 = vmatpush.msra.mxu0 0.0
    %8440 = vmatpush.msra.mxu0 0.0
    %8441 = vmatpush.msra.mxu0 0.0
    %8442 = vmatpush.msra.mxu0 0.0
    %8443 = vmatpush.msra.mxu0 0.0
    %v8444 = vand.u32 %v1803, 4294901760
    %8445 = vmatpush.msra.mxu0 %v8444
    %v8446 = vand.u32 %v1801, 4294901760
    %8447 = vmatpush.msra.mxu0 %v8446
    %v8448 = vand.u32 %v1799, 4294901760
    %8449 = vmatpush.msra.mxu0 %v8448
    %v8450 = vand.u32 %v1797, 4294901760
    %8451 = vmatpush.msra.mxu0 %v8450
    %v8452 = vand.u32 %v8330, 4294901760
    %v8453 = vsub.f32 %v8330, %v8452
    %v8454 = vand.u32 %v8453, 4294901760
    %8455 = vmatmul.f32.gmra.mxu0 %v8454
    %v8456 = vpop.f32.mrf.mxu0
    %v8457 = vadd.f32 %v8430, %v8456
    %8458 = vdwg.mxu0
    %8459 = vmatpush.msra.mxu0 0.0
    %8460 = vmatpush.msra.mxu0 0.0
    %8461 = vmatpush.msra.mxu0 0.0
    %8462 = vmatpush.msra.mxu0 0.0
    %8463 = vmatpush.msra.mxu0 0.0
    %8464 = vmatpush.msra.mxu0 0.0
    %8465 = vmatpush.msra.mxu0 0.0
    %8466 = vmatpush.msra.mxu0 0.0
    %8467 = vmatpush.msra.mxu0 0.0
    %8468 = vmatpush.msra.mxu0 0.0
    %8469 = vmatpush.msra.mxu0 0.0
    %8470 = vmatpush.msra.mxu0 0.0
    %v8471 = vand.u32 %v1803, 4294901760
    %v8472 = vsub.f32 %v1803, %v8471
    %v8473 = vand.u32 %v8472, 4294901760
    %8474 = vmatpush.msra.mxu0 %v8473
    %v8475 = vand.u32 %v1801, 4294901760
    %v8476 = vsub.f32 %v1801, %v8475
    %v8477 = vand.u32 %v8476, 4294901760
    %8478 = vmatpush.msra.mxu0 %v8477
    %v8479 = vand.u32 %v1799, 4294901760
    %v8480 = vsub.f32 %v1799, %v8479
    %v8481 = vand.u32 %v8480, 4294901760
    %8482 = vmatpush.msra.mxu0 %v8481
    %v8483 = vand.u32 %v1797, 4294901760
    %v8484 = vsub.f32 %v1797, %v8483
    %v8485 = vand.u32 %v8484, 4294901760
    %8486 = vmatpush.msra.mxu0 %v8485
    %v8487 = vand.u32 %v8330, 4294901760
    %8488 = vmatmul.f32.gmra.mxu0 %v8487
    %v8489 = vpop.f32.mrf.mxu0
    %v8490 = vadd.f32 %v8457, %v8489
    %8491 = vdwg.mxu0
    %8492 = vmatpush.msra.mxu0 0.0
    %8493 = vmatpush.msra.mxu0 0.0
    %8494 = vmatpush.msra.mxu0 0.0
    %8495 = vmatpush.msra.mxu0 0.0
    %8496 = vmatpush.msra.mxu0 0.0
    %8497 = vmatpush.msra.mxu0 0.0
    %8498 = vmatpush.msra.mxu0 0.0
    %8499 = vmatpush.msra.mxu0 0.0
    %8500 = vmatpush.msra.mxu0 0.0
    %8501 = vmatpush.msra.mxu0 0.0
    %8502 = vmatpush.msra.mxu0 0.0
    %8503 = vmatpush.msra.mxu0 0.0
    %v8504 = vand.u32 %v1803, 4294901760
    %8505 = vmatpush.msra.mxu0 %v8504
    %v8506 = vand.u32 %v1801, 4294901760
    %8507 = vmatpush.msra.mxu0 %v8506
    %v8508 = vand.u32 %v1799, 4294901760
    %8509 = vmatpush.msra.mxu0 %v8508
    %v8510 = vand.u32 %v1797, 4294901760
    %8511 = vmatpush.msra.mxu0 %v8510
    %v8512 = vand.u32 %v8330, 4294901760
    %8513 = vmatmul.f32.gmra.mxu0 %v8512
    %v8514 = vpop.f32.mrf.mxu0
    %v8515 = vadd.f32 %v8490, %v8514
    %8516 = vdwg.mxu0
    %8517 = vmatpush.msra.mxu0 0.0
    %8518 = vmatpush.msra.mxu0 0.0
    %8519 = vmatpush.msra.mxu0 0.0
    %8520 = vmatpush.msra.mxu0 0.0
    %8521 = vmatpush.msra.mxu0 0.0
    %8522 = vmatpush.msra.mxu0 0.0
    %8523 = vmatpush.msra.mxu0 0.0
    %8524 = vmatpush.msra.mxu0 0.0
    %8525 = vmatpush.msra.mxu0 0.0
    %8526 = vmatpush.msra.mxu0 0.0
    %8527 = vmatpush.msra.mxu0 0.0
    %8528 = vmatpush.msra.mxu0 0.0
    %v8529 = vand.u32 %v1804, 4294901760
    %8530 = vmatpush.msra.mxu0 %v8529
    %v8531 = vand.u32 %v1802, 4294901760
    %8532 = vmatpush.msra.mxu0 %v8531
    %v8533 = vand.u32 %v1800, 4294901760
    %8534 = vmatpush.msra.mxu0 %v8533
    %v8535 = vand.u32 %v1798, 4294901760
    %8536 = vmatpush.msra.mxu0 %v8535
    %v8537 = vand.u32 %v8330, 4294901760
    %v8538 = vsub.f32 %v8330, %v8537
    %v8539 = vand.u32 %v8538, 4294901760
    %v8540 = vsub.f32 %v8538, %v8539
    %v8541 = vand.u32 %v8540, 4294901760
    %8542 = vmatmul.f32.gmra.mxu0 %v8541
    %v8543 = vpop.f32.mrf.mxu0
    %v8544 = vadd.f32 0.0, %v8543
    %8545 = vdwg.mxu0
    %8546 = vmatpush.msra.mxu0 0.0
    %8547 = vmatpush.msra.mxu0 0.0
    %8548 = vmatpush.msra.mxu0 0.0
    %8549 = vmatpush.msra.mxu0 0.0
    %8550 = vmatpush.msra.mxu0 0.0
    %8551 = vmatpush.msra.mxu0 0.0
    %8552 = vmatpush.msra.mxu0 0.0
    %8553 = vmatpush.msra.mxu0 0.0
    %8554 = vmatpush.msra.mxu0 0.0
    %8555 = vmatpush.msra.mxu0 0.0
    %8556 = vmatpush.msra.mxu0 0.0
    %8557 = vmatpush.msra.mxu0 0.0
    %v8558 = vand.u32 %v1804, 4294901760
    %v8559 = vsub.f32 %v1804, %v8558
    %v8560 = vand.u32 %v8559, 4294901760
    %v8561 = vsub.f32 %v8559, %v8560
    %v8562 = vand.u32 %v8561, 4294901760
    %8563 = vmatpush.msra.mxu0 %v8562
    %v8564 = vand.u32 %v1802, 4294901760
    %v8565 = vsub.f32 %v1802, %v8564
    %v8566 = vand.u32 %v8565, 4294901760
    %v8567 = vsub.f32 %v8565, %v8566
    %v8568 = vand.u32 %v8567, 4294901760
    %8569 = vmatpush.msra.mxu0 %v8568
    %v8570 = vand.u32 %v1800, 4294901760
    %v8571 = vsub.f32 %v1800, %v8570
    %v8572 = vand.u32 %v8571, 4294901760
    %v8573 = vsub.f32 %v8571, %v8572
    %v8574 = vand.u32 %v8573, 4294901760
    %8575 = vmatpush.msra.mxu0 %v8574
    %v8576 = vand.u32 %v1798, 4294901760
    %v8577 = vsub.f32 %v1798, %v8576
    %v8578 = vand.u32 %v8577, 4294901760
    %v8579 = vsub.f32 %v8577, %v8578
    %v8580 = vand.u32 %v8579, 4294901760
    %8581 = vmatpush.msra.mxu0 %v8580
    %v8582 = vand.u32 %v8330, 4294901760
    %8583 = vmatmul.f32.gmra.mxu0 %v8582
    %v8584 = vpop.f32.mrf.mxu0
    %v8585 = vadd.f32 %v8544, %v8584
    %8586 = vdwg.mxu0
    %8587 = vmatpush.msra.mxu0 0.0
    %8588 = vmatpush.msra.mxu0 0.0
    %8589 = vmatpush.msra.mxu0 0.0
    %8590 = vmatpush.msra.mxu0 0.0
    %8591 = vmatpush.msra.mxu0 0.0
    %8592 = vmatpush.msra.mxu0 0.0
    %8593 = vmatpush.msra.mxu0 0.0
    %8594 = vmatpush.msra.mxu0 0.0
    %8595 = vmatpush.msra.mxu0 0.0
    %8596 = vmatpush.msra.mxu0 0.0
    %8597 = vmatpush.msra.mxu0 0.0
    %8598 = vmatpush.msra.mxu0 0.0
    %v8599 = vand.u32 %v1804, 4294901760
    %v8600 = vsub.f32 %v1804, %v8599
    %8601 = vmatpush.msra.mxu0 %v8600
    %v8602 = vand.u32 %v1802, 4294901760
    %v8603 = vsub.f32 %v1802, %v8602
    %8604 = vmatpush.msra.mxu0 %v8603
    %v8605 = vand.u32 %v1800, 4294901760
    %v8606 = vsub.f32 %v1800, %v8605
    %8607 = vmatpush.msra.mxu0 %v8606
    %v8608 = vand.u32 %v1798, 4294901760
    %v8609 = vsub.f32 %v1798, %v8608
    %8610 = vmatpush.msra.mxu0 %v8609
    %v8611 = vand.u32 %v8330, 4294901760
    %v8612 = vsub.f32 %v8330, %v8611
    %8613 = vmatmul.f32.gmra.mxu0 %v8612
    %v8614 = vpop.f32.mrf.mxu0
    %v8615 = vadd.f32 %v8585, %v8614
    %8616 = vdwg.mxu0
    %8617 = vmatpush.msra.mxu0 0.0
    %8618 = vmatpush.msra.mxu0 0.0
    %8619 = vmatpush.msra.mxu0 0.0
    %8620 = vmatpush.msra.mxu0 0.0
    %8621 = vmatpush.msra.mxu0 0.0
    %8622 = vmatpush.msra.mxu0 0.0
    %8623 = vmatpush.msra.mxu0 0.0
    %8624 = vmatpush.msra.mxu0 0.0
    %8625 = vmatpush.msra.mxu0 0.0
    %8626 = vmatpush.msra.mxu0 0.0
    %8627 = vmatpush.msra.mxu0 0.0
    %8628 = vmatpush.msra.mxu0 0.0
    %v8629 = vand.u32 %v1804, 4294901760
    %8630 = vmatpush.msra.mxu0 %v8629
    %v8631 = vand.u32 %v1802, 4294901760
    %8632 = vmatpush.msra.mxu0 %v8631
    %v8633 = vand.u32 %v1800, 4294901760
    %8634 = vmatpush.msra.mxu0 %v8633
    %v8635 = vand.u32 %v1798, 4294901760
    %8636 = vmatpush.msra.mxu0 %v8635
    %v8637 = vand.u32 %v8330, 4294901760
    %v8638 = vsub.f32 %v8330, %v8637
    %v8639 = vand.u32 %v8638, 4294901760
    %8640 = vmatmul.f32.gmra.mxu0 %v8639
    %v8641 = vpop.f32.mrf.mxu0
    %v8642 = vadd.f32 %v8615, %v8641
    %8643 = vdwg.mxu0
    %8644 = vmatpush.msra.mxu0 0.0
    %8645 = vmatpush.msra.mxu0 0.0
    %8646 = vmatpush.msra.mxu0 0.0
    %8647 = vmatpush.msra.mxu0 0.0
    %8648 = vmatpush.msra.mxu0 0.0
    %8649 = vmatpush.msra.mxu0 0.0
    %8650 = vmatpush.msra.mxu0 0.0
    %8651 = vmatpush.msra.mxu0 0.0
    %8652 = vmatpush.msra.mxu0 0.0
    %8653 = vmatpush.msra.mxu0 0.0
    %8654 = vmatpush.msra.mxu0 0.0
    %8655 = vmatpush.msra.mxu0 0.0
    %v8656 = vand.u32 %v1804, 4294901760
    %v8657 = vsub.f32 %v1804, %v8656
    %v8658 = vand.u32 %v8657, 4294901760
    %8659 = vmatpush.msra.mxu0 %v8658
    %v8660 = vand.u32 %v1802, 4294901760
    %v8661 = vsub.f32 %v1802, %v8660
    %v8662 = vand.u32 %v8661, 4294901760
    %8663 = vmatpush.msra.mxu0 %v8662
    %v8664 = vand.u32 %v1800, 4294901760
    %v8665 = vsub.f32 %v1800, %v8664
    %v8666 = vand.u32 %v8665, 4294901760
    %8667 = vmatpush.msra.mxu0 %v8666
    %v8668 = vand.u32 %v1798, 4294901760
    %v8669 = vsub.f32 %v1798, %v8668
    %v8670 = vand.u32 %v8669, 4294901760
    %8671 = vmatpush.msra.mxu0 %v8670
    %v8672 = vand.u32 %v8330, 4294901760
    %8673 = vmatmul.f32.gmra.mxu0 %v8672
    %v8674 = vpop.f32.mrf.mxu0
    %v8675 = vadd.f32 %v8642, %v8674
    %8676 = vdwg.mxu0
    %8677 = vmatpush.msra.mxu0 0.0
    %8678 = vmatpush.msra.mxu0 0.0
    %8679 = vmatpush.msra.mxu0 0.0
    %8680 = vmatpush.msra.mxu0 0.0
    %8681 = vmatpush.msra.mxu0 0.0
    %8682 = vmatpush.msra.mxu0 0.0
    %8683 = vmatpush.msra.mxu0 0.0
    %8684 = vmatpush.msra.mxu0 0.0
    %8685 = vmatpush.msra.mxu0 0.0
    %8686 = vmatpush.msra.mxu0 0.0
    %8687 = vmatpush.msra.mxu0 0.0
    %8688 = vmatpush.msra.mxu0 0.0
    %v8689 = vand.u32 %v1804, 4294901760
    %8690 = vmatpush.msra.mxu0 %v8689
    %v8691 = vand.u32 %v1802, 4294901760
    %8692 = vmatpush.msra.mxu0 %v8691
    %v8693 = vand.u32 %v1800, 4294901760
    %8694 = vmatpush.msra.mxu0 %v8693
    %v8695 = vand.u32 %v1798, 4294901760
    %8696 = vmatpush.msra.mxu0 %v8695
    %v8697 = vand.u32 %v8330, 4294901760
    %8698 = vmatmul.f32.gmra.mxu0 %v8697
    %v8699 = vpop.f32.mrf.mxu0
    %v8700 = vadd.f32 %v8675, %v8699
    %8701 = vdwg.mxu0
    %v8703 = vrot.slane %v8700, 1
    %v8704 = vrot.slane %v8700, 2
    %v8705 = vrot.slane %v8700, 3
    %v8706 = vrot.slane %v8700, 4
    %v8707 = vrot.slane %v8700, 5
    %v8708 = vrot.slane %v8700, 6
    %v8709 = vrot.slane %v8700, 7
    %v8710 = vperm.slane %v8700, 0
    %v8711 = vperm.slane %v8703, 0
    %v8712 = vperm.slane %v8704, 0
    %v8713 = vperm.slane %v8705, 0
    %v8714 = vperm.slane %v8706, 0
    %v8715 = vperm.slane %v8707, 0
    %v8716 = vperm.slane %v8708, 0
    %v8717 = vperm.slane %v8709, 0
    %v8726 = vadd.f32 %v834, %v8710
    %v8727 = vadd.f32 %v838, %v8710
    %v8728 = vadd.f32 %v842, %v8711
    %v8729 = vadd.f32 %v846, %v8711
    %v8730 = vadd.f32 %v850, %v8712
    %v8731 = vadd.f32 %v854, %v8712
    %v8732 = vadd.f32 %v858, %v8713
    %v8733 = vadd.f32 %v862, %v8713
    %v8734 = vadd.f32 %v866, %v8714
    %v8735 = vadd.f32 %v870, %v8714
    %v8736 = vadd.f32 %v874, %v8715
    %v8737 = vadd.f32 %v878, %v8715
    %v8738 = vadd.f32 %v882, %v8716
    %v8739 = vadd.f32 %v886, %v8716
    %v8740 = vadd.f32 %v890, %v8717
    %v8741 = vadd.f32 %v894, %v8717
    %v8742 = vtanh.pop %v8726
    %v8743 = vtanh.pop %v8727
    %v8744 = vtanh.pop %v8728
    %v8745 = vtanh.pop %v8729
    %v8746 = vtanh.pop %v8730
    %v8747 = vtanh.pop %v8731
    %v8748 = vtanh.pop %v8732
    %v8749 = vtanh.pop %v8733
    %v8750 = vtanh.pop %v8734
    %v8751 = vtanh.pop %v8735
    %v8752 = vtanh.pop %v8736
    %v8753 = vtanh.pop %v8737
    %v8754 = vtanh.pop %v8738
    %v8755 = vtanh.pop %v8739
    %v8756 = vtanh.pop %v8740
    %v8757 = vtanh.pop %v8741
    %v8758 = vmul.f32 %v8742, %v2235
    %v8759 = vmul.f32 %v8743, %v2235
    %v8760 = vmul.f32 %v8744, %v2235
    %v8761 = vmul.f32 %v8745, %v2235
    %v8762 = vmul.f32 %v8746, %v2235
    %v8763 = vmul.f32 %v8747, %v2235
    %v8764 = vmul.f32 %v8748, %v2235
    %v8765 = vmul.f32 %v8749, %v2235
    %v8766 = vmul.f32 %v8750, %v2235
    %v8767 = vmul.f32 %v8751, %v2235
    %v8768 = vmul.f32 %v8752, %v2235
    %v8769 = vmul.f32 %v8753, %v2235
    %v8770 = vmul.f32 %v8754, %v2235
    %v8771 = vmul.f32 %v8755, %v2235
    %v8772 = vmul.f32 %v8756, %v2235
    %v8773 = vmul.f32 %v8757, %v2235
    %v8774 = vsel %vm197, %v8758, 0.0
    %8775 = vadd.xlane.f32.xlu0 %v8774
    %v8776 = vpop.xlane.xlu0 %8775
    %v8777 = vsel %vm197, %v8759, 0.0
    %8778 = vadd.xlane.f32.xlu0 %v8777
    %v8779 = vpop.xlane.xlu0 %8778
    %v8780 = vsel %vm197, %v8760, 0.0
    %8781 = vadd.xlane.f32.xlu0 %v8780
    %v8782 = vpop.xlane.xlu0 %8781
    %v8783 = vsel %vm197, %v8761, 0.0
    %8784 = vadd.xlane.f32.xlu0 %v8783
    %v8785 = vpop.xlane.xlu0 %8784
    %v8786 = vsel %vm197, %v8762, 0.0
    %8787 = vadd.xlane.f32.xlu0 %v8786
    %v8788 = vpop.xlane.xlu0 %8787
    %v8789 = vsel %vm197, %v8763, 0.0
    %8790 = vadd.xlane.f32.xlu0 %v8789
    %v8791 = vpop.xlane.xlu0 %8790
    %v8792 = vsel %vm197, %v8764, 0.0
    %8793 = vadd.xlane.f32.xlu0 %v8792
    %v8794 = vpop.xlane.xlu0 %8793
    %v8795 = vsel %vm197, %v8765, 0.0
    %8796 = vadd.xlane.f32.xlu0 %v8795
    %v8797 = vpop.xlane.xlu0 %8796
    %v8798 = vsel %vm197, %v8766, 0.0
    %8799 = vadd.xlane.f32.xlu0 %v8798
    %v8800 = vpop.xlane.xlu0 %8799
    %v8801 = vsel %vm197, %v8767, 0.0
    %8802 = vadd.xlane.f32.xlu0 %v8801
    %v8803 = vpop.xlane.xlu0 %8802
    %v8804 = vsel %vm197, %v8768, 0.0
    %8805 = vadd.xlane.f32.xlu0 %v8804
    %v8806 = vpop.xlane.xlu0 %8805
    %v8807 = vsel %vm197, %v8769, 0.0
    %8808 = vadd.xlane.f32.xlu0 %v8807
    %v8809 = vpop.xlane.xlu0 %8808
    %v8810 = vsel %vm197, %v8770, 0.0
    %8811 = vadd.xlane.f32.xlu0 %v8810
    %v8812 = vpop.xlane.xlu0 %8811
    %v8813 = vsel %vm197, %v8771, 0.0
    %8814 = vadd.xlane.f32.xlu0 %v8813
    %v8815 = vpop.xlane.xlu0 %8814
    %v8816 = vsel %vm197, %v8772, 0.0
    %8817 = vadd.xlane.f32.xlu0 %v8816
    %v8818 = vpop.xlane.xlu0 %8817
    %v8819 = vsel %vm197, %v8773, 0.0
    %8820 = vadd.xlane.f32.xlu0 %v8819
    %v8821 = vpop.xlane.xlu0 %8820
    %v8838 = vperm.slane %v8776, %v2318
    %v8839 = vperm.slane %v8779, %v2320
    %v8840 = vsel %vm2322, %v8839, %v8838
    %v8841 = vperm.slane %v8782, %v2318
    %v8842 = vperm.slane %v8785, %v2320
    %v8843 = vsel %vm2322, %v8842, %v8841
    %v8844 = vperm.slane %v8788, %v2318
    %v8845 = vperm.slane %v8791, %v2320
    %v8846 = vsel %vm2322, %v8845, %v8844
    %v8847 = vperm.slane %v8794, %v2318
    %v8848 = vperm.slane %v8797, %v2320
    %v8849 = vsel %vm2322, %v8848, %v8847
    %v8850 = vperm.slane %v8800, %v2318
    %v8851 = vperm.slane %v8803, %v2320
    %v8852 = vsel %vm2322, %v8851, %v8850
    %v8853 = vperm.slane %v8806, %v2318
    %v8854 = vperm.slane %v8809, %v2320
    %v8855 = vsel %vm2322, %v8854, %v8853
    %v8856 = vperm.slane %v8812, %v2318
    %v8857 = vperm.slane %v8815, %v2320
    %v8858 = vsel %vm2322, %v8857, %v8856
    %v8859 = vperm.slane %v8818, %v2318
    %v8860 = vperm.slane %v8821, %v2320
    %v8861 = vsel %vm2322, %v8860, %v8859
    %v8862 = vsel %vm1398, %v8843, %v8840
    %v8863 = vsel %vm1400, %v8846, %v8862
    %v8864 = vsel %vm1402, %v8849, %v8863
    %v8865 = vsel %vm1404, %v8852, %v8864
    %v8866 = vsel %vm1406, %v8855, %v8865
    %v8867 = vsel %vm1408, %v8858, %v8866
    %v8868 = vsel %vm1410, %v8861, %v8867
    %v8870 = vsel %vm2353, %v8868, -inf
    %8871 = vmax.xlane.f32.xlu0 %v8870
    %v8872 = vpop.xlane.xlu0 %8871
    %v8874 = vperm.slane %v8872, 0
    %v8875 = vperm.slane %v8872, 1
    %v8876 = vperm.slane %v8872, 2
    %v8877 = vperm.slane %v8872, 3
    %v8878 = vperm.slane %v8872, 4
    %v8879 = vperm.slane %v8872, 5
    %v8880 = vperm.slane %v8872, 6
    %v8881 = vperm.slane %v8872, 7
    %v8890 = vsub.f32 %v8776, %v8874
    %v8891 = vsub.f32 %v8779, %v8874
    %v8892 = vsub.f32 %v8782, %v8875
    %v8893 = vsub.f32 %v8785, %v8875
    %v8894 = vsub.f32 %v8788, %v8876
    %v8895 = vsub.f32 %v8791, %v8876
    %v8896 = vsub.f32 %v8794, %v8877
    %v8897 = vsub.f32 %v8797, %v8877
    %v8898 = vsub.f32 %v8800, %v8878
    %v8899 = vsub.f32 %v8803, %v8878
    %v8900 = vsub.f32 %v8806, %v8879
    %v8901 = vsub.f32 %v8809, %v8879
    %v8902 = vsub.f32 %v8812, %v8880
    %v8903 = vsub.f32 %v8815, %v8880
    %v8904 = vsub.f32 %v8818, %v8881
    %v8905 = vsub.f32 %v8821, %v8881
    %v8906 = vmul.f32 %v8890, 1.442695
    %v8907 = vpow.pop %v8906
    %v8908 = vmul.f32 %v8891, 1.442695
    %v8909 = vpow.pop %v8908
    %v8910 = vmul.f32 %v8892, 1.442695
    %v8911 = vpow.pop %v8910
    %v8912 = vmul.f32 %v8893, 1.442695
    %v8913 = vpow.pop %v8912
    %v8914 = vmul.f32 %v8894, 1.442695
    %v8915 = vpow.pop %v8914
    %v8916 = vmul.f32 %v8895, 1.442695
    %v8917 = vpow.pop %v8916
    %v8918 = vmul.f32 %v8896, 1.442695
    %v8919 = vpow.pop %v8918
    %v8920 = vmul.f32 %v8897, 1.442695
    %v8921 = vpow.pop %v8920
    %v8922 = vmul.f32 %v8898, 1.442695
    %v8923 = vpow.pop %v8922
    %v8924 = vmul.f32 %v8899, 1.442695
    %v8925 = vpow.pop %v8924
    %v8926 = vmul.f32 %v8900, 1.442695
    %v8927 = vpow.pop %v8926
    %v8928 = vmul.f32 %v8901, 1.442695
    %v8929 = vpow.pop %v8928
    %v8930 = vmul.f32 %v8902, 1.442695
    %v8931 = vpow.pop %v8930
    %v8932 = vmul.f32 %v8903, 1.442695
    %v8933 = vpow.pop %v8932
    %v8934 = vmul.f32 %v8904, 1.442695
    %v8935 = vpow.pop %v8934
    %v8936 = vmul.f32 %v8905, 1.442695
    %v8937 = vpow.pop %v8936
    %8954 = vset.pattern.permute.xlu0 0
    %8955 = vperm.xlu0 %8954, %v8907
    %v8956 = vpop.permute.xlu0 %8955
    %8957 = vset.pattern.permute.xlu0 0
    %8958 = vperm.xlu0 %8957, %v8909
    %v8959 = vpop.permute.xlu0 %8958
    %8960 = vset.pattern.permute.xlu0 0
    %8961 = vperm.xlu0 %8960, %v8911
    %v8962 = vpop.permute.xlu0 %8961
    %8963 = vset.pattern.permute.xlu0 0
    %8964 = vperm.xlu0 %8963, %v8913
    %v8965 = vpop.permute.xlu0 %8964
    %8966 = vset.pattern.permute.xlu0 0
    %8967 = vperm.xlu0 %8966, %v8915
    %v8968 = vpop.permute.xlu0 %8967
    %8969 = vset.pattern.permute.xlu0 0
    %8970 = vperm.xlu0 %8969, %v8917
    %v8971 = vpop.permute.xlu0 %8970
    %8972 = vset.pattern.permute.xlu0 0
    %8973 = vperm.xlu0 %8972, %v8919
    %v8974 = vpop.permute.xlu0 %8973
    %8975 = vset.pattern.permute.xlu0 0
    %8976 = vperm.xlu0 %8975, %v8921
    %v8977 = vpop.permute.xlu0 %8976
    %8978 = vset.pattern.permute.xlu0 0
    %8979 = vperm.xlu0 %8978, %v8923
    %v8980 = vpop.permute.xlu0 %8979
    %8981 = vset.pattern.permute.xlu0 0
    %8982 = vperm.xlu0 %8981, %v8925
    %v8983 = vpop.permute.xlu0 %8982
    %8984 = vset.pattern.permute.xlu0 0
    %8985 = vperm.xlu0 %8984, %v8927
    %v8986 = vpop.permute.xlu0 %8985
    %8987 = vset.pattern.permute.xlu0 0
    %8988 = vperm.xlu0 %8987, %v8929
    %v8989 = vpop.permute.xlu0 %8988
    %8990 = vset.pattern.permute.xlu0 0
    %8991 = vperm.xlu0 %8990, %v8931
    %v8992 = vpop.permute.xlu0 %8991
    %8993 = vset.pattern.permute.xlu0 0
    %8994 = vperm.xlu0 %8993, %v8933
    %v8995 = vpop.permute.xlu0 %8994
    %8996 = vset.pattern.permute.xlu0 0
    %8997 = vperm.xlu0 %8996, %v8935
    %v8998 = vpop.permute.xlu0 %8997
    %8999 = vset.pattern.permute.xlu0 0
    %9000 = vperm.xlu0 %8999, %v8937
    %v9001 = vpop.permute.xlu0 %9000
    %v9002 = vperm.slane %v8956, %v2318
    %v9003 = vperm.slane %v8959, %v2320
    %v9004 = vsel %vm2322, %v9003, %v9002
    %v9005 = vperm.slane %v8962, %v2318
    %v9006 = vperm.slane %v8965, %v2320
    %v9007 = vsel %vm2322, %v9006, %v9005
    %v9008 = vperm.slane %v8968, %v2318
    %v9009 = vperm.slane %v8971, %v2320
    %v9010 = vsel %vm2322, %v9009, %v9008
    %v9011 = vperm.slane %v8974, %v2318
    %v9012 = vperm.slane %v8977, %v2320
    %v9013 = vsel %vm2322, %v9012, %v9011
    %v9014 = vperm.slane %v8980, %v2318
    %v9015 = vperm.slane %v8983, %v2320
    %v9016 = vsel %vm2322, %v9015, %v9014
    %v9017 = vperm.slane %v8986, %v2318
    %v9018 = vperm.slane %v8989, %v2320
    %v9019 = vsel %vm2322, %v9018, %v9017
    %v9020 = vperm.slane %v8992, %v2318
    %v9021 = vperm.slane %v8995, %v2320
    %v9022 = vsel %vm2322, %v9021, %v9020
    %v9023 = vperm.slane %v8998, %v2318
    %v9024 = vperm.slane %v9001, %v2320
    %v9025 = vsel %vm2322, %v9024, %v9023
    %v9026 = vsel %vm1398, %v9007, %v9004
    %v9027 = vsel %vm1400, %v9010, %v9026
    %v9028 = vsel %vm1402, %v9013, %v9027
    %v9029 = vsel %vm1404, %v9016, %v9028
    %v9030 = vsel %vm1406, %v9019, %v9029
    %v9031 = vsel %vm1408, %v9022, %v9030
    %v9032 = vsel %vm1410, %v9025, %v9031
    %v9034 = vsel %vm2353, %v9032, 0.0
    %9035 = vadd.xlane.f32.xlu0 %v9034
    %v9036 = vpop.xlane.xlu0 %9035
    %v9038 = vperm.slane %v9036, 0
    %v9039 = vperm.slane %v9036, 1
    %v9040 = vperm.slane %v9036, 2
    %v9041 = vperm.slane %v9036, 3
    %v9042 = vperm.slane %v9036, 4
    %v9043 = vperm.slane %v9036, 5
    %v9044 = vperm.slane %v9036, 6
    %v9045 = vperm.slane %v9036, 7
    %v9054 = vrcp.pop %v9038
    %v9055 = vmul.f32 %v9038, %v9054
    %v9056 = vsub.f32 1.0, %v9055
    %v9057 = vmul.f32 %v9054, %v9056
    %v9058 = vadd.f32 %v9054, %v9057
    %vm9059 = vweird.f32 %v9038
    %vm9060 = vweird.f32 %v9054
    %vm9061 = vmor %vm9059, %vm9060
    %v9062 = vsel %vm9061, %v9054, %v9058
    %v9063 = vand.u32 2147483647, %v9038
    %vm9064 = vcmp.eq.f32.partialorder %v9063, 8.507059e+37
    %v9065 = vand.u32 %v9038, 2147483648
    %v9066 = vor.u32 1.1754944e-38, %v9065
    %v9067 = vsel %vm9064, %v9066, %v9062
    %v9068 = vmul.f32 %v8907, %v9067
    %v9069 = vmul.f32 %v8909, %v9067
    %v9070 = vrcp.pop %v9039
    %v9071 = vmul.f32 %v9039, %v9070
    %v9072 = vsub.f32 1.0, %v9071
    %v9073 = vmul.f32 %v9070, %v9072
    %v9074 = vadd.f32 %v9070, %v9073
    %vm9075 = vweird.f32 %v9039
    %vm9076 = vweird.f32 %v9070
    %vm9077 = vmor %vm9075, %vm9076
    %v9078 = vsel %vm9077, %v9070, %v9074
    %v9079 = vand.u32 2147483647, %v9039
    %vm9080 = vcmp.eq.f32.partialorder %v9079, 8.507059e+37
    %v9081 = vand.u32 %v9039, 2147483648
    %v9082 = vor.u32 1.1754944e-38, %v9081
    %v9083 = vsel %vm9080, %v9082, %v9078
    %v9084 = vmul.f32 %v8911, %v9083
    %v9085 = vmul.f32 %v8913, %v9083
    %v9086 = vrcp.pop %v9040
    %v9087 = vmul.f32 %v9040, %v9086
    %v9088 = vsub.f32 1.0, %v9087
    %v9089 = vmul.f32 %v9086, %v9088
    %v9090 = vadd.f32 %v9086, %v9089
    %vm9091 = vweird.f32 %v9040
    %vm9092 = vweird.f32 %v9086
    %vm9093 = vmor %vm9091, %vm9092
    %v9094 = vsel %vm9093, %v9086, %v9090
    %v9095 = vand.u32 2147483647, %v9040
    %vm9096 = vcmp.eq.f32.partialorder %v9095, 8.507059e+37
    %v9097 = vand.u32 %v9040, 2147483648
    %v9098 = vor.u32 1.1754944e-38, %v9097
    %v9099 = vsel %vm9096, %v9098, %v9094
    %v9100 = vmul.f32 %v8915, %v9099
    %v9101 = vmul.f32 %v8917, %v9099
    %v9102 = vrcp.pop %v9041
    %v9103 = vmul.f32 %v9041, %v9102
    %v9104 = vsub.f32 1.0, %v9103
    %v9105 = vmul.f32 %v9102, %v9104
    %v9106 = vadd.f32 %v9102, %v9105
    %vm9107 = vweird.f32 %v9041
    %vm9108 = vweird.f32 %v9102
    %vm9109 = vmor %vm9107, %vm9108
    %v9110 = vsel %vm9109, %v9102, %v9106
    %v9111 = vand.u32 2147483647, %v9041
    %vm9112 = vcmp.eq.f32.partialorder %v9111, 8.507059e+37
    %v9113 = vand.u32 %v9041, 2147483648
    %v9114 = vor.u32 1.1754944e-38, %v9113
    %v9115 = vsel %vm9112, %v9114, %v9110
    %v9116 = vmul.f32 %v8919, %v9115
    %v9117 = vmul.f32 %v8921, %v9115
    %v9118 = vrcp.pop %v9042
    %v9119 = vmul.f32 %v9042, %v9118
    %v9120 = vsub.f32 1.0, %v9119
    %v9121 = vmul.f32 %v9118, %v9120
    %v9122 = vadd.f32 %v9118, %v9121
    %vm9123 = vweird.f32 %v9042
    %vm9124 = vweird.f32 %v9118
    %vm9125 = vmor %vm9123, %vm9124
    %v9126 = vsel %vm9125, %v9118, %v9122
    %v9127 = vand.u32 2147483647, %v9042
    %vm9128 = vcmp.eq.f32.partialorder %v9127, 8.507059e+37
    %v9129 = vand.u32 %v9042, 2147483648
    %v9130 = vor.u32 1.1754944e-38, %v9129
    %v9131 = vsel %vm9128, %v9130, %v9126
    %v9132 = vmul.f32 %v8923, %v9131
    %v9133 = vmul.f32 %v8925, %v9131
    %v9134 = vrcp.pop %v9043
    %v9135 = vmul.f32 %v9043, %v9134
    %v9136 = vsub.f32 1.0, %v9135
    %v9137 = vmul.f32 %v9134, %v9136
    %v9138 = vadd.f32 %v9134, %v9137
    %vm9139 = vweird.f32 %v9043
    %vm9140 = vweird.f32 %v9134
    %vm9141 = vmor %vm9139, %vm9140
    %v9142 = vsel %vm9141, %v9134, %v9138
    %v9143 = vand.u32 2147483647, %v9043
    %vm9144 = vcmp.eq.f32.partialorder %v9143, 8.507059e+37
    %v9145 = vand.u32 %v9043, 2147483648
    %v9146 = vor.u32 1.1754944e-38, %v9145
    %v9147 = vsel %vm9144, %v9146, %v9142
    %v9148 = vmul.f32 %v8927, %v9147
    %v9149 = vmul.f32 %v8929, %v9147
    %v9150 = vrcp.pop %v9044
    %v9151 = vmul.f32 %v9044, %v9150
    %v9152 = vsub.f32 1.0, %v9151
    %v9153 = vmul.f32 %v9150, %v9152
    %v9154 = vadd.f32 %v9150, %v9153
    %vm9155 = vweird.f32 %v9044
    %vm9156 = vweird.f32 %v9150
    %vm9157 = vmor %vm9155, %vm9156
    %v9158 = vsel %vm9157, %v9150, %v9154
    %v9159 = vand.u32 2147483647, %v9044
    %vm9160 = vcmp.eq.f32.partialorder %v9159, 8.507059e+37
    %v9161 = vand.u32 %v9044, 2147483648
    %v9162 = vor.u32 1.1754944e-38, %v9161
    %v9163 = vsel %vm9160, %v9162, %v9158
    %v9164 = vmul.f32 %v8931, %v9163
    %v9165 = vmul.f32 %v8933, %v9163
    %v9166 = vrcp.pop %v9045
    %v9167 = vmul.f32 %v9045, %v9166
    %v9168 = vsub.f32 1.0, %v9167
    %v9169 = vmul.f32 %v9166, %v9168
    %v9170 = vadd.f32 %v9166, %v9169
    %vm9171 = vweird.f32 %v9045
    %vm9172 = vweird.f32 %v9166
    %vm9173 = vmor %vm9171, %vm9172
    %v9174 = vsel %vm9173, %v9166, %v9170
    %v9175 = vand.u32 2147483647, %v9045
    %vm9176 = vcmp.eq.f32.partialorder %v9175, 8.507059e+37
    %v9177 = vand.u32 %v9045, 2147483648
    %v9178 = vor.u32 1.1754944e-38, %v9177
    %v9179 = vsel %vm9176, %v9178, %v9174
    %v9180 = vmul.f32 %v8935, %v9179
    %v9181 = vmul.f32 %v8937, %v9179
    %9183 = vset.pattern.permute.xlu0 0
    %9184 = vperm.xlu0 %9183, %v9068
    %v9185 = vpop.permute.xlu0 %9184
    %9188 = vset.pattern.permute.xlu0 0
    %9189 = vperm.xlu0 %9188, %v9069
    %v9190 = vpop.permute.xlu0 %9189
    %9193 = vset.pattern.permute.xlu0 0
    %9194 = vperm.xlu0 %9193, %v9084
    %v9195 = vpop.permute.xlu0 %9194
    %9198 = vset.pattern.permute.xlu0 0
    %9199 = vperm.xlu0 %9198, %v9085
    %v9200 = vpop.permute.xlu0 %9199
    %9203 = vset.pattern.permute.xlu0 0
    %9204 = vperm.xlu0 %9203, %v9100
    %v9205 = vpop.permute.xlu0 %9204
    %9208 = vset.pattern.permute.xlu0 0
    %9209 = vperm.xlu0 %9208, %v9101
    %v9210 = vpop.permute.xlu0 %9209
    %9213 = vset.pattern.permute.xlu0 0
    %9214 = vperm.xlu0 %9213, %v9116
    %v9215 = vpop.permute.xlu0 %9214
    %9218 = vset.pattern.permute.xlu0 0
    %9219 = vperm.xlu0 %9218, %v9117
    %v9220 = vpop.permute.xlu0 %9219
    %9223 = vset.pattern.permute.xlu0 0
    %9224 = vperm.xlu0 %9223, %v9132
    %v9225 = vpop.permute.xlu0 %9224
    %9228 = vset.pattern.permute.xlu0 0
    %9229 = vperm.xlu0 %9228, %v9133
    %v9230 = vpop.permute.xlu0 %9229
    %9233 = vset.pattern.permute.xlu0 0
    %9234 = vperm.xlu0 %9233, %v9148
    %v9235 = vpop.permute.xlu0 %9234
    %9238 = vset.pattern.permute.xlu0 0
    %9239 = vperm.xlu0 %9238, %v9149
    %v9240 = vpop.permute.xlu0 %9239
    %9243 = vset.pattern.permute.xlu0 0
    %9244 = vperm.xlu0 %9243, %v9164
    %v9245 = vpop.permute.xlu0 %9244
    %9248 = vset.pattern.permute.xlu0 0
    %9249 = vperm.xlu0 %9248, %v9165
    %v9250 = vpop.permute.xlu0 %9249
    %9253 = vset.pattern.permute.xlu0 0
    %9254 = vperm.xlu0 %9253, %v9180
    %v9255 = vpop.permute.xlu0 %9254
    %9258 = vset.pattern.permute.xlu0 0
    %9259 = vperm.xlu0 %9258, %v9181
    %v9260 = vpop.permute.xlu0 %9259
    %v9262 = vmul.f32 %v173, %v9185
    %v9263 = vmul.f32 %v174, %v9190
    %v9264 = vmul.f32 %v175, %v9195
    %v9265 = vmul.f32 %v176, %v9200
    %v9266 = vmul.f32 %v177, %v9205
    %v9267 = vmul.f32 %v178, %v9210
    %v9268 = vmul.f32 %v179, %v9215
    %v9269 = vmul.f32 %v180, %v9220
    %v9270 = vmul.f32 %v181, %v9225
    %v9271 = vmul.f32 %v182, %v9230
    %v9272 = vmul.f32 %v183, %v9235
    %v9273 = vmul.f32 %v184, %v9240
    %v9274 = vmul.f32 %v185, %v9245
    %v9275 = vmul.f32 %v186, %v9250
    %v9276 = vmul.f32 %v187, %v9255
    %v9277 = vmul.f32 %v188, %v9260
    %v9278 = vsel %vm197, %v9262, 0.0
    %v9279 = vsel %vm197, %v9263, 0.0
    %v9280 = vadd.f32 %v9278, %v9279
    %v9281 = vrot.slane %v9280, 4
    %v9282 = vadd.f32 %v9280, %v9281
    %v9283 = vrot.slane %v9282, 2
    %v9284 = vadd.f32 %v9282, %v9283
    %v9285 = vrot.slane %v9284, 1
    %v9286 = vadd.f32 %v9284, %v9285
    %v9287 = vsel %vm197, %v9264, 0.0
    %v9288 = vsel %vm197, %v9265, 0.0
    %v9289 = vadd.f32 %v9287, %v9288
    %v9290 = vrot.slane %v9289, 4
    %v9291 = vadd.f32 %v9289, %v9290
    %v9292 = vrot.slane %v9291, 2
    %v9293 = vadd.f32 %v9291, %v9292
    %v9294 = vrot.slane %v9293, 1
    %v9295 = vadd.f32 %v9293, %v9294
    %v9296 = vsel %vm197, %v9266, 0.0
    %v9297 = vsel %vm197, %v9267, 0.0
    %v9298 = vadd.f32 %v9296, %v9297
    %v9299 = vrot.slane %v9298, 4
    %v9300 = vadd.f32 %v9298, %v9299
    %v9301 = vrot.slane %v9300, 2
    %v9302 = vadd.f32 %v9300, %v9301
    %v9303 = vrot.slane %v9302, 1
    %v9304 = vadd.f32 %v9302, %v9303
    %v9305 = vsel %vm197, %v9268, 0.0
    %v9306 = vsel %vm197, %v9269, 0.0
    %v9307 = vadd.f32 %v9305, %v9306
    %v9308 = vrot.slane %v9307, 4
    %v9309 = vadd.f32 %v9307, %v9308
    %v9310 = vrot.slane %v9309, 2
    %v9311 = vadd.f32 %v9309, %v9310
    %v9312 = vrot.slane %v9311, 1
    %v9313 = vadd.f32 %v9311, %v9312
    %v9314 = vsel %vm197, %v9270, 0.0
    %v9315 = vsel %vm197, %v9271, 0.0
    %v9316 = vadd.f32 %v9314, %v9315
    %v9317 = vrot.slane %v9316, 4
    %v9318 = vadd.f32 %v9316, %v9317
    %v9319 = vrot.slane %v9318, 2
    %v9320 = vadd.f32 %v9318, %v9319
    %v9321 = vrot.slane %v9320, 1
    %v9322 = vadd.f32 %v9320, %v9321
    %v9323 = vsel %vm197, %v9272, 0.0
    %v9324 = vsel %vm197, %v9273, 0.0
    %v9325 = vadd.f32 %v9323, %v9324
    %v9326 = vrot.slane %v9325, 4
    %v9327 = vadd.f32 %v9325, %v9326
    %v9328 = vrot.slane %v9327, 2
    %v9329 = vadd.f32 %v9327, %v9328
    %v9330 = vrot.slane %v9329, 1
    %v9331 = vadd.f32 %v9329, %v9330
    %v9332 = vsel %vm197, %v9274, 0.0
    %v9333 = vsel %vm197, %v9275, 0.0
    %v9334 = vadd.f32 %v9332, %v9333
    %v9335 = vrot.slane %v9334, 4
    %v9336 = vadd.f32 %v9334, %v9335
    %v9337 = vrot.slane %v9336, 2
    %v9338 = vadd.f32 %v9336, %v9337
    %v9339 = vrot.slane %v9338, 1
    %v9340 = vadd.f32 %v9338, %v9339
    %v9341 = vsel %vm197, %v9276, 0.0
    %v9342 = vsel %vm197, %v9277, 0.0
    %v9343 = vadd.f32 %v9341, %v9342
    %v9344 = vrot.slane %v9343, 4
    %v9345 = vadd.f32 %v9343, %v9344
    %v9346 = vrot.slane %v9345, 2
    %v9347 = vadd.f32 %v9345, %v9346
    %v9348 = vrot.slane %v9347, 1
    %v9349 = vadd.f32 %v9347, %v9348
    %s9350 = scalar_lea.vmem [#allocation2], 40
    %v9351 = vld [vmem:[%s9350] sm:$0xff]
    %v9352 = vadd.f32 %v9351, %v8515
    %v9361 = vsel %vm1398, %v9295, %v9286
    %v9362 = vsel %vm1400, %v9304, %v9361
    %v9363 = vsel %vm1402, %v9313, %v9362
    %v9364 = vsel %vm1404, %v9322, %v9363
    %v9365 = vsel %vm1406, %v9331, %v9364
    %v9366 = vsel %vm1408, %v9340, %v9365
    %v9367 = vsel %vm1410, %v9349, %v9366
    %v9368 = vsel %vm197, %v9367, 0
    %9370 = vmatpush.msra.mxu0 0.0
    %9371 = vmatpush.msra.mxu0 0.0
    %9372 = vmatpush.msra.mxu0 0.0
    %9373 = vmatpush.msra.mxu0 0.0
    %9374 = vmatpush.msra.mxu0 0.0
    %9375 = vmatpush.msra.mxu0 0.0
    %9376 = vmatpush.msra.mxu0 0.0
    %9377 = vmatpush.msra.mxu0 0.0
    %9378 = vmatpush.msra.mxu0 0.0
    %9379 = vmatpush.msra.mxu0 0.0
    %9380 = vmatpush.msra.mxu0 0.0
    %9381 = vmatpush.msra.mxu0 0.0
    %v9382 = vand.u32 %v1796, 4294901760
    %9383 = vmatpush.msra.mxu0 %v9382
    %v9384 = vand.u32 %v1795, 4294901760
    %9385 = vmatpush.msra.mxu0 %v9384
    %v9386 = vand.u32 %v1794, 4294901760
    %9387 = vmatpush.msra.mxu0 %v9386
    %v9388 = vand.u32 %v1793, 4294901760
    %9389 = vmatpush.msra.mxu0 %v9388
    %v9390 = vand.u32 %v9368, 4294901760
    %v9391 = vsub.f32 %v9368, %v9390
    %v9392 = vand.u32 %v9391, 4294901760
    %v9393 = vsub.f32 %v9391, %v9392
    %v9394 = vand.u32 %v9393, 4294901760
    %9395 = vmatmul.f32.gmra.mxu0 %v9394
    %v9396 = vpop.f32.mrf.mxu0
    %v9397 = vadd.f32 0.0, %v9396
    %9398 = vdwg.mxu0
    %9399 = vmatpush.msra.mxu0 0.0
    %9400 = vmatpush.msra.mxu0 0.0
    %9401 = vmatpush.msra.mxu0 0.0
    %9402 = vmatpush.msra.mxu0 0.0
    %9403 = vmatpush.msra.mxu0 0.0
    %9404 = vmatpush.msra.mxu0 0.0
    %9405 = vmatpush.msra.mxu0 0.0
    %9406 = vmatpush.msra.mxu0 0.0
    %9407 = vmatpush.msra.mxu0 0.0
    %9408 = vmatpush.msra.mxu0 0.0
    %9409 = vmatpush.msra.mxu0 0.0
    %9410 = vmatpush.msra.mxu0 0.0
    %v9411 = vand.u32 %v1796, 4294901760
    %v9412 = vsub.f32 %v1796, %v9411
    %v9413 = vand.u32 %v9412, 4294901760
    %v9414 = vsub.f32 %v9412, %v9413
    %v9415 = vand.u32 %v9414, 4294901760
    %9416 = vmatpush.msra.mxu0 %v9415
    %v9417 = vand.u32 %v1795, 4294901760
    %v9418 = vsub.f32 %v1795, %v9417
    %v9419 = vand.u32 %v9418, 4294901760
    %v9420 = vsub.f32 %v9418, %v9419
    %v9421 = vand.u32 %v9420, 4294901760
    %9422 = vmatpush.msra.mxu0 %v9421
    %v9423 = vand.u32 %v1794, 4294901760
    %v9424 = vsub.f32 %v1794, %v9423
    %v9425 = vand.u32 %v9424, 4294901760
    %v9426 = vsub.f32 %v9424, %v9425
    %v9427 = vand.u32 %v9426, 4294901760
    %9428 = vmatpush.msra.mxu0 %v9427
    %v9429 = vand.u32 %v1793, 4294901760
    %v9430 = vsub.f32 %v1793, %v9429
    %v9431 = vand.u32 %v9430, 4294901760
    %v9432 = vsub.f32 %v9430, %v9431
    %v9433 = vand.u32 %v9432, 4294901760
    %9434 = vmatpush.msra.mxu0 %v9433
    %v9435 = vand.u32 %v9368, 4294901760
    %9436 = vmatmul.f32.gmra.mxu0 %v9435
    %v9437 = vpop.f32.mrf.mxu0
    %v9438 = vadd.f32 %v9397, %v9437
    %9439 = vdwg.mxu0
    %9440 = vmatpush.msra.mxu0 0.0
    %9441 = vmatpush.msra.mxu0 0.0
    %9442 = vmatpush.msra.mxu0 0.0
    %9443 = vmatpush.msra.mxu0 0.0
    %9444 = vmatpush.msra.mxu0 0.0
    %9445 = vmatpush.msra.mxu0 0.0
    %9446 = vmatpush.msra.mxu0 0.0
    %9447 = vmatpush.msra.mxu0 0.0
    %9448 = vmatpush.msra.mxu0 0.0
    %9449 = vmatpush.msra.mxu0 0.0
    %9450 = vmatpush.msra.mxu0 0.0
    %9451 = vmatpush.msra.mxu0 0.0
    %v9452 = vand.u32 %v1796, 4294901760
    %v9453 = vsub.f32 %v1796, %v9452
    %9454 = vmatpush.msra.mxu0 %v9453
    %v9455 = vand.u32 %v1795, 4294901760
    %v9456 = vsub.f32 %v1795, %v9455
    %9457 = vmatpush.msra.mxu0 %v9456
    %v9458 = vand.u32 %v1794, 4294901760
    %v9459 = vsub.f32 %v1794, %v9458
    %9460 = vmatpush.msra.mxu0 %v9459
    %v9461 = vand.u32 %v1793, 4294901760
    %v9462 = vsub.f32 %v1793, %v9461
    %9463 = vmatpush.msra.mxu0 %v9462
    %v9464 = vand.u32 %v9368, 4294901760
    %v9465 = vsub.f32 %v9368, %v9464
    %9466 = vmatmul.f32.gmra.mxu0 %v9465
    %v9467 = vpop.f32.mrf.mxu0
    %v9468 = vadd.f32 %v9438, %v9467
    %9469 = vdwg.mxu0
    %9470 = vmatpush.msra.mxu0 0.0
    %9471 = vmatpush.msra.mxu0 0.0
    %9472 = vmatpush.msra.mxu0 0.0
    %9473 = vmatpush.msra.mxu0 0.0
    %9474 = vmatpush.msra.mxu0 0.0
    %9475 = vmatpush.msra.mxu0 0.0
    %9476 = vmatpush.msra.mxu0 0.0
    %9477 = vmatpush.msra.mxu0 0.0
    %9478 = vmatpush.msra.mxu0 0.0
    %9479 = vmatpush.msra.mxu0 0.0
    %9480 = vmatpush.msra.mxu0 0.0
    %9481 = vmatpush.msra.mxu0 0.0
    %v9482 = vand.u32 %v1796, 4294901760
    %9483 = vmatpush.msra.mxu0 %v9482
    %v9484 = vand.u32 %v1795, 4294901760
    %9485 = vmatpush.msra.mxu0 %v9484
    %v9486 = vand.u32 %v1794, 4294901760
    %9487 = vmatpush.msra.mxu0 %v9486
    %v9488 = vand.u32 %v1793, 4294901760
    %9489 = vmatpush.msra.mxu0 %v9488
    %v9490 = vand.u32 %v9368, 4294901760
    %v9491 = vsub.f32 %v9368, %v9490
    %v9492 = vand.u32 %v9491, 4294901760
    %9493 = vmatmul.f32.gmra.mxu0 %v9492
    %v9494 = vpop.f32.mrf.mxu0
    %v9495 = vadd.f32 %v9468, %v9494
    %9496 = vdwg.mxu0
    %9497 = vmatpush.msra.mxu0 0.0
    %9498 = vmatpush.msra.mxu0 0.0
    %9499 = vmatpush.msra.mxu0 0.0
    %9500 = vmatpush.msra.mxu0 0.0
    %9501 = vmatpush.msra.mxu0 0.0
    %9502 = vmatpush.msra.mxu0 0.0
    %9503 = vmatpush.msra.mxu0 0.0
    %9504 = vmatpush.msra.mxu0 0.0
    %9505 = vmatpush.msra.mxu0 0.0
    %9506 = vmatpush.msra.mxu0 0.0
    %9507 = vmatpush.msra.mxu0 0.0
    %9508 = vmatpush.msra.mxu0 0.0
    %v9509 = vand.u32 %v1796, 4294901760
    %v9510 = vsub.f32 %v1796, %v9509
    %v9511 = vand.u32 %v9510, 4294901760
    %9512 = vmatpush.msra.mxu0 %v9511
    %v9513 = vand.u32 %v1795, 4294901760
    %v9514 = vsub.f32 %v1795, %v9513
    %v9515 = vand.u32 %v9514, 4294901760
    %9516 = vmatpush.msra.mxu0 %v9515
    %v9517 = vand.u32 %v1794, 4294901760
    %v9518 = vsub.f32 %v1794, %v9517
    %v9519 = vand.u32 %v9518, 4294901760
    %9520 = vmatpush.msra.mxu0 %v9519
    %v9521 = vand.u32 %v1793, 4294901760
    %v9522 = vsub.f32 %v1793, %v9521
    %v9523 = vand.u32 %v9522, 4294901760
    %9524 = vmatpush.msra.mxu0 %v9523
    %v9525 = vand.u32 %v9368, 4294901760
    %9526 = vmatmul.f32.gmra.mxu0 %v9525
    %v9527 = vpop.f32.mrf.mxu0
    %v9528 = vadd.f32 %v9495, %v9527
    %9529 = vdwg.mxu0
    %9530 = vmatpush.msra.mxu0 0.0
    %9531 = vmatpush.msra.mxu0 0.0
    %9532 = vmatpush.msra.mxu0 0.0
    %9533 = vmatpush.msra.mxu0 0.0
    %9534 = vmatpush.msra.mxu0 0.0
    %9535 = vmatpush.msra.mxu0 0.0
    %9536 = vmatpush.msra.mxu0 0.0
    %9537 = vmatpush.msra.mxu0 0.0
    %9538 = vmatpush.msra.mxu0 0.0
    %9539 = vmatpush.msra.mxu0 0.0
    %9540 = vmatpush.msra.mxu0 0.0
    %9541 = vmatpush.msra.mxu0 0.0
    %v9542 = vand.u32 %v1796, 4294901760
    %9543 = vmatpush.msra.mxu0 %v9542
    %v9544 = vand.u32 %v1795, 4294901760
    %9545 = vmatpush.msra.mxu0 %v9544
    %v9546 = vand.u32 %v1794, 4294901760
    %9547 = vmatpush.msra.mxu0 %v9546
    %v9548 = vand.u32 %v1793, 4294901760
    %9549 = vmatpush.msra.mxu0 %v9548
    %v9550 = vand.u32 %v9368, 4294901760
    %9551 = vmatmul.f32.gmra.mxu0 %v9550
    %v9552 = vpop.f32.mrf.mxu0
    %v9553 = vadd.f32 %v9528, %v9552
    %9554 = vdwg.mxu0
    %v9555 = vadd.f32 %v9352, %v9553
    %v9556 = vxor.u32 %v9555, 2147483648
    %v9557 = vmul.f32 %v9556, 1.442695
    %v9558 = vpow.pop %v9557
    %v9559 = vadd.f32 %v9558, 1.0
    %v9560 = vrcp.pop %v9559
    %v9561 = vmul.f32 %v9559, %v9560
    %v9562 = vsub.f32 1.0, %v9561
    %v9563 = vmul.f32 %v9560, %v9562
    %v9564 = vadd.f32 %v9560, %v9563
    %vm9565 = vweird.f32 %v9559
    %vm9566 = vweird.f32 %v9560
    %vm9567 = vmor %vm9565, %vm9566
    %v9568 = vsel %vm9567, %v9560, %v9564
    %v9569 = vand.u32 2147483647, %v9559
    %vm9570 = vcmp.eq.f32.partialorder %v9569, 8.507059e+37
    %v9571 = vand.u32 %v9559, 2147483648
    %v9572 = vor.u32 1.1754944e-38, %v9571
    %v9573 = vsel %vm9570, %v9572, %v9568
    %v9574 = vmul.f32 1.0, %v9573
    %v9575 = vtanh.pop %v9555
    %v9576 = vmul.f32 %v9574, %v8283
    %9578 = vrot.lane.b32.xlu0 %v9575, 64
    %v9579 = vpop.permute.xlu0 %9578
    %v9581 = vmul.f32 %v9574, %v9579
    %9583 = vrot.lane.b32.xlu0 %v9581, 32
    %v9584 = vpop.permute.xlu0 %9583
    %v9586 = vadd.f32 %v9576, %v9584
    %v9587 = vtanh.pop %v9586
    %9589 = vrot.lane.b32.xlu0 %v9587, 64
    %v9590 = vpop.permute.xlu0 %9589
    %v9592 = vmul.f32 %v9574, %v9590
    %9594 = vrot.lane.b32.xlu0 %v9592, 32
    %v9595 = vpop.permute.xlu0 %9594
    %s9597 = scalar_lea.vmem [#allocation17], 40
    %9598 = vst.msk [vmem:[%s9597] sm:$0xff] %vm197, %v9595
    %v9599 = vperm.slane %v9185, %v2318
    %v9600 = vperm.slane %v9190, %v2320
    %v9601 = vsel %vm2322, %v9600, %v9599
    %v9602 = vperm.slane %v9195, %v2318
    %v9603 = vperm.slane %v9200, %v2320
    %v9604 = vsel %vm2322, %v9603, %v9602
    %v9605 = vperm.slane %v9205, %v2318
    %v9606 = vperm.slane %v9210, %v2320
    %v9607 = vsel %vm2322, %v9606, %v9605
    %v9608 = vperm.slane %v9215, %v2318
    %v9609 = vperm.slane %v9220, %v2320
    %v9610 = vsel %vm2322, %v9609, %v9608
    %v9611 = vperm.slane %v9225, %v2318
    %v9612 = vperm.slane %v9230, %v2320
    %v9613 = vsel %vm2322, %v9612, %v9611
    %v9614 = vperm.slane %v9235, %v2318
    %v9615 = vperm.slane %v9240, %v2320
    %v9616 = vsel %vm2322, %v9615, %v9614
    %v9617 = vperm.slane %v9245, %v2318
    %v9618 = vperm.slane %v9250, %v2320
    %v9619 = vsel %vm2322, %v9618, %v9617
    %v9620 = vperm.slane %v9255, %v2318
    %v9621 = vperm.slane %v9260, %v2320
    %v9622 = vsel %vm2322, %v9621, %v9620
    %v9623 = vsel %vm1398, %v9604, %v9601
    %v9624 = vsel %vm1400, %v9607, %v9623
    %v9625 = vsel %vm1402, %v9610, %v9624
    %v9626 = vsel %vm1404, %v9613, %v9625
    %v9627 = vsel %vm1406, %v9616, %v9626
    %v9628 = vsel %vm1408, %v9619, %v9627
    %v9629 = vsel %vm1410, %v9622, %v9628
    %s9631 = scalar_lea.vmem [#allocation18], 40
    %9632 = vst.msk [vmem:[%s9631] sm:$0xff] %vm2353, %v9629
    %v9633 = vsel %vm197, %v9595, 0
    %9635 = vmatpush.msra.mxu0 0.0
    %9636 = vmatpush.msra.mxu0 0.0
    %9637 = vmatpush.msra.mxu0 0.0
    %9638 = vmatpush.msra.mxu0 0.0
    %9639 = vmatpush.msra.mxu0 0.0
    %9640 = vmatpush.msra.mxu0 0.0
    %9641 = vmatpush.msra.mxu0 0.0
    %9642 = vmatpush.msra.mxu0 0.0
    %9643 = vmatpush.msra.mxu0 0.0
    %9644 = vmatpush.msra.mxu0 0.0
    %9645 = vmatpush.msra.mxu0 0.0
    %9646 = vmatpush.msra.mxu0 0.0
    %v9647 = vand.u32 %v1803, 4294901760
    %9648 = vmatpush.msra.mxu0 %v9647
    %v9649 = vand.u32 %v1801, 4294901760
    %9650 = vmatpush.msra.mxu0 %v9649
    %v9651 = vand.u32 %v1799, 4294901760
    %9652 = vmatpush.msra.mxu0 %v9651
    %v9653 = vand.u32 %v1797, 4294901760
    %9654 = vmatpush.msra.mxu0 %v9653
    %v9655 = vand.u32 %v9633, 4294901760
    %v9656 = vsub.f32 %v9633, %v9655
    %v9657 = vand.u32 %v9656, 4294901760
    %v9658 = vsub.f32 %v9656, %v9657
    %v9659 = vand.u32 %v9658, 4294901760
    %9660 = vmatmul.f32.gmra.mxu0 %v9659
    %v9661 = vpop.f32.mrf.mxu0
    %v9662 = vadd.f32 0.0, %v9661
    %9663 = vdwg.mxu0
    %9664 = vmatpush.msra.mxu0 0.0
    %9665 = vmatpush.msra.mxu0 0.0
    %9666 = vmatpush.msra.mxu0 0.0
    %9667 = vmatpush.msra.mxu0 0.0
    %9668 = vmatpush.msra.mxu0 0.0
    %9669 = vmatpush.msra.mxu0 0.0
    %9670 = vmatpush.msra.mxu0 0.0
    %9671 = vmatpush.msra.mxu0 0.0
    %9672 = vmatpush.msra.mxu0 0.0
    %9673 = vmatpush.msra.mxu0 0.0
    %9674 = vmatpush.msra.mxu0 0.0
    %9675 = vmatpush.msra.mxu0 0.0
    %v9676 = vand.u32 %v1803, 4294901760
    %v9677 = vsub.f32 %v1803, %v9676
    %v9678 = vand.u32 %v9677, 4294901760
    %v9679 = vsub.f32 %v9677, %v9678
    %v9680 = vand.u32 %v9679, 4294901760
    %9681 = vmatpush.msra.mxu0 %v9680
    %v9682 = vand.u32 %v1801, 4294901760
    %v9683 = vsub.f32 %v1801, %v9682
    %v9684 = vand.u32 %v9683, 4294901760
    %v9685 = vsub.f32 %v9683, %v9684
    %v9686 = vand.u32 %v9685, 4294901760
    %9687 = vmatpush.msra.mxu0 %v9686
    %v9688 = vand.u32 %v1799, 4294901760
    %v9689 = vsub.f32 %v1799, %v9688
    %v9690 = vand.u32 %v9689, 4294901760
    %v9691 = vsub.f32 %v9689, %v9690
    %v9692 = vand.u32 %v9691, 4294901760
    %9693 = vmatpush.msra.mxu0 %v9692
    %v9694 = vand.u32 %v1797, 4294901760
    %v9695 = vsub.f32 %v1797, %v9694
    %v9696 = vand.u32 %v9695, 4294901760
    %v9697 = vsub.f32 %v9695, %v9696
    %v9698 = vand.u32 %v9697, 4294901760
    %9699 = vmatpush.msra.mxu0 %v9698
    %v9700 = vand.u32 %v9633, 4294901760
    %9701 = vmatmul.f32.gmra.mxu0 %v9700
    %v9702 = vpop.f32.mrf.mxu0
    %v9703 = vadd.f32 %v9662, %v9702
    %9704 = vdwg.mxu0
    %9705 = vmatpush.msra.mxu0 0.0
    %9706 = vmatpush.msra.mxu0 0.0
    %9707 = vmatpush.msra.mxu0 0.0
    %9708 = vmatpush.msra.mxu0 0.0
    %9709 = vmatpush.msra.mxu0 0.0
    %9710 = vmatpush.msra.mxu0 0.0
    %9711 = vmatpush.msra.mxu0 0.0
    %9712 = vmatpush.msra.mxu0 0.0
    %9713 = vmatpush.msra.mxu0 0.0
    %9714 = vmatpush.msra.mxu0 0.0
    %9715 = vmatpush.msra.mxu0 0.0
    %9716 = vmatpush.msra.mxu0 0.0
    %v9717 = vand.u32 %v1803, 4294901760
    %v9718 = vsub.f32 %v1803, %v9717
    %9719 = vmatpush.msra.mxu0 %v9718
    %v9720 = vand.u32 %v1801, 4294901760
    %v9721 = vsub.f32 %v1801, %v9720
    %9722 = vmatpush.msra.mxu0 %v9721
    %v9723 = vand.u32 %v1799, 4294901760
    %v9724 = vsub.f32 %v1799, %v9723
    %9725 = vmatpush.msra.mxu0 %v9724
    %v9726 = vand.u32 %v1797, 4294901760
    %v9727 = vsub.f32 %v1797, %v9726
    %9728 = vmatpush.msra.mxu0 %v9727
    %v9729 = vand.u32 %v9633, 4294901760
    %v9730 = vsub.f32 %v9633, %v9729
    %9731 = vmatmul.f32.gmra.mxu0 %v9730
    %v9732 = vpop.f32.mrf.mxu0
    %v9733 = vadd.f32 %v9703, %v9732
    %9734 = vdwg.mxu0
    %9735 = vmatpush.msra.mxu0 0.0
    %9736 = vmatpush.msra.mxu0 0.0
    %9737 = vmatpush.msra.mxu0 0.0
    %9738 = vmatpush.msra.mxu0 0.0
    %9739 = vmatpush.msra.mxu0 0.0
    %9740 = vmatpush.msra.mxu0 0.0
    %9741 = vmatpush.msra.mxu0 0.0
    %9742 = vmatpush.msra.mxu0 0.0
    %9743 = vmatpush.msra.mxu0 0.0
    %9744 = vmatpush.msra.mxu0 0.0
    %9745 = vmatpush.msra.mxu0 0.0
    %9746 = vmatpush.msra.mxu0 0.0
    %v9747 = vand.u32 %v1803, 4294901760
    %9748 = vmatpush.msra.mxu0 %v9747
    %v9749 = vand.u32 %v1801, 4294901760
    %9750 = vmatpush.msra.mxu0 %v9749
    %v9751 = vand.u32 %v1799, 4294901760
    %9752 = vmatpush.msra.mxu0 %v9751
    %v9753 = vand.u32 %v1797, 4294901760
    %9754 = vmatpush.msra.mxu0 %v9753
    %v9755 = vand.u32 %v9633, 4294901760
    %v9756 = vsub.f32 %v9633, %v9755
    %v9757 = vand.u32 %v9756, 4294901760
    %9758 = vmatmul.f32.gmra.mxu0 %v9757
    %v9759 = vpop.f32.mrf.mxu0
    %v9760 = vadd.f32 %v9733, %v9759
    %9761 = vdwg.mxu0
    %9762 = vmatpush.msra.mxu0 0.0
    %9763 = vmatpush.msra.mxu0 0.0
    %9764 = vmatpush.msra.mxu0 0.0
    %9765 = vmatpush.msra.mxu0 0.0
    %9766 = vmatpush.msra.mxu0 0.0
    %9767 = vmatpush.msra.mxu0 0.0
    %9768 = vmatpush.msra.mxu0 0.0
    %9769 = vmatpush.msra.mxu0 0.0
    %9770 = vmatpush.msra.mxu0 0.0
    %9771 = vmatpush.msra.mxu0 0.0
    %9772 = vmatpush.msra.mxu0 0.0
    %9773 = vmatpush.msra.mxu0 0.0
    %v9774 = vand.u32 %v1803, 4294901760
    %v9775 = vsub.f32 %v1803, %v9774
    %v9776 = vand.u32 %v9775, 4294901760
    %9777 = vmatpush.msra.mxu0 %v9776
    %v9778 = vand.u32 %v1801, 4294901760
    %v9779 = vsub.f32 %v1801, %v9778
    %v9780 = vand.u32 %v9779, 4294901760
    %9781 = vmatpush.msra.mxu0 %v9780
    %v9782 = vand.u32 %v1799, 4294901760
    %v9783 = vsub.f32 %v1799, %v9782
    %v9784 = vand.u32 %v9783, 4294901760
    %9785 = vmatpush.msra.mxu0 %v9784
    %v9786 = vand.u32 %v1797, 4294901760
    %v9787 = vsub.f32 %v1797, %v9786
    %v9788 = vand.u32 %v9787, 4294901760
    %9789 = vmatpush.msra.mxu0 %v9788
    %v9790 = vand.u32 %v9633, 4294901760
    %9791 = vmatmul.f32.gmra.mxu0 %v9790
    %v9792 = vpop.f32.mrf.mxu0
    %v9793 = vadd.f32 %v9760, %v9792
    %9794 = vdwg.mxu0
    %9795 = vmatpush.msra.mxu0 0.0
    %9796 = vmatpush.msra.mxu0 0.0
    %9797 = vmatpush.msra.mxu0 0.0
    %9798 = vmatpush.msra.mxu0 0.0
    %9799 = vmatpush.msra.mxu0 0.0
    %9800 = vmatpush.msra.mxu0 0.0
    %9801 = vmatpush.msra.mxu0 0.0
    %9802 = vmatpush.msra.mxu0 0.0
    %9803 = vmatpush.msra.mxu0 0.0
    %9804 = vmatpush.msra.mxu0 0.0
    %9805 = vmatpush.msra.mxu0 0.0
    %9806 = vmatpush.msra.mxu0 0.0
    %v9807 = vand.u32 %v1803, 4294901760
    %9808 = vmatpush.msra.mxu0 %v9807
    %v9809 = vand.u32 %v1801, 4294901760
    %9810 = vmatpush.msra.mxu0 %v9809
    %v9811 = vand.u32 %v1799, 4294901760
    %9812 = vmatpush.msra.mxu0 %v9811
    %v9813 = vand.u32 %v1797, 4294901760
    %9814 = vmatpush.msra.mxu0 %v9813
    %v9815 = vand.u32 %v9633, 4294901760
    %9816 = vmatmul.f32.gmra.mxu0 %v9815
    %v9817 = vpop.f32.mrf.mxu0
    %v9818 = vadd.f32 %v9793, %v9817
    %9819 = vdwg.mxu0
    %9820 = vmatpush.msra.mxu0 0.0
    %9821 = vmatpush.msra.mxu0 0.0
    %9822 = vmatpush.msra.mxu0 0.0
    %9823 = vmatpush.msra.mxu0 0.0
    %9824 = vmatpush.msra.mxu0 0.0
    %9825 = vmatpush.msra.mxu0 0.0
    %9826 = vmatpush.msra.mxu0 0.0
    %9827 = vmatpush.msra.mxu0 0.0
    %9828 = vmatpush.msra.mxu0 0.0
    %9829 = vmatpush.msra.mxu0 0.0
    %9830 = vmatpush.msra.mxu0 0.0
    %9831 = vmatpush.msra.mxu0 0.0
    %v9832 = vand.u32 %v1804, 4294901760
    %9833 = vmatpush.msra.mxu0 %v9832
    %v9834 = vand.u32 %v1802, 4294901760
    %9835 = vmatpush.msra.mxu0 %v9834
    %v9836 = vand.u32 %v1800, 4294901760
    %9837 = vmatpush.msra.mxu0 %v9836
    %v9838 = vand.u32 %v1798, 4294901760
    %9839 = vmatpush.msra.mxu0 %v9838
    %v9840 = vand.u32 %v9633, 4294901760
    %v9841 = vsub.f32 %v9633, %v9840
    %v9842 = vand.u32 %v9841, 4294901760
    %v9843 = vsub.f32 %v9841, %v9842
    %v9844 = vand.u32 %v9843, 4294901760
    %9845 = vmatmul.f32.gmra.mxu0 %v9844
    %v9846 = vpop.f32.mrf.mxu0
    %v9847 = vadd.f32 0.0, %v9846
    %9848 = vdwg.mxu0
    %9849 = vmatpush.msra.mxu0 0.0
    %9850 = vmatpush.msra.mxu0 0.0
    %9851 = vmatpush.msra.mxu0 0.0
    %9852 = vmatpush.msra.mxu0 0.0
    %9853 = vmatpush.msra.mxu0 0.0
    %9854 = vmatpush.msra.mxu0 0.0
    %9855 = vmatpush.msra.mxu0 0.0
    %9856 = vmatpush.msra.mxu0 0.0
    %9857 = vmatpush.msra.mxu0 0.0
    %9858 = vmatpush.msra.mxu0 0.0
    %9859 = vmatpush.msra.mxu0 0.0
    %9860 = vmatpush.msra.mxu0 0.0
    %v9861 = vand.u32 %v1804, 4294901760
    %v9862 = vsub.f32 %v1804, %v9861
    %v9863 = vand.u32 %v9862, 4294901760
    %v9864 = vsub.f32 %v9862, %v9863
    %v9865 = vand.u32 %v9864, 4294901760
    %9866 = vmatpush.msra.mxu0 %v9865
    %v9867 = vand.u32 %v1802, 4294901760
    %v9868 = vsub.f32 %v1802, %v9867
    %v9869 = vand.u32 %v9868, 4294901760
    %v9870 = vsub.f32 %v9868, %v9869
    %v9871 = vand.u32 %v9870, 4294901760
    %9872 = vmatpush.msra.mxu0 %v9871
    %v9873 = vand.u32 %v1800, 4294901760
    %v9874 = vsub.f32 %v1800, %v9873
    %v9875 = vand.u32 %v9874, 4294901760
    %v9876 = vsub.f32 %v9874, %v9875
    %v9877 = vand.u32 %v9876, 4294901760
    %9878 = vmatpush.msra.mxu0 %v9877
    %v9879 = vand.u32 %v1798, 4294901760
    %v9880 = vsub.f32 %v1798, %v9879
    %v9881 = vand.u32 %v9880, 4294901760
    %v9882 = vsub.f32 %v9880, %v9881
    %v9883 = vand.u32 %v9882, 4294901760
    %9884 = vmatpush.msra.mxu0 %v9883
    %v9885 = vand.u32 %v9633, 4294901760
    %9886 = vmatmul.f32.gmra.mxu0 %v9885
    %v9887 = vpop.f32.mrf.mxu0
    %v9888 = vadd.f32 %v9847, %v9887
    %9889 = vdwg.mxu0
    %9890 = vmatpush.msra.mxu0 0.0
    %9891 = vmatpush.msra.mxu0 0.0
    %9892 = vmatpush.msra.mxu0 0.0
    %9893 = vmatpush.msra.mxu0 0.0
    %9894 = vmatpush.msra.mxu0 0.0
    %9895 = vmatpush.msra.mxu0 0.0
    %9896 = vmatpush.msra.mxu0 0.0
    %9897 = vmatpush.msra.mxu0 0.0
    %9898 = vmatpush.msra.mxu0 0.0
    %9899 = vmatpush.msra.mxu0 0.0
    %9900 = vmatpush.msra.mxu0 0.0
    %9901 = vmatpush.msra.mxu0 0.0
    %v9902 = vand.u32 %v1804, 4294901760
    %v9903 = vsub.f32 %v1804, %v9902
    %9904 = vmatpush.msra.mxu0 %v9903
    %v9905 = vand.u32 %v1802, 4294901760
    %v9906 = vsub.f32 %v1802, %v9905
    %9907 = vmatpush.msra.mxu0 %v9906
    %v9908 = vand.u32 %v1800, 4294901760
    %v9909 = vsub.f32 %v1800, %v9908
    %9910 = vmatpush.msra.mxu0 %v9909
    %v9911 = vand.u32 %v1798, 4294901760
    %v9912 = vsub.f32 %v1798, %v9911
    %9913 = vmatpush.msra.mxu0 %v9912
    %v9914 = vand.u32 %v9633, 4294901760
    %v9915 = vsub.f32 %v9633, %v9914
    %9916 = vmatmul.f32.gmra.mxu0 %v9915
    %v9917 = vpop.f32.mrf.mxu0
    %v9918 = vadd.f32 %v9888, %v9917
    %9919 = vdwg.mxu0
    %9920 = vmatpush.msra.mxu0 0.0
    %9921 = vmatpush.msra.mxu0 0.0
    %9922 = vmatpush.msra.mxu0 0.0
    %9923 = vmatpush.msra.mxu0 0.0
    %9924 = vmatpush.msra.mxu0 0.0
    %9925 = vmatpush.msra.mxu0 0.0
    %9926 = vmatpush.msra.mxu0 0.0
    %9927 = vmatpush.msra.mxu0 0.0
    %9928 = vmatpush.msra.mxu0 0.0
    %9929 = vmatpush.msra.mxu0 0.0
    %9930 = vmatpush.msra.mxu0 0.0
    %9931 = vmatpush.msra.mxu0 0.0
    %v9932 = vand.u32 %v1804, 4294901760
    %9933 = vmatpush.msra.mxu0 %v9932
    %v9934 = vand.u32 %v1802, 4294901760
    %9935 = vmatpush.msra.mxu0 %v9934
    %v9936 = vand.u32 %v1800, 4294901760
    %9937 = vmatpush.msra.mxu0 %v9936
    %v9938 = vand.u32 %v1798, 4294901760
    %9939 = vmatpush.msra.mxu0 %v9938
    %v9940 = vand.u32 %v9633, 4294901760
    %v9941 = vsub.f32 %v9633, %v9940
    %v9942 = vand.u32 %v9941, 4294901760
    %9943 = vmatmul.f32.gmra.mxu0 %v9942
    %v9944 = vpop.f32.mrf.mxu0
    %v9945 = vadd.f32 %v9918, %v9944
    %9946 = vdwg.mxu0
    %9947 = vmatpush.msra.mxu0 0.0
    %9948 = vmatpush.msra.mxu0 0.0
    %9949 = vmatpush.msra.mxu0 0.0
    %9950 = vmatpush.msra.mxu0 0.0
    %9951 = vmatpush.msra.mxu0 0.0
    %9952 = vmatpush.msra.mxu0 0.0
    %9953 = vmatpush.msra.mxu0 0.0
    %9954 = vmatpush.msra.mxu0 0.0
    %9955 = vmatpush.msra.mxu0 0.0
    %9956 = vmatpush.msra.mxu0 0.0
    %9957 = vmatpush.msra.mxu0 0.0
    %9958 = vmatpush.msra.mxu0 0.0
    %v9959 = vand.u32 %v1804, 4294901760
    %v9960 = vsub.f32 %v1804, %v9959
    %v9961 = vand.u32 %v9960, 4294901760
    %9962 = vmatpush.msra.mxu0 %v9961
    %v9963 = vand.u32 %v1802, 4294901760
    %v9964 = vsub.f32 %v1802, %v9963
    %v9965 = vand.u32 %v9964, 4294901760
    %9966 = vmatpush.msra.mxu0 %v9965
    %v9967 = vand.u32 %v1800, 4294901760
    %v9968 = vsub.f32 %v1800, %v9967
    %v9969 = vand.u32 %v9968, 4294901760
    %9970 = vmatpush.msra.mxu0 %v9969
    %v9971 = vand.u32 %v1798, 4294901760
    %v9972 = vsub.f32 %v1798, %v9971
    %v9973 = vand.u32 %v9972, 4294901760
    %9974 = vmatpush.msra.mxu0 %v9973
    %v9975 = vand.u32 %v9633, 4294901760
    %9976 = vmatmul.f32.gmra.mxu0 %v9975
    %v9977 = vpop.f32.mrf.mxu0
    %v9978 = vadd.f32 %v9945, %v9977
    %9979 = vdwg.mxu0
    %9980 = vmatpush.msra.mxu0 0.0
    %9981 = vmatpush.msra.mxu0 0.0
    %9982 = vmatpush.msra.mxu0 0.0
    %9983 = vmatpush.msra.mxu0 0.0
    %9984 = vmatpush.msra.mxu0 0.0
    %9985 = vmatpush.msra.mxu0 0.0
    %9986 = vmatpush.msra.mxu0 0.0
    %9987 = vmatpush.msra.mxu0 0.0
    %9988 = vmatpush.msra.mxu0 0.0
    %9989 = vmatpush.msra.mxu0 0.0
    %9990 = vmatpush.msra.mxu0 0.0
    %9991 = vmatpush.msra.mxu0 0.0
    %v9992 = vand.u32 %v1804, 4294901760
    %9993 = vmatpush.msra.mxu0 %v9992
    %v9994 = vand.u32 %v1802, 4294901760
    %9995 = vmatpush.msra.mxu0 %v9994
    %v9996 = vand.u32 %v1800, 4294901760
    %9997 = vmatpush.msra.mxu0 %v9996
    %v9998 = vand.u32 %v1798, 4294901760
    %9999 = vmatpush.msra.mxu0 %v9998
    %v10000 = vand.u32 %v9633, 4294901760
    %10001 = vmatmul.f32.gmra.mxu0 %v10000
    %v10002 = vpop.f32.mrf.mxu0
    %v10003 = vadd.f32 %v9978, %v10002
    %10004 = vdwg.mxu0
    %v10006 = vrot.slane %v10003, 1
    %v10007 = vrot.slane %v10003, 2
    %v10008 = vrot.slane %v10003, 3
    %v10009 = vrot.slane %v10003, 4
    %v10010 = vrot.slane %v10003, 5
    %v10011 = vrot.slane %v10003, 6
    %v10012 = vrot.slane %v10003, 7
    %v10013 = vperm.slane %v10003, 0
    %v10014 = vperm.slane %v10006, 0
    %v10015 = vperm.slane %v10007, 0
    %v10016 = vperm.slane %v10008, 0
    %v10017 = vperm.slane %v10009, 0
    %v10018 = vperm.slane %v10010, 0
    %v10019 = vperm.slane %v10011, 0
    %v10020 = vperm.slane %v10012, 0
    %v10029 = vadd.f32 %v834, %v10013
    %v10030 = vadd.f32 %v838, %v10013
    %v10031 = vadd.f32 %v842, %v10014
    %v10032 = vadd.f32 %v846, %v10014
    %v10033 = vadd.f32 %v850, %v10015
    %v10034 = vadd.f32 %v854, %v10015
    %v10035 = vadd.f32 %v858, %v10016
    %v10036 = vadd.f32 %v862, %v10016
    %v10037 = vadd.f32 %v866, %v10017
    %v10038 = vadd.f32 %v870, %v10017
    %v10039 = vadd.f32 %v874, %v10018
    %v10040 = vadd.f32 %v878, %v10018
    %v10041 = vadd.f32 %v882, %v10019
    %v10042 = vadd.f32 %v886, %v10019
    %v10043 = vadd.f32 %v890, %v10020
    %v10044 = vadd.f32 %v894, %v10020
    %v10045 = vtanh.pop %v10029
    %v10046 = vtanh.pop %v10030
    %v10047 = vtanh.pop %v10031
    %v10048 = vtanh.pop %v10032
    %v10049 = vtanh.pop %v10033
    %v10050 = vtanh.pop %v10034
    %v10051 = vtanh.pop %v10035
    %v10052 = vtanh.pop %v10036
    %v10053 = vtanh.pop %v10037
    %v10054 = vtanh.pop %v10038
    %v10055 = vtanh.pop %v10039
    %v10056 = vtanh.pop %v10040
    %v10057 = vtanh.pop %v10041
    %v10058 = vtanh.pop %v10042
    %v10059 = vtanh.pop %v10043
    %v10060 = vtanh.pop %v10044
    %v10061 = vmul.f32 %v10045, %v2235
    %v10062 = vmul.f32 %v10046, %v2235
    %v10063 = vmul.f32 %v10047, %v2235
    %v10064 = vmul.f32 %v10048, %v2235
    %v10065 = vmul.f32 %v10049, %v2235
    %v10066 = vmul.f32 %v10050, %v2235
    %v10067 = vmul.f32 %v10051, %v2235
    %v10068 = vmul.f32 %v10052, %v2235
    %v10069 = vmul.f32 %v10053, %v2235
    %v10070 = vmul.f32 %v10054, %v2235
    %v10071 = vmul.f32 %v10055, %v2235
    %v10072 = vmul.f32 %v10056, %v2235
    %v10073 = vmul.f32 %v10057, %v2235
    %v10074 = vmul.f32 %v10058, %v2235
    %v10075 = vmul.f32 %v10059, %v2235
    %v10076 = vmul.f32 %v10060, %v2235
    %v10077 = vsel %vm197, %v10061, 0.0
    %10078 = vadd.xlane.f32.xlu0 %v10077
    %v10079 = vpop.xlane.xlu0 %10078
    %v10080 = vsel %vm197, %v10062, 0.0
    %10081 = vadd.xlane.f32.xlu0 %v10080
    %v10082 = vpop.xlane.xlu0 %10081
    %v10083 = vsel %vm197, %v10063, 0.0
    %10084 = vadd.xlane.f32.xlu0 %v10083
    %v10085 = vpop.xlane.xlu0 %10084
    %v10086 = vsel %vm197, %v10064, 0.0
    %10087 = vadd.xlane.f32.xlu0 %v10086
    %v10088 = vpop.xlane.xlu0 %10087
    %v10089 = vsel %vm197, %v10065, 0.0
    %10090 = vadd.xlane.f32.xlu0 %v10089
    %v10091 = vpop.xlane.xlu0 %10090
    %v10092 = vsel %vm197, %v10066, 0.0
    %10093 = vadd.xlane.f32.xlu0 %v10092
    %v10094 = vpop.xlane.xlu0 %10093
    %v10095 = vsel %vm197, %v10067, 0.0
    %10096 = vadd.xlane.f32.xlu0 %v10095
    %v10097 = vpop.xlane.xlu0 %10096
    %v10098 = vsel %vm197, %v10068, 0.0
    %10099 = vadd.xlane.f32.xlu0 %v10098
    %v10100 = vpop.xlane.xlu0 %10099
    %v10101 = vsel %vm197, %v10069, 0.0
    %10102 = vadd.xlane.f32.xlu0 %v10101
    %v10103 = vpop.xlane.xlu0 %10102
    %v10104 = vsel %vm197, %v10070, 0.0
    %10105 = vadd.xlane.f32.xlu0 %v10104
    %v10106 = vpop.xlane.xlu0 %10105
    %v10107 = vsel %vm197, %v10071, 0.0
    %10108 = vadd.xlane.f32.xlu0 %v10107
    %v10109 = vpop.xlane.xlu0 %10108
    %v10110 = vsel %vm197, %v10072, 0.0
    %10111 = vadd.xlane.f32.xlu0 %v10110
    %v10112 = vpop.xlane.xlu0 %10111
    %v10113 = vsel %vm197, %v10073, 0.0
    %10114 = vadd.xlane.f32.xlu0 %v10113
    %v10115 = vpop.xlane.xlu0 %10114
    %v10116 = vsel %vm197, %v10074, 0.0
    %10117 = vadd.xlane.f32.xlu0 %v10116
    %v10118 = vpop.xlane.xlu0 %10117
    %v10119 = vsel %vm197, %v10075, 0.0
    %10120 = vadd.xlane.f32.xlu0 %v10119
    %v10121 = vpop.xlane.xlu0 %10120
    %v10122 = vsel %vm197, %v10076, 0.0
    %10123 = vadd.xlane.f32.xlu0 %v10122
    %v10124 = vpop.xlane.xlu0 %10123
    %v10141 = vperm.slane %v10079, %v2318
    %v10142 = vperm.slane %v10082, %v2320
    %v10143 = vsel %vm2322, %v10142, %v10141
    %v10144 = vperm.slane %v10085, %v2318
    %v10145 = vperm.slane %v10088, %v2320
    %v10146 = vsel %vm2322, %v10145, %v10144
    %v10147 = vperm.slane %v10091, %v2318
    %v10148 = vperm.slane %v10094, %v2320
    %v10149 = vsel %vm2322, %v10148, %v10147
    %v10150 = vperm.slane %v10097, %v2318
    %v10151 = vperm.slane %v10100, %v2320
    %v10152 = vsel %vm2322, %v10151, %v10150
    %v10153 = vperm.slane %v10103, %v2318
    %v10154 = vperm.slane %v10106, %v2320
    %v10155 = vsel %vm2322, %v10154, %v10153
    %v10156 = vperm.slane %v10109, %v2318
    %v10157 = vperm.slane %v10112, %v2320
    %v10158 = vsel %vm2322, %v10157, %v10156
    %v10159 = vperm.slane %v10115, %v2318
    %v10160 = vperm.slane %v10118, %v2320
    %v10161 = vsel %vm2322, %v10160, %v10159
    %v10162 = vperm.slane %v10121, %v2318
    %v10163 = vperm.slane %v10124, %v2320
    %v10164 = vsel %vm2322, %v10163, %v10162
    %v10165 = vsel %vm1398, %v10146, %v10143
    %v10166 = vsel %vm1400, %v10149, %v10165
    %v10167 = vsel %vm1402, %v10152, %v10166
    %v10168 = vsel %vm1404, %v10155, %v10167
    %v10169 = vsel %vm1406, %v10158, %v10168
    %v10170 = vsel %vm1408, %v10161, %v10169
    %v10171 = vsel %vm1410, %v10164, %v10170
    %v10173 = vsel %vm2353, %v10171, -inf
    %10174 = vmax.xlane.f32.xlu0 %v10173
    %v10175 = vpop.xlane.xlu0 %10174
    %v10177 = vperm.slane %v10175, 0
    %v10178 = vperm.slane %v10175, 1
    %v10179 = vperm.slane %v10175, 2
    %v10180 = vperm.slane %v10175, 3
    %v10181 = vperm.slane %v10175, 4
    %v10182 = vperm.slane %v10175, 5
    %v10183 = vperm.slane %v10175, 6
    %v10184 = vperm.slane %v10175, 7
    %v10193 = vsub.f32 %v10079, %v10177
    %v10194 = vsub.f32 %v10082, %v10177
    %v10195 = vsub.f32 %v10085, %v10178
    %v10196 = vsub.f32 %v10088, %v10178
    %v10197 = vsub.f32 %v10091, %v10179
    %v10198 = vsub.f32 %v10094, %v10179
    %v10199 = vsub.f32 %v10097, %v10180
    %v10200 = vsub.f32 %v10100, %v10180
    %v10201 = vsub.f32 %v10103, %v10181
    %v10202 = vsub.f32 %v10106, %v10181
    %v10203 = vsub.f32 %v10109, %v10182
    %v10204 = vsub.f32 %v10112, %v10182
    %v10205 = vsub.f32 %v10115, %v10183
    %v10206 = vsub.f32 %v10118, %v10183
    %v10207 = vsub.f32 %v10121, %v10184
    %v10208 = vsub.f32 %v10124, %v10184
    %v10209 = vmul.f32 %v10193, 1.442695
    %v10210 = vpow.pop %v10209
    %v10211 = vmul.f32 %v10194, 1.442695
    %v10212 = vpow.pop %v10211
    %v10213 = vmul.f32 %v10195, 1.442695
    %v10214 = vpow.pop %v10213
    %v10215 = vmul.f32 %v10196, 1.442695
    %v10216 = vpow.pop %v10215
    %v10217 = vmul.f32 %v10197, 1.442695
    %v10218 = vpow.pop %v10217
    %v10219 = vmul.f32 %v10198, 1.442695
    %v10220 = vpow.pop %v10219
    %v10221 = vmul.f32 %v10199, 1.442695
    %v10222 = vpow.pop %v10221
    %v10223 = vmul.f32 %v10200, 1.442695
    %v10224 = vpow.pop %v10223
    %v10225 = vmul.f32 %v10201, 1.442695
    %v10226 = vpow.pop %v10225
    %v10227 = vmul.f32 %v10202, 1.442695
    %v10228 = vpow.pop %v10227
    %v10229 = vmul.f32 %v10203, 1.442695
    %v10230 = vpow.pop %v10229
    %v10231 = vmul.f32 %v10204, 1.442695
    %v10232 = vpow.pop %v10231
    %v10233 = vmul.f32 %v10205, 1.442695
    %v10234 = vpow.pop %v10233
    %v10235 = vmul.f32 %v10206, 1.442695
    %v10236 = vpow.pop %v10235
    %v10237 = vmul.f32 %v10207, 1.442695
    %v10238 = vpow.pop %v10237
    %v10239 = vmul.f32 %v10208, 1.442695
    %v10240 = vpow.pop %v10239
    %10257 = vset.pattern.permute.xlu0 0
    %10258 = vperm.xlu0 %10257, %v10210
    %v10259 = vpop.permute.xlu0 %10258
    %10260 = vset.pattern.permute.xlu0 0
    %10261 = vperm.xlu0 %10260, %v10212
    %v10262 = vpop.permute.xlu0 %10261
    %10263 = vset.pattern.permute.xlu0 0
    %10264 = vperm.xlu0 %10263, %v10214
    %v10265 = vpop.permute.xlu0 %10264
    %10266 = vset.pattern.permute.xlu0 0
    %10267 = vperm.xlu0 %10266, %v10216
    %v10268 = vpop.permute.xlu0 %10267
    %10269 = vset.pattern.permute.xlu0 0
    %10270 = vperm.xlu0 %10269, %v10218
    %v10271 = vpop.permute.xlu0 %10270
    %10272 = vset.pattern.permute.xlu0 0
    %10273 = vperm.xlu0 %10272, %v10220
    %v10274 = vpop.permute.xlu0 %10273
    %10275 = vset.pattern.permute.xlu0 0
    %10276 = vperm.xlu0 %10275, %v10222
    %v10277 = vpop.permute.xlu0 %10276
    %10278 = vset.pattern.permute.xlu0 0
    %10279 = vperm.xlu0 %10278, %v10224
    %v10280 = vpop.permute.xlu0 %10279
    %10281 = vset.pattern.permute.xlu0 0
    %10282 = vperm.xlu0 %10281, %v10226
    %v10283 = vpop.permute.xlu0 %10282
    %10284 = vset.pattern.permute.xlu0 0
    %10285 = vperm.xlu0 %10284, %v10228
    %v10286 = vpop.permute.xlu0 %10285
    %10287 = vset.pattern.permute.xlu0 0
    %10288 = vperm.xlu0 %10287, %v10230
    %v10289 = vpop.permute.xlu0 %10288
    %10290 = vset.pattern.permute.xlu0 0
    %10291 = vperm.xlu0 %10290, %v10232
    %v10292 = vpop.permute.xlu0 %10291
    %10293 = vset.pattern.permute.xlu0 0
    %10294 = vperm.xlu0 %10293, %v10234
    %v10295 = vpop.permute.xlu0 %10294
    %10296 = vset.pattern.permute.xlu0 0
    %10297 = vperm.xlu0 %10296, %v10236
    %v10298 = vpop.permute.xlu0 %10297
    %10299 = vset.pattern.permute.xlu0 0
    %10300 = vperm.xlu0 %10299, %v10238
    %v10301 = vpop.permute.xlu0 %10300
    %10302 = vset.pattern.permute.xlu0 0
    %10303 = vperm.xlu0 %10302, %v10240
    %v10304 = vpop.permute.xlu0 %10303
    %v10305 = vperm.slane %v10259, %v2318
    %v10306 = vperm.slane %v10262, %v2320
    %v10307 = vsel %vm2322, %v10306, %v10305
    %v10308 = vperm.slane %v10265, %v2318
    %v10309 = vperm.slane %v10268, %v2320
    %v10310 = vsel %vm2322, %v10309, %v10308
    %v10311 = vperm.slane %v10271, %v2318
    %v10312 = vperm.slane %v10274, %v2320
    %v10313 = vsel %vm2322, %v10312, %v10311
    %v10314 = vperm.slane %v10277, %v2318
    %v10315 = vperm.slane %v10280, %v2320
    %v10316 = vsel %vm2322, %v10315, %v10314
    %v10317 = vperm.slane %v10283, %v2318
    %v10318 = vperm.slane %v10286, %v2320
    %v10319 = vsel %vm2322, %v10318, %v10317
    %v10320 = vperm.slane %v10289, %v2318
    %v10321 = vperm.slane %v10292, %v2320
    %v10322 = vsel %vm2322, %v10321, %v10320
    %v10323 = vperm.slane %v10295, %v2318
    %v10324 = vperm.slane %v10298, %v2320
    %v10325 = vsel %vm2322, %v10324, %v10323
    %v10326 = vperm.slane %v10301, %v2318
    %v10327 = vperm.slane %v10304, %v2320
    %v10328 = vsel %vm2322, %v10327, %v10326
    %v10329 = vsel %vm1398, %v10310, %v10307
    %v10330 = vsel %vm1400, %v10313, %v10329
    %v10331 = vsel %vm1402, %v10316, %v10330
    %v10332 = vsel %vm1404, %v10319, %v10331
    %v10333 = vsel %vm1406, %v10322, %v10332
    %v10334 = vsel %vm1408, %v10325, %v10333
    %v10335 = vsel %vm1410, %v10328, %v10334
    %v10337 = vsel %vm2353, %v10335, 0.0
    %10338 = vadd.xlane.f32.xlu0 %v10337
    %v10339 = vpop.xlane.xlu0 %10338
    %v10341 = vperm.slane %v10339, 0
    %v10342 = vperm.slane %v10339, 1
    %v10343 = vperm.slane %v10339, 2
    %v10344 = vperm.slane %v10339, 3
    %v10345 = vperm.slane %v10339, 4
    %v10346 = vperm.slane %v10339, 5
    %v10347 = vperm.slane %v10339, 6
    %v10348 = vperm.slane %v10339, 7
    %v10357 = vrcp.pop %v10341
    %v10358 = vmul.f32 %v10341, %v10357
    %v10359 = vsub.f32 1.0, %v10358
    %v10360 = vmul.f32 %v10357, %v10359
    %v10361 = vadd.f32 %v10357, %v10360
    %vm10362 = vweird.f32 %v10341
    %vm10363 = vweird.f32 %v10357
    %vm10364 = vmor %vm10362, %vm10363
    %v10365 = vsel %vm10364, %v10357, %v10361
    %v10366 = vand.u32 2147483647, %v10341
    %vm10367 = vcmp.eq.f32.partialorder %v10366, 8.507059e+37
    %v10368 = vand.u32 %v10341, 2147483648
    %v10369 = vor.u32 1.1754944e-38, %v10368
    %v10370 = vsel %vm10367, %v10369, %v10365
    %v10371 = vmul.f32 %v10210, %v10370
    %v10372 = vmul.f32 %v10212, %v10370
    %v10373 = vrcp.pop %v10342
    %v10374 = vmul.f32 %v10342, %v10373
    %v10375 = vsub.f32 1.0, %v10374
    %v10376 = vmul.f32 %v10373, %v10375
    %v10377 = vadd.f32 %v10373, %v10376
    %vm10378 = vweird.f32 %v10342
    %vm10379 = vweird.f32 %v10373
    %vm10380 = vmor %vm10378, %vm10379
    %v10381 = vsel %vm10380, %v10373, %v10377
    %v10382 = vand.u32 2147483647, %v10342
    %vm10383 = vcmp.eq.f32.partialorder %v10382, 8.507059e+37
    %v10384 = vand.u32 %v10342, 2147483648
    %v10385 = vor.u32 1.1754944e-38, %v10384
    %v10386 = vsel %vm10383, %v10385, %v10381
    %v10387 = vmul.f32 %v10214, %v10386
    %v10388 = vmul.f32 %v10216, %v10386
    %v10389 = vrcp.pop %v10343
    %v10390 = vmul.f32 %v10343, %v10389
    %v10391 = vsub.f32 1.0, %v10390
    %v10392 = vmul.f32 %v10389, %v10391
    %v10393 = vadd.f32 %v10389, %v10392
    %vm10394 = vweird.f32 %v10343
    %vm10395 = vweird.f32 %v10389
    %vm10396 = vmor %vm10394, %vm10395
    %v10397 = vsel %vm10396, %v10389, %v10393
    %v10398 = vand.u32 2147483647, %v10343
    %vm10399 = vcmp.eq.f32.partialorder %v10398, 8.507059e+37
    %v10400 = vand.u32 %v10343, 2147483648
    %v10401 = vor.u32 1.1754944e-38, %v10400
    %v10402 = vsel %vm10399, %v10401, %v10397
    %v10403 = vmul.f32 %v10218, %v10402
    %v10404 = vmul.f32 %v10220, %v10402
    %v10405 = vrcp.pop %v10344
    %v10406 = vmul.f32 %v10344, %v10405
    %v10407 = vsub.f32 1.0, %v10406
    %v10408 = vmul.f32 %v10405, %v10407
    %v10409 = vadd.f32 %v10405, %v10408
    %vm10410 = vweird.f32 %v10344
    %vm10411 = vweird.f32 %v10405
    %vm10412 = vmor %vm10410, %vm10411
    %v10413 = vsel %vm10412, %v10405, %v10409
    %v10414 = vand.u32 2147483647, %v10344
    %vm10415 = vcmp.eq.f32.partialorder %v10414, 8.507059e+37
    %v10416 = vand.u32 %v10344, 2147483648
    %v10417 = vor.u32 1.1754944e-38, %v10416
    %v10418 = vsel %vm10415, %v10417, %v10413
    %v10419 = vmul.f32 %v10222, %v10418
    %v10420 = vmul.f32 %v10224, %v10418
    %v10421 = vrcp.pop %v10345
    %v10422 = vmul.f32 %v10345, %v10421
    %v10423 = vsub.f32 1.0, %v10422
    %v10424 = vmul.f32 %v10421, %v10423
    %v10425 = vadd.f32 %v10421, %v10424
    %vm10426 = vweird.f32 %v10345
    %vm10427 = vweird.f32 %v10421
    %vm10428 = vmor %vm10426, %vm10427
    %v10429 = vsel %vm10428, %v10421, %v10425
    %v10430 = vand.u32 2147483647, %v10345
    %vm10431 = vcmp.eq.f32.partialorder %v10430, 8.507059e+37
    %v10432 = vand.u32 %v10345, 2147483648
    %v10433 = vor.u32 1.1754944e-38, %v10432
    %v10434 = vsel %vm10431, %v10433, %v10429
    %v10435 = vmul.f32 %v10226, %v10434
    %v10436 = vmul.f32 %v10228, %v10434
    %v10437 = vrcp.pop %v10346
    %v10438 = vmul.f32 %v10346, %v10437
    %v10439 = vsub.f32 1.0, %v10438
    %v10440 = vmul.f32 %v10437, %v10439
    %v10441 = vadd.f32 %v10437, %v10440
    %vm10442 = vweird.f32 %v10346
    %vm10443 = vweird.f32 %v10437
    %vm10444 = vmor %vm10442, %vm10443
    %v10445 = vsel %vm10444, %v10437, %v10441
    %v10446 = vand.u32 2147483647, %v10346
    %vm10447 = vcmp.eq.f32.partialorder %v10446, 8.507059e+37
    %v10448 = vand.u32 %v10346, 2147483648
    %v10449 = vor.u32 1.1754944e-38, %v10448
    %v10450 = vsel %vm10447, %v10449, %v10445
    %v10451 = vmul.f32 %v10230, %v10450
    %v10452 = vmul.f32 %v10232, %v10450
    %v10453 = vrcp.pop %v10347
    %v10454 = vmul.f32 %v10347, %v10453
    %v10455 = vsub.f32 1.0, %v10454
    %v10456 = vmul.f32 %v10453, %v10455
    %v10457 = vadd.f32 %v10453, %v10456
    %vm10458 = vweird.f32 %v10347
    %vm10459 = vweird.f32 %v10453
    %vm10460 = vmor %vm10458, %vm10459
    %v10461 = vsel %vm10460, %v10453, %v10457
    %v10462 = vand.u32 2147483647, %v10347
    %vm10463 = vcmp.eq.f32.partialorder %v10462, 8.507059e+37
    %v10464 = vand.u32 %v10347, 2147483648
    %v10465 = vor.u32 1.1754944e-38, %v10464
    %v10466 = vsel %vm10463, %v10465, %v10461
    %v10467 = vmul.f32 %v10234, %v10466
    %v10468 = vmul.f32 %v10236, %v10466
    %v10469 = vrcp.pop %v10348
    %v10470 = vmul.f32 %v10348, %v10469
    %v10471 = vsub.f32 1.0, %v10470
    %v10472 = vmul.f32 %v10469, %v10471
    %v10473 = vadd.f32 %v10469, %v10472
    %vm10474 = vweird.f32 %v10348
    %vm10475 = vweird.f32 %v10469
    %vm10476 = vmor %vm10474, %vm10475
    %v10477 = vsel %vm10476, %v10469, %v10473
    %v10478 = vand.u32 2147483647, %v10348
    %vm10479 = vcmp.eq.f32.partialorder %v10478, 8.507059e+37
    %v10480 = vand.u32 %v10348, 2147483648
    %v10481 = vor.u32 1.1754944e-38, %v10480
    %v10482 = vsel %vm10479, %v10481, %v10477
    %v10483 = vmul.f32 %v10238, %v10482
    %v10484 = vmul.f32 %v10240, %v10482
    %10486 = vset.pattern.permute.xlu0 0
    %10487 = vperm.xlu0 %10486, %v10371
    %v10488 = vpop.permute.xlu0 %10487
    %10491 = vset.pattern.permute.xlu0 0
    %10492 = vperm.xlu0 %10491, %v10372
    %v10493 = vpop.permute.xlu0 %10492
    %10496 = vset.pattern.permute.xlu0 0
    %10497 = vperm.xlu0 %10496, %v10387
    %v10498 = vpop.permute.xlu0 %10497
    %10501 = vset.pattern.permute.xlu0 0
    %10502 = vperm.xlu0 %10501, %v10388
    %v10503 = vpop.permute.xlu0 %10502
    %10506 = vset.pattern.permute.xlu0 0
    %10507 = vperm.xlu0 %10506, %v10403
    %v10508 = vpop.permute.xlu0 %10507
    %10511 = vset.pattern.permute.xlu0 0
    %10512 = vperm.xlu0 %10511, %v10404
    %v10513 = vpop.permute.xlu0 %10512
    %10516 = vset.pattern.permute.xlu0 0
    %10517 = vperm.xlu0 %10516, %v10419
    %v10518 = vpop.permute.xlu0 %10517
    %10521 = vset.pattern.permute.xlu0 0
    %10522 = vperm.xlu0 %10521, %v10420
    %v10523 = vpop.permute.xlu0 %10522
    %10526 = vset.pattern.permute.xlu0 0
    %10527 = vperm.xlu0 %10526, %v10435
    %v10528 = vpop.permute.xlu0 %10527
    %10531 = vset.pattern.permute.xlu0 0
    %10532 = vperm.xlu0 %10531, %v10436
    %v10533 = vpop.permute.xlu0 %10532
    %10536 = vset.pattern.permute.xlu0 0
    %10537 = vperm.xlu0 %10536, %v10451
    %v10538 = vpop.permute.xlu0 %10537
    %10541 = vset.pattern.permute.xlu0 0
    %10542 = vperm.xlu0 %10541, %v10452
    %v10543 = vpop.permute.xlu0 %10542
    %10546 = vset.pattern.permute.xlu0 0
    %10547 = vperm.xlu0 %10546, %v10467
    %v10548 = vpop.permute.xlu0 %10547
    %10551 = vset.pattern.permute.xlu0 0
    %10552 = vperm.xlu0 %10551, %v10468
    %v10553 = vpop.permute.xlu0 %10552
    %10556 = vset.pattern.permute.xlu0 0
    %10557 = vperm.xlu0 %10556, %v10483
    %v10558 = vpop.permute.xlu0 %10557
    %10561 = vset.pattern.permute.xlu0 0
    %10562 = vperm.xlu0 %10561, %v10484
    %v10563 = vpop.permute.xlu0 %10562
    %v10565 = vmul.f32 %v173, %v10488
    %v10566 = vmul.f32 %v174, %v10493
    %v10567 = vmul.f32 %v175, %v10498
    %v10568 = vmul.f32 %v176, %v10503
    %v10569 = vmul.f32 %v177, %v10508
    %v10570 = vmul.f32 %v178, %v10513
    %v10571 = vmul.f32 %v179, %v10518
    %v10572 = vmul.f32 %v180, %v10523
    %v10573 = vmul.f32 %v181, %v10528
    %v10574 = vmul.f32 %v182, %v10533
    %v10575 = vmul.f32 %v183, %v10538
    %v10576 = vmul.f32 %v184, %v10543
    %v10577 = vmul.f32 %v185, %v10548
    %v10578 = vmul.f32 %v186, %v10553
    %v10579 = vmul.f32 %v187, %v10558
    %v10580 = vmul.f32 %v188, %v10563
    %v10581 = vsel %vm197, %v10565, 0.0
    %v10582 = vsel %vm197, %v10566, 0.0
    %v10583 = vadd.f32 %v10581, %v10582
    %v10584 = vrot.slane %v10583, 4
    %v10585 = vadd.f32 %v10583, %v10584
    %v10586 = vrot.slane %v10585, 2
    %v10587 = vadd.f32 %v10585, %v10586
    %v10588 = vrot.slane %v10587, 1
    %v10589 = vadd.f32 %v10587, %v10588
    %v10590 = vsel %vm197, %v10567, 0.0
    %v10591 = vsel %vm197, %v10568, 0.0
    %v10592 = vadd.f32 %v10590, %v10591
    %v10593 = vrot.slane %v10592, 4
    %v10594 = vadd.f32 %v10592, %v10593
    %v10595 = vrot.slane %v10594, 2
    %v10596 = vadd.f32 %v10594, %v10595
    %v10597 = vrot.slane %v10596, 1
    %v10598 = vadd.f32 %v10596, %v10597
    %v10599 = vsel %vm197, %v10569, 0.0
    %v10600 = vsel %vm197, %v10570, 0.0
    %v10601 = vadd.f32 %v10599, %v10600
    %v10602 = vrot.slane %v10601, 4
    %v10603 = vadd.f32 %v10601, %v10602
    %v10604 = vrot.slane %v10603, 2
    %v10605 = vadd.f32 %v10603, %v10604
    %v10606 = vrot.slane %v10605, 1
    %v10607 = vadd.f32 %v10605, %v10606
    %v10608 = vsel %vm197, %v10571, 0.0
    %v10609 = vsel %vm197, %v10572, 0.0
    %v10610 = vadd.f32 %v10608, %v10609
    %v10611 = vrot.slane %v10610, 4
    %v10612 = vadd.f32 %v10610, %v10611
    %v10613 = vrot.slane %v10612, 2
    %v10614 = vadd.f32 %v10612, %v10613
    %v10615 = vrot.slane %v10614, 1
    %v10616 = vadd.f32 %v10614, %v10615
    %v10617 = vsel %vm197, %v10573, 0.0
    %v10618 = vsel %vm197, %v10574, 0.0
    %v10619 = vadd.f32 %v10617, %v10618
    %v10620 = vrot.slane %v10619, 4
    %v10621 = vadd.f32 %v10619, %v10620
    %v10622 = vrot.slane %v10621, 2
    %v10623 = vadd.f32 %v10621, %v10622
    %v10624 = vrot.slane %v10623, 1
    %v10625 = vadd.f32 %v10623, %v10624
    %v10626 = vsel %vm197, %v10575, 0.0
    %v10627 = vsel %vm197, %v10576, 0.0
    %v10628 = vadd.f32 %v10626, %v10627
    %v10629 = vrot.slane %v10628, 4
    %v10630 = vadd.f32 %v10628, %v10629
    %v10631 = vrot.slane %v10630, 2
    %v10632 = vadd.f32 %v10630, %v10631
    %v10633 = vrot.slane %v10632, 1
    %v10634 = vadd.f32 %v10632, %v10633
    %v10635 = vsel %vm197, %v10577, 0.0
    %v10636 = vsel %vm197, %v10578, 0.0
    %v10637 = vadd.f32 %v10635, %v10636
    %v10638 = vrot.slane %v10637, 4
    %v10639 = vadd.f32 %v10637, %v10638
    %v10640 = vrot.slane %v10639, 2
    %v10641 = vadd.f32 %v10639, %v10640
    %v10642 = vrot.slane %v10641, 1
    %v10643 = vadd.f32 %v10641, %v10642
    %v10644 = vsel %vm197, %v10579, 0.0
    %v10645 = vsel %vm197, %v10580, 0.0
    %v10646 = vadd.f32 %v10644, %v10645
    %v10647 = vrot.slane %v10646, 4
    %v10648 = vadd.f32 %v10646, %v10647
    %v10649 = vrot.slane %v10648, 2
    %v10650 = vadd.f32 %v10648, %v10649
    %v10651 = vrot.slane %v10650, 1
    %v10652 = vadd.f32 %v10650, %v10651
    %s10653 = scalar_lea.vmem [#allocation2], 48
    %v10654 = vld [vmem:[%s10653] sm:$0xff]
    %v10655 = vadd.f32 %v10654, %v9818
    %v10664 = vsel %vm1398, %v10598, %v10589
    %v10665 = vsel %vm1400, %v10607, %v10664
    %v10666 = vsel %vm1402, %v10616, %v10665
    %v10667 = vsel %vm1404, %v10625, %v10666
    %v10668 = vsel %vm1406, %v10634, %v10667
    %v10669 = vsel %vm1408, %v10643, %v10668
    %v10670 = vsel %vm1410, %v10652, %v10669
    %v10671 = vsel %vm197, %v10670, 0
    %10673 = vmatpush.msra.mxu0 0.0
    %10674 = vmatpush.msra.mxu0 0.0
    %10675 = vmatpush.msra.mxu0 0.0
    %10676 = vmatpush.msra.mxu0 0.0
    %10677 = vmatpush.msra.mxu0 0.0
    %10678 = vmatpush.msra.mxu0 0.0
    %10679 = vmatpush.msra.mxu0 0.0
    %10680 = vmatpush.msra.mxu0 0.0
    %10681 = vmatpush.msra.mxu0 0.0
    %10682 = vmatpush.msra.mxu0 0.0
    %10683 = vmatpush.msra.mxu0 0.0
    %10684 = vmatpush.msra.mxu0 0.0
    %v10685 = vand.u32 %v1796, 4294901760
    %10686 = vmatpush.msra.mxu0 %v10685
    %v10687 = vand.u32 %v1795, 4294901760
    %10688 = vmatpush.msra.mxu0 %v10687
    %v10689 = vand.u32 %v1794, 4294901760
    %10690 = vmatpush.msra.mxu0 %v10689
    %v10691 = vand.u32 %v1793, 4294901760
    %10692 = vmatpush.msra.mxu0 %v10691
    %v10693 = vand.u32 %v10671, 4294901760
    %v10694 = vsub.f32 %v10671, %v10693
    %v10695 = vand.u32 %v10694, 4294901760
    %v10696 = vsub.f32 %v10694, %v10695
    %v10697 = vand.u32 %v10696, 4294901760
    %10698 = vmatmul.f32.gmra.mxu0 %v10697
    %v10699 = vpop.f32.mrf.mxu0
    %v10700 = vadd.f32 0.0, %v10699
    %10701 = vdwg.mxu0
    %10702 = vmatpush.msra.mxu0 0.0
    %10703 = vmatpush.msra.mxu0 0.0
    %10704 = vmatpush.msra.mxu0 0.0
    %10705 = vmatpush.msra.mxu0 0.0
    %10706 = vmatpush.msra.mxu0 0.0
    %10707 = vmatpush.msra.mxu0 0.0
    %10708 = vmatpush.msra.mxu0 0.0
    %10709 = vmatpush.msra.mxu0 0.0
    %10710 = vmatpush.msra.mxu0 0.0
    %10711 = vmatpush.msra.mxu0 0.0
    %10712 = vmatpush.msra.mxu0 0.0
    %10713 = vmatpush.msra.mxu0 0.0
    %v10714 = vand.u32 %v1796, 4294901760
    %v10715 = vsub.f32 %v1796, %v10714
    %v10716 = vand.u32 %v10715, 4294901760
    %v10717 = vsub.f32 %v10715, %v10716
    %v10718 = vand.u32 %v10717, 4294901760
    %10719 = vmatpush.msra.mxu0 %v10718
    %v10720 = vand.u32 %v1795, 4294901760
    %v10721 = vsub.f32 %v1795, %v10720
    %v10722 = vand.u32 %v10721, 4294901760
    %v10723 = vsub.f32 %v10721, %v10722
    %v10724 = vand.u32 %v10723, 4294901760
    %10725 = vmatpush.msra.mxu0 %v10724
    %v10726 = vand.u32 %v1794, 4294901760
    %v10727 = vsub.f32 %v1794, %v10726
    %v10728 = vand.u32 %v10727, 4294901760
    %v10729 = vsub.f32 %v10727, %v10728
    %v10730 = vand.u32 %v10729, 4294901760
    %10731 = vmatpush.msra.mxu0 %v10730
    %v10732 = vand.u32 %v1793, 4294901760
    %v10733 = vsub.f32 %v1793, %v10732
    %v10734 = vand.u32 %v10733, 4294901760
    %v10735 = vsub.f32 %v10733, %v10734
    %v10736 = vand.u32 %v10735, 4294901760
    %10737 = vmatpush.msra.mxu0 %v10736
    %v10738 = vand.u32 %v10671, 4294901760
    %10739 = vmatmul.f32.gmra.mxu0 %v10738
    %v10740 = vpop.f32.mrf.mxu0
    %v10741 = vadd.f32 %v10700, %v10740
    %10742 = vdwg.mxu0
    %10743 = vmatpush.msra.mxu0 0.0
    %10744 = vmatpush.msra.mxu0 0.0
    %10745 = vmatpush.msra.mxu0 0.0
    %10746 = vmatpush.msra.mxu0 0.0
    %10747 = vmatpush.msra.mxu0 0.0
    %10748 = vmatpush.msra.mxu0 0.0
    %10749 = vmatpush.msra.mxu0 0.0
    %10750 = vmatpush.msra.mxu0 0.0
    %10751 = vmatpush.msra.mxu0 0.0
    %10752 = vmatpush.msra.mxu0 0.0
    %10753 = vmatpush.msra.mxu0 0.0
    %10754 = vmatpush.msra.mxu0 0.0
    %v10755 = vand.u32 %v1796, 4294901760
    %v10756 = vsub.f32 %v1796, %v10755
    %10757 = vmatpush.msra.mxu0 %v10756
    %v10758 = vand.u32 %v1795, 4294901760
    %v10759 = vsub.f32 %v1795, %v10758
    %10760 = vmatpush.msra.mxu0 %v10759
    %v10761 = vand.u32 %v1794, 4294901760
    %v10762 = vsub.f32 %v1794, %v10761
    %10763 = vmatpush.msra.mxu0 %v10762
    %v10764 = vand.u32 %v1793, 4294901760
    %v10765 = vsub.f32 %v1793, %v10764
    %10766 = vmatpush.msra.mxu0 %v10765
    %v10767 = vand.u32 %v10671, 4294901760
    %v10768 = vsub.f32 %v10671, %v10767
    %10769 = vmatmul.f32.gmra.mxu0 %v10768
    %v10770 = vpop.f32.mrf.mxu0
    %v10771 = vadd.f32 %v10741, %v10770
    %10772 = vdwg.mxu0
    %10773 = vmatpush.msra.mxu0 0.0
    %10774 = vmatpush.msra.mxu0 0.0
    %10775 = vmatpush.msra.mxu0 0.0
    %10776 = vmatpush.msra.mxu0 0.0
    %10777 = vmatpush.msra.mxu0 0.0
    %10778 = vmatpush.msra.mxu0 0.0
    %10779 = vmatpush.msra.mxu0 0.0
    %10780 = vmatpush.msra.mxu0 0.0
    %10781 = vmatpush.msra.mxu0 0.0
    %10782 = vmatpush.msra.mxu0 0.0
    %10783 = vmatpush.msra.mxu0 0.0
    %10784 = vmatpush.msra.mxu0 0.0
    %v10785 = vand.u32 %v1796, 4294901760
    %10786 = vmatpush.msra.mxu0 %v10785
    %v10787 = vand.u32 %v1795, 4294901760
    %10788 = vmatpush.msra.mxu0 %v10787
    %v10789 = vand.u32 %v1794, 4294901760
    %10790 = vmatpush.msra.mxu0 %v10789
    %v10791 = vand.u32 %v1793, 4294901760
    %10792 = vmatpush.msra.mxu0 %v10791
    %v10793 = vand.u32 %v10671, 4294901760
    %v10794 = vsub.f32 %v10671, %v10793
    %v10795 = vand.u32 %v10794, 4294901760
    %10796 = vmatmul.f32.gmra.mxu0 %v10795
    %v10797 = vpop.f32.mrf.mxu0
    %v10798 = vadd.f32 %v10771, %v10797
    %10799 = vdwg.mxu0
    %10800 = vmatpush.msra.mxu0 0.0
    %10801 = vmatpush.msra.mxu0 0.0
    %10802 = vmatpush.msra.mxu0 0.0
    %10803 = vmatpush.msra.mxu0 0.0
    %10804 = vmatpush.msra.mxu0 0.0
    %10805 = vmatpush.msra.mxu0 0.0
    %10806 = vmatpush.msra.mxu0 0.0
    %10807 = vmatpush.msra.mxu0 0.0
    %10808 = vmatpush.msra.mxu0 0.0
    %10809 = vmatpush.msra.mxu0 0.0
    %10810 = vmatpush.msra.mxu0 0.0
    %10811 = vmatpush.msra.mxu0 0.0
    %v10812 = vand.u32 %v1796, 4294901760
    %v10813 = vsub.f32 %v1796, %v10812
    %v10814 = vand.u32 %v10813, 4294901760
    %10815 = vmatpush.msra.mxu0 %v10814
    %v10816 = vand.u32 %v1795, 4294901760
    %v10817 = vsub.f32 %v1795, %v10816
    %v10818 = vand.u32 %v10817, 4294901760
    %10819 = vmatpush.msra.mxu0 %v10818
    %v10820 = vand.u32 %v1794, 4294901760
    %v10821 = vsub.f32 %v1794, %v10820
    %v10822 = vand.u32 %v10821, 4294901760
    %10823 = vmatpush.msra.mxu0 %v10822
    %v10824 = vand.u32 %v1793, 4294901760
    %v10825 = vsub.f32 %v1793, %v10824
    %v10826 = vand.u32 %v10825, 4294901760
    %10827 = vmatpush.msra.mxu0 %v10826
    %v10828 = vand.u32 %v10671, 4294901760
    %10829 = vmatmul.f32.gmra.mxu0 %v10828
    %v10830 = vpop.f32.mrf.mxu0
    %v10831 = vadd.f32 %v10798, %v10830
    %10832 = vdwg.mxu0
    %10833 = vmatpush.msra.mxu0 0.0
    %10834 = vmatpush.msra.mxu0 0.0
    %10835 = vmatpush.msra.mxu0 0.0
    %10836 = vmatpush.msra.mxu0 0.0
    %10837 = vmatpush.msra.mxu0 0.0
    %10838 = vmatpush.msra.mxu0 0.0
    %10839 = vmatpush.msra.mxu0 0.0
    %10840 = vmatpush.msra.mxu0 0.0
    %10841 = vmatpush.msra.mxu0 0.0
    %10842 = vmatpush.msra.mxu0 0.0
    %10843 = vmatpush.msra.mxu0 0.0
    %10844 = vmatpush.msra.mxu0 0.0
    %v10845 = vand.u32 %v1796, 4294901760
    %10846 = vmatpush.msra.mxu0 %v10845
    %v10847 = vand.u32 %v1795, 4294901760
    %10848 = vmatpush.msra.mxu0 %v10847
    %v10849 = vand.u32 %v1794, 4294901760
    %10850 = vmatpush.msra.mxu0 %v10849
    %v10851 = vand.u32 %v1793, 4294901760
    %10852 = vmatpush.msra.mxu0 %v10851
    %v10853 = vand.u32 %v10671, 4294901760
    %10854 = vmatmul.f32.gmra.mxu0 %v10853
    %v10855 = vpop.f32.mrf.mxu0
    %v10856 = vadd.f32 %v10831, %v10855
    %10857 = vdwg.mxu0
    %v10858 = vadd.f32 %v10655, %v10856
    %v10859 = vxor.u32 %v10858, 2147483648
    %v10860 = vmul.f32 %v10859, 1.442695
    %v10861 = vpow.pop %v10860
    %v10862 = vadd.f32 %v10861, 1.0
    %v10863 = vrcp.pop %v10862
    %v10864 = vmul.f32 %v10862, %v10863
    %v10865 = vsub.f32 1.0, %v10864
    %v10866 = vmul.f32 %v10863, %v10865
    %v10867 = vadd.f32 %v10863, %v10866
    %vm10868 = vweird.f32 %v10862
    %vm10869 = vweird.f32 %v10863
    %vm10870 = vmor %vm10868, %vm10869
    %v10871 = vsel %vm10870, %v10863, %v10867
    %v10872 = vand.u32 2147483647, %v10862
    %vm10873 = vcmp.eq.f32.partialorder %v10872, 8.507059e+37
    %v10874 = vand.u32 %v10862, 2147483648
    %v10875 = vor.u32 1.1754944e-38, %v10874
    %v10876 = vsel %vm10873, %v10875, %v10871
    %v10877 = vmul.f32 1.0, %v10876
    %v10878 = vtanh.pop %v10858
    %v10879 = vmul.f32 %v10877, %v9586
    %10881 = vrot.lane.b32.xlu0 %v10878, 64
    %v10882 = vpop.permute.xlu0 %10881
    %v10884 = vmul.f32 %v10877, %v10882
    %10886 = vrot.lane.b32.xlu0 %v10884, 32
    %v10887 = vpop.permute.xlu0 %10886
    %v10889 = vadd.f32 %v10879, %v10887
    %v10890 = vtanh.pop %v10889
    %10892 = vrot.lane.b32.xlu0 %v10890, 64
    %v10893 = vpop.permute.xlu0 %10892
    %v10895 = vmul.f32 %v10877, %v10893
    %10897 = vrot.lane.b32.xlu0 %v10895, 32
    %v10898 = vpop.permute.xlu0 %10897
    %s10900 = scalar_lea.vmem [#allocation17], 48
    %10901 = vst.msk [vmem:[%s10900] sm:$0xff] %vm197, %v10898
    %v10902 = vperm.slane %v10488, %v2318
    %v10903 = vperm.slane %v10493, %v2320
    %v10904 = vsel %vm2322, %v10903, %v10902
    %v10905 = vperm.slane %v10498, %v2318
    %v10906 = vperm.slane %v10503, %v2320
    %v10907 = vsel %vm2322, %v10906, %v10905
    %v10908 = vperm.slane %v10508, %v2318
    %v10909 = vperm.slane %v10513, %v2320
    %v10910 = vsel %vm2322, %v10909, %v10908
    %v10911 = vperm.slane %v10518, %v2318
    %v10912 = vperm.slane %v10523, %v2320
    %v10913 = vsel %vm2322, %v10912, %v10911
    %v10914 = vperm.slane %v10528, %v2318
    %v10915 = vperm.slane %v10533, %v2320
    %v10916 = vsel %vm2322, %v10915, %v10914
    %v10917 = vperm.slane %v10538, %v2318
    %v10918 = vperm.slane %v10543, %v2320
    %v10919 = vsel %vm2322, %v10918, %v10917
    %v10920 = vperm.slane %v10548, %v2318
    %v10921 = vperm.slane %v10553, %v2320
    %v10922 = vsel %vm2322, %v10921, %v10920
    %v10923 = vperm.slane %v10558, %v2318
    %v10924 = vperm.slane %v10563, %v2320
    %v10925 = vsel %vm2322, %v10924, %v10923
    %v10926 = vsel %vm1398, %v10907, %v10904
    %v10927 = vsel %vm1400, %v10910, %v10926
    %v10928 = vsel %vm1402, %v10913, %v10927
    %v10929 = vsel %vm1404, %v10916, %v10928
    %v10930 = vsel %vm1406, %v10919, %v10929
    %v10931 = vsel %vm1408, %v10922, %v10930
    %v10932 = vsel %vm1410, %v10925, %v10931
    %s10934 = scalar_lea.vmem [#allocation18], 48
    %10935 = vst.msk [vmem:[%s10934] sm:$0xff] %vm2353, %v10932
    // Predicated region
    $region86: #{tpu_custom_call.1} parent=1 // pred_check
      _
    $region87: #{tpu_custom_call.1} parent=1 // pred_check_branch
      %10937 = sbr.rel (0) target = $region89
    $region88: #{tpu_custom_call.1} parent=1 // pred_region
      %10939 = vsyncadd [#allocation5], 0
      %s10940 = sshll.u32 [#allocation17], 4
      %s10941 = int_to_ptr.vmem [resolvable:$true] %s10940
      %s10942 = sshll.u32 %s13, 4
      %s10943 = int_to_ptr.hbm [resolvable:$true] %s10942
      %10948 = dma.vmem_to_hbm [thread:$0]  %s10941, 896, %s10943, [#allocation5], 128, 128, 8
    $region89: #{tpu_custom_call.1} parent=1 // pred_fallthru
      _
    // Predicated region
    $region90: #{tpu_custom_call.1} parent=1 // pred_check
      _
    $region91: #{tpu_custom_call.1} parent=1 // pred_check_branch
      %10950 = sbr.rel (0) target = $region93
    $region92: #{tpu_custom_call.1} parent=1 // pred_region
      %10952 = vsyncadd [#allocation19], 0
      %s10953 = sshll.u32 [#allocation18], 4
      %s10954 = int_to_ptr.vmem [resolvable:$true] %s10953
      %s10955 = sshll.u32 %s14, 4
      %s10956 = int_to_ptr.hbm [resolvable:$true] %s10955
      %10961 = dma.vmem_to_hbm [thread:$0]  %s10954, 896, %s10956, [#allocation19], 128, 128, 8
    $region93: #{tpu_custom_call.1} parent=1 // pred_fallthru
      _
    // Predicated region
    $region94: #{tpu_custom_call.1} parent=1 // pred_check
      _
    $region95: #{tpu_custom_call.1} parent=1 // pred_check_branch
      %10963 = sbr.rel (0) target = $region97
    $region96: #{tpu_custom_call.1} parent=1 // pred_region
      %10965 = dma.done [#allocation5], 896
    $region97: #{tpu_custom_call.1} parent=1 // pred_fallthru
      _
    // Predicated region
    $region98: #{tpu_custom_call.1} parent=1 // pred_check
      _
    $region99: #{tpu_custom_call.1} parent=1 // pred_check_branch
      %10967 = sbr.rel (0) target = $region101
    $region100: #{tpu_custom_call.1} parent=1 // pred_region
      %10969 = dma.done [#allocation19], 896
    $region101: #{tpu_custom_call.1} parent=1 // pred_fallthru
      _
    %10970 = vsyncpa [#allocation4], 1
    %10971 = vsyncpa [#allocation7], 1
    %10972 = vsyncpa [#allocation10], 1
    %10973 = vsyncpa [#allocation13], 1
    %10974 = vsyncpa [#allocation16], 1
    %10975 = vsyncpa [#allocation5], 1
    %10976 = vsyncpa [#allocation19], 1

</llo_original>
